<compile_context>
chip_gen: v7x
topology: tpu7x:2x2x1
jax: 0.10.0
libtpu: 0.0.40
codegen_flags: <defaults>
</compile_context>

<pallas_src>
import functools

import jax
import jax.numpy as jnp
from jax import lax
from jax.experimental import pallas as pl
from jax.experimental.pallas import tpu as pltpu


def _round_up(v, m):
    return ((v + m - 1) // m) * m


# ------------------------------ Pallas kernel ------------------------------

def _conv_layer_kernel(*refs, n_stages, Hp, Wp, eps, last_relu, inv_cnt):
    """Fused [Conv3x3(reflect) -> BatchNorm(train stats) -> ReLU] x n_stages.

    refs = [xpf, mask, rid, cid,
            (w2d, gamma, beta) * n_stages,      # inputs
            out,                                # output
            pad_scr, col_scr]                   # VMEM scratch
    """
    x_ref, msk_ref, rid_ref, cid_ref = refs[0], refs[1], refs[2], refs[3]
    stage_refs = [refs[4 + 3 * i: 7 + 3 * i] for i in range(n_stages)]
    o_ref = refs[4 + 3 * n_stages]
    pad_scr = refs[5 + 3 * n_stages]
    col_scr = refs[6 + 3 * n_stages]

    L = x_ref.shape[1]                      # lane-padded N*Hp*Wp (mult. of 128)
    G = (pad_scr.shape[1] - L) // 2         # guard-band width (>= 2*Wp + 2)

    # Hoisted once: interior mask (f32 0/1) and ring-position predicates.
    mask = msk_ref[...]                     # (1, L)
    row = rid_ref[...]
    col = cid_ref[...]
    is_c0 = col == 0
    is_cW = col == Wp - 1
    is_r0 = row == 0
    is_rH = row == Hp - 1

    # Zero the guard bands exactly once; they are never overwritten later, so
    # every statically shifted slice read below stays finite and in bounds.
    n_rows = pad_scr.shape[0]
    pad_scr[:, :G] = jnp.zeros((n_rows, G), jnp.float32)
    pad_scr[:, G + L:] = jnp.zeros((n_rows, G), jnp.float32)

    # Stage-0 input: ring already reflect-padded (and lane-padded) by wrapper.
    cur = x_ref[...].astype(jnp.float32)

    for i in range(n_stages):
        w_ref, g_ref, b_ref = stage_refs[i]
        c_out = w_ref.shape[0]
        c_in = w_ref.shape[1] // 9

        if i == 0:
            pad_scr[:c_in, G:G + L] = cur
        else:
            # Rebuild the reflect-padding ring of the previous activation in
            # flattened coordinates: one payload store of `cur`, shifted
            # guarded reads, one where-chain (the column fix is folded into
            # the row shift so corners resolve correctly), one payload store.
            pad_scr[:c_in, G:G + L] = cur

            def sh(d, _c=c_in):
                return pad_scr[:_c, G + d:G + d + L]

            colfix = jnp.where(is_c0, sh(2), jnp.where(is_cW, sh(-2), cur))
            up = jnp.where(is_c0, sh(2 * Wp + 2),
                           jnp.where(is_cW, sh(2 * Wp - 2), sh(2 * Wp)))
            dn = jnp.where(is_c0, sh(-2 * Wp + 2),
                           jnp.where(is_cW, sh(-2 * Wp - 2), sh(-2 * Wp)))
            fixed = jnp.where(is_r0, up, jnp.where(is_rH, dn, colfix))
            pad_scr[:c_in, G:G + L] = fixed

        # im2col in VMEM (bf16): 9 statically shifted slices of the guarded
        # slab stacked into a (9*Cin, L) matrix.  A (kh-1, kw-1) 2-D shift is
        # a (kh-1)*Wp + (kw-1) shift in flattened coordinates; sample
        # boundaries only affect the discarded padding ring.
        for kh in range(3):
            for kw in range(3):
                t = kh * 3 + kw
                d = (kh - 1) * Wp + (kw - 1)
                col_scr[t * c_in:(t + 1) * c_in, :] = (
                    pad_scr[:c_in, G + d:G + d + L].astype(col_scr.dtype))

        # 3x3 conv == ONE MXU matmul, K = 9*Cin, bf16 operands, f32 accumulate.
        acc = jnp.dot(w_ref[...], col_scr[:9 * c_in, :],
                      preferred_element_type=jnp.float32)       # (Cout, L) f32

        # BatchNorm2d: training-mode batch stats over the real interior only
        # (masked, two-pass centered variance), folded into scale/shift + ReLU.
        xm = acc * mask
        mean = jnp.sum(xm, axis=1, keepdims=True) * inv_cnt      # (Cout, 1)
        cen = (acc - mean) * mask
        var = jnp.sum(cen * cen, axis=1, keepdims=True) * inv_cnt
        scl = g_ref[...] * lax.rsqrt(var + eps)
        # Ring / tail positions get `beta`: they are rebuilt by the next
        # stage's reflect fix or cropped by the wrapper, never consumed.
        y = cen * scl + b_ref[...]
        if last_relu or i < n_stages - 1:
            y = jnp.maximum(y, 0.0)
        cur = y

    o_ref[...] = cur.astype(o_ref.dtype)


# --------------------------------- wrapper ---------------------------------

@functools.partial(jax.jit, static_argnames=("last_relu", "eps"))
def conv_layer_forward(params, x, *, last_relu=True, eps=1e-5):
    """ConvLayer.forward (norm='batch', k=3, s=1, p=1, reflect, cond_dim=None).

    x: (N, C_in, H, W) -> (N, C_out, H, W).
    """
    N, c_in, H, W = x.shape
    Hp, Wp = H + 2, W + 2
    Ntot = N * Hp * Wp
    L = _round_up(Ntot, 128)                    # lane-padded width
    G = max(128, _round_up(2 * Wp + 2, 128))    # guard band, 128-aligned
    n_stages = len(params)

    # --- XLA glue (cheap, O(input)): reflect-pad once, lane-dense slab ---
    xp = jnp.pad(x, ((0, 0), (0, 0), (1, 1), (1, 1)), mode='reflect')
    xpf = jnp.transpose(xp, (1, 0, 2, 3)).reshape(c_in, Ntot)
    xpf = jnp.pad(xpf, ((0, 0), (0, L - Ntot)))

    # Padded-grid row/col index of every flattened position + f32 interior
    # mask (ring and lane-pad tail excluded) for the in-kernel BN reductions.
    rid = jnp.broadcast_to(jnp.arange(Hp, dtype=jnp.int32).reshape(1, 1, Hp, 1),
                           (1, N, Hp, Wp)).reshape(1, Ntot)
    cid = jnp.broadcast_to(jnp.arange(Wp, dtype=jnp.int32).reshape(1, 1, 1, Wp),
                           (1, N, Hp, Wp)).reshape(1, Ntot)
    interior = ((rid > 0) & (rid < Hp - 1) & (cid > 0) & (cid < Wp - 1))
    msk = jnp.pad(interior.astype(jnp.float32), ((0, 0), (0, L - Ntot)))
    rid = jnp.pad(rid, ((0, 0), (0, L - Ntot)))
    cid = jnp.pad(cid, ((0, 0), (0, L - Ntot)))

    inputs = [xpf, msk, rid, cid]
    in_specs = [
        pl.BlockSpec((c_in, L), lambda i: (0, 0)),
        pl.BlockSpec((1, L), lambda i: (0, 0)),
        pl.BlockSpec((1, L), lambda i: (0, 0)),
        pl.BlockSpec((1, L), lambda i: (0, 0)),
    ]
    max_cin = c_in
    for p in params:
        c_out, c_in_w = p['w'].shape[0], p['w'].shape[1]
        max_cin = max(max_cin, c_in_w)
        # (Cout, Cin, 3, 3) -> (Cout, 9*Cin), (kh, kw, ci) order; bf16 for MXU.
        w2d = jnp.transpose(p['w'], (0, 2, 3, 1)).reshape(c_out, 9 * c_in_w)
        inputs += [w2d.astype(jnp.bfloat16),
                   p['gamma'].reshape(c_out, 1).astype(jnp.float32),
                   p['beta'].reshape(c_out, 1).astype(jnp.float32)]
        in_specs += [pl.BlockSpec((c_out, 9 * c_in_w), lambda i: (0, 0)),
                     pl.BlockSpec((c_out, 1), lambda i: (0, 0)),
                     pl.BlockSpec((c_out, 1), lambda i: (0, 0))]
    c_last = params[-1]['w'].shape[0]

    scratch_shapes = [
        # Guarded reflect-padded activation slab (reused by both stages).
        pltpu.VMEM((_round_up(max_cin, 8), 2 * G + L), jnp.float32),
        # im2col slab (bf16 MXU operand), sized for the widest stage.
        pltpu.VMEM((9 * max_cin, L), jnp.bfloat16),
    ]

    out_flat = pl.pallas_call(
        functools.partial(_conv_layer_kernel, n_stages=n_stages, Hp=Hp, Wp=Wp,
                          eps=eps, last_relu=last_relu,
                          inv_cnt=1.0 / float(N * H * W)),
        out_shape=jax.ShapeDtypeStruct((c_last, L), x.dtype),
        grid=(1,),
        in_specs=in_specs,
        out_specs=pl.BlockSpec((c_last, L), lambda i: (0, 0)),
        scratch_shapes=scratch_shapes,
        compiler_params=pltpu.CompilerParams(
            dimension_semantics=("arbitrary",),
            vmem_limit_bytes=32 * 1024 * 1024),
    )(*inputs)

    # --- XLA glue: drop lane padding + ring, back to NCHW ---
    out = out_flat[:, :Ntot].reshape(c_last, N, Hp, Wp)[:, :, 1:-1, 1:-1]
    return jnp.transpose(out, (1, 0, 2, 3))


# --------------------------- parameter construction ------------------------

def init_conv_layer_params(key, nkernels):
    """Deterministic synthetic parameters (PyTorch-like uniform conv init).

    The conv bias is intentionally omitted: every conv is immediately followed
    by training-mode BatchNorm2d, whose batch-mean subtraction cancels any
    per-channel constant bias exactly, so it is dead compute.
    """
    params = []
    for i in range(len(nkernels) - 1):
        cin, cout = nkernels[i], nkernels[i + 1]
        key, k1 = jax.random.split(key)
        bound = (cin * 9.0) ** -0.5
        w = jax.random.uniform(k1, (cout, cin, 3, 3), jnp.float32, -bound, bound)
        params.append({
            'w': w,
            'gamma': jnp.ones((cout,), jnp.float32),   # BatchNorm affine init
            'beta': jnp.zeros((cout,), jnp.float32),
        })
    return params


# ----------------------------------- main -----------------------------------

if __name__ == "__main__":
    key = jax.random.PRNGKey(0)
    kp, kx = jax.random.split(key)

    nkernels = [4, 8, 8]                  # two conv stages: 4 -> 8 -> 8
    params = init_conv_layer_params(kp, nkernels)

    # (N, C, H, W); N=8 corresponds to a folded (batch=2, time=4) UTAE input.
    x = jax.random.normal(kx, (8, 4, 16, 16), dtype=jnp.float32)

    out = conv_layer_forward(params, x)
    out = jax.block_until_ready(out)
    assert out.shape == (8, 8, 16, 16), out.shape
    assert bool(jnp.all(jnp.isfinite(out)))
    print("KERNEL_OK")
</pallas_src>

<mosaic_0001>
module attributes {stable_mosaic.version = 11 : i64} {
  func.func @_conv_layer_kernel(%arg0: i32, %arg1: memref<4x2688xf32, #tpu.memory_space<vmem>>, %arg2: memref<1x2688xf32, #tpu.memory_space<vmem>>, %arg3: memref<1x2688xi32, #tpu.memory_space<vmem>>, %arg4: memref<1x2688xi32, #tpu.memory_space<vmem>>, %arg5: memref<8x36xbf16, #tpu.memory_space<vmem>>, %arg6: memref<8x1xf32, #tpu.memory_space<vmem>>, %arg7: memref<8x1xf32, #tpu.memory_space<vmem>>, %arg8: memref<8x72xbf16, #tpu.memory_space<vmem>>, %arg9: memref<8x1xf32, #tpu.memory_space<vmem>>, %arg10: memref<8x1xf32, #tpu.memory_space<vmem>>, %arg11: memref<8x2688xf32, #tpu.memory_space<vmem>>, %arg12: memref<8x2944xf32, #tpu.memory_space<vmem>>, %arg13: memref<72x2688xbf16, #tpu.memory_space<vmem>>) attributes {dimension_semantics = [#tpu.dimension_semantics<arbitrary>], iteration_bounds = array<i64: 1>, scalar_prefetch = 0 : i64, scratch_operands = 2 : i64, tpu.core_type = #tpu.core_type<tc>, window_params = [{pipeline_mode = #tpu.pipeline_mode<synchronous>, transform_indices = @transform_0, window_bounds = array<i64: 4, 2688>}, {pipeline_mode = #tpu.pipeline_mode<synchronous>, transform_indices = @transform_1, window_bounds = array<i64: 1, 2688>}, {pipeline_mode = #tpu.pipeline_mode<synchronous>, transform_indices = @transform_2, window_bounds = array<i64: 1, 2688>}, {pipeline_mode = #tpu.pipeline_mode<synchronous>, transform_indices = @transform_3, window_bounds = array<i64: 1, 2688>}, {pipeline_mode = #tpu.pipeline_mode<synchronous>, transform_indices = @transform_4, window_bounds = array<i64: 8, 36>}, {pipeline_mode = #tpu.pipeline_mode<synchronous>, transform_indices = @transform_5, window_bounds = array<i64: 8, 1>}, {pipeline_mode = #tpu.pipeline_mode<synchronous>, transform_indices = @transform_6, window_bounds = array<i64: 8, 1>}, {pipeline_mode = #tpu.pipeline_mode<synchronous>, transform_indices = @transform_7, window_bounds = array<i64: 8, 72>}, {pipeline_mode = #tpu.pipeline_mode<synchronous>, transform_indices = @transform_8, window_bounds = array<i64: 8, 1>}, {pipeline_mode = #tpu.pipeline_mode<synchronous>, transform_indices = @transform_9, window_bounds = array<i64: 8, 1>}, {pipeline_mode = #tpu.pipeline_mode<synchronous>, transform_indices = @transform_10, window_bounds = array<i64: 8, 2688>}]} {
    %c0 = arith.constant 0 : index
    %c0_0 = arith.constant 0 : index
    %0 = vector.load %arg2[%c0, %c0_0] : memref<1x2688xf32, #tpu.memory_space<vmem>>, vector<1x2688xf32>
    %c0_1 = arith.constant 0 : index
    %c0_2 = arith.constant 0 : index
    %1 = vector.load %arg3[%c0_1, %c0_2] : memref<1x2688xi32, #tpu.memory_space<vmem>>, vector<1x2688xi32>
    %c0_3 = arith.constant 0 : index
    %c0_4 = arith.constant 0 : index
    %2 = vector.load %arg4[%c0_3, %c0_4] : memref<1x2688xi32, #tpu.memory_space<vmem>>, vector<1x2688xi32>
    %c0_i32 = arith.constant 0 : i32
    %3 = vector.broadcast %c0_i32 : i32 to vector<1x2688xi32>
    %4 = arith.cmpi eq, %2, %3 : vector<1x2688xi32>
    %c17_i32 = arith.constant 17 : i32
    %5 = vector.broadcast %c17_i32 : i32 to vector<1x2688xi32>
    %6 = arith.cmpi eq, %2, %5 : vector<1x2688xi32>
    %c0_i32_5 = arith.constant 0 : i32
    %7 = vector.broadcast %c0_i32_5 : i32 to vector<1x2688xi32>
    %8 = arith.cmpi eq, %1, %7 : vector<1x2688xi32>
    %c17_i32_6 = arith.constant 17 : i32
    %9 = vector.broadcast %c17_i32_6 : i32 to vector<1x2688xi32>
    %10 = arith.cmpi eq, %1, %9 : vector<1x2688xi32>
    %cst = arith.constant 0.000000e+00 : f32
    %11 = vector.broadcast %cst : f32 to vector<8x128xf32>
    %c0_7 = arith.constant 0 : index
    %c0_8 = arith.constant 0 : index
    %12 = vector.load %arg12[%c0_7, %c0_8] : memref<8x2944xf32, #tpu.memory_space<vmem>>, vector<8x128xf32>
    tpu.vector_store %arg12[%c0_7, %c0_8], %11 {strides = array<i32>} : memref<8x2944xf32, #tpu.memory_space<vmem>>, vector<8x128xf32>,
    %cst_9 = arith.constant 0.000000e+00 : f32
    %13 = vector.broadcast %cst_9 : f32 to vector<8x128xf32>
    %c0_10 = arith.constant 0 : index
    %c2816 = arith.constant 2816 : index
    %14 = vector.load %arg12[%c0_10, %c2816] : memref<8x2944xf32, #tpu.memory_space<vmem>>, vector<8x128xf32>
    tpu.vector_store %arg12[%c0_10, %c2816], %13 {strides = array<i32>} : memref<8x2944xf32, #tpu.memory_space<vmem>>, vector<8x128xf32>,
    %c0_11 = arith.constant 0 : index
    %c0_12 = arith.constant 0 : index
    %15 = vector.load %arg1[%c0_11, %c0_12] : memref<4x2688xf32, #tpu.memory_space<vmem>>, vector<4x2688xf32>
    %c0_13 = arith.constant 0 : index
    %c128 = arith.constant 128 : index
    %16 = vector.load %arg12[%c0_13, %c128] : memref<8x2944xf32, #tpu.memory_space<vmem>>, vector<4x2688xf32>
    tpu.vector_store %arg12[%c0_13, %c128], %15 {strides = array<i32>} : memref<8x2944xf32, #tpu.memory_space<vmem>>, vector<4x2688xf32>,
    %c0_14 = arith.constant 0 : index
    %c109 = arith.constant 109 : index
    %17 = vector.load %arg12[%c0_14, %c109] : memref<8x2944xf32, #tpu.memory_space<vmem>>, vector<4x2688xf32>
    %18 = arith.truncf %17 : vector<4x2688xf32> to vector<4x2688xbf16>
    %c0_15 = arith.constant 0 : index
    %c0_16 = arith.constant 0 : index
    %19 = vector.load %arg13[%c0_15, %c0_16] : memref<72x2688xbf16, #tpu.memory_space<vmem>>, vector<4x2688xbf16>
    tpu.vector_store %arg13[%c0_15, %c0_16], %18 {strides = array<i32>} : memref<72x2688xbf16, #tpu.memory_space<vmem>>, vector<4x2688xbf16>,
    %c0_17 = arith.constant 0 : index
    %c110 = arith.constant 110 : index
    %20 = vector.load %arg12[%c0_17, %c110] : memref<8x2944xf32, #tpu.memory_space<vmem>>, vector<4x2688xf32>
    %21 = arith.truncf %20 : vector<4x2688xf32> to vector<4x2688xbf16>
    %c4 = arith.constant 4 : index
    %c0_18 = arith.constant 0 : index
    %22 = vector.load %arg13[%c4, %c0_18] : memref<72x2688xbf16, #tpu.memory_space<vmem>>, vector<4x2688xbf16>
    tpu.vector_store %arg13[%c4, %c0_18], %21 {strides = array<i32>} : memref<72x2688xbf16, #tpu.memory_space<vmem>>, vector<4x2688xbf16>,
    %c0_19 = arith.constant 0 : index
    %c111 = arith.constant 111 : index
    %23 = vector.load %arg12[%c0_19, %c111] : memref<8x2944xf32, #tpu.memory_space<vmem>>, vector<4x2688xf32>
    %24 = arith.truncf %23 : vector<4x2688xf32> to vector<4x2688xbf16>
    %c8 = arith.constant 8 : index
    %c0_20 = arith.constant 0 : index
    %25 = vector.load %arg13[%c8, %c0_20] : memref<72x2688xbf16, #tpu.memory_space<vmem>>, vector<4x2688xbf16>
    tpu.vector_store %arg13[%c8, %c0_20], %24 {strides = array<i32>} : memref<72x2688xbf16, #tpu.memory_space<vmem>>, vector<4x2688xbf16>,
    %c0_21 = arith.constant 0 : index
    %c127 = arith.constant 127 : index
    %26 = vector.load %arg12[%c0_21, %c127] : memref<8x2944xf32, #tpu.memory_space<vmem>>, vector<4x2688xf32>
    %27 = arith.truncf %26 : vector<4x2688xf32> to vector<4x2688xbf16>
    %c12 = arith.constant 12 : index
    %c0_22 = arith.constant 0 : index
    %28 = vector.load %arg13[%c12, %c0_22] : memref<72x2688xbf16, #tpu.memory_space<vmem>>, vector<4x2688xbf16>
    tpu.vector_store %arg13[%c12, %c0_22], %27 {strides = array<i32>} : memref<72x2688xbf16, #tpu.memory_space<vmem>>, vector<4x2688xbf16>,
    %c0_23 = arith.constant 0 : index
    %c128_24 = arith.constant 128 : index
    %29 = vector.load %arg12[%c0_23, %c128_24] : memref<8x2944xf32, #tpu.memory_space<vmem>>, vector<4x2688xf32>
    %30 = arith.truncf %29 : vector<4x2688xf32> to vector<4x2688xbf16>
    %c16 = arith.constant 16 : index
    %c0_25 = arith.constant 0 : index
    %31 = vector.load %arg13[%c16, %c0_25] : memref<72x2688xbf16, #tpu.memory_space<vmem>>, vector<4x2688xbf16>
    tpu.vector_store %arg13[%c16, %c0_25], %30 {strides = array<i32>} : memref<72x2688xbf16, #tpu.memory_space<vmem>>, vector<4x2688xbf16>,
    %c0_26 = arith.constant 0 : index
    %c129 = arith.constant 129 : index
    %32 = vector.load %arg12[%c0_26, %c129] : memref<8x2944xf32, #tpu.memory_space<vmem>>, vector<4x2688xf32>
    %33 = arith.truncf %32 : vector<4x2688xf32> to vector<4x2688xbf16>
    %c20 = arith.constant 20 : index
    %c0_27 = arith.constant 0 : index
    %34 = vector.load %arg13[%c20, %c0_27] : memref<72x2688xbf16, #tpu.memory_space<vmem>>, vector<4x2688xbf16>
    tpu.vector_store %arg13[%c20, %c0_27], %33 {strides = array<i32>} : memref<72x2688xbf16, #tpu.memory_space<vmem>>, vector<4x2688xbf16>,
    %c0_28 = arith.constant 0 : index
    %c145 = arith.constant 145 : index
    %35 = vector.load %arg12[%c0_28, %c145] : memref<8x2944xf32, #tpu.memory_space<vmem>>, vector<4x2688xf32>
    %36 = arith.truncf %35 : vector<4x2688xf32> to vector<4x2688xbf16>
    %c24 = arith.constant 24 : index
    %c0_29 = arith.constant 0 : index
    %37 = vector.load %arg13[%c24, %c0_29] : memref<72x2688xbf16, #tpu.memory_space<vmem>>, vector<4x2688xbf16>
    tpu.vector_store %arg13[%c24, %c0_29], %36 {strides = array<i32>} : memref<72x2688xbf16, #tpu.memory_space<vmem>>, vector<4x2688xbf16>,
    %c0_30 = arith.constant 0 : index
    %c146 = arith.constant 146 : index
    %38 = vector.load %arg12[%c0_30, %c146] : memref<8x2944xf32, #tpu.memory_space<vmem>>, vector<4x2688xf32>
    %39 = arith.truncf %38 : vector<4x2688xf32> to vector<4x2688xbf16>
    %c28 = arith.constant 28 : index
    %c0_31 = arith.constant 0 : index
    %40 = vector.load %arg13[%c28, %c0_31] : memref<72x2688xbf16, #tpu.memory_space<vmem>>, vector<4x2688xbf16>
    tpu.vector_store %arg13[%c28, %c0_31], %39 {strides = array<i32>} : memref<72x2688xbf16, #tpu.memory_space<vmem>>, vector<4x2688xbf16>,
    %c0_32 = arith.constant 0 : index
    %c147 = arith.constant 147 : index
    %41 = vector.load %arg12[%c0_32, %c147] : memref<8x2944xf32, #tpu.memory_space<vmem>>, vector<4x2688xf32>
    %42 = arith.truncf %41 : vector<4x2688xf32> to vector<4x2688xbf16>
    %c32 = arith.constant 32 : index
    %c0_33 = arith.constant 0 : index
    %43 = vector.load %arg13[%c32, %c0_33] : memref<72x2688xbf16, #tpu.memory_space<vmem>>, vector<4x2688xbf16>
    tpu.vector_store %arg13[%c32, %c0_33], %42 {strides = array<i32>} : memref<72x2688xbf16, #tpu.memory_space<vmem>>, vector<4x2688xbf16>,
    %c0_34 = arith.constant 0 : index
    %c0_35 = arith.constant 0 : index
    %44 = vector.load %arg5[%c0_34, %c0_35] : memref<8x36xbf16, #tpu.memory_space<vmem>>, vector<8x36xbf16>
    %c0_36 = arith.constant 0 : index
    %c0_37 = arith.constant 0 : index
    %45 = vector.load %arg13[%c0_36, %c0_37] : memref<72x2688xbf16, #tpu.memory_space<vmem>>, vector<36x2688xbf16>
    %cst_38 = arith.constant dense<0.000000e+00> : vector<8x2688xf32>
    %46 = tpu.matmul %44, %45, %cst_38 {dimension_numbers = #tpu.dot_dimension_numbers<[1], [0], [0], [1], [0, 0, 1, 1], [], []>} : vector<8x36xbf16>, vector<36x2688xbf16>, vector<8x2688xf32> -> vector<8x2688xf32>
    %47 = vector.broadcast %0 : vector<1x2688xf32> to vector<8x2688xf32>
    %48 = arith.mulf %46, %47 : vector<8x2688xf32>
    %cst_39 = arith.constant dense<0.000000e+00> : vector<8xf32>
    %49 = vector.multi_reduction <add>, %48, %cst_39 [1] : vector<8x2688xf32> to vector<8xf32>
    %50 = vector.shape_cast %49 : vector<8xf32> to vector<8x1xf32>
    %cst_40 = arith.constant 4.8828125E-4 : f32
    %51 = vector.broadcast %cst_40 : f32 to vector<8x1xf32>
    %52 = arith.mulf %50, %51 : vector<8x1xf32>
    %53 = vector.broadcast %52 : vector<8x1xf32> to vector<8x2688xf32>
    %54 = arith.subf %46, %53 : vector<8x2688xf32>
    %55 = vector.broadcast %0 : vector<1x2688xf32> to vector<8x2688xf32>
    %56 = arith.mulf %54, %55 : vector<8x2688xf32>
    %57 = arith.mulf %56, %56 : vector<8x2688xf32>
    %cst_41 = arith.constant dense<0.000000e+00> : vector<8xf32>
    %58 = vector.multi_reduction <add>, %57, %cst_41 [1] : vector<8x2688xf32> to vector<8xf32>
    %59 = vector.shape_cast %58 : vector<8xf32> to vector<8x1xf32>
    %cst_42 = arith.constant 4.8828125E-4 : f32
    %60 = vector.broadcast %cst_42 : f32 to vector<8x1xf32>
    %61 = arith.mulf %59, %60 : vector<8x1xf32>
    %c0_43 = arith.constant 0 : index
    %c0_44 = arith.constant 0 : index
    %62 = vector.load %arg6[%c0_43, %c0_44] : memref<8x1xf32, #tpu.memory_space<vmem>>, vector<8x1xf32>
    %cst_45 = arith.constant 9.99999974E-6 : f32
    %63 = vector.broadcast %cst_45 : f32 to vector<8x1xf32>
    %64 = arith.addf %61, %63 : vector<8x1xf32>
    %65 = math.rsqrt %64 : vector<8x1xf32>
    %66 = arith.mulf %62, %65 : vector<8x1xf32>
    %67 = vector.broadcast %66 : vector<8x1xf32> to vector<8x2688xf32>
    %68 = arith.mulf %56, %67 : vector<8x2688xf32>
    %c0_46 = arith.constant 0 : index
    %c0_47 = arith.constant 0 : index
    %69 = vector.load %arg7[%c0_46, %c0_47] : memref<8x1xf32, #tpu.memory_space<vmem>>, vector<8x1xf32>
    %70 = vector.broadcast %69 : vector<8x1xf32> to vector<8x2688xf32>
    %71 = arith.addf %68, %70 : vector<8x2688xf32>
    %cst_48 = arith.constant 0.000000e+00 : f32
    %72 = vector.broadcast %cst_48 : f32 to vector<8x2688xf32>
    %73 = arith.maximumf %71, %72 : vector<8x2688xf32>
    %c0_49 = arith.constant 0 : index
    %c128_50 = arith.constant 128 : index
    %74 = vector.load %arg12[%c0_49, %c128_50] : memref<8x2944xf32, #tpu.memory_space<vmem>>, vector<8x2688xf32>
    tpu.vector_store %arg12[%c0_49, %c128_50], %73 {strides = array<i32>} : memref<8x2944xf32, #tpu.memory_space<vmem>>, vector<8x2688xf32>,
    %c0_51 = arith.constant 0 : index
    %c130 = arith.constant 130 : index
    %75 = vector.load %arg12[%c0_51, %c130] : memref<8x2944xf32, #tpu.memory_space<vmem>>, vector<8x2688xf32>
    %c0_52 = arith.constant 0 : index
    %c126 = arith.constant 126 : index
    %76 = vector.load %arg12[%c0_52, %c126] : memref<8x2944xf32, #tpu.memory_space<vmem>>, vector<8x2688xf32>
    %77 = vector.shape_cast %6 : vector<1x2688xi1> to vector<1x2688xi1>
    %78 = vector.broadcast %77 : vector<1x2688xi1> to vector<8x2688xi1>
    %79 = arith.select %78, %76, %73 : vector<8x2688xi1>, vector<8x2688xf32>
    %80 = vector.shape_cast %4 : vector<1x2688xi1> to vector<1x2688xi1>
    %81 = vector.broadcast %80 : vector<1x2688xi1> to vector<8x2688xi1>
    %82 = arith.select %81, %75, %79 : vector<8x2688xi1>, vector<8x2688xf32>
    %c0_53 = arith.constant 0 : index
    %c166 = arith.constant 166 : index
    %83 = vector.load %arg12[%c0_53, %c166] : memref<8x2944xf32, #tpu.memory_space<vmem>>, vector<8x2688xf32>
    %c0_54 = arith.constant 0 : index
    %c162 = arith.constant 162 : index
    %84 = vector.load %arg12[%c0_54, %c162] : memref<8x2944xf32, #tpu.memory_space<vmem>>, vector<8x2688xf32>
    %c0_55 = arith.constant 0 : index
    %c164 = arith.constant 164 : index
    %85 = vector.load %arg12[%c0_55, %c164] : memref<8x2944xf32, #tpu.memory_space<vmem>>, vector<8x2688xf32>
    %86 = vector.shape_cast %6 : vector<1x2688xi1> to vector<1x2688xi1>
    %87 = vector.broadcast %86 : vector<1x2688xi1> to vector<8x2688xi1>
    %88 = arith.select %87, %84, %85 : vector<8x2688xi1>, vector<8x2688xf32>
    %89 = vector.shape_cast %4 : vector<1x2688xi1> to vector<1x2688xi1>
    %90 = vector.broadcast %89 : vector<1x2688xi1> to vector<8x2688xi1>
    %91 = arith.select %90, %83, %88 : vector<8x2688xi1>, vector<8x2688xf32>
    %c0_56 = arith.constant 0 : index
    %c94 = arith.constant 94 : index
    %92 = vector.load %arg12[%c0_56, %c94] : memref<8x2944xf32, #tpu.memory_space<vmem>>, vector<8x2688xf32>
    %c0_57 = arith.constant 0 : index
    %c90 = arith.constant 90 : index
    %93 = vector.load %arg12[%c0_57, %c90] : memref<8x2944xf32, #tpu.memory_space<vmem>>, vector<8x2688xf32>
    %c0_58 = arith.constant 0 : index
    %c92 = arith.constant 92 : index
    %94 = vector.load %arg12[%c0_58, %c92] : memref<8x2944xf32, #tpu.memory_space<vmem>>, vector<8x2688xf32>
    %95 = vector.shape_cast %6 : vector<1x2688xi1> to vector<1x2688xi1>
    %96 = vector.broadcast %95 : vector<1x2688xi1> to vector<8x2688xi1>
    %97 = arith.select %96, %93, %94 : vector<8x2688xi1>, vector<8x2688xf32>
    %98 = vector.shape_cast %4 : vector<1x2688xi1> to vector<1x2688xi1>
    %99 = vector.broadcast %98 : vector<1x2688xi1> to vector<8x2688xi1>
    %100 = arith.select %99, %92, %97 : vector<8x2688xi1>, vector<8x2688xf32>
    %101 = vector.shape_cast %10 : vector<1x2688xi1> to vector<1x2688xi1>
    %102 = vector.broadcast %101 : vector<1x2688xi1> to vector<8x2688xi1>
    %103 = arith.select %102, %100, %82 : vector<8x2688xi1>, vector<8x2688xf32>
    %104 = vector.shape_cast %8 : vector<1x2688xi1> to vector<1x2688xi1>
    %105 = vector.broadcast %104 : vector<1x2688xi1> to vector<8x2688xi1>
    %106 = arith.select %105, %91, %103 : vector<8x2688xi1>, vector<8x2688xf32>
    %c0_59 = arith.constant 0 : index
    %c128_60 = arith.constant 128 : index
    %107 = vector.load %arg12[%c0_59, %c128_60] : memref<8x2944xf32, #tpu.memory_space<vmem>>, vector<8x2688xf32>
    tpu.vector_store %arg12[%c0_59, %c128_60], %106 {strides = array<i32>} : memref<8x2944xf32, #tpu.memory_space<vmem>>, vector<8x2688xf32>,
    %c0_61 = arith.constant 0 : index
    %c109_62 = arith.constant 109 : index
    %108 = vector.load %arg12[%c0_61, %c109_62] : memref<8x2944xf32, #tpu.memory_space<vmem>>, vector<8x2688xf32>
    %109 = arith.truncf %108 : vector<8x2688xf32> to vector<8x2688xbf16>
    %c0_63 = arith.constant 0 : index
    %c0_64 = arith.constant 0 : index
    %110 = vector.load %arg13[%c0_63, %c0_64] : memref<72x2688xbf16, #tpu.memory_space<vmem>>, vector<8x2688xbf16>
    tpu.vector_store %arg13[%c0_63, %c0_64], %109 {strides = array<i32>} : memref<72x2688xbf16, #tpu.memory_space<vmem>>, vector<8x2688xbf16>,
    %c0_65 = arith.constant 0 : index
    %c110_66 = arith.constant 110 : index
    %111 = vector.load %arg12[%c0_65, %c110_66] : memref<8x2944xf32, #tpu.memory_space<vmem>>, vector<8x2688xf32>
    %112 = arith.truncf %111 : vector<8x2688xf32> to vector<8x2688xbf16>
    %c8_67 = arith.constant 8 : index
    %c0_68 = arith.constant 0 : index
    %113 = vector.load %arg13[%c8_67, %c0_68] : memref<72x2688xbf16, #tpu.memory_space<vmem>>, vector<8x2688xbf16>
    tpu.vector_store %arg13[%c8_67, %c0_68], %112 {strides = array<i32>} : memref<72x2688xbf16, #tpu.memory_space<vmem>>, vector<8x2688xbf16>,
    %c0_69 = arith.constant 0 : index
    %c111_70 = arith.constant 111 : index
    %114 = vector.load %arg12[%c0_69, %c111_70] : memref<8x2944xf32, #tpu.memory_space<vmem>>, vector<8x2688xf32>
    %115 = arith.truncf %114 : vector<8x2688xf32> to vector<8x2688xbf16>
    %c16_71 = arith.constant 16 : index
    %c0_72 = arith.constant 0 : index
    %116 = vector.load %arg13[%c16_71, %c0_72] : memref<72x2688xbf16, #tpu.memory_space<vmem>>, vector<8x2688xbf16>
    tpu.vector_store %arg13[%c16_71, %c0_72], %115 {strides = array<i32>} : memref<72x2688xbf16, #tpu.memory_space<vmem>>, vector<8x2688xbf16>,
    %c0_73 = arith.constant 0 : index
    %c127_74 = arith.constant 127 : index
    %117 = vector.load %arg12[%c0_73, %c127_74] : memref<8x2944xf32, #tpu.memory_space<vmem>>, vector<8x2688xf32>
    %118 = arith.truncf %117 : vector<8x2688xf32> to vector<8x2688xbf16>
    %c24_75 = arith.constant 24 : index
    %c0_76 = arith.constant 0 : index
    %119 = vector.load %arg13[%c24_75, %c0_76] : memref<72x2688xbf16, #tpu.memory_space<vmem>>, vector<8x2688xbf16>
    tpu.vector_store %arg13[%c24_75, %c0_76], %118 {strides = array<i32>} : memref<72x2688xbf16, #tpu.memory_space<vmem>>, vector<8x2688xbf16>,
    %c0_77 = arith.constant 0 : index
    %c128_78 = arith.constant 128 : index
    %120 = vector.load %arg12[%c0_77, %c128_78] : memref<8x2944xf32, #tpu.memory_space<vmem>>, vector<8x2688xf32>
    %121 = arith.truncf %120 : vector<8x2688xf32> to vector<8x2688xbf16>
    %c32_79 = arith.constant 32 : index
    %c0_80 = arith.constant 0 : index
    %122 = vector.load %arg13[%c32_79, %c0_80] : memref<72x2688xbf16, #tpu.memory_space<vmem>>, vector<8x2688xbf16>
    tpu.vector_store %arg13[%c32_79, %c0_80], %121 {strides = array<i32>} : memref<72x2688xbf16, #tpu.memory_space<vmem>>, vector<8x2688xbf16>,
    %c0_81 = arith.constant 0 : index
    %c129_82 = arith.constant 129 : index
    %123 = vector.load %arg12[%c0_81, %c129_82] : memref<8x2944xf32, #tpu.memory_space<vmem>>, vector<8x2688xf32>
    %124 = arith.truncf %123 : vector<8x2688xf32> to vector<8x2688xbf16>
    %c40 = arith.constant 40 : index
    %c0_83 = arith.constant 0 : index
    %125 = vector.load %arg13[%c40, %c0_83] : memref<72x2688xbf16, #tpu.memory_space<vmem>>, vector<8x2688xbf16>
    tpu.vector_store %arg13[%c40, %c0_83], %124 {strides = array<i32>} : memref<72x2688xbf16, #tpu.memory_space<vmem>>, vector<8x2688xbf16>,
    %c0_84 = arith.constant 0 : index
    %c145_85 = arith.constant 145 : index
    %126 = vector.load %arg12[%c0_84, %c145_85] : memref<8x2944xf32, #tpu.memory_space<vmem>>, vector<8x2688xf32>
    %127 = arith.truncf %126 : vector<8x2688xf32> to vector<8x2688xbf16>
    %c48 = arith.constant 48 : index
    %c0_86 = arith.constant 0 : index
    %128 = vector.load %arg13[%c48, %c0_86] : memref<72x2688xbf16, #tpu.memory_space<vmem>>, vector<8x2688xbf16>
    tpu.vector_store %arg13[%c48, %c0_86], %127 {strides = array<i32>} : memref<72x2688xbf16, #tpu.memory_space<vmem>>, vector<8x2688xbf16>,
    %c0_87 = arith.constant 0 : index
    %c146_88 = arith.constant 146 : index
    %129 = vector.load %arg12[%c0_87, %c146_88] : memref<8x2944xf32, #tpu.memory_space<vmem>>, vector<8x2688xf32>
    %130 = arith.truncf %129 : vector<8x2688xf32> to vector<8x2688xbf16>
    %c56 = arith.constant 56 : index
    %c0_89 = arith.constant 0 : index
    %131 = vector.load %arg13[%c56, %c0_89] : memref<72x2688xbf16, #tpu.memory_space<vmem>>, vector<8x2688xbf16>
    tpu.vector_store %arg13[%c56, %c0_89], %130 {strides = array<i32>} : memref<72x2688xbf16, #tpu.memory_space<vmem>>, vector<8x2688xbf16>,
    %c0_90 = arith.constant 0 : index
    %c147_91 = arith.constant 147 : index
    %132 = vector.load %arg12[%c0_90, %c147_91] : memref<8x2944xf32, #tpu.memory_space<vmem>>, vector<8x2688xf32>
    %133 = arith.truncf %132 : vector<8x2688xf32> to vector<8x2688xbf16>
    %c64 = arith.constant 64 : index
    %c0_92 = arith.constant 0 : index
    %134 = vector.load %arg13[%c64, %c0_92] : memref<72x2688xbf16, #tpu.memory_space<vmem>>, vector<8x2688xbf16>
    tpu.vector_store %arg13[%c64, %c0_92], %133 {strides = array<i32>} : memref<72x2688xbf16, #tpu.memory_space<vmem>>, vector<8x2688xbf16>,
    %c0_93 = arith.constant 0 : index
    %c0_94 = arith.constant 0 : index
    %135 = vector.load %arg8[%c0_93, %c0_94] : memref<8x72xbf16, #tpu.memory_space<vmem>>, vector<8x72xbf16>
    %c0_95 = arith.constant 0 : index
    %c0_96 = arith.constant 0 : index
    %136 = vector.load %arg13[%c0_95, %c0_96] : memref<72x2688xbf16, #tpu.memory_space<vmem>>, vector<72x2688xbf16>
    %cst_97 = arith.constant dense<0.000000e+00> : vector<8x2688xf32>
    %137 = tpu.matmul %135, %136, %cst_97 {dimension_numbers = #tpu.dot_dimension_numbers<[1], [0], [0], [1], [0, 0, 1, 1], [], []>} : vector<8x72xbf16>, vector<72x2688xbf16>, vector<8x2688xf32> -> vector<8x2688xf32>
    %138 = vector.broadcast %0 : vector<1x2688xf32> to vector<8x2688xf32>
    %139 = arith.mulf %137, %138 : vector<8x2688xf32>
    %cst_98 = arith.constant dense<0.000000e+00> : vector<8xf32>
    %140 = vector.multi_reduction <add>, %139, %cst_98 [1] : vector<8x2688xf32> to vector<8xf32>
    %141 = vector.shape_cast %140 : vector<8xf32> to vector<8x1xf32>
    %cst_99 = arith.constant 4.8828125E-4 : f32
    %142 = vector.broadcast %cst_99 : f32 to vector<8x1xf32>
    %143 = arith.mulf %141, %142 : vector<8x1xf32>
    %144 = vector.broadcast %143 : vector<8x1xf32> to vector<8x2688xf32>
    %145 = arith.subf %137, %144 : vector<8x2688xf32>
    %146 = vector.broadcast %0 : vector<1x2688xf32> to vector<8x2688xf32>
    %147 = arith.mulf %145, %146 : vector<8x2688xf32>
    %148 = arith.mulf %147, %147 : vector<8x2688xf32>
    %cst_100 = arith.constant dense<0.000000e+00> : vector<8xf32>
    %149 = vector.multi_reduction <add>, %148, %cst_100 [1] : vector<8x2688xf32> to vector<8xf32>
    %150 = vector.shape_cast %149 : vector<8xf32> to vector<8x1xf32>
    %cst_101 = arith.constant 4.8828125E-4 : f32
    %151 = vector.broadcast %cst_101 : f32 to vector<8x1xf32>
    %152 = arith.mulf %150, %151 : vector<8x1xf32>
    %c0_102 = arith.constant 0 : index
    %c0_103 = arith.constant 0 : index
    %153 = vector.load %arg9[%c0_102, %c0_103] : memref<8x1xf32, #tpu.memory_space<vmem>>, vector<8x1xf32>
    %cst_104 = arith.constant 9.99999974E-6 : f32
    %154 = vector.broadcast %cst_104 : f32 to vector<8x1xf32>
    %155 = arith.addf %152, %154 : vector<8x1xf32>
    %156 = math.rsqrt %155 : vector<8x1xf32>
    %157 = arith.mulf %153, %156 : vector<8x1xf32>
    %158 = vector.broadcast %157 : vector<8x1xf32> to vector<8x2688xf32>
    %159 = arith.mulf %147, %158 : vector<8x2688xf32>
    %c0_105 = arith.constant 0 : index
    %c0_106 = arith.constant 0 : index
    %160 = vector.load %arg10[%c0_105, %c0_106] : memref<8x1xf32, #tpu.memory_space<vmem>>, vector<8x1xf32>
    %161 = vector.broadcast %160 : vector<8x1xf32> to vector<8x2688xf32>
    %162 = arith.addf %159, %161 : vector<8x2688xf32>
    %cst_107 = arith.constant 0.000000e+00 : f32
    %163 = vector.broadcast %cst_107 : f32 to vector<8x2688xf32>
    %164 = arith.maximumf %162, %163 : vector<8x2688xf32>
    %c0_108 = arith.constant 0 : index
    %c0_109 = arith.constant 0 : index
    %165 = vector.load %arg11[%c0_108, %c0_109] : memref<8x2688xf32, #tpu.memory_space<vmem>>, vector<8x2688xf32>
    tpu.vector_store %arg11[%c0_108, %c0_109], %164 {strides = array<i32>} : memref<8x2688xf32, #tpu.memory_space<vmem>>, vector<8x2688xf32>,
    return
  }
  func.func @transform_0(%arg0: i32) -> (i32, i32) {
    %c0_i32 = arith.constant 0 : i32
    %c0_i32_0 = arith.constant 0 : i32
    %c0_i32_1 = arith.constant 0 : i32
    return %c0_i32, %c0_i32_0 : i32, i32
  }
  func.func @transform_1(%arg0: i32) -> (i32, i32) {
    %c0_i32 = arith.constant 0 : i32
    %c0_i32_0 = arith.constant 0 : i32
    %c0_i32_1 = arith.constant 0 : i32
    return %c0_i32, %c0_i32_0 : i32, i32
  }
  func.func @transform_2(%arg0: i32) -> (i32, i32) {
    %c0_i32 = arith.constant 0 : i32
    %c0_i32_0 = arith.constant 0 : i32
    %c0_i32_1 = arith.constant 0 : i32
    return %c0_i32, %c0_i32_0 : i32, i32
  }
  func.func @transform_3(%arg0: i32) -> (i32, i32) {
    %c0_i32 = arith.constant 0 : i32
    %c0_i32_0 = arith.constant 0 : i32
    %c0_i32_1 = arith.constant 0 : i32
    return %c0_i32, %c0_i32_0 : i32, i32
  }
  func.func @transform_4(%arg0: i32) -> (i32, i32) {
    %c0_i32 = arith.constant 0 : i32
    %c0_i32_0 = arith.constant 0 : i32
    %c0_i32_1 = arith.constant 0 : i32
    return %c0_i32, %c0_i32_0 : i32, i32
  }
  func.func @transform_5(%arg0: i32) -> (i32, i32) {
    %c0_i32 = arith.constant 0 : i32
    %c0_i32_0 = arith.constant 0 : i32
    %c0_i32_1 = arith.constant 0 : i32
    return %c0_i32, %c0_i32_0 : i32, i32
  }
  func.func @transform_6(%arg0: i32) -> (i32, i32) {
    %c0_i32 = arith.constant 0 : i32
    %c0_i32_0 = arith.constant 0 : i32
    %c0_i32_1 = arith.constant 0 : i32
    return %c0_i32, %c0_i32_0 : i32, i32
  }
  func.func @transform_7(%arg0: i32) -> (i32, i32) {
    %c0_i32 = arith.constant 0 : i32
    %c0_i32_0 = arith.constant 0 : i32
    %c0_i32_1 = arith.constant 0 : i32
    return %c0_i32, %c0_i32_0 : i32, i32
  }
  func.func @transform_8(%arg0: i32) -> (i32, i32) {
    %c0_i32 = arith.constant 0 : i32
    %c0_i32_0 = arith.constant 0 : i32
    %c0_i32_1 = arith.constant 0 : i32
    return %c0_i32, %c0_i32_0 : i32, i32
  }
  func.func @transform_9(%arg0: i32) -> (i32, i32) {
    %c0_i32 = arith.constant 0 : i32
    %c0_i32_0 = arith.constant 0 : i32
    %c0_i32_1 = arith.constant 0 : i32
    return %c0_i32, %c0_i32_0 : i32, i32
  }
  func.func @transform_10(%arg0: i32) -> (i32, i32) {
    %c0_i32 = arith.constant 0 : i32
    %c0_i32_0 = arith.constant 0 : i32
    %c0_i32_1 = arith.constant 0 : i32
    return %c0_i32, %c0_i32_0 : i32, i32
  }
}

</mosaic_0001>

<llo_original>
// kernel: conv_layer_forward.1
$region0: #{conv_layer_forward.1}
  #allocation0 [shape = 'u32[]', space=smem, size = 0x4, offset = 0x4, fixed_abs, tag = 'smem constant byte address 0x4 - core index']
  #allocation1 [shape = 'u32[144,128]{1,0:T(1,128)}', space=vmem, size = 0x12000, scoped, tag = 'internal scratch']
  #allocation2 [shape = 'f32[8,2944]{1,0:T(8,128)}', space=vmem, size = 0x17000, scoped, tag = 'scratch operand']
  #allocation3 [shape = 'bf16[72,2688]{1,0:T(8,128)(2,1)}', space=vmem, size = 0x5e800, scoped, tag = 'scratch operand']
  %s0 = inlined_call_operand.vmem [shape: f32[4,2688], index: 0, kind: input, shape index: {}]
  %s1 = inlined_call_operand.vmem [shape: f32[1,2688], index: 1, kind: input, shape index: {}]
  %s2 = inlined_call_operand.vmem [shape: s32[1,2688], index: 2, kind: input, shape index: {}]
  %s3 = inlined_call_operand.vmem [shape: s32[1,2688], index: 3, kind: input, shape index: {}]
  %s4 = inlined_call_operand.vmem [shape: bf16[8,36], index: 4, kind: input, shape index: {}]
  %s5 = inlined_call_operand.vmem [shape: f32[8,1], index: 5, kind: input, shape index: {}]
  %s6 = inlined_call_operand.vmem [shape: f32[8,1], index: 6, kind: input, shape index: {}]
  %s7 = inlined_call_operand.vmem [shape: bf16[8,72], index: 7, kind: input, shape index: {}]
  %s8 = inlined_call_operand.vmem [shape: f32[8,1], index: 8, kind: input, shape index: {}]
  %s9 = inlined_call_operand.vmem [shape: f32[8,1], index: 9, kind: input, shape index: {}]
  %s10 = inlined_call_operand.vmem [shape: f32[8,2688], index: 10, kind: output, shape index: {}]
  %s11 = sld [smem:[#allocation0]]
  $region50: #{conv_layer_forward.1} parent=0
    _
  %s13 = ssub.s32 1, %s11
  %s14 = scalar_select 0, %s13, %s11
  // Predicated region
  $region2: #{conv_layer_forward.1} parent=0 // pred_check
    _
  $region3: #{conv_layer_forward.1} parent=0 // pred_check_branch
    %16 = sbr.rel (0) target = $region5
  $region4: #{conv_layer_forward.1} parent=0 // pred_region
    _
  $region5: #{conv_layer_forward.1} parent=0 // pred_fallthru
    _
  // Predicated region
  $region6: #{conv_layer_forward.1} parent=0 // pred_check
    _
  $region7: #{conv_layer_forward.1} parent=0 // pred_check_branch
    %18 = sbr.rel (0) target = $region9
  $region8: #{conv_layer_forward.1} parent=0 // pred_region
    _
  $region9: #{conv_layer_forward.1} parent=0 // pred_fallthru
    _
  // Predicated region
  $region10: #{conv_layer_forward.1} parent=0 // pred_check
    _
  $region11: #{conv_layer_forward.1} parent=0 // pred_check_branch
    %20 = sbr.rel (0) target = $region13
  $region12: #{conv_layer_forward.1} parent=0 // pred_region
    _
  $region13: #{conv_layer_forward.1} parent=0 // pred_fallthru
    _
  // Predicated region
  $region14: #{conv_layer_forward.1} parent=0 // pred_check
    _
  $region15: #{conv_layer_forward.1} parent=0 // pred_check_branch
    %22 = sbr.rel (0) target = $region17
  $region16: #{conv_layer_forward.1} parent=0 // pred_region
    _
  $region17: #{conv_layer_forward.1} parent=0 // pred_fallthru
    _
  // Predicated region
  $region18: #{conv_layer_forward.1} parent=0 // pred_check
    _
  $region19: #{conv_layer_forward.1} parent=0 // pred_check_branch
    %24 = sbr.rel (0) target = $region21
  $region20: #{conv_layer_forward.1} parent=0 // pred_region
    _
  $region21: #{conv_layer_forward.1} parent=0 // pred_fallthru
    _
  // Predicated region
  $region22: #{conv_layer_forward.1} parent=0 // pred_check
    _
  $region23: #{conv_layer_forward.1} parent=0 // pred_check_branch
    %26 = sbr.rel (0) target = $region25
  $region24: #{conv_layer_forward.1} parent=0 // pred_region
    _
  $region25: #{conv_layer_forward.1} parent=0 // pred_fallthru
    _
  // Predicated region
  $region26: #{conv_layer_forward.1} parent=0 // pred_check
    _
  $region27: #{conv_layer_forward.1} parent=0 // pred_check_branch
    %28 = sbr.rel (0) target = $region29
  $region28: #{conv_layer_forward.1} parent=0 // pred_region
    _
  $region29: #{conv_layer_forward.1} parent=0 // pred_fallthru
    _
  // Predicated region
  $region30: #{conv_layer_forward.1} parent=0 // pred_check
    _
  $region31: #{conv_layer_forward.1} parent=0 // pred_check_branch
    %30 = sbr.rel (0) target = $region33
  $region32: #{conv_layer_forward.1} parent=0 // pred_region
    _
  $region33: #{conv_layer_forward.1} parent=0 // pred_fallthru
    _
  // Predicated region
  $region34: #{conv_layer_forward.1} parent=0 // pred_check
    _
  $region35: #{conv_layer_forward.1} parent=0 // pred_check_branch
    %32 = sbr.rel (0) target = $region37
  $region36: #{conv_layer_forward.1} parent=0 // pred_region
    _
  $region37: #{conv_layer_forward.1} parent=0 // pred_fallthru
    _
  // Predicated region
  $region38: #{conv_layer_forward.1} parent=0 // pred_check
    _
  $region39: #{conv_layer_forward.1} parent=0 // pred_check_branch
    %34 = sbr.rel (0) target = $region41
  $region40: #{conv_layer_forward.1} parent=0 // pred_region
    _
  $region41: #{conv_layer_forward.1} parent=0 // pred_fallthru
    _
  %v36 = vld [vmem:[%s1] sm:$0xff]
  %v37 = vld [vmem:[%s1 + $0x8] sm:$0xff]
  %v38 = vld [vmem:[%s1 + $0x10] sm:$0x1f]
  %v39 = vld [vmem:[%s2] sm:$0xff]
  %v40 = vld [vmem:[%s2 + $0x8] sm:$0xff]
  %v41 = vld [vmem:[%s2 + $0x10] sm:$0x1f]
  %v42 = vld [vmem:[%s3] sm:$0xff]
  %v43 = vld [vmem:[%s3 + $0x8] sm:$0xff]
  %v44 = vld [vmem:[%s3 + $0x10] sm:$0x1f]
  %vm45 = vcmp.eq.s32.totalorder %v42, 0
  %vm46 = vcmp.eq.s32.totalorder %v43, 0
  %vm47 = vcmp.eq.s32.totalorder %v44, 0
  %vm48 = vcmp.eq.s32.totalorder %v42, 17
  %vm49 = vcmp.eq.s32.totalorder %v43, 17
  %vm50 = vcmp.eq.s32.totalorder %v44, 17
  %vm51 = vcmp.eq.s32.totalorder %v39, 0
  %vm52 = vcmp.eq.s32.totalorder %v40, 0
  %vm53 = vcmp.eq.s32.totalorder %v41, 0
  %vm54 = vcmp.eq.s32.totalorder %v39, 17
  %vm55 = vcmp.eq.s32.totalorder %v40, 17
  %vm56 = vcmp.eq.s32.totalorder %v41, 17
  %57 = vst [vmem:[#allocation2] sm:$0xff] 0.0
  %58 = vst [vmem:[#allocation2 + $0xb0] sm:$0xff] 0.0
  %v59 = vld [vmem:[%s0] sm:$0xff]
  %v60 = vld [vmem:[%s0 + $0x8] sm:$0xff]
  %v61 = vld [vmem:[%s0 + $0x10] sm:$0xff]
  %v62 = vld [vmem:[%s0 + $0x18] sm:$0xff]
  %v63 = vld [vmem:[%s0 + $0x20] sm:$0xff]
  %v64 = vld [vmem:[%s0 + $0x28] sm:$0xff]
  %v65 = vld [vmem:[%s0 + $0x30] sm:$0xff]
  %v66 = vld [vmem:[%s0 + $0x38] sm:$0xff]
  %v67 = vld [vmem:[%s0 + $0x40] sm:$0xff]
  %v68 = vld [vmem:[%s0 + $0x48] sm:$0xff]
  %v69 = vld [vmem:[%s0 + $0x50] sm:$0xf]
  %v80 = vcombine.high %v59, %v59
  %v81 = vcombine.high %v60, %v60
  %v82 = vcombine.high %v61, %v61
  %v83 = vcombine.high %v62, %v62
  %v84 = vcombine.high %v63, %v63
  %v85 = vcombine.high %v64, %v64
  %v86 = vcombine.high %v65, %v65
  %v87 = vcombine.high %v66, %v66
  %v88 = vcombine.high %v67, %v67
  %v89 = vcombine.high %v68, %v68
  %100 = vst [vmem:[#allocation2 + $0x8] sm:$0xf] %v59
  %101 = vst [vmem:[#allocation2 + $0x10] sm:$0xf] %v80
  %102 = vst [vmem:[#allocation2 + $0x18] sm:$0xf] %v60
  %103 = vst [vmem:[#allocation2 + $0x20] sm:$0xf] %v81
  %104 = vst [vmem:[#allocation2 + $0x28] sm:$0xf] %v61
  %105 = vst [vmem:[#allocation2 + $0x30] sm:$0xf] %v82
  %106 = vst [vmem:[#allocation2 + $0x38] sm:$0xf] %v62
  %107 = vst [vmem:[#allocation2 + $0x40] sm:$0xf] %v83
  %108 = vst [vmem:[#allocation2 + $0x48] sm:$0xf] %v63
  %109 = vst [vmem:[#allocation2 + $0x50] sm:$0xf] %v84
  %110 = vst [vmem:[#allocation2 + $0x58] sm:$0xf] %v64
  %111 = vst [vmem:[#allocation2 + $0x60] sm:$0xf] %v85
  %112 = vst [vmem:[#allocation2 + $0x68] sm:$0xf] %v65
  %113 = vst [vmem:[#allocation2 + $0x70] sm:$0xf] %v86
  %114 = vst [vmem:[#allocation2 + $0x78] sm:$0xf] %v66
  %115 = vst [vmem:[#allocation2 + $0x80] sm:$0xf] %v87
  %116 = vst [vmem:[#allocation2 + $0x88] sm:$0xf] %v67
  %117 = vst [vmem:[#allocation2 + $0x90] sm:$0xf] %v88
  %118 = vst [vmem:[#allocation2 + $0x98] sm:$0xf] %v68
  %119 = vst [vmem:[#allocation2 + $0xa0] sm:$0xf] %v89
  %120 = vst [vmem:[#allocation2 + $0xa8] sm:$0xf] %v69
  %v121 = vld [vmem:[#allocation2] sm:$0xf]
  %v122 = vld [vmem:[#allocation2 + $0x8] sm:$0xf]
  %v123 = vld [vmem:[#allocation2 + $0x10] sm:$0xf]
  %v124 = vld [vmem:[#allocation2 + $0x18] sm:$0xf]
  %v125 = vld [vmem:[#allocation2 + $0x20] sm:$0xf]
  %v126 = vld [vmem:[#allocation2 + $0x28] sm:$0xf]
  %v127 = vld [vmem:[#allocation2 + $0x30] sm:$0xf]
  %v128 = vld [vmem:[#allocation2 + $0x38] sm:$0xf]
  %v129 = vld [vmem:[#allocation2 + $0x40] sm:$0xf]
  %v130 = vld [vmem:[#allocation2 + $0x48] sm:$0xf]
  %v131 = vld [vmem:[#allocation2 + $0x50] sm:$0xf]
  %v132 = vld [vmem:[#allocation2 + $0x58] sm:$0xf]
  %v133 = vld [vmem:[#allocation2 + $0x60] sm:$0xf]
  %v134 = vld [vmem:[#allocation2 + $0x68] sm:$0xf]
  %v135 = vld [vmem:[#allocation2 + $0x70] sm:$0xf]
  %v136 = vld [vmem:[#allocation2 + $0x78] sm:$0xf]
  %v137 = vld [vmem:[#allocation2 + $0x80] sm:$0xf]
  %v138 = vld [vmem:[#allocation2 + $0x88] sm:$0xf]
  %v139 = vld [vmem:[#allocation2 + $0x90] sm:$0xf]
  %v140 = vld [vmem:[#allocation2 + $0x98] sm:$0xf]
  %v141 = vld [vmem:[#allocation2 + $0xa0] sm:$0xf]
  %v142 = vld [vmem:[#allocation2 + $0xa8] sm:$0xf]
  %v143 = vpack.c.bf16 %v121, %v121
  %v144 = vpack.c.bf16 %v122, %v122
  %v145 = vpack.c.bf16 %v123, %v123
  %v146 = vpack.c.bf16 %v124, %v124
  %v147 = vpack.c.bf16 %v125, %v125
  %v148 = vpack.c.bf16 %v126, %v126
  %v149 = vpack.c.bf16 %v127, %v127
  %v150 = vpack.c.bf16 %v128, %v128
  %v151 = vpack.c.bf16 %v129, %v129
  %v152 = vpack.c.bf16 %v130, %v130
  %v153 = vpack.c.bf16 %v131, %v131
  %v154 = vpack.c.bf16 %v132, %v132
  %v155 = vpack.c.bf16 %v133, %v133
  %v156 = vpack.c.bf16 %v134, %v134
  %v157 = vpack.c.bf16 %v135, %v135
  %v158 = vpack.c.bf16 %v136, %v136
  %v159 = vpack.c.bf16 %v137, %v137
  %v160 = vpack.c.bf16 %v138, %v138
  %v161 = vpack.c.bf16 %v139, %v139
  %v162 = vpack.c.bf16 %v140, %v140
  %v163 = vpack.c.bf16 %v141, %v141
  %v164 = vpack.c.bf16 %v142, %v142
  %v187 = vunpack.c.l.b16 %v143
  %v188 = vunpack.c.l.b16 %v144
  %v189 = vunpack.c.l.b16 %v145
  %v190 = vunpack.c.l.b16 %v146
  %v191 = vunpack.c.l.b16 %v147
  %v192 = vunpack.c.l.b16 %v148
  %v193 = vunpack.c.l.b16 %v149
  %v194 = vunpack.c.l.b16 %v150
  %v195 = vunpack.c.l.b16 %v151
  %v196 = vunpack.c.l.b16 %v152
  %v197 = vunpack.c.l.b16 %v153
  %v198 = vunpack.c.l.b16 %v154
  %v199 = vunpack.c.l.b16 %v155
  %v200 = vunpack.c.l.b16 %v156
  %v201 = vunpack.c.l.b16 %v157
  %v202 = vunpack.c.l.b16 %v158
  %v203 = vunpack.c.l.b16 %v159
  %v204 = vunpack.c.l.b16 %v160
  %v205 = vunpack.c.l.b16 %v161
  %v206 = vunpack.c.l.b16 %v162
  %v207 = vunpack.c.l.b16 %v163
  %v208 = vunpack.c.l.b16 %v164
  %v209 = vpack.c.b16 %v188, %v187
  %v210 = vpack.c.b16 %v190, %v189
  %v211 = vpack.c.b16 %v192, %v191
  %v212 = vpack.c.b16 %v194, %v193
  %v213 = vpack.c.b16 %v196, %v195
  %v214 = vpack.c.b16 %v198, %v197
  %v215 = vpack.c.b16 %v200, %v199
  %v216 = vpack.c.b16 %v202, %v201
  %v217 = vpack.c.b16 %v204, %v203
  %v218 = vpack.c.b16 %v206, %v205
  %v219 = vpack.c.b16 %v208, %v207
  %220 = vrot.lane.b32.xlu0 %v209, 19
  %v221 = vpop.permute.xlu0 %220
  %222 = vrot.lane.b32.xlu0 %v210, 19
  %v223 = vpop.permute.xlu0 %222
  %224 = vrot.lane.b32.xlu0 %v211, 19
  %v225 = vpop.permute.xlu0 %224
  %226 = vrot.lane.b32.xlu0 %v212, 19
  %v227 = vpop.permute.xlu0 %226
  %228 = vrot.lane.b32.xlu0 %v213, 19
  %v229 = vpop.permute.xlu0 %228
  %230 = vrot.lane.b32.xlu0 %v214, 19
  %v231 = vpop.permute.xlu0 %230
  %232 = vrot.lane.b32.xlu0 %v215, 19
  %v233 = vpop.permute.xlu0 %232
  %234 = vrot.lane.b32.xlu0 %v216, 19
  %v235 = vpop.permute.xlu0 %234
  %236 = vrot.lane.b32.xlu0 %v217, 19
  %v237 = vpop.permute.xlu0 %236
  %238 = vrot.lane.b32.xlu0 %v218, 19
  %v239 = vpop.permute.xlu0 %238
  %240 = vrot.lane.b32.xlu0 %v219, 19
  %v241 = vpop.permute.xlu0 %240
  %v242 = vrot.slane %v221, 4
  %v243 = vrot.slane %v223, 4
  %v244 = vrot.slane %v225, 4
  %v245 = vrot.slane %v227, 4
  %v246 = vrot.slane %v229, 4
  %v247 = vrot.slane %v231, 4
  %v248 = vrot.slane %v233, 4
  %v249 = vrot.slane %v235, 4
  %v250 = vrot.slane %v237, 4
  %v251 = vrot.slane %v239, 4
  %v252 = vrot.slane %v241, 4
  %vm253 = vcmask 1043456
  %v254 = vsel %vm253, %v242, %v243
  %vm255 = vcmask 154624
  %v256 = vsel %vm255, %v221, %v254
  %v257 = vsel %vm253, %v243, %v244
  %v258 = vsel %vm255, %v223, %v257
  %v259 = vsel %vm253, %v244, %v245
  %v260 = vsel %vm255, %v225, %v259
  %v261 = vsel %vm253, %v245, %v246
  %v262 = vsel %vm255, %v227, %v261
  %v263 = vsel %vm253, %v246, %v247
  %v264 = vsel %vm255, %v229, %v263
  %v265 = vsel %vm253, %v247, %v248
  %v266 = vsel %vm255, %v231, %v265
  %v267 = vsel %vm253, %v248, %v249
  %v268 = vsel %vm255, %v233, %v267
  %v269 = vsel %vm253, %v249, %v250
  %v270 = vsel %vm255, %v235, %v269
  %v271 = vsel %vm253, %v250, %v251
  %v272 = vsel %vm255, %v237, %v271
  %v273 = vsel %vm253, %v251, %v252
  %v274 = vsel %vm255, %v239, %v273
  %v275 = vsel %vm255, %v241, %v252
  %287 = vst [vmem:[#allocation3] sm:$0x33] %v256
  %288 = vst [vmem:[#allocation3 + $0x8] sm:$0x33] %v258
  %289 = vst [vmem:[#allocation3 + $0x10] sm:$0x33] %v260
  %290 = vst [vmem:[#allocation3 + $0x18] sm:$0x33] %v262
  %291 = vst [vmem:[#allocation3 + $0x20] sm:$0x33] %v264
  %292 = vst [vmem:[#allocation3 + $0x28] sm:$0x33] %v266
  %293 = vst [vmem:[#allocation3 + $0x30] sm:$0x33] %v268
  %294 = vst [vmem:[#allocation3 + $0x38] sm:$0x33] %v270
  %295 = vst [vmem:[#allocation3 + $0x40] sm:$0x33] %v272
  %296 = vst [vmem:[#allocation3 + $0x48] sm:$0x33] %v274
  %297 = vst [vmem:[#allocation3 + $0x50] sm:$0x3] %v275
  %v298 = vld [vmem:[#allocation2] sm:$0xf]
  %v299 = vld [vmem:[#allocation2 + $0x8] sm:$0xf]
  %v300 = vld [vmem:[#allocation2 + $0x10] sm:$0xf]
  %v301 = vld [vmem:[#allocation2 + $0x18] sm:$0xf]
  %v302 = vld [vmem:[#allocation2 + $0x20] sm:$0xf]
  %v303 = vld [vmem:[#allocation2 + $0x28] sm:$0xf]
  %v304 = vld [vmem:[#allocation2 + $0x30] sm:$0xf]
  %v305 = vld [vmem:[#allocation2 + $0x38] sm:$0xf]
  %v306 = vld [vmem:[#allocation2 + $0x40] sm:$0xf]
  %v307 = vld [vmem:[#allocation2 + $0x48] sm:$0xf]
  %v308 = vld [vmem:[#allocation2 + $0x50] sm:$0xf]
  %v309 = vld [vmem:[#allocation2 + $0x58] sm:$0xf]
  %v310 = vld [vmem:[#allocation2 + $0x60] sm:$0xf]
  %v311 = vld [vmem:[#allocation2 + $0x68] sm:$0xf]
  %v312 = vld [vmem:[#allocation2 + $0x70] sm:$0xf]
  %v313 = vld [vmem:[#allocation2 + $0x78] sm:$0xf]
  %v314 = vld [vmem:[#allocation2 + $0x80] sm:$0xf]
  %v315 = vld [vmem:[#allocation2 + $0x88] sm:$0xf]
  %v316 = vld [vmem:[#allocation2 + $0x90] sm:$0xf]
  %v317 = vld [vmem:[#allocation2 + $0x98] sm:$0xf]
  %v318 = vld [vmem:[#allocation2 + $0xa0] sm:$0xf]
  %v319 = vld [vmem:[#allocation2 + $0xa8] sm:$0xf]
  %v320 = vpack.c.bf16 %v298, %v298
  %v321 = vpack.c.bf16 %v299, %v299
  %v322 = vpack.c.bf16 %v300, %v300
  %v323 = vpack.c.bf16 %v301, %v301
  %v324 = vpack.c.bf16 %v302, %v302
  %v325 = vpack.c.bf16 %v303, %v303
  %v326 = vpack.c.bf16 %v304, %v304
  %v327 = vpack.c.bf16 %v305, %v305
  %v328 = vpack.c.bf16 %v306, %v306
  %v329 = vpack.c.bf16 %v307, %v307
  %v330 = vpack.c.bf16 %v308, %v308
  %v331 = vpack.c.bf16 %v309, %v309
  %v332 = vpack.c.bf16 %v310, %v310
  %v333 = vpack.c.bf16 %v311, %v311
  %v334 = vpack.c.bf16 %v312, %v312
  %v335 = vpack.c.bf16 %v313, %v313
  %v336 = vpack.c.bf16 %v314, %v314
  %v337 = vpack.c.bf16 %v315, %v315
  %v338 = vpack.c.bf16 %v316, %v316
  %v339 = vpack.c.bf16 %v317, %v317
  %v340 = vpack.c.bf16 %v318, %v318
  %v341 = vpack.c.bf16 %v319, %v319
  %v364 = vunpack.c.l.b16 %v320
  %v365 = vunpack.c.l.b16 %v321
  %v366 = vunpack.c.l.b16 %v322
  %v367 = vunpack.c.l.b16 %v323
  %v368 = vunpack.c.l.b16 %v324
  %v369 = vunpack.c.l.b16 %v325
  %v370 = vunpack.c.l.b16 %v326
  %v371 = vunpack.c.l.b16 %v327
  %v372 = vunpack.c.l.b16 %v328
  %v373 = vunpack.c.l.b16 %v329
  %v374 = vunpack.c.l.b16 %v330
  %v375 = vunpack.c.l.b16 %v331
  %v376 = vunpack.c.l.b16 %v332
  %v377 = vunpack.c.l.b16 %v333
  %v378 = vunpack.c.l.b16 %v334
  %v379 = vunpack.c.l.b16 %v335
  %v380 = vunpack.c.l.b16 %v336
  %v381 = vunpack.c.l.b16 %v337
  %v382 = vunpack.c.l.b16 %v338
  %v383 = vunpack.c.l.b16 %v339
  %v384 = vunpack.c.l.b16 %v340
  %v385 = vunpack.c.l.b16 %v341
  %v386 = vpack.c.b16 %v365, %v364
  %v387 = vpack.c.b16 %v367, %v366
  %v388 = vpack.c.b16 %v369, %v368
  %v389 = vpack.c.b16 %v371, %v370
  %v390 = vpack.c.b16 %v373, %v372
  %v391 = vpack.c.b16 %v375, %v374
  %v392 = vpack.c.b16 %v377, %v376
  %v393 = vpack.c.b16 %v379, %v378
  %v394 = vpack.c.b16 %v381, %v380
  %v395 = vpack.c.b16 %v383, %v382
  %v396 = vpack.c.b16 %v385, %v384
  %v397 = vrot.slane %v386, 6
  %v398 = vrot.slane %v387, 6
  %v399 = vrot.slane %v388, 6
  %v400 = vrot.slane %v389, 6
  %v401 = vrot.slane %v390, 6
  %v402 = vrot.slane %v391, 6
  %v403 = vrot.slane %v392, 6
  %v404 = vrot.slane %v393, 6
  %v405 = vrot.slane %v394, 6
  %v406 = vrot.slane %v395, 6
  %v407 = vrot.slane %v396, 6
  %408 = vrot.lane.b32.xlu0 %v397, 18
  %v409 = vpop.permute.xlu0 %408
  %410 = vrot.lane.b32.xlu0 %v398, 18
  %v411 = vpop.permute.xlu0 %410
  %412 = vrot.lane.b32.xlu0 %v399, 18
  %v413 = vpop.permute.xlu0 %412
  %414 = vrot.lane.b32.xlu0 %v400, 18
  %v415 = vpop.permute.xlu0 %414
  %416 = vrot.lane.b32.xlu0 %v401, 18
  %v417 = vpop.permute.xlu0 %416
  %418 = vrot.lane.b32.xlu0 %v402, 18
  %v419 = vpop.permute.xlu0 %418
  %420 = vrot.lane.b32.xlu0 %v403, 18
  %v421 = vpop.permute.xlu0 %420
  %422 = vrot.lane.b32.xlu0 %v404, 18
  %v423 = vpop.permute.xlu0 %422
  %424 = vrot.lane.b32.xlu0 %v405, 18
  %v425 = vpop.permute.xlu0 %424
  %426 = vrot.lane.b32.xlu0 %v406, 18
  %v427 = vpop.permute.xlu0 %426
  %428 = vrot.lane.b32.xlu0 %v407, 18
  %v429 = vpop.permute.xlu0 %428
  %v430 = vrot.slane %v409, 4
  %v431 = vrot.slane %v411, 4
  %v432 = vrot.slane %v413, 4
  %v433 = vrot.slane %v415, 4
  %v434 = vrot.slane %v417, 4
  %v435 = vrot.slane %v419, 4
  %v436 = vrot.slane %v421, 4
  %v437 = vrot.slane %v423, 4
  %v438 = vrot.slane %v425, 4
  %v439 = vrot.slane %v427, 4
  %v440 = vrot.slane %v429, 4
  %v441 = vsel %vm253, %v430, %v431
  %vm442 = vcmask 146432
  %v443 = vsel %vm442, %v409, %v441
  %v444 = vsel %vm253, %v431, %v432
  %v445 = vsel %vm442, %v411, %v444
  %v446 = vsel %vm253, %v432, %v433
  %v447 = vsel %vm442, %v413, %v446
  %v448 = vsel %vm253, %v433, %v434
  %v449 = vsel %vm442, %v415, %v448
  %v450 = vsel %vm253, %v434, %v435
  %v451 = vsel %vm442, %v417, %v450
  %v452 = vsel %vm253, %v435, %v436
  %v453 = vsel %vm442, %v419, %v452
  %v454 = vsel %vm253, %v436, %v437
  %v455 = vsel %vm442, %v421, %v454
  %v456 = vsel %vm253, %v437, %v438
  %v457 = vsel %vm442, %v423, %v456
  %v458 = vsel %vm253, %v438, %v439
  %v459 = vsel %vm442, %v425, %v458
  %v460 = vsel %vm253, %v439, %v440
  %v461 = vsel %vm442, %v427, %v460
  %v462 = vsel %vm442, %v429, %v440
  %474 = vst [vmem:[#allocation3] sm:$0xcc] %v443
  %475 = vst [vmem:[#allocation3 + $0x8] sm:$0xcc] %v445
  %476 = vst [vmem:[#allocation3 + $0x10] sm:$0xcc] %v447
  %477 = vst [vmem:[#allocation3 + $0x18] sm:$0xcc] %v449
  %478 = vst [vmem:[#allocation3 + $0x20] sm:$0xcc] %v451
  %479 = vst [vmem:[#allocation3 + $0x28] sm:$0xcc] %v453
  %480 = vst [vmem:[#allocation3 + $0x30] sm:$0xcc] %v455
  %481 = vst [vmem:[#allocation3 + $0x38] sm:$0xcc] %v457
  %482 = vst [vmem:[#allocation3 + $0x40] sm:$0xcc] %v459
  %483 = vst [vmem:[#allocation3 + $0x48] sm:$0xcc] %v461
  %484 = vst [vmem:[#allocation3 + $0x50] sm:$0xc] %v462
  %v485 = vld [vmem:[#allocation2] sm:$0xf]
  %v486 = vld [vmem:[#allocation2 + $0x8] sm:$0xf]
  %v487 = vld [vmem:[#allocation2 + $0x10] sm:$0xf]
  %v488 = vld [vmem:[#allocation2 + $0x18] sm:$0xf]
  %v489 = vld [vmem:[#allocation2 + $0x20] sm:$0xf]
  %v490 = vld [vmem:[#allocation2 + $0x28] sm:$0xf]
  %v491 = vld [vmem:[#allocation2 + $0x30] sm:$0xf]
  %v492 = vld [vmem:[#allocation2 + $0x38] sm:$0xf]
  %v493 = vld [vmem:[#allocation2 + $0x40] sm:$0xf]
  %v494 = vld [vmem:[#allocation2 + $0x48] sm:$0xf]
  %v495 = vld [vmem:[#allocation2 + $0x50] sm:$0xf]
  %v496 = vld [vmem:[#allocation2 + $0x58] sm:$0xf]
  %v497 = vld [vmem:[#allocation2 + $0x60] sm:$0xf]
  %v498 = vld [vmem:[#allocation2 + $0x68] sm:$0xf]
  %v499 = vld [vmem:[#allocation2 + $0x70] sm:$0xf]
  %v500 = vld [vmem:[#allocation2 + $0x78] sm:$0xf]
  %v501 = vld [vmem:[#allocation2 + $0x80] sm:$0xf]
  %v502 = vld [vmem:[#allocation2 + $0x88] sm:$0xf]
  %v503 = vld [vmem:[#allocation2 + $0x90] sm:$0xf]
  %v504 = vld [vmem:[#allocation2 + $0x98] sm:$0xf]
  %v505 = vld [vmem:[#allocation2 + $0xa0] sm:$0xf]
  %v506 = vld [vmem:[#allocation2 + $0xa8] sm:$0xf]
  %v507 = vpack.c.bf16 %v485, %v485
  %v508 = vpack.c.bf16 %v486, %v486
  %v509 = vpack.c.bf16 %v487, %v487
  %v510 = vpack.c.bf16 %v488, %v488
  %v511 = vpack.c.bf16 %v489, %v489
  %v512 = vpack.c.bf16 %v490, %v490
  %v513 = vpack.c.bf16 %v491, %v491
  %v514 = vpack.c.bf16 %v492, %v492
  %v515 = vpack.c.bf16 %v493, %v493
  %v516 = vpack.c.bf16 %v494, %v494
  %v517 = vpack.c.bf16 %v495, %v495
  %v518 = vpack.c.bf16 %v496, %v496
  %v519 = vpack.c.bf16 %v497, %v497
  %v520 = vpack.c.bf16 %v498, %v498
  %v521 = vpack.c.bf16 %v499, %v499
  %v522 = vpack.c.bf16 %v500, %v500
  %v523 = vpack.c.bf16 %v501, %v501
  %v524 = vpack.c.bf16 %v502, %v502
  %v525 = vpack.c.bf16 %v503, %v503
  %v526 = vpack.c.bf16 %v504, %v504
  %v527 = vpack.c.bf16 %v505, %v505
  %v528 = vpack.c.bf16 %v506, %v506
  %v551 = vunpack.c.l.b16 %v507
  %v552 = vunpack.c.l.b16 %v508
  %v553 = vunpack.c.l.b16 %v509
  %v554 = vunpack.c.l.b16 %v510
  %v555 = vunpack.c.l.b16 %v511
  %v556 = vunpack.c.l.b16 %v512
  %v557 = vunpack.c.l.b16 %v513
  %v558 = vunpack.c.l.b16 %v514
  %v559 = vunpack.c.l.b16 %v515
  %v560 = vunpack.c.l.b16 %v516
  %v561 = vunpack.c.l.b16 %v517
  %v562 = vunpack.c.l.b16 %v518
  %v563 = vunpack.c.l.b16 %v519
  %v564 = vunpack.c.l.b16 %v520
  %v565 = vunpack.c.l.b16 %v521
  %v566 = vunpack.c.l.b16 %v522
  %v567 = vunpack.c.l.b16 %v523
  %v568 = vunpack.c.l.b16 %v524
  %v569 = vunpack.c.l.b16 %v525
  %v570 = vunpack.c.l.b16 %v526
  %v571 = vunpack.c.l.b16 %v527
  %v572 = vunpack.c.l.b16 %v528
  %v573 = vpack.c.b16 %v552, %v551
  %v574 = vpack.c.b16 %v554, %v553
  %v575 = vpack.c.b16 %v556, %v555
  %v576 = vpack.c.b16 %v558, %v557
  %v577 = vpack.c.b16 %v560, %v559
  %v578 = vpack.c.b16 %v562, %v561
  %v579 = vpack.c.b16 %v564, %v563
  %v580 = vpack.c.b16 %v566, %v565
  %v581 = vpack.c.b16 %v568, %v567
  %v582 = vpack.c.b16 %v570, %v569
  %v583 = vpack.c.b16 %v572, %v571
  %584 = vrot.lane.b32.xlu0 %v573, 17
  %v585 = vpop.permute.xlu0 %584
  %586 = vrot.lane.b32.xlu0 %v574, 17
  %v587 = vpop.permute.xlu0 %586
  %588 = vrot.lane.b32.xlu0 %v575, 17
  %v589 = vpop.permute.xlu0 %588
  %590 = vrot.lane.b32.xlu0 %v576, 17
  %v591 = vpop.permute.xlu0 %590
  %592 = vrot.lane.b32.xlu0 %v577, 17
  %v593 = vpop.permute.xlu0 %592
  %594 = vrot.lane.b32.xlu0 %v578, 17
  %v595 = vpop.permute.xlu0 %594
  %596 = vrot.lane.b32.xlu0 %v579, 17
  %v597 = vpop.permute.xlu0 %596
  %598 = vrot.lane.b32.xlu0 %v580, 17
  %v599 = vpop.permute.xlu0 %598
  %600 = vrot.lane.b32.xlu0 %v581, 17
  %v601 = vpop.permute.xlu0 %600
  %602 = vrot.lane.b32.xlu0 %v582, 17
  %v603 = vpop.permute.xlu0 %602
  %604 = vrot.lane.b32.xlu0 %v583, 17
  %v605 = vpop.permute.xlu0 %604
  %v606 = vrot.slane %v585, 4
  %v607 = vrot.slane %v587, 4
  %v608 = vrot.slane %v589, 4
  %v609 = vrot.slane %v591, 4
  %v610 = vrot.slane %v593, 4
  %v611 = vrot.slane %v595, 4
  %v612 = vrot.slane %v597, 4
  %v613 = vrot.slane %v599, 4
  %v614 = vrot.slane %v601, 4
  %v615 = vrot.slane %v603, 4
  %v616 = vrot.slane %v605, 4
  %v617 = vsel %vm253, %v606, %v607
  %vm618 = vcmask 138240
  %v619 = vsel %vm618, %v585, %v617
  %v620 = vsel %vm253, %v607, %v608
  %v621 = vsel %vm618, %v587, %v620
  %v622 = vsel %vm253, %v608, %v609
  %v623 = vsel %vm618, %v589, %v622
  %v624 = vsel %vm253, %v609, %v610
  %v625 = vsel %vm618, %v591, %v624
  %v626 = vsel %vm253, %v610, %v611
  %v627 = vsel %vm618, %v593, %v626
  %v628 = vsel %vm253, %v611, %v612
  %v629 = vsel %vm618, %v595, %v628
  %v630 = vsel %vm253, %v612, %v613
  %v631 = vsel %vm618, %v597, %v630
  %v632 = vsel %vm253, %v613, %v614
  %v633 = vsel %vm618, %v599, %v632
  %v634 = vsel %vm253, %v614, %v615
  %v635 = vsel %vm618, %v601, %v634
  %v636 = vsel %vm253, %v615, %v616
  %v637 = vsel %vm618, %v603, %v636
  %v638 = vsel %vm618, %v605, %v616
  %650 = vst [vmem:[#allocation3 + $0x54] sm:$0x33] %v619
  %651 = vst [vmem:[#allocation3 + $0x5c] sm:$0x33] %v621
  %652 = vst [vmem:[#allocation3 + $0x64] sm:$0x33] %v623
  %653 = vst [vmem:[#allocation3 + $0x6c] sm:$0x33] %v625
  %654 = vst [vmem:[#allocation3 + $0x74] sm:$0x33] %v627
  %655 = vst [vmem:[#allocation3 + $0x7c] sm:$0x33] %v629
  %656 = vst [vmem:[#allocation3 + $0x84] sm:$0x33] %v631
  %657 = vst [vmem:[#allocation3 + $0x8c] sm:$0x33] %v633
  %658 = vst [vmem:[#allocation3 + $0x94] sm:$0x33] %v635
  %659 = vst [vmem:[#allocation3 + $0x9c] sm:$0x33] %v637
  %660 = vst [vmem:[#allocation3 + $0xa4] sm:$0x3] %v638
  %v661 = vld [vmem:[#allocation2] sm:$0xf]
  %v662 = vld [vmem:[#allocation2 + $0x8] sm:$0xf]
  %v663 = vld [vmem:[#allocation2 + $0x10] sm:$0xf]
  %v664 = vld [vmem:[#allocation2 + $0x18] sm:$0xf]
  %v665 = vld [vmem:[#allocation2 + $0x20] sm:$0xf]
  %v666 = vld [vmem:[#allocation2 + $0x28] sm:$0xf]
  %v667 = vld [vmem:[#allocation2 + $0x30] sm:$0xf]
  %v668 = vld [vmem:[#allocation2 + $0x38] sm:$0xf]
  %v669 = vld [vmem:[#allocation2 + $0x40] sm:$0xf]
  %v670 = vld [vmem:[#allocation2 + $0x48] sm:$0xf]
  %v671 = vld [vmem:[#allocation2 + $0x50] sm:$0xf]
  %v672 = vld [vmem:[#allocation2 + $0x58] sm:$0xf]
  %v673 = vld [vmem:[#allocation2 + $0x60] sm:$0xf]
  %v674 = vld [vmem:[#allocation2 + $0x68] sm:$0xf]
  %v675 = vld [vmem:[#allocation2 + $0x70] sm:$0xf]
  %v676 = vld [vmem:[#allocation2 + $0x78] sm:$0xf]
  %v677 = vld [vmem:[#allocation2 + $0x80] sm:$0xf]
  %v678 = vld [vmem:[#allocation2 + $0x88] sm:$0xf]
  %v679 = vld [vmem:[#allocation2 + $0x90] sm:$0xf]
  %v680 = vld [vmem:[#allocation2 + $0x98] sm:$0xf]
  %v681 = vld [vmem:[#allocation2 + $0xa0] sm:$0xf]
  %v682 = vld [vmem:[#allocation2 + $0xa8] sm:$0xf]
  %v683 = vpack.c.bf16 %v661, %v661
  %v684 = vpack.c.bf16 %v662, %v662
  %v685 = vpack.c.bf16 %v663, %v663
  %v686 = vpack.c.bf16 %v664, %v664
  %v687 = vpack.c.bf16 %v665, %v665
  %v688 = vpack.c.bf16 %v666, %v666
  %v689 = vpack.c.bf16 %v667, %v667
  %v690 = vpack.c.bf16 %v668, %v668
  %v691 = vpack.c.bf16 %v669, %v669
  %v692 = vpack.c.bf16 %v670, %v670
  %v693 = vpack.c.bf16 %v671, %v671
  %v694 = vpack.c.bf16 %v672, %v672
  %v695 = vpack.c.bf16 %v673, %v673
  %v696 = vpack.c.bf16 %v674, %v674
  %v697 = vpack.c.bf16 %v675, %v675
  %v698 = vpack.c.bf16 %v676, %v676
  %v699 = vpack.c.bf16 %v677, %v677
  %v700 = vpack.c.bf16 %v678, %v678
  %v701 = vpack.c.bf16 %v679, %v679
  %v702 = vpack.c.bf16 %v680, %v680
  %v703 = vpack.c.bf16 %v681, %v681
  %v704 = vpack.c.bf16 %v682, %v682
  %v727 = vunpack.c.l.b16 %v683
  %v728 = vunpack.c.l.b16 %v684
  %v729 = vunpack.c.l.b16 %v685
  %v730 = vunpack.c.l.b16 %v686
  %v731 = vunpack.c.l.b16 %v687
  %v732 = vunpack.c.l.b16 %v688
  %v733 = vunpack.c.l.b16 %v689
  %v734 = vunpack.c.l.b16 %v690
  %v735 = vunpack.c.l.b16 %v691
  %v736 = vunpack.c.l.b16 %v692
  %v737 = vunpack.c.l.b16 %v693
  %v738 = vunpack.c.l.b16 %v694
  %v739 = vunpack.c.l.b16 %v695
  %v740 = vunpack.c.l.b16 %v696
  %v741 = vunpack.c.l.b16 %v697
  %v742 = vunpack.c.l.b16 %v698
  %v743 = vunpack.c.l.b16 %v699
  %v744 = vunpack.c.l.b16 %v700
  %v745 = vunpack.c.l.b16 %v701
  %v746 = vunpack.c.l.b16 %v702
  %v747 = vunpack.c.l.b16 %v703
  %v748 = vunpack.c.l.b16 %v704
  %v749 = vpack.c.b16 %v728, %v727
  %v750 = vpack.c.b16 %v730, %v729
  %v751 = vpack.c.b16 %v732, %v731
  %v752 = vpack.c.b16 %v734, %v733
  %v753 = vpack.c.b16 %v736, %v735
  %v754 = vpack.c.b16 %v738, %v737
  %v755 = vpack.c.b16 %v740, %v739
  %v756 = vpack.c.b16 %v742, %v741
  %v757 = vpack.c.b16 %v744, %v743
  %v758 = vpack.c.b16 %v746, %v745
  %v759 = vpack.c.b16 %v748, %v747
  %v760 = vrot.slane %v749, 6
  %v761 = vrot.slane %v750, 6
  %v762 = vrot.slane %v751, 6
  %v763 = vrot.slane %v752, 6
  %v764 = vrot.slane %v753, 6
  %v765 = vrot.slane %v754, 6
  %v766 = vrot.slane %v755, 6
  %v767 = vrot.slane %v756, 6
  %v768 = vrot.slane %v757, 6
  %v769 = vrot.slane %v758, 6
  %v770 = vrot.slane %v759, 6
  %771 = vrot.lane.b32.xlu0 %v760, 1
  %v772 = vpop.permute.xlu0 %771
  %773 = vrot.lane.b32.xlu0 %v761, 1
  %v774 = vpop.permute.xlu0 %773
  %775 = vrot.lane.b32.xlu0 %v762, 1
  %v776 = vpop.permute.xlu0 %775
  %777 = vrot.lane.b32.xlu0 %v763, 1
  %v778 = vpop.permute.xlu0 %777
  %779 = vrot.lane.b32.xlu0 %v764, 1
  %v780 = vpop.permute.xlu0 %779
  %781 = vrot.lane.b32.xlu0 %v765, 1
  %v782 = vpop.permute.xlu0 %781
  %783 = vrot.lane.b32.xlu0 %v766, 1
  %v784 = vpop.permute.xlu0 %783
  %785 = vrot.lane.b32.xlu0 %v767, 1
  %v786 = vpop.permute.xlu0 %785
  %787 = vrot.lane.b32.xlu0 %v768, 1
  %v788 = vpop.permute.xlu0 %787
  %789 = vrot.lane.b32.xlu0 %v769, 1
  %v790 = vpop.permute.xlu0 %789
  %791 = vrot.lane.b32.xlu0 %v770, 1
  %v792 = vpop.permute.xlu0 %791
  %v793 = vrot.slane %v772, 4
  %v794 = vrot.slane %v774, 4
  %v795 = vrot.slane %v776, 4
  %v796 = vrot.slane %v778, 4
  %v797 = vrot.slane %v780, 4
  %v798 = vrot.slane %v782, 4
  %v799 = vrot.slane %v784, 4
  %v800 = vrot.slane %v786, 4
  %v801 = vrot.slane %v788, 4
  %v802 = vrot.slane %v790, 4
  %v803 = vrot.slane %v792, 4
  %v804 = vsel %vm253, %v793, %v794
  %vm805 = vcmask 7168
  %v806 = vsel %vm805, %v772, %v804
  %v807 = vsel %vm253, %v794, %v795
  %v808 = vsel %vm805, %v774, %v807
  %v809 = vsel %vm253, %v795, %v796
  %v810 = vsel %vm805, %v776, %v809
  %v811 = vsel %vm253, %v796, %v797
  %v812 = vsel %vm805, %v778, %v811
  %v813 = vsel %vm253, %v797, %v798
  %v814 = vsel %vm805, %v780, %v813
  %v815 = vsel %vm253, %v798, %v799
  %v816 = vsel %vm805, %v782, %v815
  %v817 = vsel %vm253, %v799, %v800
  %v818 = vsel %vm805, %v784, %v817
  %v819 = vsel %vm253, %v800, %v801
  %v820 = vsel %vm805, %v786, %v819
  %v821 = vsel %vm253, %v801, %v802
  %v822 = vsel %vm805, %v788, %v821
  %v823 = vsel %vm253, %v802, %v803
  %v824 = vsel %vm805, %v790, %v823
  %v825 = vsel %vm805, %v792, %v803
  %837 = vst [vmem:[#allocation3 + $0x54] sm:$0xcc] %v806
  %838 = vst [vmem:[#allocation3 + $0x5c] sm:$0xcc] %v808
  %839 = vst [vmem:[#allocation3 + $0x64] sm:$0xcc] %v810
  %840 = vst [vmem:[#allocation3 + $0x6c] sm:$0xcc] %v812
  %841 = vst [vmem:[#allocation3 + $0x74] sm:$0xcc] %v814
  %842 = vst [vmem:[#allocation3 + $0x7c] sm:$0xcc] %v816
  %843 = vst [vmem:[#allocation3 + $0x84] sm:$0xcc] %v818
  %844 = vst [vmem:[#allocation3 + $0x8c] sm:$0xcc] %v820
  %845 = vst [vmem:[#allocation3 + $0x94] sm:$0xcc] %v822
  %846 = vst [vmem:[#allocation3 + $0x9c] sm:$0xcc] %v824
  %847 = vst [vmem:[#allocation3 + $0xa4] sm:$0xc] %v825
  %v848 = vld [vmem:[#allocation2 + $0x8] sm:$0xf]
  %v849 = vld [vmem:[#allocation2 + $0x10] sm:$0xf]
  %v850 = vld [vmem:[#allocation2 + $0x18] sm:$0xf]
  %v851 = vld [vmem:[#allocation2 + $0x20] sm:$0xf]
  %v852 = vld [vmem:[#allocation2 + $0x28] sm:$0xf]
  %v853 = vld [vmem:[#allocation2 + $0x30] sm:$0xf]
  %v854 = vld [vmem:[#allocation2 + $0x38] sm:$0xf]
  %v855 = vld [vmem:[#allocation2 + $0x40] sm:$0xf]
  %v856 = vld [vmem:[#allocation2 + $0x48] sm:$0xf]
  %v857 = vld [vmem:[#allocation2 + $0x50] sm:$0xf]
  %v858 = vld [vmem:[#allocation2 + $0x58] sm:$0xf]
  %v859 = vld [vmem:[#allocation2 + $0x60] sm:$0xf]
  %v860 = vld [vmem:[#allocation2 + $0x68] sm:$0xf]
  %v861 = vld [vmem:[#allocation2 + $0x70] sm:$0xf]
  %v862 = vld [vmem:[#allocation2 + $0x78] sm:$0xf]
  %v863 = vld [vmem:[#allocation2 + $0x80] sm:$0xf]
  %v864 = vld [vmem:[#allocation2 + $0x88] sm:$0xf]
  %v865 = vld [vmem:[#allocation2 + $0x90] sm:$0xf]
  %v866 = vld [vmem:[#allocation2 + $0x98] sm:$0xf]
  %v867 = vld [vmem:[#allocation2 + $0xa0] sm:$0xf]
  %v868 = vld [vmem:[#allocation2 + $0xa8] sm:$0xf]
  %v869 = vpack.c.bf16 %v848, %v848
  %v870 = vpack.c.bf16 %v849, %v849
  %v871 = vpack.c.bf16 %v850, %v850
  %v872 = vpack.c.bf16 %v851, %v851
  %v873 = vpack.c.bf16 %v852, %v852
  %v874 = vpack.c.bf16 %v853, %v853
  %v875 = vpack.c.bf16 %v854, %v854
  %v876 = vpack.c.bf16 %v855, %v855
  %v877 = vpack.c.bf16 %v856, %v856
  %v878 = vpack.c.bf16 %v857, %v857
  %v879 = vpack.c.bf16 %v858, %v858
  %v880 = vpack.c.bf16 %v859, %v859
  %v881 = vpack.c.bf16 %v860, %v860
  %v882 = vpack.c.bf16 %v861, %v861
  %v883 = vpack.c.bf16 %v862, %v862
  %v884 = vpack.c.bf16 %v863, %v863
  %v885 = vpack.c.bf16 %v864, %v864
  %v886 = vpack.c.bf16 %v865, %v865
  %v887 = vpack.c.bf16 %v866, %v866
  %v888 = vpack.c.bf16 %v867, %v867
  %v889 = vpack.c.bf16 %v868, %v868
  %v911 = vunpack.c.l.b16 %v869
  %v912 = vunpack.c.l.b16 %v870
  %v913 = vunpack.c.l.b16 %v871
  %v914 = vunpack.c.l.b16 %v872
  %v915 = vunpack.c.l.b16 %v873
  %v916 = vunpack.c.l.b16 %v874
  %v917 = vunpack.c.l.b16 %v875
  %v918 = vunpack.c.l.b16 %v876
  %v919 = vunpack.c.l.b16 %v877
  %v920 = vunpack.c.l.b16 %v878
  %v921 = vunpack.c.l.b16 %v879
  %v922 = vunpack.c.l.b16 %v880
  %v923 = vunpack.c.l.b16 %v881
  %v924 = vunpack.c.l.b16 %v882
  %v925 = vunpack.c.l.b16 %v883
  %v926 = vunpack.c.l.b16 %v884
  %v927 = vunpack.c.l.b16 %v885
  %v928 = vunpack.c.l.b16 %v886
  %v929 = vunpack.c.l.b16 %v887
  %v930 = vunpack.c.l.b16 %v888
  %v931 = vunpack.c.l.b16 %v889
  %v932 = vpack.c.b16 %v912, %v911
  %v933 = vpack.c.b16 %v914, %v913
  %v934 = vpack.c.b16 %v916, %v915
  %v935 = vpack.c.b16 %v918, %v917
  %v936 = vpack.c.b16 %v920, %v919
  %v937 = vpack.c.b16 %v922, %v921
  %v938 = vpack.c.b16 %v924, %v923
  %v939 = vpack.c.b16 %v926, %v925
  %v940 = vpack.c.b16 %v928, %v927
  %v941 = vpack.c.b16 %v930, %v929
  %v942 = vpack.c.b16 %v931, %v931
  %954 = vst [vmem:[#allocation3 + $0xa8] sm:$0x33] %v932
  %955 = vst [vmem:[#allocation3 + $0xb0] sm:$0x33] %v933
  %956 = vst [vmem:[#allocation3 + $0xb8] sm:$0x33] %v934
  %957 = vst [vmem:[#allocation3 + $0xc0] sm:$0x33] %v935
  %958 = vst [vmem:[#allocation3 + $0xc8] sm:$0x33] %v936
  %959 = vst [vmem:[#allocation3 + $0xd0] sm:$0x33] %v937
  %960 = vst [vmem:[#allocation3 + $0xd8] sm:$0x33] %v938
  %961 = vst [vmem:[#allocation3 + $0xe0] sm:$0x33] %v939
  %962 = vst [vmem:[#allocation3 + $0xe8] sm:$0x33] %v940
  %963 = vst [vmem:[#allocation3 + $0xf0] sm:$0x33] %v941
  %964 = vst [vmem:[#allocation3 + $0xf8] sm:$0x3] %v942
  %v965 = vld [vmem:[#allocation2 + $0x8] sm:$0xf]
  %v966 = vld [vmem:[#allocation2 + $0x10] sm:$0xf]
  %v967 = vld [vmem:[#allocation2 + $0x18] sm:$0xf]
  %v968 = vld [vmem:[#allocation2 + $0x20] sm:$0xf]
  %v969 = vld [vmem:[#allocation2 + $0x28] sm:$0xf]
  %v970 = vld [vmem:[#allocation2 + $0x30] sm:$0xf]
  %v971 = vld [vmem:[#allocation2 + $0x38] sm:$0xf]
  %v972 = vld [vmem:[#allocation2 + $0x40] sm:$0xf]
  %v973 = vld [vmem:[#allocation2 + $0x48] sm:$0xf]
  %v974 = vld [vmem:[#allocation2 + $0x50] sm:$0xf]
  %v975 = vld [vmem:[#allocation2 + $0x58] sm:$0xf]
  %v976 = vld [vmem:[#allocation2 + $0x60] sm:$0xf]
  %v977 = vld [vmem:[#allocation2 + $0x68] sm:$0xf]
  %v978 = vld [vmem:[#allocation2 + $0x70] sm:$0xf]
  %v979 = vld [vmem:[#allocation2 + $0x78] sm:$0xf]
  %v980 = vld [vmem:[#allocation2 + $0x80] sm:$0xf]
  %v981 = vld [vmem:[#allocation2 + $0x88] sm:$0xf]
  %v982 = vld [vmem:[#allocation2 + $0x90] sm:$0xf]
  %v983 = vld [vmem:[#allocation2 + $0x98] sm:$0xf]
  %v984 = vld [vmem:[#allocation2 + $0xa0] sm:$0xf]
  %v985 = vld [vmem:[#allocation2 + $0xa8] sm:$0xf]
  %v986 = vld [vmem:[#allocation2 + $0xb0] sm:$0xf]
  %v987 = vpack.c.bf16 %v965, %v965
  %v988 = vpack.c.bf16 %v966, %v966
  %v989 = vpack.c.bf16 %v967, %v967
  %v990 = vpack.c.bf16 %v968, %v968
  %v991 = vpack.c.bf16 %v969, %v969
  %v992 = vpack.c.bf16 %v970, %v970
  %v993 = vpack.c.bf16 %v971, %v971
  %v994 = vpack.c.bf16 %v972, %v972
  %v995 = vpack.c.bf16 %v973, %v973
  %v996 = vpack.c.bf16 %v974, %v974
  %v997 = vpack.c.bf16 %v975, %v975
  %v998 = vpack.c.bf16 %v976, %v976
  %v999 = vpack.c.bf16 %v977, %v977
  %v1000 = vpack.c.bf16 %v978, %v978
  %v1001 = vpack.c.bf16 %v979, %v979
  %v1002 = vpack.c.bf16 %v980, %v980
  %v1003 = vpack.c.bf16 %v981, %v981
  %v1004 = vpack.c.bf16 %v982, %v982
  %v1005 = vpack.c.bf16 %v983, %v983
  %v1006 = vpack.c.bf16 %v984, %v984
  %v1007 = vpack.c.bf16 %v985, %v985
  %v1008 = vpack.c.bf16 %v986, %v986
  %v1031 = vunpack.c.l.b16 %v987
  %v1032 = vunpack.c.l.b16 %v988
  %v1033 = vunpack.c.l.b16 %v989
  %v1034 = vunpack.c.l.b16 %v990
  %v1035 = vunpack.c.l.b16 %v991
  %v1036 = vunpack.c.l.b16 %v992
  %v1037 = vunpack.c.l.b16 %v993
  %v1038 = vunpack.c.l.b16 %v994
  %v1039 = vunpack.c.l.b16 %v995
  %v1040 = vunpack.c.l.b16 %v996
  %v1041 = vunpack.c.l.b16 %v997
  %v1042 = vunpack.c.l.b16 %v998
  %v1043 = vunpack.c.l.b16 %v999
  %v1044 = vunpack.c.l.b16 %v1000
  %v1045 = vunpack.c.l.b16 %v1001
  %v1046 = vunpack.c.l.b16 %v1002
  %v1047 = vunpack.c.l.b16 %v1003
  %v1048 = vunpack.c.l.b16 %v1004
  %v1049 = vunpack.c.l.b16 %v1005
  %v1050 = vunpack.c.l.b16 %v1006
  %v1051 = vunpack.c.l.b16 %v1007
  %v1052 = vunpack.c.l.b16 %v1008
  %v1053 = vpack.c.b16 %v1032, %v1031
  %v1054 = vpack.c.b16 %v1034, %v1033
  %v1055 = vpack.c.b16 %v1036, %v1035
  %v1056 = vpack.c.b16 %v1038, %v1037
  %v1057 = vpack.c.b16 %v1040, %v1039
  %v1058 = vpack.c.b16 %v1042, %v1041
  %v1059 = vpack.c.b16 %v1044, %v1043
  %v1060 = vpack.c.b16 %v1046, %v1045
  %v1061 = vpack.c.b16 %v1048, %v1047
  %v1062 = vpack.c.b16 %v1050, %v1049
  %v1063 = vpack.c.b16 %v1052, %v1051
  %v1064 = vrot.slane %v1053, 6
  %v1065 = vrot.slane %v1054, 6
  %v1066 = vrot.slane %v1055, 6
  %v1067 = vrot.slane %v1056, 6
  %v1068 = vrot.slane %v1057, 6
  %v1069 = vrot.slane %v1058, 6
  %v1070 = vrot.slane %v1059, 6
  %v1071 = vrot.slane %v1060, 6
  %v1072 = vrot.slane %v1061, 6
  %v1073 = vrot.slane %v1062, 6
  %v1074 = vrot.slane %v1063, 6
  %1075 = vrot.lane.b32.xlu0 %v1064, 127
  %v1076 = vpop.permute.xlu0 %1075
  %1077 = vrot.lane.b32.xlu0 %v1065, 127
  %v1078 = vpop.permute.xlu0 %1077
  %1079 = vrot.lane.b32.xlu0 %v1066, 127
  %v1080 = vpop.permute.xlu0 %1079
  %1081 = vrot.lane.b32.xlu0 %v1067, 127
  %v1082 = vpop.permute.xlu0 %1081
  %1083 = vrot.lane.b32.xlu0 %v1068, 127
  %v1084 = vpop.permute.xlu0 %1083
  %1085 = vrot.lane.b32.xlu0 %v1069, 127
  %v1086 = vpop.permute.xlu0 %1085
  %1087 = vrot.lane.b32.xlu0 %v1070, 127
  %v1088 = vpop.permute.xlu0 %1087
  %1089 = vrot.lane.b32.xlu0 %v1071, 127
  %v1090 = vpop.permute.xlu0 %1089
  %1091 = vrot.lane.b32.xlu0 %v1072, 127
  %v1092 = vpop.permute.xlu0 %1091
  %1093 = vrot.lane.b32.xlu0 %v1073, 127
  %v1094 = vpop.permute.xlu0 %1093
  %1095 = vrot.lane.b32.xlu0 %v1074, 127
  %v1096 = vpop.permute.xlu0 %1095
  %v1097 = vrot.slane %v1076, 4
  %v1098 = vrot.slane %v1078, 4
  %v1099 = vrot.slane %v1080, 4
  %v1100 = vrot.slane %v1082, 4
  %v1101 = vrot.slane %v1084, 4
  %v1102 = vrot.slane %v1086, 4
  %v1103 = vrot.slane %v1088, 4
  %v1104 = vrot.slane %v1090, 4
  %v1105 = vrot.slane %v1092, 4
  %v1106 = vrot.slane %v1094, 4
  %v1107 = vrot.slane %v1096, 4
  %v1108 = vsel %vm253, %v1097, %v1098
  %vm1109 = vcmask 1039360
  %v1110 = vsel %vm1109, %v1076, %v1108
  %v1111 = vsel %vm253, %v1098, %v1099
  %v1112 = vsel %vm1109, %v1078, %v1111
  %v1113 = vsel %vm253, %v1099, %v1100
  %v1114 = vsel %vm1109, %v1080, %v1113
  %v1115 = vsel %vm253, %v1100, %v1101
  %v1116 = vsel %vm1109, %v1082, %v1115
  %v1117 = vsel %vm253, %v1101, %v1102
  %v1118 = vsel %vm1109, %v1084, %v1117
  %v1119 = vsel %vm253, %v1102, %v1103
  %v1120 = vsel %vm1109, %v1086, %v1119
  %v1121 = vsel %vm253, %v1103, %v1104
  %v1122 = vsel %vm1109, %v1088, %v1121
  %v1123 = vsel %vm253, %v1104, %v1105
  %v1124 = vsel %vm1109, %v1090, %v1123
  %v1125 = vsel %vm253, %v1105, %v1106
  %v1126 = vsel %vm1109, %v1092, %v1125
  %v1127 = vsel %vm253, %v1106, %v1107
  %v1128 = vsel %vm1109, %v1094, %v1127
  %v1129 = vsel %vm1109, %v1096, %v1107
  %1141 = vst [vmem:[#allocation3 + $0xa8] sm:$0xcc] %v1110
  %1142 = vst [vmem:[#allocation3 + $0xb0] sm:$0xcc] %v1112
  %1143 = vst [vmem:[#allocation3 + $0xb8] sm:$0xcc] %v1114
  %1144 = vst [vmem:[#allocation3 + $0xc0] sm:$0xcc] %v1116
  %1145 = vst [vmem:[#allocation3 + $0xc8] sm:$0xcc] %v1118
  %1146 = vst [vmem:[#allocation3 + $0xd0] sm:$0xcc] %v1120
  %1147 = vst [vmem:[#allocation3 + $0xd8] sm:$0xcc] %v1122
  %1148 = vst [vmem:[#allocation3 + $0xe0] sm:$0xcc] %v1124
  %1149 = vst [vmem:[#allocation3 + $0xe8] sm:$0xcc] %v1126
  %1150 = vst [vmem:[#allocation3 + $0xf0] sm:$0xcc] %v1128
  %1151 = vst [vmem:[#allocation3 + $0xf8] sm:$0xc] %v1129
  %v1152 = vld [vmem:[#allocation2 + $0x8] sm:$0xf]
  %v1153 = vld [vmem:[#allocation2 + $0x10] sm:$0xf]
  %v1154 = vld [vmem:[#allocation2 + $0x18] sm:$0xf]
  %v1155 = vld [vmem:[#allocation2 + $0x20] sm:$0xf]
  %v1156 = vld [vmem:[#allocation2 + $0x28] sm:$0xf]
  %v1157 = vld [vmem:[#allocation2 + $0x30] sm:$0xf]
  %v1158 = vld [vmem:[#allocation2 + $0x38] sm:$0xf]
  %v1159 = vld [vmem:[#allocation2 + $0x40] sm:$0xf]
  %v1160 = vld [vmem:[#allocation2 + $0x48] sm:$0xf]
  %v1161 = vld [vmem:[#allocation2 + $0x50] sm:$0xf]
  %v1162 = vld [vmem:[#allocation2 + $0x58] sm:$0xf]
  %v1163 = vld [vmem:[#allocation2 + $0x60] sm:$0xf]
  %v1164 = vld [vmem:[#allocation2 + $0x68] sm:$0xf]
  %v1165 = vld [vmem:[#allocation2 + $0x70] sm:$0xf]
  %v1166 = vld [vmem:[#allocation2 + $0x78] sm:$0xf]
  %v1167 = vld [vmem:[#allocation2 + $0x80] sm:$0xf]
  %v1168 = vld [vmem:[#allocation2 + $0x88] sm:$0xf]
  %v1169 = vld [vmem:[#allocation2 + $0x90] sm:$0xf]
  %v1170 = vld [vmem:[#allocation2 + $0x98] sm:$0xf]
  %v1171 = vld [vmem:[#allocation2 + $0xa0] sm:$0xf]
  %v1172 = vld [vmem:[#allocation2 + $0xa8] sm:$0xf]
  %v1173 = vld [vmem:[#allocation2 + $0xb0] sm:$0xf]
  %v1174 = vpack.c.bf16 %v1152, %v1152
  %v1175 = vpack.c.bf16 %v1153, %v1153
  %v1176 = vpack.c.bf16 %v1154, %v1154
  %v1177 = vpack.c.bf16 %v1155, %v1155
  %v1178 = vpack.c.bf16 %v1156, %v1156
  %v1179 = vpack.c.bf16 %v1157, %v1157
  %v1180 = vpack.c.bf16 %v1158, %v1158
  %v1181 = vpack.c.bf16 %v1159, %v1159
  %v1182 = vpack.c.bf16 %v1160, %v1160
  %v1183 = vpack.c.bf16 %v1161, %v1161
  %v1184 = vpack.c.bf16 %v1162, %v1162
  %v1185 = vpack.c.bf16 %v1163, %v1163
  %v1186 = vpack.c.bf16 %v1164, %v1164
  %v1187 = vpack.c.bf16 %v1165, %v1165
  %v1188 = vpack.c.bf16 %v1166, %v1166
  %v1189 = vpack.c.bf16 %v1167, %v1167
  %v1190 = vpack.c.bf16 %v1168, %v1168
  %v1191 = vpack.c.bf16 %v1169, %v1169
  %v1192 = vpack.c.bf16 %v1170, %v1170
  %v1193 = vpack.c.bf16 %v1171, %v1171
  %v1194 = vpack.c.bf16 %v1172, %v1172
  %v1195 = vpack.c.bf16 %v1173, %v1173
  %v1218 = vunpack.c.l.b16 %v1174
  %v1219 = vunpack.c.l.b16 %v1175
  %v1220 = vunpack.c.l.b16 %v1176
  %v1221 = vunpack.c.l.b16 %v1177
  %v1222 = vunpack.c.l.b16 %v1178
  %v1223 = vunpack.c.l.b16 %v1179
  %v1224 = vunpack.c.l.b16 %v1180
  %v1225 = vunpack.c.l.b16 %v1181
  %v1226 = vunpack.c.l.b16 %v1182
  %v1227 = vunpack.c.l.b16 %v1183
  %v1228 = vunpack.c.l.b16 %v1184
  %v1229 = vunpack.c.l.b16 %v1185
  %v1230 = vunpack.c.l.b16 %v1186
  %v1231 = vunpack.c.l.b16 %v1187
  %v1232 = vunpack.c.l.b16 %v1188
  %v1233 = vunpack.c.l.b16 %v1189
  %v1234 = vunpack.c.l.b16 %v1190
  %v1235 = vunpack.c.l.b16 %v1191
  %v1236 = vunpack.c.l.b16 %v1192
  %v1237 = vunpack.c.l.b16 %v1193
  %v1238 = vunpack.c.l.b16 %v1194
  %v1239 = vunpack.c.l.b16 %v1195
  %v1240 = vpack.c.b16 %v1219, %v1218
  %v1241 = vpack.c.b16 %v1221, %v1220
  %v1242 = vpack.c.b16 %v1223, %v1222
  %v1243 = vpack.c.b16 %v1225, %v1224
  %v1244 = vpack.c.b16 %v1227, %v1226
  %v1245 = vpack.c.b16 %v1229, %v1228
  %v1246 = vpack.c.b16 %v1231, %v1230
  %v1247 = vpack.c.b16 %v1233, %v1232
  %v1248 = vpack.c.b16 %v1235, %v1234
  %v1249 = vpack.c.b16 %v1237, %v1236
  %v1250 = vpack.c.b16 %v1239, %v1238
  %1251 = vrot.lane.b32.xlu0 %v1240, 111
  %v1252 = vpop.permute.xlu0 %1251
  %1253 = vrot.lane.b32.xlu0 %v1241, 111
  %v1254 = vpop.permute.xlu0 %1253
  %1255 = vrot.lane.b32.xlu0 %v1242, 111
  %v1256 = vpop.permute.xlu0 %1255
  %1257 = vrot.lane.b32.xlu0 %v1243, 111
  %v1258 = vpop.permute.xlu0 %1257
  %1259 = vrot.lane.b32.xlu0 %v1244, 111
  %v1260 = vpop.permute.xlu0 %1259
  %1261 = vrot.lane.b32.xlu0 %v1245, 111
  %v1262 = vpop.permute.xlu0 %1261
  %1263 = vrot.lane.b32.xlu0 %v1246, 111
  %v1264 = vpop.permute.xlu0 %1263
  %1265 = vrot.lane.b32.xlu0 %v1247, 111
  %v1266 = vpop.permute.xlu0 %1265
  %1267 = vrot.lane.b32.xlu0 %v1248, 111
  %v1268 = vpop.permute.xlu0 %1267
  %1269 = vrot.lane.b32.xlu0 %v1249, 111
  %v1270 = vpop.permute.xlu0 %1269
  %1271 = vrot.lane.b32.xlu0 %v1250, 111
  %v1272 = vpop.permute.xlu0 %1271
  %v1273 = vrot.slane %v1252, 4
  %v1274 = vrot.slane %v1254, 4
  %v1275 = vrot.slane %v1256, 4
  %v1276 = vrot.slane %v1258, 4
  %v1277 = vrot.slane %v1260, 4
  %v1278 = vrot.slane %v1262, 4
  %v1279 = vrot.slane %v1264, 4
  %v1280 = vrot.slane %v1266, 4
  %v1281 = vrot.slane %v1268, 4
  %v1282 = vrot.slane %v1270, 4
  %v1283 = vrot.slane %v1272, 4
  %v1284 = vsel %vm253, %v1273, %v1274
  %vm1285 = vcmask 908288
  %v1286 = vsel %vm1285, %v1252, %v1284
  %v1287 = vsel %vm253, %v1274, %v1275
  %v1288 = vsel %vm1285, %v1254, %v1287
  %v1289 = vsel %vm253, %v1275, %v1276
  %v1290 = vsel %vm1285, %v1256, %v1289
  %v1291 = vsel %vm253, %v1276, %v1277
  %v1292 = vsel %vm1285, %v1258, %v1291
  %v1293 = vsel %vm253, %v1277, %v1278
  %v1294 = vsel %vm1285, %v1260, %v1293
  %v1295 = vsel %vm253, %v1278, %v1279
  %v1296 = vsel %vm1285, %v1262, %v1295
  %v1297 = vsel %vm253, %v1279, %v1280
  %v1298 = vsel %vm1285, %v1264, %v1297
  %v1299 = vsel %vm253, %v1280, %v1281
  %v1300 = vsel %vm1285, %v1266, %v1299
  %v1301 = vsel %vm253, %v1281, %v1282
  %v1302 = vsel %vm1285, %v1268, %v1301
  %v1303 = vsel %vm253, %v1282, %v1283
  %v1304 = vsel %vm1285, %v1270, %v1303
  %v1305 = vsel %vm1285, %v1272, %v1283
  %1317 = vst [vmem:[#allocation3 + $0xfc] sm:$0x33] %v1286
  %1318 = vst [vmem:[#allocation3 + $0x104] sm:$0x33] %v1288
  %1319 = vst [vmem:[#allocation3 + $0x10c] sm:$0x33] %v1290
  %1320 = vst [vmem:[#allocation3 + $0x114] sm:$0x33] %v1292
  %1321 = vst [vmem:[#allocation3 + $0x11c] sm:$0x33] %v1294
  %1322 = vst [vmem:[#allocation3 + $0x124] sm:$0x33] %v1296
  %1323 = vst [vmem:[#allocation3 + $0x12c] sm:$0x33] %v1298
  %1324 = vst [vmem:[#allocation3 + $0x134] sm:$0x33] %v1300
  %1325 = vst [vmem:[#allocation3 + $0x13c] sm:$0x33] %v1302
  %1326 = vst [vmem:[#allocation3 + $0x144] sm:$0x33] %v1304
  %1327 = vst [vmem:[#allocation3 + $0x14c] sm:$0x3] %v1305
  %v1328 = vld [vmem:[#allocation2 + $0x8] sm:$0xf]
  %v1329 = vld [vmem:[#allocation2 + $0x10] sm:$0xf]
  %v1330 = vld [vmem:[#allocation2 + $0x18] sm:$0xf]
  %v1331 = vld [vmem:[#allocation2 + $0x20] sm:$0xf]
  %v1332 = vld [vmem:[#allocation2 + $0x28] sm:$0xf]
  %v1333 = vld [vmem:[#allocation2 + $0x30] sm:$0xf]
  %v1334 = vld [vmem:[#allocation2 + $0x38] sm:$0xf]
  %v1335 = vld [vmem:[#allocation2 + $0x40] sm:$0xf]
  %v1336 = vld [vmem:[#allocation2 + $0x48] sm:$0xf]
  %v1337 = vld [vmem:[#allocation2 + $0x50] sm:$0xf]
  %v1338 = vld [vmem:[#allocation2 + $0x58] sm:$0xf]
  %v1339 = vld [vmem:[#allocation2 + $0x60] sm:$0xf]
  %v1340 = vld [vmem:[#allocation2 + $0x68] sm:$0xf]
  %v1341 = vld [vmem:[#allocation2 + $0x70] sm:$0xf]
  %v1342 = vld [vmem:[#allocation2 + $0x78] sm:$0xf]
  %v1343 = vld [vmem:[#allocation2 + $0x80] sm:$0xf]
  %v1344 = vld [vmem:[#allocation2 + $0x88] sm:$0xf]
  %v1345 = vld [vmem:[#allocation2 + $0x90] sm:$0xf]
  %v1346 = vld [vmem:[#allocation2 + $0x98] sm:$0xf]
  %v1347 = vld [vmem:[#allocation2 + $0xa0] sm:$0xf]
  %v1348 = vld [vmem:[#allocation2 + $0xa8] sm:$0xf]
  %v1349 = vld [vmem:[#allocation2 + $0xb0] sm:$0xf]
  %v1350 = vpack.c.bf16 %v1328, %v1328
  %v1351 = vpack.c.bf16 %v1329, %v1329
  %v1352 = vpack.c.bf16 %v1330, %v1330
  %v1353 = vpack.c.bf16 %v1331, %v1331
  %v1354 = vpack.c.bf16 %v1332, %v1332
  %v1355 = vpack.c.bf16 %v1333, %v1333
  %v1356 = vpack.c.bf16 %v1334, %v1334
  %v1357 = vpack.c.bf16 %v1335, %v1335
  %v1358 = vpack.c.bf16 %v1336, %v1336
  %v1359 = vpack.c.bf16 %v1337, %v1337
  %v1360 = vpack.c.bf16 %v1338, %v1338
  %v1361 = vpack.c.bf16 %v1339, %v1339
  %v1362 = vpack.c.bf16 %v1340, %v1340
  %v1363 = vpack.c.bf16 %v1341, %v1341
  %v1364 = vpack.c.bf16 %v1342, %v1342
  %v1365 = vpack.c.bf16 %v1343, %v1343
  %v1366 = vpack.c.bf16 %v1344, %v1344
  %v1367 = vpack.c.bf16 %v1345, %v1345
  %v1368 = vpack.c.bf16 %v1346, %v1346
  %v1369 = vpack.c.bf16 %v1347, %v1347
  %v1370 = vpack.c.bf16 %v1348, %v1348
  %v1371 = vpack.c.bf16 %v1349, %v1349
  %v1394 = vunpack.c.l.b16 %v1350
  %v1395 = vunpack.c.l.b16 %v1351
  %v1396 = vunpack.c.l.b16 %v1352
  %v1397 = vunpack.c.l.b16 %v1353
  %v1398 = vunpack.c.l.b16 %v1354
  %v1399 = vunpack.c.l.b16 %v1355
  %v1400 = vunpack.c.l.b16 %v1356
  %v1401 = vunpack.c.l.b16 %v1357
  %v1402 = vunpack.c.l.b16 %v1358
  %v1403 = vunpack.c.l.b16 %v1359
  %v1404 = vunpack.c.l.b16 %v1360
  %v1405 = vunpack.c.l.b16 %v1361
  %v1406 = vunpack.c.l.b16 %v1362
  %v1407 = vunpack.c.l.b16 %v1363
  %v1408 = vunpack.c.l.b16 %v1364
  %v1409 = vunpack.c.l.b16 %v1365
  %v1410 = vunpack.c.l.b16 %v1366
  %v1411 = vunpack.c.l.b16 %v1367
  %v1412 = vunpack.c.l.b16 %v1368
  %v1413 = vunpack.c.l.b16 %v1369
  %v1414 = vunpack.c.l.b16 %v1370
  %v1415 = vunpack.c.l.b16 %v1371
  %v1416 = vpack.c.b16 %v1395, %v1394
  %v1417 = vpack.c.b16 %v1397, %v1396
  %v1418 = vpack.c.b16 %v1399, %v1398
  %v1419 = vpack.c.b16 %v1401, %v1400
  %v1420 = vpack.c.b16 %v1403, %v1402
  %v1421 = vpack.c.b16 %v1405, %v1404
  %v1422 = vpack.c.b16 %v1407, %v1406
  %v1423 = vpack.c.b16 %v1409, %v1408
  %v1424 = vpack.c.b16 %v1411, %v1410
  %v1425 = vpack.c.b16 %v1413, %v1412
  %v1426 = vpack.c.b16 %v1415, %v1414
  %v1427 = vrot.slane %v1416, 6
  %v1428 = vrot.slane %v1417, 6
  %v1429 = vrot.slane %v1418, 6
  %v1430 = vrot.slane %v1419, 6
  %v1431 = vrot.slane %v1420, 6
  %v1432 = vrot.slane %v1421, 6
  %v1433 = vrot.slane %v1422, 6
  %v1434 = vrot.slane %v1423, 6
  %v1435 = vrot.slane %v1424, 6
  %v1436 = vrot.slane %v1425, 6
  %v1437 = vrot.slane %v1426, 6
  %1438 = vrot.lane.b32.xlu0 %v1427, 110
  %v1439 = vpop.permute.xlu0 %1438
  %1440 = vrot.lane.b32.xlu0 %v1428, 110
  %v1441 = vpop.permute.xlu0 %1440
  %1442 = vrot.lane.b32.xlu0 %v1429, 110
  %v1443 = vpop.permute.xlu0 %1442
  %1444 = vrot.lane.b32.xlu0 %v1430, 110
  %v1445 = vpop.permute.xlu0 %1444
  %1446 = vrot.lane.b32.xlu0 %v1431, 110
  %v1447 = vpop.permute.xlu0 %1446
  %1448 = vrot.lane.b32.xlu0 %v1432, 110
  %v1449 = vpop.permute.xlu0 %1448
  %1450 = vrot.lane.b32.xlu0 %v1433, 110
  %v1451 = vpop.permute.xlu0 %1450
  %1452 = vrot.lane.b32.xlu0 %v1434, 110
  %v1453 = vpop.permute.xlu0 %1452
  %1454 = vrot.lane.b32.xlu0 %v1435, 110
  %v1455 = vpop.permute.xlu0 %1454
  %1456 = vrot.lane.b32.xlu0 %v1436, 110
  %v1457 = vpop.permute.xlu0 %1456
  %1458 = vrot.lane.b32.xlu0 %v1437, 110
  %v1459 = vpop.permute.xlu0 %1458
  %v1460 = vrot.slane %v1439, 4
  %v1461 = vrot.slane %v1441, 4
  %v1462 = vrot.slane %v1443, 4
  %v1463 = vrot.slane %v1445, 4
  %v1464 = vrot.slane %v1447, 4
  %v1465 = vrot.slane %v1449, 4
  %v1466 = vrot.slane %v1451, 4
  %v1467 = vrot.slane %v1453, 4
  %v1468 = vrot.slane %v1455, 4
  %v1469 = vrot.slane %v1457, 4
  %v1470 = vrot.slane %v1459, 4
  %v1471 = vsel %vm253, %v1460, %v1461
  %vm1472 = vcmask 900096
  %v1473 = vsel %vm1472, %v1439, %v1471
  %v1474 = vsel %vm253, %v1461, %v1462
  %v1475 = vsel %vm1472, %v1441, %v1474
  %v1476 = vsel %vm253, %v1462, %v1463
  %v1477 = vsel %vm1472, %v1443, %v1476
  %v1478 = vsel %vm253, %v1463, %v1464
  %v1479 = vsel %vm1472, %v1445, %v1478
  %v1480 = vsel %vm253, %v1464, %v1465
  %v1481 = vsel %vm1472, %v1447, %v1480
  %v1482 = vsel %vm253, %v1465, %v1466
  %v1483 = vsel %vm1472, %v1449, %v1482
  %v1484 = vsel %vm253, %v1466, %v1467
  %v1485 = vsel %vm1472, %v1451, %v1484
  %v1486 = vsel %vm253, %v1467, %v1468
  %v1487 = vsel %vm1472, %v1453, %v1486
  %v1488 = vsel %vm253, %v1468, %v1469
  %v1489 = vsel %vm1472, %v1455, %v1488
  %v1490 = vsel %vm253, %v1469, %v1470
  %v1491 = vsel %vm1472, %v1457, %v1490
  %v1492 = vsel %vm1472, %v1459, %v1470
  %1504 = vst [vmem:[#allocation3 + $0xfc] sm:$0xcc] %v1473
  %1505 = vst [vmem:[#allocation3 + $0x104] sm:$0xcc] %v1475
  %1506 = vst [vmem:[#allocation3 + $0x10c] sm:$0xcc] %v1477
  %1507 = vst [vmem:[#allocation3 + $0x114] sm:$0xcc] %v1479
  %1508 = vst [vmem:[#allocation3 + $0x11c] sm:$0xcc] %v1481
  %1509 = vst [vmem:[#allocation3 + $0x124] sm:$0xcc] %v1483
  %1510 = vst [vmem:[#allocation3 + $0x12c] sm:$0xcc] %v1485
  %1511 = vst [vmem:[#allocation3 + $0x134] sm:$0xcc] %v1487
  %1512 = vst [vmem:[#allocation3 + $0x13c] sm:$0xcc] %v1489
  %1513 = vst [vmem:[#allocation3 + $0x144] sm:$0xcc] %v1491
  %1514 = vst [vmem:[#allocation3 + $0x14c] sm:$0xc] %v1492
  %v1515 = vld [vmem:[#allocation2 + $0x8] sm:$0xf]
  %v1516 = vld [vmem:[#allocation2 + $0x10] sm:$0xf]
  %v1517 = vld [vmem:[#allocation2 + $0x18] sm:$0xf]
  %v1518 = vld [vmem:[#allocation2 + $0x20] sm:$0xf]
  %v1519 = vld [vmem:[#allocation2 + $0x28] sm:$0xf]
  %v1520 = vld [vmem:[#allocation2 + $0x30] sm:$0xf]
  %v1521 = vld [vmem:[#allocation2 + $0x38] sm:$0xf]
  %v1522 = vld [vmem:[#allocation2 + $0x40] sm:$0xf]
  %v1523 = vld [vmem:[#allocation2 + $0x48] sm:$0xf]
  %v1524 = vld [vmem:[#allocation2 + $0x50] sm:$0xf]
  %v1525 = vld [vmem:[#allocation2 + $0x58] sm:$0xf]
  %v1526 = vld [vmem:[#allocation2 + $0x60] sm:$0xf]
  %v1527 = vld [vmem:[#allocation2 + $0x68] sm:$0xf]
  %v1528 = vld [vmem:[#allocation2 + $0x70] sm:$0xf]
  %v1529 = vld [vmem:[#allocation2 + $0x78] sm:$0xf]
  %v1530 = vld [vmem:[#allocation2 + $0x80] sm:$0xf]
  %v1531 = vld [vmem:[#allocation2 + $0x88] sm:$0xf]
  %v1532 = vld [vmem:[#allocation2 + $0x90] sm:$0xf]
  %v1533 = vld [vmem:[#allocation2 + $0x98] sm:$0xf]
  %v1534 = vld [vmem:[#allocation2 + $0xa0] sm:$0xf]
  %v1535 = vld [vmem:[#allocation2 + $0xa8] sm:$0xf]
  %v1536 = vld [vmem:[#allocation2 + $0xb0] sm:$0xf]
  %v1537 = vpack.c.bf16 %v1515, %v1515
  %v1538 = vpack.c.bf16 %v1516, %v1516
  %v1539 = vpack.c.bf16 %v1517, %v1517
  %v1540 = vpack.c.bf16 %v1518, %v1518
  %v1541 = vpack.c.bf16 %v1519, %v1519
  %v1542 = vpack.c.bf16 %v1520, %v1520
  %v1543 = vpack.c.bf16 %v1521, %v1521
  %v1544 = vpack.c.bf16 %v1522, %v1522
  %v1545 = vpack.c.bf16 %v1523, %v1523
  %v1546 = vpack.c.bf16 %v1524, %v1524
  %v1547 = vpack.c.bf16 %v1525, %v1525
  %v1548 = vpack.c.bf16 %v1526, %v1526
  %v1549 = vpack.c.bf16 %v1527, %v1527
  %v1550 = vpack.c.bf16 %v1528, %v1528
  %v1551 = vpack.c.bf16 %v1529, %v1529
  %v1552 = vpack.c.bf16 %v1530, %v1530
  %v1553 = vpack.c.bf16 %v1531, %v1531
  %v1554 = vpack.c.bf16 %v1532, %v1532
  %v1555 = vpack.c.bf16 %v1533, %v1533
  %v1556 = vpack.c.bf16 %v1534, %v1534
  %v1557 = vpack.c.bf16 %v1535, %v1535
  %v1558 = vpack.c.bf16 %v1536, %v1536
  %v1581 = vunpack.c.l.b16 %v1537
  %v1582 = vunpack.c.l.b16 %v1538
  %v1583 = vunpack.c.l.b16 %v1539
  %v1584 = vunpack.c.l.b16 %v1540
  %v1585 = vunpack.c.l.b16 %v1541
  %v1586 = vunpack.c.l.b16 %v1542
  %v1587 = vunpack.c.l.b16 %v1543
  %v1588 = vunpack.c.l.b16 %v1544
  %v1589 = vunpack.c.l.b16 %v1545
  %v1590 = vunpack.c.l.b16 %v1546
  %v1591 = vunpack.c.l.b16 %v1547
  %v1592 = vunpack.c.l.b16 %v1548
  %v1593 = vunpack.c.l.b16 %v1549
  %v1594 = vunpack.c.l.b16 %v1550
  %v1595 = vunpack.c.l.b16 %v1551
  %v1596 = vunpack.c.l.b16 %v1552
  %v1597 = vunpack.c.l.b16 %v1553
  %v1598 = vunpack.c.l.b16 %v1554
  %v1599 = vunpack.c.l.b16 %v1555
  %v1600 = vunpack.c.l.b16 %v1556
  %v1601 = vunpack.c.l.b16 %v1557
  %v1602 = vunpack.c.l.b16 %v1558
  %v1603 = vpack.c.b16 %v1582, %v1581
  %v1604 = vpack.c.b16 %v1584, %v1583
  %v1605 = vpack.c.b16 %v1586, %v1585
  %v1606 = vpack.c.b16 %v1588, %v1587
  %v1607 = vpack.c.b16 %v1590, %v1589
  %v1608 = vpack.c.b16 %v1592, %v1591
  %v1609 = vpack.c.b16 %v1594, %v1593
  %v1610 = vpack.c.b16 %v1596, %v1595
  %v1611 = vpack.c.b16 %v1598, %v1597
  %v1612 = vpack.c.b16 %v1600, %v1599
  %v1613 = vpack.c.b16 %v1602, %v1601
  %1614 = vrot.lane.b32.xlu0 %v1603, 109
  %v1615 = vpop.permute.xlu0 %1614
  %1616 = vrot.lane.b32.xlu0 %v1604, 109
  %v1617 = vpop.permute.xlu0 %1616
  %1618 = vrot.lane.b32.xlu0 %v1605, 109
  %v1619 = vpop.permute.xlu0 %1618
  %1620 = vrot.lane.b32.xlu0 %v1606, 109
  %v1621 = vpop.permute.xlu0 %1620
  %1622 = vrot.lane.b32.xlu0 %v1607, 109
  %v1623 = vpop.permute.xlu0 %1622
  %1624 = vrot.lane.b32.xlu0 %v1608, 109
  %v1625 = vpop.permute.xlu0 %1624
  %1626 = vrot.lane.b32.xlu0 %v1609, 109
  %v1627 = vpop.permute.xlu0 %1626
  %1628 = vrot.lane.b32.xlu0 %v1610, 109
  %v1629 = vpop.permute.xlu0 %1628
  %1630 = vrot.lane.b32.xlu0 %v1611, 109
  %v1631 = vpop.permute.xlu0 %1630
  %1632 = vrot.lane.b32.xlu0 %v1612, 109
  %v1633 = vpop.permute.xlu0 %1632
  %1634 = vrot.lane.b32.xlu0 %v1613, 109
  %v1635 = vpop.permute.xlu0 %1634
  %v1636 = vrot.slane %v1615, 4
  %v1637 = vrot.slane %v1617, 4
  %v1638 = vrot.slane %v1619, 4
  %v1639 = vrot.slane %v1621, 4
  %v1640 = vrot.slane %v1623, 4
  %v1641 = vrot.slane %v1625, 4
  %v1642 = vrot.slane %v1627, 4
  %v1643 = vrot.slane %v1629, 4
  %v1644 = vrot.slane %v1631, 4
  %v1645 = vrot.slane %v1633, 4
  %v1646 = vrot.slane %v1635, 4
  %v1647 = vsel %vm253, %v1636, %v1637
  %vm1648 = vcmask 891904
  %v1649 = vsel %vm1648, %v1615, %v1647
  %v1650 = vsel %vm253, %v1637, %v1638
  %v1651 = vsel %vm1648, %v1617, %v1650
  %v1652 = vsel %vm253, %v1638, %v1639
  %v1653 = vsel %vm1648, %v1619, %v1652
  %v1654 = vsel %vm253, %v1639, %v1640
  %v1655 = vsel %vm1648, %v1621, %v1654
  %v1656 = vsel %vm253, %v1640, %v1641
  %v1657 = vsel %vm1648, %v1623, %v1656
  %v1658 = vsel %vm253, %v1641, %v1642
  %v1659 = vsel %vm1648, %v1625, %v1658
  %v1660 = vsel %vm253, %v1642, %v1643
  %v1661 = vsel %vm1648, %v1627, %v1660
  %v1662 = vsel %vm253, %v1643, %v1644
  %v1663 = vsel %vm1648, %v1629, %v1662
  %v1664 = vsel %vm253, %v1644, %v1645
  %v1665 = vsel %vm1648, %v1631, %v1664
  %v1666 = vsel %vm253, %v1645, %v1646
  %v1667 = vsel %vm1648, %v1633, %v1666
  %v1668 = vsel %vm1648, %v1635, %v1646
  %1680 = vst [vmem:[#allocation3 + $0x150] sm:$0x33] %v1649
  %1681 = vst [vmem:[#allocation3 + $0x158] sm:$0x33] %v1651
  %1682 = vst [vmem:[#allocation3 + $0x160] sm:$0x33] %v1653
  %1683 = vst [vmem:[#allocation3 + $0x168] sm:$0x33] %v1655
  %1684 = vst [vmem:[#allocation3 + $0x170] sm:$0x33] %v1657
  %1685 = vst [vmem:[#allocation3 + $0x178] sm:$0x33] %v1659
  %1686 = vst [vmem:[#allocation3 + $0x180] sm:$0x33] %v1661
  %1687 = vst [vmem:[#allocation3 + $0x188] sm:$0x33] %v1663
  %1688 = vst [vmem:[#allocation3 + $0x190] sm:$0x33] %v1665
  %1689 = vst [vmem:[#allocation3 + $0x198] sm:$0x33] %v1667
  %1690 = vst [vmem:[#allocation3 + $0x1a0] sm:$0x3] %v1668
  %v1691 = vld [vmem:[%s4] sm:$0xf]
  %v1692 = vld [vmem:[#allocation3] sm:$0xff]
  %v1693 = vld [vmem:[#allocation3 + $0x8] sm:$0xff]
  %v1694 = vld [vmem:[#allocation3 + $0x10] sm:$0xff]
  %v1695 = vld [vmem:[#allocation3 + $0x18] sm:$0xff]
  %v1696 = vld [vmem:[#allocation3 + $0x20] sm:$0xff]
  %v1697 = vld [vmem:[#allocation3 + $0x28] sm:$0xff]
  %v1698 = vld [vmem:[#allocation3 + $0x30] sm:$0xff]
  %v1699 = vld [vmem:[#allocation3 + $0x38] sm:$0xff]
  %v1700 = vld [vmem:[#allocation3 + $0x40] sm:$0xff]
  %v1701 = vld [vmem:[#allocation3 + $0x48] sm:$0xff]
  %v1702 = vld [vmem:[#allocation3 + $0x50] sm:$0xf]
  %v1703 = vld [vmem:[#allocation3 + $0x54] sm:$0xff]
  %v1704 = vld [vmem:[#allocation3 + $0x5c] sm:$0xff]
  %v1705 = vld [vmem:[#allocation3 + $0x64] sm:$0xff]
  %v1706 = vld [vmem:[#allocation3 + $0x6c] sm:$0xff]
  %v1707 = vld [vmem:[#allocation3 + $0x74] sm:$0xff]
  %v1708 = vld [vmem:[#allocation3 + $0x7c] sm:$0xff]
  %v1709 = vld [vmem:[#allocation3 + $0x84] sm:$0xff]
  %v1710 = vld [vmem:[#allocation3 + $0x8c] sm:$0xff]
  %v1711 = vld [vmem:[#allocation3 + $0x94] sm:$0xff]
  %v1712 = vld [vmem:[#allocation3 + $0x9c] sm:$0xff]
  %v1713 = vld [vmem:[#allocation3 + $0xa4] sm:$0xf]
  %v1714 = vld [vmem:[#allocation3 + $0xa8] sm:$0xff]
  %v1715 = vld [vmem:[#allocation3 + $0xb0] sm:$0xff]
  %v1716 = vld [vmem:[#allocation3 + $0xb8] sm:$0xff]
  %v1717 = vld [vmem:[#allocation3 + $0xc0] sm:$0xff]
  %v1718 = vld [vmem:[#allocation3 + $0xc8] sm:$0xff]
  %v1719 = vld [vmem:[#allocation3 + $0xd0] sm:$0xff]
  %v1720 = vld [vmem:[#allocation3 + $0xd8] sm:$0xff]
  %v1721 = vld [vmem:[#allocation3 + $0xe0] sm:$0xff]
  %v1722 = vld [vmem:[#allocation3 + $0xe8] sm:$0xff]
  %v1723 = vld [vmem:[#allocation3 + $0xf0] sm:$0xff]
  %v1724 = vld [vmem:[#allocation3 + $0xf8] sm:$0xf]
  %v1725 = vld [vmem:[#allocation3 + $0xfc] sm:$0xff]
  %v1726 = vld [vmem:[#allocation3 + $0x104] sm:$0xff]
  %v1727 = vld [vmem:[#allocation3 + $0x10c] sm:$0xff]
  %v1728 = vld [vmem:[#allocation3 + $0x114] sm:$0xff]
  %v1729 = vld [vmem:[#allocation3 + $0x11c] sm:$0xff]
  %v1730 = vld [vmem:[#allocation3 + $0x124] sm:$0xff]
  %v1731 = vld [vmem:[#allocation3 + $0x12c] sm:$0xff]
  %v1732 = vld [vmem:[#allocation3 + $0x134] sm:$0xff]
  %v1733 = vld [vmem:[#allocation3 + $0x13c] sm:$0xff]
  %v1734 = vld [vmem:[#allocation3 + $0x144] sm:$0xff]
  %v1735 = vld [vmem:[#allocation3 + $0x14c] sm:$0xf]
  %v1736 = vld [vmem:[#allocation3 + $0x150] sm:$0x33]
  %v1737 = vld [vmem:[#allocation3 + $0x158] sm:$0x33]
  %v1738 = vld [vmem:[#allocation3 + $0x160] sm:$0x33]
  %v1739 = vld [vmem:[#allocation3 + $0x168] sm:$0x33]
  %v1740 = vld [vmem:[#allocation3 + $0x170] sm:$0x33]
  %v1741 = vld [vmem:[#allocation3 + $0x178] sm:$0x33]
  %v1742 = vld [vmem:[#allocation3 + $0x180] sm:$0x33]
  %v1743 = vld [vmem:[#allocation3 + $0x188] sm:$0x33]
  %v1744 = vld [vmem:[#allocation3 + $0x190] sm:$0x33]
  %v1745 = vld [vmem:[#allocation3 + $0x198] sm:$0x33]
  %v1746 = vld [vmem:[#allocation3 + $0x1a0] sm:$0x3]
  %v1802 = vunpack.c.l.b16 %v1692
  %v1803 = vunpack.c.h.b16 %v1692
  %v1804 = vunpack.c.l.b16 %v1693
  %v1805 = vunpack.c.h.b16 %v1693
  %v1806 = vunpack.c.l.b16 %v1694
  %v1807 = vunpack.c.h.b16 %v1694
  %v1808 = vunpack.c.l.b16 %v1695
  %v1809 = vunpack.c.h.b16 %v1695
  %v1810 = vunpack.c.l.b16 %v1696
  %v1811 = vunpack.c.h.b16 %v1696
  %v1812 = vunpack.c.l.b16 %v1697
  %v1813 = vunpack.c.h.b16 %v1697
  %v1814 = vunpack.c.l.b16 %v1698
  %v1815 = vunpack.c.h.b16 %v1698
  %v1816 = vunpack.c.l.b16 %v1699
  %v1817 = vunpack.c.h.b16 %v1699
  %v1818 = vunpack.c.l.b16 %v1700
  %v1819 = vunpack.c.h.b16 %v1700
  %v1820 = vunpack.c.l.b16 %v1701
  %v1821 = vunpack.c.h.b16 %v1701
  %v1822 = vunpack.c.l.b16 %v1702
  %v1823 = vunpack.c.l.b16 %v1703
  %v1824 = vunpack.c.h.b16 %v1703
  %v1825 = vunpack.c.l.b16 %v1704
  %v1826 = vunpack.c.h.b16 %v1704
  %v1827 = vunpack.c.l.b16 %v1705
  %v1828 = vunpack.c.h.b16 %v1705
  %v1829 = vunpack.c.l.b16 %v1706
  %v1830 = vunpack.c.h.b16 %v1706
  %v1831 = vunpack.c.l.b16 %v1707
  %v1832 = vunpack.c.h.b16 %v1707
  %v1833 = vunpack.c.l.b16 %v1708
  %v1834 = vunpack.c.h.b16 %v1708
  %v1835 = vunpack.c.l.b16 %v1709
  %v1836 = vunpack.c.h.b16 %v1709
  %v1837 = vunpack.c.l.b16 %v1710
  %v1838 = vunpack.c.h.b16 %v1710
  %v1839 = vunpack.c.l.b16 %v1711
  %v1840 = vunpack.c.h.b16 %v1711
  %v1841 = vunpack.c.l.b16 %v1712
  %v1842 = vunpack.c.h.b16 %v1712
  %v1843 = vunpack.c.l.b16 %v1713
  %v1844 = vunpack.c.l.b16 %v1714
  %v1845 = vunpack.c.h.b16 %v1714
  %v1846 = vunpack.c.l.b16 %v1715
  %v1847 = vunpack.c.h.b16 %v1715
  %v1848 = vunpack.c.l.b16 %v1716
  %v1849 = vunpack.c.h.b16 %v1716
  %v1850 = vunpack.c.l.b16 %v1717
  %v1851 = vunpack.c.h.b16 %v1717
  %v1852 = vunpack.c.l.b16 %v1718
  %v1853 = vunpack.c.h.b16 %v1718
  %v1854 = vunpack.c.l.b16 %v1719
  %v1855 = vunpack.c.h.b16 %v1719
  %v1856 = vunpack.c.l.b16 %v1720
  %v1857 = vunpack.c.h.b16 %v1720
  %v1858 = vunpack.c.l.b16 %v1721
  %v1859 = vunpack.c.h.b16 %v1721
  %v1860 = vunpack.c.l.b16 %v1722
  %v1861 = vunpack.c.h.b16 %v1722
  %v1862 = vunpack.c.l.b16 %v1723
  %v1863 = vunpack.c.h.b16 %v1723
  %v1864 = vunpack.c.l.b16 %v1724
  %v1865 = vunpack.c.l.b16 %v1725
  %v1866 = vunpack.c.h.b16 %v1725
  %v1867 = vunpack.c.l.b16 %v1726
  %v1868 = vunpack.c.h.b16 %v1726
  %v1869 = vunpack.c.l.b16 %v1727
  %v1870 = vunpack.c.h.b16 %v1727
  %v1871 = vunpack.c.l.b16 %v1728
  %v1872 = vunpack.c.h.b16 %v1728
  %v1873 = vunpack.c.l.b16 %v1729
  %v1874 = vunpack.c.h.b16 %v1729
  %v1875 = vunpack.c.l.b16 %v1730
  %v1876 = vunpack.c.h.b16 %v1730
  %v1877 = vunpack.c.l.b16 %v1731
  %v1878 = vunpack.c.h.b16 %v1731
  %v1879 = vunpack.c.l.b16 %v1732
  %v1880 = vunpack.c.h.b16 %v1732
  %v1881 = vunpack.c.l.b16 %v1733
  %v1882 = vunpack.c.h.b16 %v1733
  %v1883 = vunpack.c.l.b16 %v1734
  %v1884 = vunpack.c.h.b16 %v1734
  %v1885 = vunpack.c.l.b16 %v1735
  %v1886 = vunpack.c.l.b16 %v1736
  %v1887 = vunpack.c.h.b16 %v1736
  %v1888 = vunpack.c.l.b16 %v1737
  %v1889 = vunpack.c.h.b16 %v1737
  %v1890 = vunpack.c.l.b16 %v1738
  %v1891 = vunpack.c.h.b16 %v1738
  %v1892 = vunpack.c.l.b16 %v1739
  %v1893 = vunpack.c.h.b16 %v1739
  %v1894 = vunpack.c.l.b16 %v1740
  %v1895 = vunpack.c.h.b16 %v1740
  %v1896 = vunpack.c.l.b16 %v1741
  %v1897 = vunpack.c.h.b16 %v1741
  %v1898 = vunpack.c.l.b16 %v1742
  %v1899 = vunpack.c.h.b16 %v1742
  %v1900 = vunpack.c.l.b16 %v1743
  %v1901 = vunpack.c.h.b16 %v1743
  %v1902 = vunpack.c.l.b16 %v1744
  %v1903 = vunpack.c.h.b16 %v1744
  %v1904 = vunpack.c.l.b16 %v1745
  %v1905 = vunpack.c.h.b16 %v1745
  %v1906 = vunpack.c.l.b16 %v1746
  %v1907 = vpack.c.b16 %v1823, %v1802
  %v1908 = vpack.c.b16 %v1824, %v1803
  %v1909 = vpack.c.b16 %v1825, %v1804
  %v1910 = vpack.c.b16 %v1826, %v1805
  %v1911 = vpack.c.b16 %v1827, %v1806
  %v1912 = vpack.c.b16 %v1828, %v1807
  %v1913 = vpack.c.b16 %v1829, %v1808
  %v1914 = vpack.c.b16 %v1830, %v1809
  %v1915 = vpack.c.b16 %v1831, %v1810
  %v1916 = vpack.c.b16 %v1832, %v1811
  %v1917 = vpack.c.b16 %v1833, %v1812
  %v1918 = vpack.c.b16 %v1834, %v1813
  %v1919 = vpack.c.b16 %v1835, %v1814
  %v1920 = vpack.c.b16 %v1836, %v1815
  %v1921 = vpack.c.b16 %v1837, %v1816
  %v1922 = vpack.c.b16 %v1838, %v1817
  %v1923 = vpack.c.b16 %v1839, %v1818
  %v1924 = vpack.c.b16 %v1840, %v1819
  %v1925 = vpack.c.b16 %v1841, %v1820
  %v1926 = vpack.c.b16 %v1842, %v1821
  %v1927 = vpack.c.b16 %v1843, %v1822
  %v1928 = vpack.c.b16 %v1865, %v1844
  %v1929 = vpack.c.b16 %v1866, %v1845
  %v1930 = vpack.c.b16 %v1867, %v1846
  %v1931 = vpack.c.b16 %v1868, %v1847
  %v1932 = vpack.c.b16 %v1869, %v1848
  %v1933 = vpack.c.b16 %v1870, %v1849
  %v1934 = vpack.c.b16 %v1871, %v1850
  %v1935 = vpack.c.b16 %v1872, %v1851
  %v1936 = vpack.c.b16 %v1873, %v1852
  %v1937 = vpack.c.b16 %v1874, %v1853
  %v1938 = vpack.c.b16 %v1875, %v1854
  %v1939 = vpack.c.b16 %v1876, %v1855
  %v1940 = vpack.c.b16 %v1877, %v1856
  %v1941 = vpack.c.b16 %v1878, %v1857
  %v1942 = vpack.c.b16 %v1879, %v1858
  %v1943 = vpack.c.b16 %v1880, %v1859
  %v1944 = vpack.c.b16 %v1881, %v1860
  %v1945 = vpack.c.b16 %v1882, %v1861
  %v1946 = vpack.c.b16 %v1883, %v1862
  %v1947 = vpack.c.b16 %v1884, %v1863
  %v1948 = vpack.c.b16 %v1885, %v1864
  %v1949 = vpack.c.b16 %v1886, %v1886
  %v1950 = vpack.c.b16 %v1887, %v1887
  %v1951 = vpack.c.b16 %v1888, %v1888
  %v1952 = vpack.c.b16 %v1889, %v1889
  %v1953 = vpack.c.b16 %v1890, %v1890
  %v1954 = vpack.c.b16 %v1891, %v1891
  %v1955 = vpack.c.b16 %v1892, %v1892
  %v1956 = vpack.c.b16 %v1893, %v1893
  %v1957 = vpack.c.b16 %v1894, %v1894
  %v1958 = vpack.c.b16 %v1895, %v1895
  %v1959 = vpack.c.b16 %v1896, %v1896
  %v1960 = vpack.c.b16 %v1897, %v1897
  %v1961 = vpack.c.b16 %v1898, %v1898
  %v1962 = vpack.c.b16 %v1899, %v1899
  %v1963 = vpack.c.b16 %v1900, %v1900
  %v1964 = vpack.c.b16 %v1901, %v1901
  %v1965 = vpack.c.b16 %v1902, %v1902
  %v1966 = vpack.c.b16 %v1903, %v1903
  %v1967 = vpack.c.b16 %v1904, %v1904
  %v1968 = vpack.c.b16 %v1905, %v1905
  %v1969 = vpack.c.b16 %v1906, %v1906
  %vm2012 = vcmask 293888
  %v2014 = vsel %vm2012, %v1691, 0
  %vm2016 = vcmask 1041408
  %v2018 = vsel %vm2016, %v1949, 0
  %v2021 = vsel %vm2016, %v1950, 0
  %v2024 = vsel %vm2016, %v1951, 0
  %v2027 = vsel %vm2016, %v1952, 0
  %v2030 = vsel %vm2016, %v1953, 0
  %v2033 = vsel %vm2016, %v1954, 0
  %v2036 = vsel %vm2016, %v1955, 0
  %v2039 = vsel %vm2016, %v1956, 0
  %v2042 = vsel %vm2016, %v1957, 0
  %v2045 = vsel %vm2016, %v1958, 0
  %v2048 = vsel %vm2016, %v1959, 0
  %v2051 = vsel %vm2016, %v1960, 0
  %v2054 = vsel %vm2016, %v1961, 0
  %v2057 = vsel %vm2016, %v1962, 0
  %v2060 = vsel %vm2016, %v1963, 0
  %v2063 = vsel %vm2016, %v1964, 0
  %v2066 = vsel %vm2016, %v1965, 0
  %v2069 = vsel %vm2016, %v1966, 0
  %v2072 = vsel %vm2016, %v1967, 0
  %v2075 = vsel %vm2016, %v1968, 0
  %v2078 = vsel %vm2016, %v1969, 0
  %2080 = vmatprep.subr.bf16.mxu0 %v1908
  %2081 = vmatpush1.bf16.msra.mxu0 %v1907
  %2082 = vmatprep.subr.bf16.mxu0 %v1929
  %2083 = vmatpush1.bf16.msra.mxu0 %v1928
  %2084 = vmatprep.subr.bf16.mxu0 %v2021
  %2085 = vmatpush1.bf16.msra.mxu0 %v2018
  %2086 = vmatprep.subr.bf16.mxu0 0
  %2087 = vmatpush1.bf16.msra.mxu0 0
  %2088 = vmatprep.subr.bf16.mxu0 0
  %2089 = vmatpush1.bf16.msra.mxu0 0
  %2090 = vmatprep.subr.bf16.mxu0 0
  %2091 = vmatpush1.bf16.msra.mxu0 0
  %2092 = vmatprep.subr.bf16.mxu0 0
  %2093 = vmatpush1.bf16.msra.mxu0 0
  %2094 = vmatprep.subr.bf16.mxu0 0
  %2095 = vmatpush1.bf16.msra.mxu0 0
  %2096 = vmatprep.subr.bf16.mxu0 0
  %2097 = vmatpush1.bf16.msra.mxu0 0
  %2098 = vmatprep.subr.bf16.mxu0 0
  %2099 = vmatpush1.bf16.msra.mxu0 0
  %2100 = vmatprep.subr.bf16.mxu0 0
  %2101 = vmatpush1.bf16.msra.mxu0 0
  %2102 = vmatprep.subr.bf16.mxu0 0
  %2103 = vmatpush1.bf16.msra.mxu0 0
  %2104 = vmatprep.subr.bf16.mxu0 0
  %2105 = vmatpush1.bf16.msra.mxu0 0
  %2106 = vmatprep.subr.bf16.mxu0 0
  %2107 = vmatpush1.bf16.msra.mxu0 0
  %2108 = vmatprep.subr.bf16.mxu0 0
  %2109 = vmatpush1.bf16.msra.mxu0 0
  %2110 = vmatprep.subr.bf16.mxu0 0
  %2111 = vmatpush1.bf16.msra.mxu0 0
  %2112 = vmatprep.mubr.bf16.mxu0 0
  %2113 = vmatmul.mubr.bf16.gmra.mrb[0].mxu0 %v2014
  %v2114 = vpop.f32.mrb[0].mxu0
  %v2115 = vadd.f32 0.0, %v2114
  %v2116 = vpop.f32.mrb[0].mxu0
  %v2117 = vadd.f32 0.0, %v2116
  %v2118 = vpop.f32.mrb[0].mxu0
  %v2119 = vpop.f32.mrb[0].mxu0
  %2120 = vdwg.mxu0
  %2121 = vmatprep.subr.bf16.mxu0 %v1910
  %2122 = vmatpush1.bf16.msra.mxu0 %v1909
  %2123 = vmatprep.subr.bf16.mxu0 %v1931
  %2124 = vmatpush1.bf16.msra.mxu0 %v1930
  %2125 = vmatprep.subr.bf16.mxu0 %v2027
  %2126 = vmatpush1.bf16.msra.mxu0 %v2024
  %2127 = vmatprep.subr.bf16.mxu0 0
  %2128 = vmatpush1.bf16.msra.mxu0 0
  %2129 = vmatprep.subr.bf16.mxu0 0
  %2130 = vmatpush1.bf16.msra.mxu0 0
  %2131 = vmatprep.subr.bf16.mxu0 0
  %2132 = vmatpush1.bf16.msra.mxu0 0
  %2133 = vmatprep.subr.bf16.mxu0 0
  %2134 = vmatpush1.bf16.msra.mxu0 0
  %2135 = vmatprep.subr.bf16.mxu0 0
  %2136 = vmatpush1.bf16.msra.mxu0 0
  %2137 = vmatprep.subr.bf16.mxu0 0
  %2138 = vmatpush1.bf16.msra.mxu0 0
  %2139 = vmatprep.subr.bf16.mxu0 0
  %2140 = vmatpush1.bf16.msra.mxu0 0
  %2141 = vmatprep.subr.bf16.mxu0 0
  %2142 = vmatpush1.bf16.msra.mxu0 0
  %2143 = vmatprep.subr.bf16.mxu0 0
  %2144 = vmatpush1.bf16.msra.mxu0 0
  %2145 = vmatprep.subr.bf16.mxu0 0
  %2146 = vmatpush1.bf16.msra.mxu0 0
  %2147 = vmatprep.subr.bf16.mxu0 0
  %2148 = vmatpush1.bf16.msra.mxu0 0
  %2149 = vmatprep.subr.bf16.mxu0 0
  %2150 = vmatpush1.bf16.msra.mxu0 0
  %2151 = vmatprep.subr.bf16.mxu0 0
  %2152 = vmatpush1.bf16.msra.mxu0 0
  %2153 = vmatprep.mubr.bf16.mxu0 0
  %2154 = vmatmul.mubr.bf16.gmra.mrb[0].mxu0 %v2014
  %v2155 = vpop.f32.mrb[0].mxu0
  %v2156 = vadd.f32 0.0, %v2155
  %v2157 = vpop.f32.mrb[0].mxu0
  %v2158 = vadd.f32 0.0, %v2157
  %v2159 = vpop.f32.mrb[0].mxu0
  %v2160 = vpop.f32.mrb[0].mxu0
  %2161 = vdwg.mxu0
  %2162 = vmatprep.subr.bf16.mxu0 %v1912
  %2163 = vmatpush1.bf16.msra.mxu0 %v1911
  %2164 = vmatprep.subr.bf16.mxu0 %v1933
  %2165 = vmatpush1.bf16.msra.mxu0 %v1932
  %2166 = vmatprep.subr.bf16.mxu0 %v2033
  %2167 = vmatpush1.bf16.msra.mxu0 %v2030
  %2168 = vmatprep.subr.bf16.mxu0 0
  %2169 = vmatpush1.bf16.msra.mxu0 0
  %2170 = vmatprep.subr.bf16.mxu0 0
  %2171 = vmatpush1.bf16.msra.mxu0 0
  %2172 = vmatprep.subr.bf16.mxu0 0
  %2173 = vmatpush1.bf16.msra.mxu0 0
  %2174 = vmatprep.subr.bf16.mxu0 0
  %2175 = vmatpush1.bf16.msra.mxu0 0
  %2176 = vmatprep.subr.bf16.mxu0 0
  %2177 = vmatpush1.bf16.msra.mxu0 0
  %2178 = vmatprep.subr.bf16.mxu0 0
  %2179 = vmatpush1.bf16.msra.mxu0 0
  %2180 = vmatprep.subr.bf16.mxu0 0
  %2181 = vmatpush1.bf16.msra.mxu0 0
  %2182 = vmatprep.subr.bf16.mxu0 0
  %2183 = vmatpush1.bf16.msra.mxu0 0
  %2184 = vmatprep.subr.bf16.mxu0 0
  %2185 = vmatpush1.bf16.msra.mxu0 0
  %2186 = vmatprep.subr.bf16.mxu0 0
  %2187 = vmatpush1.bf16.msra.mxu0 0
  %2188 = vmatprep.subr.bf16.mxu0 0
  %2189 = vmatpush1.bf16.msra.mxu0 0
  %2190 = vmatprep.subr.bf16.mxu0 0
  %2191 = vmatpush1.bf16.msra.mxu0 0
  %2192 = vmatprep.subr.bf16.mxu0 0
  %2193 = vmatpush1.bf16.msra.mxu0 0
  %2194 = vmatprep.mubr.bf16.mxu0 0
  %2195 = vmatmul.mubr.bf16.gmra.mrb[0].mxu0 %v2014
  %v2196 = vpop.f32.mrb[0].mxu0
  %v2197 = vadd.f32 0.0, %v2196
  %v2198 = vpop.f32.mrb[0].mxu0
  %v2199 = vadd.f32 0.0, %v2198
  %v2200 = vpop.f32.mrb[0].mxu0
  %v2201 = vpop.f32.mrb[0].mxu0
  %2202 = vdwg.mxu0
  %2203 = vmatprep.subr.bf16.mxu0 %v1914
  %2204 = vmatpush1.bf16.msra.mxu0 %v1913
  %2205 = vmatprep.subr.bf16.mxu0 %v1935
  %2206 = vmatpush1.bf16.msra.mxu0 %v1934
  %2207 = vmatprep.subr.bf16.mxu0 %v2039
  %2208 = vmatpush1.bf16.msra.mxu0 %v2036
  %2209 = vmatprep.subr.bf16.mxu0 0
  %2210 = vmatpush1.bf16.msra.mxu0 0
  %2211 = vmatprep.subr.bf16.mxu0 0
  %2212 = vmatpush1.bf16.msra.mxu0 0
  %2213 = vmatprep.subr.bf16.mxu0 0
  %2214 = vmatpush1.bf16.msra.mxu0 0
  %2215 = vmatprep.subr.bf16.mxu0 0
  %2216 = vmatpush1.bf16.msra.mxu0 0
  %2217 = vmatprep.subr.bf16.mxu0 0
  %2218 = vmatpush1.bf16.msra.mxu0 0
  %2219 = vmatprep.subr.bf16.mxu0 0
  %2220 = vmatpush1.bf16.msra.mxu0 0
  %2221 = vmatprep.subr.bf16.mxu0 0
  %2222 = vmatpush1.bf16.msra.mxu0 0
  %2223 = vmatprep.subr.bf16.mxu0 0
  %2224 = vmatpush1.bf16.msra.mxu0 0
  %2225 = vmatprep.subr.bf16.mxu0 0
  %2226 = vmatpush1.bf16.msra.mxu0 0
  %2227 = vmatprep.subr.bf16.mxu0 0
  %2228 = vmatpush1.bf16.msra.mxu0 0
  %2229 = vmatprep.subr.bf16.mxu0 0
  %2230 = vmatpush1.bf16.msra.mxu0 0
  %2231 = vmatprep.subr.bf16.mxu0 0
  %2232 = vmatpush1.bf16.msra.mxu0 0
  %2233 = vmatprep.subr.bf16.mxu0 0
  %2234 = vmatpush1.bf16.msra.mxu0 0
  %2235 = vmatprep.mubr.bf16.mxu0 0
  %2236 = vmatmul.mubr.bf16.gmra.mrb[0].mxu0 %v2014
  %v2237 = vpop.f32.mrb[0].mxu0
  %v2238 = vadd.f32 0.0, %v2237
  %v2239 = vpop.f32.mrb[0].mxu0
  %v2240 = vadd.f32 0.0, %v2239
  %v2241 = vpop.f32.mrb[0].mxu0
  %v2242 = vpop.f32.mrb[0].mxu0
  %2243 = vdwg.mxu0
  %2244 = vmatprep.subr.bf16.mxu0 %v1916
  %2245 = vmatpush1.bf16.msra.mxu0 %v1915
  %2246 = vmatprep.subr.bf16.mxu0 %v1937
  %2247 = vmatpush1.bf16.msra.mxu0 %v1936
  %2248 = vmatprep.subr.bf16.mxu0 %v2045
  %2249 = vmatpush1.bf16.msra.mxu0 %v2042
  %2250 = vmatprep.subr.bf16.mxu0 0
  %2251 = vmatpush1.bf16.msra.mxu0 0
  %2252 = vmatprep.subr.bf16.mxu0 0
  %2253 = vmatpush1.bf16.msra.mxu0 0
  %2254 = vmatprep.subr.bf16.mxu0 0
  %2255 = vmatpush1.bf16.msra.mxu0 0
  %2256 = vmatprep.subr.bf16.mxu0 0
  %2257 = vmatpush1.bf16.msra.mxu0 0
  %2258 = vmatprep.subr.bf16.mxu0 0
  %2259 = vmatpush1.bf16.msra.mxu0 0
  %2260 = vmatprep.subr.bf16.mxu0 0
  %2261 = vmatpush1.bf16.msra.mxu0 0
  %2262 = vmatprep.subr.bf16.mxu0 0
  %2263 = vmatpush1.bf16.msra.mxu0 0
  %2264 = vmatprep.subr.bf16.mxu0 0
  %2265 = vmatpush1.bf16.msra.mxu0 0
  %2266 = vmatprep.subr.bf16.mxu0 0
  %2267 = vmatpush1.bf16.msra.mxu0 0
  %2268 = vmatprep.subr.bf16.mxu0 0
  %2269 = vmatpush1.bf16.msra.mxu0 0
  %2270 = vmatprep.subr.bf16.mxu0 0
  %2271 = vmatpush1.bf16.msra.mxu0 0
  %2272 = vmatprep.subr.bf16.mxu0 0
  %2273 = vmatpush1.bf16.msra.mxu0 0
  %2274 = vmatprep.subr.bf16.mxu0 0
  %2275 = vmatpush1.bf16.msra.mxu0 0
  %2276 = vmatprep.mubr.bf16.mxu0 0
  %2277 = vmatmul.mubr.bf16.gmra.mrb[0].mxu0 %v2014
  %v2278 = vpop.f32.mrb[0].mxu0
  %v2279 = vadd.f32 0.0, %v2278
  %v2280 = vpop.f32.mrb[0].mxu0
  %v2281 = vadd.f32 0.0, %v2280
  %v2282 = vpop.f32.mrb[0].mxu0
  %v2283 = vpop.f32.mrb[0].mxu0
  %2284 = vdwg.mxu0
  %2285 = vmatprep.subr.bf16.mxu0 %v1918
  %2286 = vmatpush1.bf16.msra.mxu0 %v1917
  %2287 = vmatprep.subr.bf16.mxu0 %v1939
  %2288 = vmatpush1.bf16.msra.mxu0 %v1938
  %2289 = vmatprep.subr.bf16.mxu0 %v2051
  %2290 = vmatpush1.bf16.msra.mxu0 %v2048
  %2291 = vmatprep.subr.bf16.mxu0 0
  %2292 = vmatpush1.bf16.msra.mxu0 0
  %2293 = vmatprep.subr.bf16.mxu0 0
  %2294 = vmatpush1.bf16.msra.mxu0 0
  %2295 = vmatprep.subr.bf16.mxu0 0
  %2296 = vmatpush1.bf16.msra.mxu0 0
  %2297 = vmatprep.subr.bf16.mxu0 0
  %2298 = vmatpush1.bf16.msra.mxu0 0
  %2299 = vmatprep.subr.bf16.mxu0 0
  %2300 = vmatpush1.bf16.msra.mxu0 0
  %2301 = vmatprep.subr.bf16.mxu0 0
  %2302 = vmatpush1.bf16.msra.mxu0 0
  %2303 = vmatprep.subr.bf16.mxu0 0
  %2304 = vmatpush1.bf16.msra.mxu0 0
  %2305 = vmatprep.subr.bf16.mxu0 0
  %2306 = vmatpush1.bf16.msra.mxu0 0
  %2307 = vmatprep.subr.bf16.mxu0 0
  %2308 = vmatpush1.bf16.msra.mxu0 0
  %2309 = vmatprep.subr.bf16.mxu0 0
  %2310 = vmatpush1.bf16.msra.mxu0 0
  %2311 = vmatprep.subr.bf16.mxu0 0
  %2312 = vmatpush1.bf16.msra.mxu0 0
  %2313 = vmatprep.subr.bf16.mxu0 0
  %2314 = vmatpush1.bf16.msra.mxu0 0
  %2315 = vmatprep.subr.bf16.mxu0 0
  %2316 = vmatpush1.bf16.msra.mxu0 0
  %2317 = vmatprep.mubr.bf16.mxu0 0
  %2318 = vmatmul.mubr.bf16.gmra.mrb[0].mxu0 %v2014
  %v2319 = vpop.f32.mrb[0].mxu0
  %v2320 = vadd.f32 0.0, %v2319
  %v2321 = vpop.f32.mrb[0].mxu0
  %v2322 = vadd.f32 0.0, %v2321
  %v2323 = vpop.f32.mrb[0].mxu0
  %v2324 = vpop.f32.mrb[0].mxu0
  %2325 = vdwg.mxu0
  %2326 = vmatprep.subr.bf16.mxu0 %v1920
  %2327 = vmatpush1.bf16.msra.mxu0 %v1919
  %2328 = vmatprep.subr.bf16.mxu0 %v1941
  %2329 = vmatpush1.bf16.msra.mxu0 %v1940
  %2330 = vmatprep.subr.bf16.mxu0 %v2057
  %2331 = vmatpush1.bf16.msra.mxu0 %v2054
  %2332 = vmatprep.subr.bf16.mxu0 0
  %2333 = vmatpush1.bf16.msra.mxu0 0
  %2334 = vmatprep.subr.bf16.mxu0 0
  %2335 = vmatpush1.bf16.msra.mxu0 0
  %2336 = vmatprep.subr.bf16.mxu0 0
  %2337 = vmatpush1.bf16.msra.mxu0 0
  %2338 = vmatprep.subr.bf16.mxu0 0
  %2339 = vmatpush1.bf16.msra.mxu0 0
  %2340 = vmatprep.subr.bf16.mxu0 0
  %2341 = vmatpush1.bf16.msra.mxu0 0
  %2342 = vmatprep.subr.bf16.mxu0 0
  %2343 = vmatpush1.bf16.msra.mxu0 0
  %2344 = vmatprep.subr.bf16.mxu0 0
  %2345 = vmatpush1.bf16.msra.mxu0 0
  %2346 = vmatprep.subr.bf16.mxu0 0
  %2347 = vmatpush1.bf16.msra.mxu0 0
  %2348 = vmatprep.subr.bf16.mxu0 0
  %2349 = vmatpush1.bf16.msra.mxu0 0
  %2350 = vmatprep.subr.bf16.mxu0 0
  %2351 = vmatpush1.bf16.msra.mxu0 0
  %2352 = vmatprep.subr.bf16.mxu0 0
  %2353 = vmatpush1.bf16.msra.mxu0 0
  %2354 = vmatprep.subr.bf16.mxu0 0
  %2355 = vmatpush1.bf16.msra.mxu0 0
  %2356 = vmatprep.subr.bf16.mxu0 0
  %2357 = vmatpush1.bf16.msra.mxu0 0
  %2358 = vmatprep.mubr.bf16.mxu0 0
  %2359 = vmatmul.mubr.bf16.gmra.mrb[0].mxu0 %v2014
  %v2360 = vpop.f32.mrb[0].mxu0
  %v2361 = vadd.f32 0.0, %v2360
  %v2362 = vpop.f32.mrb[0].mxu0
  %v2363 = vadd.f32 0.0, %v2362
  %v2364 = vpop.f32.mrb[0].mxu0
  %v2365 = vpop.f32.mrb[0].mxu0
  %2366 = vdwg.mxu0
  %2367 = vmatprep.subr.bf16.mxu0 %v1922
  %2368 = vmatpush1.bf16.msra.mxu0 %v1921
  %2369 = vmatprep.subr.bf16.mxu0 %v1943
  %2370 = vmatpush1.bf16.msra.mxu0 %v1942
  %2371 = vmatprep.subr.bf16.mxu0 %v2063
  %2372 = vmatpush1.bf16.msra.mxu0 %v2060
  %2373 = vmatprep.subr.bf16.mxu0 0
  %2374 = vmatpush1.bf16.msra.mxu0 0
  %2375 = vmatprep.subr.bf16.mxu0 0
  %2376 = vmatpush1.bf16.msra.mxu0 0
  %2377 = vmatprep.subr.bf16.mxu0 0
  %2378 = vmatpush1.bf16.msra.mxu0 0
  %2379 = vmatprep.subr.bf16.mxu0 0
  %2380 = vmatpush1.bf16.msra.mxu0 0
  %2381 = vmatprep.subr.bf16.mxu0 0
  %2382 = vmatpush1.bf16.msra.mxu0 0
  %2383 = vmatprep.subr.bf16.mxu0 0
  %2384 = vmatpush1.bf16.msra.mxu0 0
  %2385 = vmatprep.subr.bf16.mxu0 0
  %2386 = vmatpush1.bf16.msra.mxu0 0
  %2387 = vmatprep.subr.bf16.mxu0 0
  %2388 = vmatpush1.bf16.msra.mxu0 0
  %2389 = vmatprep.subr.bf16.mxu0 0
  %2390 = vmatpush1.bf16.msra.mxu0 0
  %2391 = vmatprep.subr.bf16.mxu0 0
  %2392 = vmatpush1.bf16.msra.mxu0 0
  %2393 = vmatprep.subr.bf16.mxu0 0
  %2394 = vmatpush1.bf16.msra.mxu0 0
  %2395 = vmatprep.subr.bf16.mxu0 0
  %2396 = vmatpush1.bf16.msra.mxu0 0
  %2397 = vmatprep.subr.bf16.mxu0 0
  %2398 = vmatpush1.bf16.msra.mxu0 0
  %2399 = vmatprep.mubr.bf16.mxu0 0
  %2400 = vmatmul.mubr.bf16.gmra.mrb[0].mxu0 %v2014
  %v2401 = vpop.f32.mrb[0].mxu0
  %v2402 = vadd.f32 0.0, %v2401
  %v2403 = vpop.f32.mrb[0].mxu0
  %v2404 = vadd.f32 0.0, %v2403
  %v2405 = vpop.f32.mrb[0].mxu0
  %v2406 = vpop.f32.mrb[0].mxu0
  %2407 = vdwg.mxu0
  %2408 = vmatprep.subr.bf16.mxu0 %v1924
  %2409 = vmatpush1.bf16.msra.mxu0 %v1923
  %2410 = vmatprep.subr.bf16.mxu0 %v1945
  %2411 = vmatpush1.bf16.msra.mxu0 %v1944
  %2412 = vmatprep.subr.bf16.mxu0 %v2069
  %2413 = vmatpush1.bf16.msra.mxu0 %v2066
  %2414 = vmatprep.subr.bf16.mxu0 0
  %2415 = vmatpush1.bf16.msra.mxu0 0
  %2416 = vmatprep.subr.bf16.mxu0 0
  %2417 = vmatpush1.bf16.msra.mxu0 0
  %2418 = vmatprep.subr.bf16.mxu0 0
  %2419 = vmatpush1.bf16.msra.mxu0 0
  %2420 = vmatprep.subr.bf16.mxu0 0
  %2421 = vmatpush1.bf16.msra.mxu0 0
  %2422 = vmatprep.subr.bf16.mxu0 0
  %2423 = vmatpush1.bf16.msra.mxu0 0
  %2424 = vmatprep.subr.bf16.mxu0 0
  %2425 = vmatpush1.bf16.msra.mxu0 0
  %2426 = vmatprep.subr.bf16.mxu0 0
  %2427 = vmatpush1.bf16.msra.mxu0 0
  %2428 = vmatprep.subr.bf16.mxu0 0
  %2429 = vmatpush1.bf16.msra.mxu0 0
  %2430 = vmatprep.subr.bf16.mxu0 0
  %2431 = vmatpush1.bf16.msra.mxu0 0
  %2432 = vmatprep.subr.bf16.mxu0 0
  %2433 = vmatpush1.bf16.msra.mxu0 0
  %2434 = vmatprep.subr.bf16.mxu0 0
  %2435 = vmatpush1.bf16.msra.mxu0 0
  %2436 = vmatprep.subr.bf16.mxu0 0
  %2437 = vmatpush1.bf16.msra.mxu0 0
  %2438 = vmatprep.subr.bf16.mxu0 0
  %2439 = vmatpush1.bf16.msra.mxu0 0
  %2440 = vmatprep.mubr.bf16.mxu0 0
  %2441 = vmatmul.mubr.bf16.gmra.mrb[0].mxu0 %v2014
  %v2442 = vpop.f32.mrb[0].mxu0
  %v2443 = vadd.f32 0.0, %v2442
  %v2444 = vpop.f32.mrb[0].mxu0
  %v2445 = vadd.f32 0.0, %v2444
  %v2446 = vpop.f32.mrb[0].mxu0
  %v2447 = vpop.f32.mrb[0].mxu0
  %2448 = vdwg.mxu0
  %2449 = vmatprep.subr.bf16.mxu0 %v1926
  %2450 = vmatpush1.bf16.msra.mxu0 %v1925
  %2451 = vmatprep.subr.bf16.mxu0 %v1947
  %2452 = vmatpush1.bf16.msra.mxu0 %v1946
  %2453 = vmatprep.subr.bf16.mxu0 %v2075
  %2454 = vmatpush1.bf16.msra.mxu0 %v2072
  %2455 = vmatprep.subr.bf16.mxu0 0
  %2456 = vmatpush1.bf16.msra.mxu0 0
  %2457 = vmatprep.subr.bf16.mxu0 0
  %2458 = vmatpush1.bf16.msra.mxu0 0
  %2459 = vmatprep.subr.bf16.mxu0 0
  %2460 = vmatpush1.bf16.msra.mxu0 0
  %2461 = vmatprep.subr.bf16.mxu0 0
  %2462 = vmatpush1.bf16.msra.mxu0 0
  %2463 = vmatprep.subr.bf16.mxu0 0
  %2464 = vmatpush1.bf16.msra.mxu0 0
  %2465 = vmatprep.subr.bf16.mxu0 0
  %2466 = vmatpush1.bf16.msra.mxu0 0
  %2467 = vmatprep.subr.bf16.mxu0 0
  %2468 = vmatpush1.bf16.msra.mxu0 0
  %2469 = vmatprep.subr.bf16.mxu0 0
  %2470 = vmatpush1.bf16.msra.mxu0 0
  %2471 = vmatprep.subr.bf16.mxu0 0
  %2472 = vmatpush1.bf16.msra.mxu0 0
  %2473 = vmatprep.subr.bf16.mxu0 0
  %2474 = vmatpush1.bf16.msra.mxu0 0
  %2475 = vmatprep.subr.bf16.mxu0 0
  %2476 = vmatpush1.bf16.msra.mxu0 0
  %2477 = vmatprep.subr.bf16.mxu0 0
  %2478 = vmatpush1.bf16.msra.mxu0 0
  %2479 = vmatprep.subr.bf16.mxu0 0
  %2480 = vmatpush1.bf16.msra.mxu0 0
  %2481 = vmatprep.mubr.bf16.mxu0 0
  %2482 = vmatmul.mubr.bf16.gmra.mrb[0].mxu0 %v2014
  %v2483 = vpop.f32.mrb[0].mxu0
  %v2484 = vadd.f32 0.0, %v2483
  %v2485 = vpop.f32.mrb[0].mxu0
  %v2486 = vadd.f32 0.0, %v2485
  %v2487 = vpop.f32.mrb[0].mxu0
  %v2488 = vpop.f32.mrb[0].mxu0
  %2489 = vdwg.mxu0
  %2490 = vmatprep.subr.bf16.mxu0 0
  %2491 = vmatpush1.bf16.msra.mxu0 %v1927
  %2492 = vmatprep.subr.bf16.mxu0 0
  %2493 = vmatpush1.bf16.msra.mxu0 %v1948
  %2494 = vmatprep.subr.bf16.mxu0 0
  %2495 = vmatpush1.bf16.msra.mxu0 %v2078
  %2496 = vmatprep.subr.bf16.mxu0 0
  %2497 = vmatpush1.bf16.msra.mxu0 0
  %2498 = vmatprep.subr.bf16.mxu0 0
  %2499 = vmatpush1.bf16.msra.mxu0 0
  %2500 = vmatprep.subr.bf16.mxu0 0
  %2501 = vmatpush1.bf16.msra.mxu0 0
  %2502 = vmatprep.subr.bf16.mxu0 0
  %2503 = vmatpush1.bf16.msra.mxu0 0
  %2504 = vmatprep.subr.bf16.mxu0 0
  %2505 = vmatpush1.bf16.msra.mxu0 0
  %2506 = vmatprep.subr.bf16.mxu0 0
  %2507 = vmatpush1.bf16.msra.mxu0 0
  %2508 = vmatprep.subr.bf16.mxu0 0
  %2509 = vmatpush1.bf16.msra.mxu0 0
  %2510 = vmatprep.subr.bf16.mxu0 0
  %2511 = vmatpush1.bf16.msra.mxu0 0
  %2512 = vmatprep.subr.bf16.mxu0 0
  %2513 = vmatpush1.bf16.msra.mxu0 0
  %2514 = vmatprep.subr.bf16.mxu0 0
  %2515 = vmatpush1.bf16.msra.mxu0 0
  %2516 = vmatprep.subr.bf16.mxu0 0
  %2517 = vmatpush1.bf16.msra.mxu0 0
  %2518 = vmatprep.subr.bf16.mxu0 0
  %2519 = vmatpush1.bf16.msra.mxu0 0
  %2520 = vmatprep.subr.bf16.mxu0 0
  %2521 = vmatpush1.bf16.msra.mxu0 0
  %2522 = vmatprep.mubr.bf16.mxu0 0
  %2523 = vmatmul.mubr.bf16.gmra.mrb[0].mxu0 %v2014
  %v2524 = vpop.f32.mrb[0].mxu0
  %v2525 = vadd.f32 0.0, %v2524
  %v2526 = vpop.f32.mrb[0].mxu0
  %v2527 = vpop.f32.mrb[0].mxu0
  %v2528 = vpop.f32.mrb[0].mxu0
  %2529 = vdwg.mxu0
  %v2533 = vlaneseq
  %v2534 = vshrl.u32 %v2533, 7
  %v2535 = vsub.s32 0, %v2534
  %v2536 = vrot.slane %v36, %v2535
  %v2537 = vlaneseq
  %v2538 = vshrl.u32 %v2537, 7
  %v2539 = vsub.s32 1, %v2538
  %v2540 = vrot.slane %v36, %v2539
  %v2541 = vlaneseq
  %v2542 = vshrl.u32 %v2541, 7
  %v2543 = vsub.s32 2, %v2542
  %v2544 = vrot.slane %v36, %v2543
  %v2545 = vlaneseq
  %v2546 = vshrl.u32 %v2545, 7
  %v2547 = vsub.s32 3, %v2546
  %v2548 = vrot.slane %v36, %v2547
  %v2549 = vlaneseq
  %v2550 = vshrl.u32 %v2549, 7
  %v2551 = vsub.s32 4, %v2550
  %v2552 = vrot.slane %v36, %v2551
  %v2553 = vlaneseq
  %v2554 = vshrl.u32 %v2553, 7
  %v2555 = vsub.s32 5, %v2554
  %v2556 = vrot.slane %v36, %v2555
  %v2557 = vlaneseq
  %v2558 = vshrl.u32 %v2557, 7
  %v2559 = vsub.s32 6, %v2558
  %v2560 = vrot.slane %v36, %v2559
  %v2561 = vlaneseq
  %v2562 = vshrl.u32 %v2561, 7
  %v2563 = vsub.s32 7, %v2562
  %v2564 = vrot.slane %v36, %v2563
  %v2565 = vlaneseq
  %v2566 = vshrl.u32 %v2565, 7
  %v2567 = vsub.s32 0, %v2566
  %v2568 = vrot.slane %v37, %v2567
  %v2569 = vlaneseq
  %v2570 = vshrl.u32 %v2569, 7
  %v2571 = vsub.s32 1, %v2570
  %v2572 = vrot.slane %v37, %v2571
  %v2573 = vlaneseq
  %v2574 = vshrl.u32 %v2573, 7
  %v2575 = vsub.s32 2, %v2574
  %v2576 = vrot.slane %v37, %v2575
  %v2577 = vlaneseq
  %v2578 = vshrl.u32 %v2577, 7
  %v2579 = vsub.s32 3, %v2578
  %v2580 = vrot.slane %v37, %v2579
  %v2581 = vlaneseq
  %v2582 = vshrl.u32 %v2581, 7
  %v2583 = vsub.s32 4, %v2582
  %v2584 = vrot.slane %v37, %v2583
  %v2585 = vlaneseq
  %v2586 = vshrl.u32 %v2585, 7
  %v2587 = vsub.s32 5, %v2586
  %v2588 = vrot.slane %v37, %v2587
  %v2589 = vlaneseq
  %v2590 = vshrl.u32 %v2589, 7
  %v2591 = vsub.s32 6, %v2590
  %v2592 = vrot.slane %v37, %v2591
  %v2593 = vlaneseq
  %v2594 = vshrl.u32 %v2593, 7
  %v2595 = vsub.s32 7, %v2594
  %v2596 = vrot.slane %v37, %v2595
  %v2597 = vlaneseq
  %v2598 = vshrl.u32 %v2597, 7
  %v2599 = vsub.s32 0, %v2598
  %v2600 = vrot.slane %v38, %v2599
  %v2601 = vlaneseq
  %v2602 = vshrl.u32 %v2601, 7
  %v2603 = vsub.s32 1, %v2602
  %v2604 = vrot.slane %v38, %v2603
  %v2605 = vlaneseq
  %v2606 = vshrl.u32 %v2605, 7
  %v2607 = vsub.s32 2, %v2606
  %v2608 = vrot.slane %v38, %v2607
  %v2609 = vlaneseq
  %v2610 = vshrl.u32 %v2609, 7
  %v2611 = vsub.s32 3, %v2610
  %v2612 = vrot.slane %v38, %v2611
  %v2613 = vlaneseq
  %v2614 = vshrl.u32 %v2613, 7
  %v2615 = vsub.s32 4, %v2614
  %v2616 = vrot.slane %v38, %v2615
  %v2638 = vmul.f32 %v2115, %v2536
  %v2639 = vmul.f32 %v2117, %v2540
  %v2640 = vmul.f32 %v2156, %v2544
  %v2641 = vmul.f32 %v2158, %v2548
  %v2642 = vmul.f32 %v2197, %v2552
  %v2643 = vmul.f32 %v2199, %v2556
  %v2644 = vmul.f32 %v2238, %v2560
  %v2645 = vmul.f32 %v2240, %v2564
  %v2646 = vmul.f32 %v2279, %v2568
  %v2647 = vmul.f32 %v2281, %v2572
  %v2648 = vmul.f32 %v2320, %v2576
  %v2649 = vmul.f32 %v2322, %v2580
  %v2650 = vmul.f32 %v2361, %v2584
  %v2651 = vmul.f32 %v2363, %v2588
  %v2652 = vmul.f32 %v2402, %v2592
  %v2653 = vmul.f32 %v2404, %v2596
  %v2654 = vmul.f32 %v2443, %v2600
  %v2655 = vmul.f32 %v2445, %v2604
  %v2656 = vmul.f32 %v2484, %v2608
  %v2657 = vmul.f32 %v2486, %v2612
  %v2658 = vmul.f32 %v2525, %v2616
  %v2659 = vadd.f32 %v2638, %v2639
  %v2660 = vadd.f32 %v2659, %v2640
  %v2661 = vadd.f32 %v2660, %v2641
  %v2662 = vadd.f32 %v2661, %v2642
  %v2663 = vadd.f32 %v2662, %v2643
  %v2664 = vadd.f32 %v2663, %v2644
  %v2665 = vadd.f32 %v2664, %v2645
  %v2666 = vadd.f32 %v2665, %v2646
  %v2667 = vadd.f32 %v2666, %v2647
  %v2668 = vadd.f32 %v2667, %v2648
  %v2669 = vadd.f32 %v2668, %v2649
  %v2670 = vadd.f32 %v2669, %v2650
  %v2671 = vadd.f32 %v2670, %v2651
  %v2672 = vadd.f32 %v2671, %v2652
  %v2673 = vadd.f32 %v2672, %v2653
  %v2674 = vadd.f32 %v2673, %v2654
  %v2675 = vadd.f32 %v2674, %v2655
  %v2676 = vadd.f32 %v2675, %v2656
  %v2677 = vadd.f32 %v2676, %v2657
  %v2678 = vadd.f32 %v2677, %v2658
  %2679 = vadd.xlane.f32.xlu0 %v2678
  %v2680 = vpop.xlane.xlu0 %2679
  %v2681 = vmul.f32 %v2680, 0.00048828125
  %v2682 = vsub.f32 %v2115, %v2681
  %v2683 = vsub.f32 %v2117, %v2681
  %v2684 = vsub.f32 %v2156, %v2681
  %v2685 = vsub.f32 %v2158, %v2681
  %v2686 = vsub.f32 %v2197, %v2681
  %v2687 = vsub.f32 %v2199, %v2681
  %v2688 = vsub.f32 %v2238, %v2681
  %v2689 = vsub.f32 %v2240, %v2681
  %v2690 = vsub.f32 %v2279, %v2681
  %v2691 = vsub.f32 %v2281, %v2681
  %v2692 = vsub.f32 %v2320, %v2681
  %v2693 = vsub.f32 %v2322, %v2681
  %v2694 = vsub.f32 %v2361, %v2681
  %v2695 = vsub.f32 %v2363, %v2681
  %v2696 = vsub.f32 %v2402, %v2681
  %v2697 = vsub.f32 %v2404, %v2681
  %v2698 = vsub.f32 %v2443, %v2681
  %v2699 = vsub.f32 %v2445, %v2681
  %v2700 = vsub.f32 %v2484, %v2681
  %v2701 = vsub.f32 %v2486, %v2681
  %v2702 = vsub.f32 %v2525, %v2681
  %v2703 = vmul.f32 %v2682, %v2536
  %v2704 = vmul.f32 %v2683, %v2540
  %v2705 = vmul.f32 %v2684, %v2544
  %v2706 = vmul.f32 %v2685, %v2548
  %v2707 = vmul.f32 %v2686, %v2552
  %v2708 = vmul.f32 %v2687, %v2556
  %v2709 = vmul.f32 %v2688, %v2560
  %v2710 = vmul.f32 %v2689, %v2564
  %v2711 = vmul.f32 %v2690, %v2568
  %v2712 = vmul.f32 %v2691, %v2572
  %v2713 = vmul.f32 %v2692, %v2576
  %v2714 = vmul.f32 %v2693, %v2580
  %v2715 = vmul.f32 %v2694, %v2584
  %v2716 = vmul.f32 %v2695, %v2588
  %v2717 = vmul.f32 %v2696, %v2592
  %v2718 = vmul.f32 %v2697, %v2596
  %v2719 = vmul.f32 %v2698, %v2600
  %v2720 = vmul.f32 %v2699, %v2604
  %v2721 = vmul.f32 %v2700, %v2608
  %v2722 = vmul.f32 %v2701, %v2612
  %v2723 = vmul.f32 %v2702, %v2616
  %v2724 = vmul.f32 %v2703, %v2703
  %v2725 = vmul.f32 %v2704, %v2704
  %v2726 = vmul.f32 %v2705, %v2705
  %v2727 = vmul.f32 %v2706, %v2706
  %v2728 = vmul.f32 %v2707, %v2707
  %v2729 = vmul.f32 %v2708, %v2708
  %v2730 = vmul.f32 %v2709, %v2709
  %v2731 = vmul.f32 %v2710, %v2710
  %v2732 = vmul.f32 %v2711, %v2711
  %v2733 = vmul.f32 %v2712, %v2712
  %v2734 = vmul.f32 %v2713, %v2713
  %v2735 = vmul.f32 %v2714, %v2714
  %v2736 = vmul.f32 %v2715, %v2715
  %v2737 = vmul.f32 %v2716, %v2716
  %v2738 = vmul.f32 %v2717, %v2717
  %v2739 = vmul.f32 %v2718, %v2718
  %v2740 = vmul.f32 %v2719, %v2719
  %v2741 = vmul.f32 %v2720, %v2720
  %v2742 = vmul.f32 %v2721, %v2721
  %v2743 = vmul.f32 %v2722, %v2722
  %v2744 = vmul.f32 %v2723, %v2723
  %v2745 = vadd.f32 %v2724, %v2725
  %v2746 = vadd.f32 %v2745, %v2726
  %v2747 = vadd.f32 %v2746, %v2727
  %v2748 = vadd.f32 %v2747, %v2728
  %v2749 = vadd.f32 %v2748, %v2729
  %v2750 = vadd.f32 %v2749, %v2730
  %v2751 = vadd.f32 %v2750, %v2731
  %v2752 = vadd.f32 %v2751, %v2732
  %v2753 = vadd.f32 %v2752, %v2733
  %v2754 = vadd.f32 %v2753, %v2734
  %v2755 = vadd.f32 %v2754, %v2735
  %v2756 = vadd.f32 %v2755, %v2736
  %v2757 = vadd.f32 %v2756, %v2737
  %v2758 = vadd.f32 %v2757, %v2738
  %v2759 = vadd.f32 %v2758, %v2739
  %v2760 = vadd.f32 %v2759, %v2740
  %v2761 = vadd.f32 %v2760, %v2741
  %v2762 = vadd.f32 %v2761, %v2742
  %v2763 = vadd.f32 %v2762, %v2743
  %v2764 = vadd.f32 %v2763, %v2744
  %2765 = vadd.xlane.f32.xlu0 %v2764
  %v2766 = vpop.xlane.xlu0 %2765
  %v2767 = vmul.f32 %v2766, 0.00048828125
  %v2768 = vld [vmem:[%s5] sm:$0xff]
  %v2769 = vadd.f32 %v2767, 1e-05
  %v2770 = vrsqrt.pop %v2769
  %v2771 = vmul.f32 %v2768, %v2770
  %2773 = vset.pattern.permute.xlu0 0
  %2774 = vperm.xlu0 %2773, %v2771
  %v2775 = vpop.permute.xlu0 %2774
  %v2777 = vmul.f32 %v2703, %v2775
  %v2778 = vmul.f32 %v2704, %v2775
  %v2779 = vmul.f32 %v2705, %v2775
  %v2780 = vmul.f32 %v2706, %v2775
  %v2781 = vmul.f32 %v2707, %v2775
  %v2782 = vmul.f32 %v2708, %v2775
  %v2783 = vmul.f32 %v2709, %v2775
  %v2784 = vmul.f32 %v2710, %v2775
  %v2785 = vmul.f32 %v2711, %v2775
  %v2786 = vmul.f32 %v2712, %v2775
  %v2787 = vmul.f32 %v2713, %v2775
  %v2788 = vmul.f32 %v2714, %v2775
  %v2789 = vmul.f32 %v2715, %v2775
  %v2790 = vmul.f32 %v2716, %v2775
  %v2791 = vmul.f32 %v2717, %v2775
  %v2792 = vmul.f32 %v2718, %v2775
  %v2793 = vmul.f32 %v2719, %v2775
  %v2794 = vmul.f32 %v2720, %v2775
  %v2795 = vmul.f32 %v2721, %v2775
  %v2796 = vmul.f32 %v2722, %v2775
  %v2797 = vmul.f32 %v2723, %v2775
  %v2798 = vld [vmem:[%s6] sm:$0xff]
  %2800 = vset.pattern.permute.xlu0 0
  %2801 = vperm.xlu0 %2800, %v2798
  %v2802 = vpop.permute.xlu0 %2801
  %v2804 = vadd.f32 %v2777, %v2802
  %v2805 = vadd.f32 %v2778, %v2802
  %v2806 = vadd.f32 %v2779, %v2802
  %v2807 = vadd.f32 %v2780, %v2802
  %v2808 = vadd.f32 %v2781, %v2802
  %v2809 = vadd.f32 %v2782, %v2802
  %v2810 = vadd.f32 %v2783, %v2802
  %v2811 = vadd.f32 %v2784, %v2802
  %v2812 = vadd.f32 %v2785, %v2802
  %v2813 = vadd.f32 %v2786, %v2802
  %v2814 = vadd.f32 %v2787, %v2802
  %v2815 = vadd.f32 %v2788, %v2802
  %v2816 = vadd.f32 %v2789, %v2802
  %v2817 = vadd.f32 %v2790, %v2802
  %v2818 = vadd.f32 %v2791, %v2802
  %v2819 = vadd.f32 %v2792, %v2802
  %v2820 = vadd.f32 %v2793, %v2802
  %v2821 = vadd.f32 %v2794, %v2802
  %v2822 = vadd.f32 %v2795, %v2802
  %v2823 = vadd.f32 %v2796, %v2802
  %v2824 = vadd.f32 %v2797, %v2802
  %v2825 = vmax.f32 %v2804, 0.0
  %v2826 = vmax.f32 %v2805, 0.0
  %v2827 = vmax.f32 %v2806, 0.0
  %v2828 = vmax.f32 %v2807, 0.0
  %v2829 = vmax.f32 %v2808, 0.0
  %v2830 = vmax.f32 %v2809, 0.0
  %v2831 = vmax.f32 %v2810, 0.0
  %v2832 = vmax.f32 %v2811, 0.0
  %v2833 = vmax.f32 %v2812, 0.0
  %v2834 = vmax.f32 %v2813, 0.0
  %v2835 = vmax.f32 %v2814, 0.0
  %v2836 = vmax.f32 %v2815, 0.0
  %v2837 = vmax.f32 %v2816, 0.0
  %v2838 = vmax.f32 %v2817, 0.0
  %v2839 = vmax.f32 %v2818, 0.0
  %v2840 = vmax.f32 %v2819, 0.0
  %v2841 = vmax.f32 %v2820, 0.0
  %v2842 = vmax.f32 %v2821, 0.0
  %v2843 = vmax.f32 %v2822, 0.0
  %v2844 = vmax.f32 %v2823, 0.0
  %v2845 = vmax.f32 %v2824, 0.0
  %2846 = vst [vmem:[#allocation2 + $0x8] sm:$0xff] %v2825
  %2847 = vst [vmem:[#allocation2 + $0x10] sm:$0xff] %v2826
  %2848 = vst [vmem:[#allocation2 + $0x18] sm:$0xff] %v2827
  %2849 = vst [vmem:[#allocation2 + $0x20] sm:$0xff] %v2828
  %2850 = vst [vmem:[#allocation2 + $0x28] sm:$0xff] %v2829
  %2851 = vst [vmem:[#allocation2 + $0x30] sm:$0xff] %v2830
  %2852 = vst [vmem:[#allocation2 + $0x38] sm:$0xff] %v2831
  %2853 = vst [vmem:[#allocation2 + $0x40] sm:$0xff] %v2832
  %2854 = vst [vmem:[#allocation2 + $0x48] sm:$0xff] %v2833
  %2855 = vst [vmem:[#allocation2 + $0x50] sm:$0xff] %v2834
  %2856 = vst [vmem:[#allocation2 + $0x58] sm:$0xff] %v2835
  %2857 = vst [vmem:[#allocation2 + $0x60] sm:$0xff] %v2836
  %2858 = vst [vmem:[#allocation2 + $0x68] sm:$0xff] %v2837
  %2859 = vst [vmem:[#allocation2 + $0x70] sm:$0xff] %v2838
  %2860 = vst [vmem:[#allocation2 + $0x78] sm:$0xff] %v2839
  %2861 = vst [vmem:[#allocation2 + $0x80] sm:$0xff] %v2840
  %2862 = vst [vmem:[#allocation2 + $0x88] sm:$0xff] %v2841
  %2863 = vst [vmem:[#allocation2 + $0x90] sm:$0xff] %v2842
  %2864 = vst [vmem:[#allocation2 + $0x98] sm:$0xff] %v2843
  %2865 = vst [vmem:[#allocation2 + $0xa0] sm:$0xff] %v2844
  %2866 = vst [vmem:[#allocation2 + $0xa8] sm:$0xff] %v2845
  %v2867 = vld [vmem:[#allocation2 + $0x8] sm:$0xff]
  %v2868 = vld [vmem:[#allocation2 + $0x10] sm:$0xff]
  %v2869 = vld [vmem:[#allocation2 + $0x18] sm:$0xff]
  %v2870 = vld [vmem:[#allocation2 + $0x20] sm:$0xff]
  %v2871 = vld [vmem:[#allocation2 + $0x28] sm:$0xff]
  %v2872 = vld [vmem:[#allocation2 + $0x30] sm:$0xff]
  %v2873 = vld [vmem:[#allocation2 + $0x38] sm:$0xff]
  %v2874 = vld [vmem:[#allocation2 + $0x40] sm:$0xff]
  %v2875 = vld [vmem:[#allocation2 + $0x48] sm:$0xff]
  %v2876 = vld [vmem:[#allocation2 + $0x50] sm:$0xff]
  %v2877 = vld [vmem:[#allocation2 + $0x58] sm:$0xff]
  %v2878 = vld [vmem:[#allocation2 + $0x60] sm:$0xff]
  %v2879 = vld [vmem:[#allocation2 + $0x68] sm:$0xff]
  %v2880 = vld [vmem:[#allocation2 + $0x70] sm:$0xff]
  %v2881 = vld [vmem:[#allocation2 + $0x78] sm:$0xff]
  %v2882 = vld [vmem:[#allocation2 + $0x80] sm:$0xff]
  %v2883 = vld [vmem:[#allocation2 + $0x88] sm:$0xff]
  %v2884 = vld [vmem:[#allocation2 + $0x90] sm:$0xff]
  %v2885 = vld [vmem:[#allocation2 + $0x98] sm:$0xff]
  %v2886 = vld [vmem:[#allocation2 + $0xa0] sm:$0xff]
  %v2887 = vld [vmem:[#allocation2 + $0xa8] sm:$0xff]
  %v2888 = vld [vmem:[#allocation2 + $0xb0] sm:$0xff]
  %v2889 = vld [vmem:[#allocation2] sm:$0xff]
  %v2890 = vld [vmem:[#allocation2 + $0x8] sm:$0xff]
  %v2891 = vld [vmem:[#allocation2 + $0x10] sm:$0xff]
  %v2892 = vld [vmem:[#allocation2 + $0x18] sm:$0xff]
  %v2893 = vld [vmem:[#allocation2 + $0x20] sm:$0xff]
  %v2894 = vld [vmem:[#allocation2 + $0x28] sm:$0xff]
  %v2895 = vld [vmem:[#allocation2 + $0x30] sm:$0xff]
  %v2896 = vld [vmem:[#allocation2 + $0x38] sm:$0xff]
  %v2897 = vld [vmem:[#allocation2 + $0x40] sm:$0xff]
  %v2898 = vld [vmem:[#allocation2 + $0x48] sm:$0xff]
  %v2899 = vld [vmem:[#allocation2 + $0x50] sm:$0xff]
  %v2900 = vld [vmem:[#allocation2 + $0x58] sm:$0xff]
  %v2901 = vld [vmem:[#allocation2 + $0x60] sm:$0xff]
  %v2902 = vld [vmem:[#allocation2 + $0x68] sm:$0xff]
  %v2903 = vld [vmem:[#allocation2 + $0x70] sm:$0xff]
  %v2904 = vld [vmem:[#allocation2 + $0x78] sm:$0xff]
  %v2905 = vld [vmem:[#allocation2 + $0x80] sm:$0xff]
  %v2906 = vld [vmem:[#allocation2 + $0x88] sm:$0xff]
  %v2907 = vld [vmem:[#allocation2 + $0x90] sm:$0xff]
  %v2908 = vld [vmem:[#allocation2 + $0x98] sm:$0xff]
  %v2909 = vld [vmem:[#allocation2 + $0xa0] sm:$0xff]
  %v2910 = vld [vmem:[#allocation2 + $0xa8] sm:$0xff]
  %v2911 = vsel %vm48, 1, 0
  %v2912 = vsel %vm49, 1, 0
  %v2913 = vsel %vm50, 1, 0
  %v2914 = vlaneseq
  %v2915 = vshrl.u32 %v2914, 7
  %v2916 = vsub.s32 0, %v2915
  %v2917 = vrot.slane %v2911, %v2916
  %v2918 = vlaneseq
  %v2919 = vshrl.u32 %v2918, 7
  %v2920 = vsub.s32 1, %v2919
  %v2921 = vrot.slane %v2911, %v2920
  %v2922 = vlaneseq
  %v2923 = vshrl.u32 %v2922, 7
  %v2924 = vsub.s32 2, %v2923
  %v2925 = vrot.slane %v2911, %v2924
  %v2926 = vlaneseq
  %v2927 = vshrl.u32 %v2926, 7
  %v2928 = vsub.s32 3, %v2927
  %v2929 = vrot.slane %v2911, %v2928
  %v2930 = vlaneseq
  %v2931 = vshrl.u32 %v2930, 7
  %v2932 = vsub.s32 4, %v2931
  %v2933 = vrot.slane %v2911, %v2932
  %v2934 = vlaneseq
  %v2935 = vshrl.u32 %v2934, 7
  %v2936 = vsub.s32 5, %v2935
  %v2937 = vrot.slane %v2911, %v2936
  %v2938 = vlaneseq
  %v2939 = vshrl.u32 %v2938, 7
  %v2940 = vsub.s32 6, %v2939
  %v2941 = vrot.slane %v2911, %v2940
  %v2942 = vlaneseq
  %v2943 = vshrl.u32 %v2942, 7
  %v2944 = vsub.s32 7, %v2943
  %v2945 = vrot.slane %v2911, %v2944
  %v2946 = vlaneseq
  %v2947 = vshrl.u32 %v2946, 7
  %v2948 = vsub.s32 0, %v2947
  %v2949 = vrot.slane %v2912, %v2948
  %v2950 = vlaneseq
  %v2951 = vshrl.u32 %v2950, 7
  %v2952 = vsub.s32 1, %v2951
  %v2953 = vrot.slane %v2912, %v2952
  %v2954 = vlaneseq
  %v2955 = vshrl.u32 %v2954, 7
  %v2956 = vsub.s32 2, %v2955
  %v2957 = vrot.slane %v2912, %v2956
  %v2958 = vlaneseq
  %v2959 = vshrl.u32 %v2958, 7
  %v2960 = vsub.s32 3, %v2959
  %v2961 = vrot.slane %v2912, %v2960
  %v2962 = vlaneseq
  %v2963 = vshrl.u32 %v2962, 7
  %v2964 = vsub.s32 4, %v2963
  %v2965 = vrot.slane %v2912, %v2964
  %v2966 = vlaneseq
  %v2967 = vshrl.u32 %v2966, 7
  %v2968 = vsub.s32 5, %v2967
  %v2969 = vrot.slane %v2912, %v2968
  %v2970 = vlaneseq
  %v2971 = vshrl.u32 %v2970, 7
  %v2972 = vsub.s32 6, %v2971
  %v2973 = vrot.slane %v2912, %v2972
  %v2974 = vlaneseq
  %v2975 = vshrl.u32 %v2974, 7
  %v2976 = vsub.s32 7, %v2975
  %v2977 = vrot.slane %v2912, %v2976
  %v2978 = vlaneseq
  %v2979 = vshrl.u32 %v2978, 7
  %v2980 = vsub.s32 0, %v2979
  %v2981 = vrot.slane %v2913, %v2980
  %v2982 = vlaneseq
  %v2983 = vshrl.u32 %v2982, 7
  %v2984 = vsub.s32 1, %v2983
  %v2985 = vrot.slane %v2913, %v2984
  %v2986 = vlaneseq
  %v2987 = vshrl.u32 %v2986, 7
  %v2988 = vsub.s32 2, %v2987
  %v2989 = vrot.slane %v2913, %v2988
  %v2990 = vlaneseq
  %v2991 = vshrl.u32 %v2990, 7
  %v2992 = vsub.s32 3, %v2991
  %v2993 = vrot.slane %v2913, %v2992
  %v2994 = vlaneseq
  %v2995 = vshrl.u32 %v2994, 7
  %v2996 = vsub.s32 4, %v2995
  %v2997 = vrot.slane %v2913, %v2996
  %vm2998 = vcmp.eq.s32.totalorder %v2917, 1
  %vm2999 = vcmp.eq.s32.totalorder %v2921, 1
  %vm3000 = vcmp.eq.s32.totalorder %v2925, 1
  %vm3001 = vcmp.eq.s32.totalorder %v2929, 1
  %vm3002 = vcmp.eq.s32.totalorder %v2933, 1
  %vm3003 = vcmp.eq.s32.totalorder %v2937, 1
  %vm3004 = vcmp.eq.s32.totalorder %v2941, 1
  %vm3005 = vcmp.eq.s32.totalorder %v2945, 1
  %vm3006 = vcmp.eq.s32.totalorder %v2949, 1
  %vm3007 = vcmp.eq.s32.totalorder %v2953, 1
  %vm3008 = vcmp.eq.s32.totalorder %v2957, 1
  %vm3009 = vcmp.eq.s32.totalorder %v2961, 1
  %vm3010 = vcmp.eq.s32.totalorder %v2965, 1
  %vm3011 = vcmp.eq.s32.totalorder %v2969, 1
  %vm3012 = vcmp.eq.s32.totalorder %v2973, 1
  %vm3013 = vcmp.eq.s32.totalorder %v2977, 1
  %vm3014 = vcmp.eq.s32.totalorder %v2981, 1
  %vm3015 = vcmp.eq.s32.totalorder %v2985, 1
  %vm3016 = vcmp.eq.s32.totalorder %v2989, 1
  %vm3017 = vcmp.eq.s32.totalorder %v2993, 1
  %vm3018 = vcmp.eq.s32.totalorder %v2997, 1
  %3041 = vrot.lane.b32.xlu0 %v2889, 2
  %v3042 = vpop.permute.xlu0 %3041
  %3043 = vrot.lane.b32.xlu0 %v2890, 2
  %v3044 = vpop.permute.xlu0 %3043
  %3045 = vrot.lane.b32.xlu0 %v2891, 2
  %v3046 = vpop.permute.xlu0 %3045
  %3047 = vrot.lane.b32.xlu0 %v2892, 2
  %v3048 = vpop.permute.xlu0 %3047
  %3049 = vrot.lane.b32.xlu0 %v2893, 2
  %v3050 = vpop.permute.xlu0 %3049
  %3051 = vrot.lane.b32.xlu0 %v2894, 2
  %v3052 = vpop.permute.xlu0 %3051
  %3053 = vrot.lane.b32.xlu0 %v2895, 2
  %v3054 = vpop.permute.xlu0 %3053
  %3055 = vrot.lane.b32.xlu0 %v2896, 2
  %v3056 = vpop.permute.xlu0 %3055
  %3057 = vrot.lane.b32.xlu0 %v2897, 2
  %v3058 = vpop.permute.xlu0 %3057
  %3059 = vrot.lane.b32.xlu0 %v2898, 2
  %v3060 = vpop.permute.xlu0 %3059
  %3061 = vrot.lane.b32.xlu0 %v2899, 2
  %v3062 = vpop.permute.xlu0 %3061
  %3063 = vrot.lane.b32.xlu0 %v2900, 2
  %v3064 = vpop.permute.xlu0 %3063
  %3065 = vrot.lane.b32.xlu0 %v2901, 2
  %v3066 = vpop.permute.xlu0 %3065
  %3067 = vrot.lane.b32.xlu0 %v2902, 2
  %v3068 = vpop.permute.xlu0 %3067
  %3069 = vrot.lane.b32.xlu0 %v2903, 2
  %v3070 = vpop.permute.xlu0 %3069
  %3071 = vrot.lane.b32.xlu0 %v2904, 2
  %v3072 = vpop.permute.xlu0 %3071
  %3073 = vrot.lane.b32.xlu0 %v2905, 2
  %v3074 = vpop.permute.xlu0 %3073
  %3075 = vrot.lane.b32.xlu0 %v2906, 2
  %v3076 = vpop.permute.xlu0 %3075
  %3077 = vrot.lane.b32.xlu0 %v2907, 2
  %v3078 = vpop.permute.xlu0 %3077
  %3079 = vrot.lane.b32.xlu0 %v2908, 2
  %v3080 = vpop.permute.xlu0 %3079
  %3081 = vrot.lane.b32.xlu0 %v2909, 2
  %v3082 = vpop.permute.xlu0 %3081
  %3083 = vrot.lane.b32.xlu0 %v2910, 2
  %v3084 = vpop.permute.xlu0 %3083
  %vm3085 = vcmask 15360
  %v3086 = vsel %vm3085, %v3042, %v3044
  %v3087 = vsel %vm3085, %v3044, %v3046
  %v3088 = vsel %vm3085, %v3046, %v3048
  %v3089 = vsel %vm3085, %v3048, %v3050
  %v3090 = vsel %vm3085, %v3050, %v3052
  %v3091 = vsel %vm3085, %v3052, %v3054
  %v3092 = vsel %vm3085, %v3054, %v3056
  %v3093 = vsel %vm3085, %v3056, %v3058
  %v3094 = vsel %vm3085, %v3058, %v3060
  %v3095 = vsel %vm3085, %v3060, %v3062
  %v3096 = vsel %vm3085, %v3062, %v3064
  %v3097 = vsel %vm3085, %v3064, %v3066
  %v3098 = vsel %vm3085, %v3066, %v3068
  %v3099 = vsel %vm3085, %v3068, %v3070
  %v3100 = vsel %vm3085, %v3070, %v3072
  %v3101 = vsel %vm3085, %v3072, %v3074
  %v3102 = vsel %vm3085, %v3074, %v3076
  %v3103 = vsel %vm3085, %v3076, %v3078
  %v3104 = vsel %vm3085, %v3078, %v3080
  %v3105 = vsel %vm3085, %v3080, %v3082
  %v3106 = vsel %vm3085, %v3082, %v3084
  %v3128 = vsel %vm2998, %v3086, %v2825
  %v3129 = vsel %vm2999, %v3087, %v2826
  %v3130 = vsel %vm3000, %v3088, %v2827
  %v3131 = vsel %vm3001, %v3089, %v2828
  %v3132 = vsel %vm3002, %v3090, %v2829
  %v3133 = vsel %vm3003, %v3091, %v2830
  %v3134 = vsel %vm3004, %v3092, %v2831
  %v3135 = vsel %vm3005, %v3093, %v2832
  %v3136 = vsel %vm3006, %v3094, %v2833
  %v3137 = vsel %vm3007, %v3095, %v2834
  %v3138 = vsel %vm3008, %v3096, %v2835
  %v3139 = vsel %vm3009, %v3097, %v2836
  %v3140 = vsel %vm3010, %v3098, %v2837
  %v3141 = vsel %vm3011, %v3099, %v2838
  %v3142 = vsel %vm3012, %v3100, %v2839
  %v3143 = vsel %vm3013, %v3101, %v2840
  %v3144 = vsel %vm3014, %v3102, %v2841
  %v3145 = vsel %vm3015, %v3103, %v2842
  %v3146 = vsel %vm3016, %v3104, %v2843
  %v3147 = vsel %vm3017, %v3105, %v2844
  %v3148 = vsel %vm3018, %v3106, %v2845
  %v3149 = vsel %vm45, 1, 0
  %v3150 = vsel %vm46, 1, 0
  %v3151 = vsel %vm47, 1, 0
  %v3152 = vlaneseq
  %v3153 = vshrl.u32 %v3152, 7
  %v3154 = vsub.s32 0, %v3153
  %v3155 = vrot.slane %v3149, %v3154
  %v3156 = vlaneseq
  %v3157 = vshrl.u32 %v3156, 7
  %v3158 = vsub.s32 1, %v3157
  %v3159 = vrot.slane %v3149, %v3158
  %v3160 = vlaneseq
  %v3161 = vshrl.u32 %v3160, 7
  %v3162 = vsub.s32 2, %v3161
  %v3163 = vrot.slane %v3149, %v3162
  %v3164 = vlaneseq
  %v3165 = vshrl.u32 %v3164, 7
  %v3166 = vsub.s32 3, %v3165
  %v3167 = vrot.slane %v3149, %v3166
  %v3168 = vlaneseq
  %v3169 = vshrl.u32 %v3168, 7
  %v3170 = vsub.s32 4, %v3169
  %v3171 = vrot.slane %v3149, %v3170
  %v3172 = vlaneseq
  %v3173 = vshrl.u32 %v3172, 7
  %v3174 = vsub.s32 5, %v3173
  %v3175 = vrot.slane %v3149, %v3174
  %v3176 = vlaneseq
  %v3177 = vshrl.u32 %v3176, 7
  %v3178 = vsub.s32 6, %v3177
  %v3179 = vrot.slane %v3149, %v3178
  %v3180 = vlaneseq
  %v3181 = vshrl.u32 %v3180, 7
  %v3182 = vsub.s32 7, %v3181
  %v3183 = vrot.slane %v3149, %v3182
  %v3184 = vlaneseq
  %v3185 = vshrl.u32 %v3184, 7
  %v3186 = vsub.s32 0, %v3185
  %v3187 = vrot.slane %v3150, %v3186
  %v3188 = vlaneseq
  %v3189 = vshrl.u32 %v3188, 7
  %v3190 = vsub.s32 1, %v3189
  %v3191 = vrot.slane %v3150, %v3190
  %v3192 = vlaneseq
  %v3193 = vshrl.u32 %v3192, 7
  %v3194 = vsub.s32 2, %v3193
  %v3195 = vrot.slane %v3150, %v3194
  %v3196 = vlaneseq
  %v3197 = vshrl.u32 %v3196, 7
  %v3198 = vsub.s32 3, %v3197
  %v3199 = vrot.slane %v3150, %v3198
  %v3200 = vlaneseq
  %v3201 = vshrl.u32 %v3200, 7
  %v3202 = vsub.s32 4, %v3201
  %v3203 = vrot.slane %v3150, %v3202
  %v3204 = vlaneseq
  %v3205 = vshrl.u32 %v3204, 7
  %v3206 = vsub.s32 5, %v3205
  %v3207 = vrot.slane %v3150, %v3206
  %v3208 = vlaneseq
  %v3209 = vshrl.u32 %v3208, 7
  %v3210 = vsub.s32 6, %v3209
  %v3211 = vrot.slane %v3150, %v3210
  %v3212 = vlaneseq
  %v3213 = vshrl.u32 %v3212, 7
  %v3214 = vsub.s32 7, %v3213
  %v3215 = vrot.slane %v3150, %v3214
  %v3216 = vlaneseq
  %v3217 = vshrl.u32 %v3216, 7
  %v3218 = vsub.s32 0, %v3217
  %v3219 = vrot.slane %v3151, %v3218
  %v3220 = vlaneseq
  %v3221 = vshrl.u32 %v3220, 7
  %v3222 = vsub.s32 1, %v3221
  %v3223 = vrot.slane %v3151, %v3222
  %v3224 = vlaneseq
  %v3225 = vshrl.u32 %v3224, 7
  %v3226 = vsub.s32 2, %v3225
  %v3227 = vrot.slane %v3151, %v3226
  %v3228 = vlaneseq
  %v3229 = vshrl.u32 %v3228, 7
  %v3230 = vsub.s32 3, %v3229
  %v3231 = vrot.slane %v3151, %v3230
  %v3232 = vlaneseq
  %v3233 = vshrl.u32 %v3232, 7
  %v3234 = vsub.s32 4, %v3233
  %v3235 = vrot.slane %v3151, %v3234
  %vm3236 = vcmp.eq.s32.totalorder %v3155, 1
  %vm3237 = vcmp.eq.s32.totalorder %v3159, 1
  %vm3238 = vcmp.eq.s32.totalorder %v3163, 1
  %vm3239 = vcmp.eq.s32.totalorder %v3167, 1
  %vm3240 = vcmp.eq.s32.totalorder %v3171, 1
  %vm3241 = vcmp.eq.s32.totalorder %v3175, 1
  %vm3242 = vcmp.eq.s32.totalorder %v3179, 1
  %vm3243 = vcmp.eq.s32.totalorder %v3183, 1
  %vm3244 = vcmp.eq.s32.totalorder %v3187, 1
  %vm3245 = vcmp.eq.s32.totalorder %v3191, 1
  %vm3246 = vcmp.eq.s32.totalorder %v3195, 1
  %vm3247 = vcmp.eq.s32.totalorder %v3199, 1
  %vm3248 = vcmp.eq.s32.totalorder %v3203, 1
  %vm3249 = vcmp.eq.s32.totalorder %v3207, 1
  %vm3250 = vcmp.eq.s32.totalorder %v3211, 1
  %vm3251 = vcmp.eq.s32.totalorder %v3215, 1
  %vm3252 = vcmp.eq.s32.totalorder %v3219, 1
  %vm3253 = vcmp.eq.s32.totalorder %v3223, 1
  %vm3254 = vcmp.eq.s32.totalorder %v3227, 1
  %vm3255 = vcmp.eq.s32.totalorder %v3231, 1
  %vm3256 = vcmp.eq.s32.totalorder %v3235, 1
  %3279 = vrot.lane.b32.xlu0 %v2867, 126
  %v3280 = vpop.permute.xlu0 %3279
  %3281 = vrot.lane.b32.xlu0 %v2868, 126
  %v3282 = vpop.permute.xlu0 %3281
  %3283 = vrot.lane.b32.xlu0 %v2869, 126
  %v3284 = vpop.permute.xlu0 %3283
  %3285 = vrot.lane.b32.xlu0 %v2870, 126
  %v3286 = vpop.permute.xlu0 %3285
  %3287 = vrot.lane.b32.xlu0 %v2871, 126
  %v3288 = vpop.permute.xlu0 %3287
  %3289 = vrot.lane.b32.xlu0 %v2872, 126
  %v3290 = vpop.permute.xlu0 %3289
  %3291 = vrot.lane.b32.xlu0 %v2873, 126
  %v3292 = vpop.permute.xlu0 %3291
  %3293 = vrot.lane.b32.xlu0 %v2874, 126
  %v3294 = vpop.permute.xlu0 %3293
  %3295 = vrot.lane.b32.xlu0 %v2875, 126
  %v3296 = vpop.permute.xlu0 %3295
  %3297 = vrot.lane.b32.xlu0 %v2876, 126
  %v3298 = vpop.permute.xlu0 %3297
  %3299 = vrot.lane.b32.xlu0 %v2877, 126
  %v3300 = vpop.permute.xlu0 %3299
  %3301 = vrot.lane.b32.xlu0 %v2878, 126
  %v3302 = vpop.permute.xlu0 %3301
  %3303 = vrot.lane.b32.xlu0 %v2879, 126
  %v3304 = vpop.permute.xlu0 %3303
  %3305 = vrot.lane.b32.xlu0 %v2880, 126
  %v3306 = vpop.permute.xlu0 %3305
  %3307 = vrot.lane.b32.xlu0 %v2881, 126
  %v3308 = vpop.permute.xlu0 %3307
  %3309 = vrot.lane.b32.xlu0 %v2882, 126
  %v3310 = vpop.permute.xlu0 %3309
  %3311 = vrot.lane.b32.xlu0 %v2883, 126
  %v3312 = vpop.permute.xlu0 %3311
  %3313 = vrot.lane.b32.xlu0 %v2884, 126
  %v3314 = vpop.permute.xlu0 %3313
  %3315 = vrot.lane.b32.xlu0 %v2885, 126
  %v3316 = vpop.permute.xlu0 %3315
  %3317 = vrot.lane.b32.xlu0 %v2886, 126
  %v3318 = vpop.permute.xlu0 %3317
  %3319 = vrot.lane.b32.xlu0 %v2887, 126
  %v3320 = vpop.permute.xlu0 %3319
  %3321 = vrot.lane.b32.xlu0 %v2888, 126
  %v3322 = vpop.permute.xlu0 %3321
  %vm3323 = vcmask 1031168
  %v3324 = vsel %vm3323, %v3280, %v3282
  %v3325 = vsel %vm3323, %v3282, %v3284
  %v3326 = vsel %vm3323, %v3284, %v3286
  %v3327 = vsel %vm3323, %v3286, %v3288
  %v3328 = vsel %vm3323, %v3288, %v3290
  %v3329 = vsel %vm3323, %v3290, %v3292
  %v3330 = vsel %vm3323, %v3292, %v3294
  %v3331 = vsel %vm3323, %v3294, %v3296
  %v3332 = vsel %vm3323, %v3296, %v3298
  %v3333 = vsel %vm3323, %v3298, %v3300
  %v3334 = vsel %vm3323, %v3300, %v3302
  %v3335 = vsel %vm3323, %v3302, %v3304
  %v3336 = vsel %vm3323, %v3304, %v3306
  %v3337 = vsel %vm3323, %v3306, %v3308
  %v3338 = vsel %vm3323, %v3308, %v3310
  %v3339 = vsel %vm3323, %v3310, %v3312
  %v3340 = vsel %vm3323, %v3312, %v3314
  %v3341 = vsel %vm3323, %v3314, %v3316
  %v3342 = vsel %vm3323, %v3316, %v3318
  %v3343 = vsel %vm3323, %v3318, %v3320
  %v3344 = vsel %vm3323, %v3320, %v3322
  %v3366 = vsel %vm3236, %v3324, %v3128
  %v3367 = vsel %vm3237, %v3325, %v3129
  %v3368 = vsel %vm3238, %v3326, %v3130
  %v3369 = vsel %vm3239, %v3327, %v3131
  %v3370 = vsel %vm3240, %v3328, %v3132
  %v3371 = vsel %vm3241, %v3329, %v3133
  %v3372 = vsel %vm3242, %v3330, %v3134
  %v3373 = vsel %vm3243, %v3331, %v3135
  %v3374 = vsel %vm3244, %v3332, %v3136
  %v3375 = vsel %vm3245, %v3333, %v3137
  %v3376 = vsel %vm3246, %v3334, %v3138
  %v3377 = vsel %vm3247, %v3335, %v3139
  %v3378 = vsel %vm3248, %v3336, %v3140
  %v3379 = vsel %vm3249, %v3337, %v3141
  %v3380 = vsel %vm3250, %v3338, %v3142
  %v3381 = vsel %vm3251, %v3339, %v3143
  %v3382 = vsel %vm3252, %v3340, %v3144
  %v3383 = vsel %vm3253, %v3341, %v3145
  %v3384 = vsel %vm3254, %v3342, %v3146
  %v3385 = vsel %vm3255, %v3343, %v3147
  %v3386 = vsel %vm3256, %v3344, %v3148
  %3387 = vrot.lane.b32.xlu0 %v2867, 94
  %v3388 = vpop.permute.xlu0 %3387
  %3389 = vrot.lane.b32.xlu0 %v2868, 94
  %v3390 = vpop.permute.xlu0 %3389
  %3391 = vrot.lane.b32.xlu0 %v2869, 94
  %v3392 = vpop.permute.xlu0 %3391
  %3393 = vrot.lane.b32.xlu0 %v2870, 94
  %v3394 = vpop.permute.xlu0 %3393
  %3395 = vrot.lane.b32.xlu0 %v2871, 94
  %v3396 = vpop.permute.xlu0 %3395
  %3397 = vrot.lane.b32.xlu0 %v2872, 94
  %v3398 = vpop.permute.xlu0 %3397
  %3399 = vrot.lane.b32.xlu0 %v2873, 94
  %v3400 = vpop.permute.xlu0 %3399
  %3401 = vrot.lane.b32.xlu0 %v2874, 94
  %v3402 = vpop.permute.xlu0 %3401
  %3403 = vrot.lane.b32.xlu0 %v2875, 94
  %v3404 = vpop.permute.xlu0 %3403
  %3405 = vrot.lane.b32.xlu0 %v2876, 94
  %v3406 = vpop.permute.xlu0 %3405
  %3407 = vrot.lane.b32.xlu0 %v2877, 94
  %v3408 = vpop.permute.xlu0 %3407
  %3409 = vrot.lane.b32.xlu0 %v2878, 94
  %v3410 = vpop.permute.xlu0 %3409
  %3411 = vrot.lane.b32.xlu0 %v2879, 94
  %v3412 = vpop.permute.xlu0 %3411
  %3413 = vrot.lane.b32.xlu0 %v2880, 94
  %v3414 = vpop.permute.xlu0 %3413
  %3415 = vrot.lane.b32.xlu0 %v2881, 94
  %v3416 = vpop.permute.xlu0 %3415
  %3417 = vrot.lane.b32.xlu0 %v2882, 94
  %v3418 = vpop.permute.xlu0 %3417
  %3419 = vrot.lane.b32.xlu0 %v2883, 94
  %v3420 = vpop.permute.xlu0 %3419
  %3421 = vrot.lane.b32.xlu0 %v2884, 94
  %v3422 = vpop.permute.xlu0 %3421
  %3423 = vrot.lane.b32.xlu0 %v2885, 94
  %v3424 = vpop.permute.xlu0 %3423
  %3425 = vrot.lane.b32.xlu0 %v2886, 94
  %v3426 = vpop.permute.xlu0 %3425
  %3427 = vrot.lane.b32.xlu0 %v2887, 94
  %v3428 = vpop.permute.xlu0 %3427
  %3429 = vrot.lane.b32.xlu0 %v2888, 94
  %v3430 = vpop.permute.xlu0 %3429
  %vm3431 = vcmask 769024
  %v3432 = vsel %vm3431, %v3388, %v3390
  %v3433 = vsel %vm3431, %v3390, %v3392
  %v3434 = vsel %vm3431, %v3392, %v3394
  %v3435 = vsel %vm3431, %v3394, %v3396
  %v3436 = vsel %vm3431, %v3396, %v3398
  %v3437 = vsel %vm3431, %v3398, %v3400
  %v3438 = vsel %vm3431, %v3400, %v3402
  %v3439 = vsel %vm3431, %v3402, %v3404
  %v3440 = vsel %vm3431, %v3404, %v3406
  %v3441 = vsel %vm3431, %v3406, %v3408
  %v3442 = vsel %vm3431, %v3408, %v3410
  %v3443 = vsel %vm3431, %v3410, %v3412
  %v3444 = vsel %vm3431, %v3412, %v3414
  %v3445 = vsel %vm3431, %v3414, %v3416
  %v3446 = vsel %vm3431, %v3416, %v3418
  %v3447 = vsel %vm3431, %v3418, %v3420
  %v3448 = vsel %vm3431, %v3420, %v3422
  %v3449 = vsel %vm3431, %v3422, %v3424
  %v3450 = vsel %vm3431, %v3424, %v3426
  %v3451 = vsel %vm3431, %v3426, %v3428
  %v3452 = vsel %vm3431, %v3428, %v3430
  %3474 = vrot.lane.b32.xlu0 %v2867, 92
  %v3475 = vpop.permute.xlu0 %3474
  %3476 = vrot.lane.b32.xlu0 %v2868, 92
  %v3477 = vpop.permute.xlu0 %3476
  %3478 = vrot.lane.b32.xlu0 %v2869, 92
  %v3479 = vpop.permute.xlu0 %3478
  %3480 = vrot.lane.b32.xlu0 %v2870, 92
  %v3481 = vpop.permute.xlu0 %3480
  %3482 = vrot.lane.b32.xlu0 %v2871, 92
  %v3483 = vpop.permute.xlu0 %3482
  %3484 = vrot.lane.b32.xlu0 %v2872, 92
  %v3485 = vpop.permute.xlu0 %3484
  %3486 = vrot.lane.b32.xlu0 %v2873, 92
  %v3487 = vpop.permute.xlu0 %3486
  %3488 = vrot.lane.b32.xlu0 %v2874, 92
  %v3489 = vpop.permute.xlu0 %3488
  %3490 = vrot.lane.b32.xlu0 %v2875, 92
  %v3491 = vpop.permute.xlu0 %3490
  %3492 = vrot.lane.b32.xlu0 %v2876, 92
  %v3493 = vpop.permute.xlu0 %3492
  %3494 = vrot.lane.b32.xlu0 %v2877, 92
  %v3495 = vpop.permute.xlu0 %3494
  %3496 = vrot.lane.b32.xlu0 %v2878, 92
  %v3497 = vpop.permute.xlu0 %3496
  %3498 = vrot.lane.b32.xlu0 %v2879, 92
  %v3499 = vpop.permute.xlu0 %3498
  %3500 = vrot.lane.b32.xlu0 %v2880, 92
  %v3501 = vpop.permute.xlu0 %3500
  %3502 = vrot.lane.b32.xlu0 %v2881, 92
  %v3503 = vpop.permute.xlu0 %3502
  %3504 = vrot.lane.b32.xlu0 %v2882, 92
  %v3505 = vpop.permute.xlu0 %3504
  %3506 = vrot.lane.b32.xlu0 %v2883, 92
  %v3507 = vpop.permute.xlu0 %3506
  %3508 = vrot.lane.b32.xlu0 %v2884, 92
  %v3509 = vpop.permute.xlu0 %3508
  %3510 = vrot.lane.b32.xlu0 %v2885, 92
  %v3511 = vpop.permute.xlu0 %3510
  %3512 = vrot.lane.b32.xlu0 %v2886, 92
  %v3513 = vpop.permute.xlu0 %3512
  %3514 = vrot.lane.b32.xlu0 %v2887, 92
  %v3515 = vpop.permute.xlu0 %3514
  %3516 = vrot.lane.b32.xlu0 %v2888, 92
  %v3517 = vpop.permute.xlu0 %3516
  %vm3518 = vcmask 752640
  %v3519 = vsel %vm3518, %v3475, %v3477
  %v3520 = vsel %vm3518, %v3477, %v3479
  %v3521 = vsel %vm3518, %v3479, %v3481
  %v3522 = vsel %vm3518, %v3481, %v3483
  %v3523 = vsel %vm3518, %v3483, %v3485
  %v3524 = vsel %vm3518, %v3485, %v3487
  %v3525 = vsel %vm3518, %v3487, %v3489
  %v3526 = vsel %vm3518, %v3489, %v3491
  %v3527 = vsel %vm3518, %v3491, %v3493
  %v3528 = vsel %vm3518, %v3493, %v3495
  %v3529 = vsel %vm3518, %v3495, %v3497
  %v3530 = vsel %vm3518, %v3497, %v3499
  %v3531 = vsel %vm3518, %v3499, %v3501
  %v3532 = vsel %vm3518, %v3501, %v3503
  %v3533 = vsel %vm3518, %v3503, %v3505
  %v3534 = vsel %vm3518, %v3505, %v3507
  %v3535 = vsel %vm3518, %v3507, %v3509
  %v3536 = vsel %vm3518, %v3509, %v3511
  %v3537 = vsel %vm3518, %v3511, %v3513
  %v3538 = vsel %vm3518, %v3513, %v3515
  %v3539 = vsel %vm3518, %v3515, %v3517
  %v3561 = vsel %vm2998, %v3432, %v3519
  %v3562 = vsel %vm2999, %v3433, %v3520
  %v3563 = vsel %vm3000, %v3434, %v3521
  %v3564 = vsel %vm3001, %v3435, %v3522
  %v3565 = vsel %vm3002, %v3436, %v3523
  %v3566 = vsel %vm3003, %v3437, %v3524
  %v3567 = vsel %vm3004, %v3438, %v3525
  %v3568 = vsel %vm3005, %v3439, %v3526
  %v3569 = vsel %vm3006, %v3440, %v3527
  %v3570 = vsel %vm3007, %v3441, %v3528
  %v3571 = vsel %vm3008, %v3442, %v3529
  %v3572 = vsel %vm3009, %v3443, %v3530
  %v3573 = vsel %vm3010, %v3444, %v3531
  %v3574 = vsel %vm3011, %v3445, %v3532
  %v3575 = vsel %vm3012, %v3446, %v3533
  %v3576 = vsel %vm3013, %v3447, %v3534
  %v3577 = vsel %vm3014, %v3448, %v3535
  %v3578 = vsel %vm3015, %v3449, %v3536
  %v3579 = vsel %vm3016, %v3450, %v3537
  %v3580 = vsel %vm3017, %v3451, %v3538
  %v3581 = vsel %vm3018, %v3452, %v3539
  %3582 = vrot.lane.b32.xlu0 %v2867, 90
  %v3583 = vpop.permute.xlu0 %3582
  %3584 = vrot.lane.b32.xlu0 %v2868, 90
  %v3585 = vpop.permute.xlu0 %3584
  %3586 = vrot.lane.b32.xlu0 %v2869, 90
  %v3587 = vpop.permute.xlu0 %3586
  %3588 = vrot.lane.b32.xlu0 %v2870, 90
  %v3589 = vpop.permute.xlu0 %3588
  %3590 = vrot.lane.b32.xlu0 %v2871, 90
  %v3591 = vpop.permute.xlu0 %3590
  %3592 = vrot.lane.b32.xlu0 %v2872, 90
  %v3593 = vpop.permute.xlu0 %3592
  %3594 = vrot.lane.b32.xlu0 %v2873, 90
  %v3595 = vpop.permute.xlu0 %3594
  %3596 = vrot.lane.b32.xlu0 %v2874, 90
  %v3597 = vpop.permute.xlu0 %3596
  %3598 = vrot.lane.b32.xlu0 %v2875, 90
  %v3599 = vpop.permute.xlu0 %3598
  %3600 = vrot.lane.b32.xlu0 %v2876, 90
  %v3601 = vpop.permute.xlu0 %3600
  %3602 = vrot.lane.b32.xlu0 %v2877, 90
  %v3603 = vpop.permute.xlu0 %3602
  %3604 = vrot.lane.b32.xlu0 %v2878, 90
  %v3605 = vpop.permute.xlu0 %3604
  %3606 = vrot.lane.b32.xlu0 %v2879, 90
  %v3607 = vpop.permute.xlu0 %3606
  %3608 = vrot.lane.b32.xlu0 %v2880, 90
  %v3609 = vpop.permute.xlu0 %3608
  %3610 = vrot.lane.b32.xlu0 %v2881, 90
  %v3611 = vpop.permute.xlu0 %3610
  %3612 = vrot.lane.b32.xlu0 %v2882, 90
  %v3613 = vpop.permute.xlu0 %3612
  %3614 = vrot.lane.b32.xlu0 %v2883, 90
  %v3615 = vpop.permute.xlu0 %3614
  %3616 = vrot.lane.b32.xlu0 %v2884, 90
  %v3617 = vpop.permute.xlu0 %3616
  %3618 = vrot.lane.b32.xlu0 %v2885, 90
  %v3619 = vpop.permute.xlu0 %3618
  %3620 = vrot.lane.b32.xlu0 %v2886, 90
  %v3621 = vpop.permute.xlu0 %3620
  %3622 = vrot.lane.b32.xlu0 %v2887, 90
  %v3623 = vpop.permute.xlu0 %3622
  %3624 = vrot.lane.b32.xlu0 %v2888, 90
  %v3625 = vpop.permute.xlu0 %3624
  %vm3626 = vcmask 736256
  %v3627 = vsel %vm3626, %v3583, %v3585
  %v3628 = vsel %vm3626, %v3585, %v3587
  %v3629 = vsel %vm3626, %v3587, %v3589
  %v3630 = vsel %vm3626, %v3589, %v3591
  %v3631 = vsel %vm3626, %v3591, %v3593
  %v3632 = vsel %vm3626, %v3593, %v3595
  %v3633 = vsel %vm3626, %v3595, %v3597
  %v3634 = vsel %vm3626, %v3597, %v3599
  %v3635 = vsel %vm3626, %v3599, %v3601
  %v3636 = vsel %vm3626, %v3601, %v3603
  %v3637 = vsel %vm3626, %v3603, %v3605
  %v3638 = vsel %vm3626, %v3605, %v3607
  %v3639 = vsel %vm3626, %v3607, %v3609
  %v3640 = vsel %vm3626, %v3609, %v3611
  %v3641 = vsel %vm3626, %v3611, %v3613
  %v3642 = vsel %vm3626, %v3613, %v3615
  %v3643 = vsel %vm3626, %v3615, %v3617
  %v3644 = vsel %vm3626, %v3617, %v3619
  %v3645 = vsel %vm3626, %v3619, %v3621
  %v3646 = vsel %vm3626, %v3621, %v3623
  %v3647 = vsel %vm3626, %v3623, %v3625
  %v3669 = vsel %vm3236, %v3627, %v3561
  %v3670 = vsel %vm3237, %v3628, %v3562
  %v3671 = vsel %vm3238, %v3629, %v3563
  %v3672 = vsel %vm3239, %v3630, %v3564
  %v3673 = vsel %vm3240, %v3631, %v3565
  %v3674 = vsel %vm3241, %v3632, %v3566
  %v3675 = vsel %vm3242, %v3633, %v3567
  %v3676 = vsel %vm3243, %v3634, %v3568
  %v3677 = vsel %vm3244, %v3635, %v3569
  %v3678 = vsel %vm3245, %v3636, %v3570
  %v3679 = vsel %vm3246, %v3637, %v3571
  %v3680 = vsel %vm3247, %v3638, %v3572
  %v3681 = vsel %vm3248, %v3639, %v3573
  %v3682 = vsel %vm3249, %v3640, %v3574
  %v3683 = vsel %vm3250, %v3641, %v3575
  %v3684 = vsel %vm3251, %v3642, %v3576
  %v3685 = vsel %vm3252, %v3643, %v3577
  %v3686 = vsel %vm3253, %v3644, %v3578
  %v3687 = vsel %vm3254, %v3645, %v3579
  %v3688 = vsel %vm3255, %v3646, %v3580
  %v3689 = vsel %vm3256, %v3647, %v3581
  %3690 = vrot.lane.b32.xlu0 %v2889, 38
  %v3691 = vpop.permute.xlu0 %3690
  %3692 = vrot.lane.b32.xlu0 %v2890, 38
  %v3693 = vpop.permute.xlu0 %3692
  %3694 = vrot.lane.b32.xlu0 %v2891, 38
  %v3695 = vpop.permute.xlu0 %3694
  %3696 = vrot.lane.b32.xlu0 %v2892, 38
  %v3697 = vpop.permute.xlu0 %3696
  %3698 = vrot.lane.b32.xlu0 %v2893, 38
  %v3699 = vpop.permute.xlu0 %3698
  %3700 = vrot.lane.b32.xlu0 %v2894, 38
  %v3701 = vpop.permute.xlu0 %3700
  %3702 = vrot.lane.b32.xlu0 %v2895, 38
  %v3703 = vpop.permute.xlu0 %3702
  %3704 = vrot.lane.b32.xlu0 %v2896, 38
  %v3705 = vpop.permute.xlu0 %3704
  %3706 = vrot.lane.b32.xlu0 %v2897, 38
  %v3707 = vpop.permute.xlu0 %3706
  %3708 = vrot.lane.b32.xlu0 %v2898, 38
  %v3709 = vpop.permute.xlu0 %3708
  %3710 = vrot.lane.b32.xlu0 %v2899, 38
  %v3711 = vpop.permute.xlu0 %3710
  %3712 = vrot.lane.b32.xlu0 %v2900, 38
  %v3713 = vpop.permute.xlu0 %3712
  %3714 = vrot.lane.b32.xlu0 %v2901, 38
  %v3715 = vpop.permute.xlu0 %3714
  %3716 = vrot.lane.b32.xlu0 %v2902, 38
  %v3717 = vpop.permute.xlu0 %3716
  %3718 = vrot.lane.b32.xlu0 %v2903, 38
  %v3719 = vpop.permute.xlu0 %3718
  %3720 = vrot.lane.b32.xlu0 %v2904, 38
  %v3721 = vpop.permute.xlu0 %3720
  %3722 = vrot.lane.b32.xlu0 %v2905, 38
  %v3723 = vpop.permute.xlu0 %3722
  %3724 = vrot.lane.b32.xlu0 %v2906, 38
  %v3725 = vpop.permute.xlu0 %3724
  %3726 = vrot.lane.b32.xlu0 %v2907, 38
  %v3727 = vpop.permute.xlu0 %3726
  %3728 = vrot.lane.b32.xlu0 %v2908, 38
  %v3729 = vpop.permute.xlu0 %3728
  %3730 = vrot.lane.b32.xlu0 %v2909, 38
  %v3731 = vpop.permute.xlu0 %3730
  %3732 = vrot.lane.b32.xlu0 %v2910, 38
  %v3733 = vpop.permute.xlu0 %3732
  %vm3734 = vcmask 310272
  %v3735 = vsel %vm3734, %v3691, %v3693
  %v3736 = vsel %vm3734, %v3693, %v3695
  %v3737 = vsel %vm3734, %v3695, %v3697
  %v3738 = vsel %vm3734, %v3697, %v3699
  %v3739 = vsel %vm3734, %v3699, %v3701
  %v3740 = vsel %vm3734, %v3701, %v3703
  %v3741 = vsel %vm3734, %v3703, %v3705
  %v3742 = vsel %vm3734, %v3705, %v3707
  %v3743 = vsel %vm3734, %v3707, %v3709
  %v3744 = vsel %vm3734, %v3709, %v3711
  %v3745 = vsel %vm3734, %v3711, %v3713
  %v3746 = vsel %vm3734, %v3713, %v3715
  %v3747 = vsel %vm3734, %v3715, %v3717
  %v3748 = vsel %vm3734, %v3717, %v3719
  %v3749 = vsel %vm3734, %v3719, %v3721
  %v3750 = vsel %vm3734, %v3721, %v3723
  %v3751 = vsel %vm3734, %v3723, %v3725
  %v3752 = vsel %vm3734, %v3725, %v3727
  %v3753 = vsel %vm3734, %v3727, %v3729
  %v3754 = vsel %vm3734, %v3729, %v3731
  %v3755 = vsel %vm3734, %v3731, %v3733
  %3777 = vrot.lane.b32.xlu0 %v2889, 36
  %v3778 = vpop.permute.xlu0 %3777
  %3779 = vrot.lane.b32.xlu0 %v2890, 36
  %v3780 = vpop.permute.xlu0 %3779
  %3781 = vrot.lane.b32.xlu0 %v2891, 36
  %v3782 = vpop.permute.xlu0 %3781
  %3783 = vrot.lane.b32.xlu0 %v2892, 36
  %v3784 = vpop.permute.xlu0 %3783
  %3785 = vrot.lane.b32.xlu0 %v2893, 36
  %v3786 = vpop.permute.xlu0 %3785
  %3787 = vrot.lane.b32.xlu0 %v2894, 36
  %v3788 = vpop.permute.xlu0 %3787
  %3789 = vrot.lane.b32.xlu0 %v2895, 36
  %v3790 = vpop.permute.xlu0 %3789
  %3791 = vrot.lane.b32.xlu0 %v2896, 36
  %v3792 = vpop.permute.xlu0 %3791
  %3793 = vrot.lane.b32.xlu0 %v2897, 36
  %v3794 = vpop.permute.xlu0 %3793
  %3795 = vrot.lane.b32.xlu0 %v2898, 36
  %v3796 = vpop.permute.xlu0 %3795
  %3797 = vrot.lane.b32.xlu0 %v2899, 36
  %v3798 = vpop.permute.xlu0 %3797
  %3799 = vrot.lane.b32.xlu0 %v2900, 36
  %v3800 = vpop.permute.xlu0 %3799
  %3801 = vrot.lane.b32.xlu0 %v2901, 36
  %v3802 = vpop.permute.xlu0 %3801
  %3803 = vrot.lane.b32.xlu0 %v2902, 36
  %v3804 = vpop.permute.xlu0 %3803
  %3805 = vrot.lane.b32.xlu0 %v2903, 36
  %v3806 = vpop.permute.xlu0 %3805
  %3807 = vrot.lane.b32.xlu0 %v2904, 36
  %v3808 = vpop.permute.xlu0 %3807
  %3809 = vrot.lane.b32.xlu0 %v2905, 36
  %v3810 = vpop.permute.xlu0 %3809
  %3811 = vrot.lane.b32.xlu0 %v2906, 36
  %v3812 = vpop.permute.xlu0 %3811
  %3813 = vrot.lane.b32.xlu0 %v2907, 36
  %v3814 = vpop.permute.xlu0 %3813
  %3815 = vrot.lane.b32.xlu0 %v2908, 36
  %v3816 = vpop.permute.xlu0 %3815
  %3817 = vrot.lane.b32.xlu0 %v2909, 36
  %v3818 = vpop.permute.xlu0 %3817
  %3819 = vrot.lane.b32.xlu0 %v2910, 36
  %v3820 = vpop.permute.xlu0 %3819
  %v3821 = vsel %vm2012, %v3778, %v3780
  %v3822 = vsel %vm2012, %v3780, %v3782
  %v3823 = vsel %vm2012, %v3782, %v3784
  %v3824 = vsel %vm2012, %v3784, %v3786
  %v3825 = vsel %vm2012, %v3786, %v3788
  %v3826 = vsel %vm2012, %v3788, %v3790
  %v3827 = vsel %vm2012, %v3790, %v3792
  %v3828 = vsel %vm2012, %v3792, %v3794
  %v3829 = vsel %vm2012, %v3794, %v3796
  %v3830 = vsel %vm2012, %v3796, %v3798
  %v3831 = vsel %vm2012, %v3798, %v3800
  %v3832 = vsel %vm2012, %v3800, %v3802
  %v3833 = vsel %vm2012, %v3802, %v3804
  %v3834 = vsel %vm2012, %v3804, %v3806
  %v3835 = vsel %vm2012, %v3806, %v3808
  %v3836 = vsel %vm2012, %v3808, %v3810
  %v3837 = vsel %vm2012, %v3810, %v3812
  %v3838 = vsel %vm2012, %v3812, %v3814
  %v3839 = vsel %vm2012, %v3814, %v3816
  %v3840 = vsel %vm2012, %v3816, %v3818
  %v3841 = vsel %vm2012, %v3818, %v3820
  %v3863 = vsel %vm2998, %v3735, %v3821
  %v3864 = vsel %vm2999, %v3736, %v3822
  %v3865 = vsel %vm3000, %v3737, %v3823
  %v3866 = vsel %vm3001, %v3738, %v3824
  %v3867 = vsel %vm3002, %v3739, %v3825
  %v3868 = vsel %vm3003, %v3740, %v3826
  %v3869 = vsel %vm3004, %v3741, %v3827
  %v3870 = vsel %vm3005, %v3742, %v3828
  %v3871 = vsel %vm3006, %v3743, %v3829
  %v3872 = vsel %vm3007, %v3744, %v3830
  %v3873 = vsel %vm3008, %v3745, %v3831
  %v3874 = vsel %vm3009, %v3746, %v3832
  %v3875 = vsel %vm3010, %v3747, %v3833
  %v3876 = vsel %vm3011, %v3748, %v3834
  %v3877 = vsel %vm3012, %v3749, %v3835
  %v3878 = vsel %vm3013, %v3750, %v3836
  %v3879 = vsel %vm3014, %v3751, %v3837
  %v3880 = vsel %vm3015, %v3752, %v3838
  %v3881 = vsel %vm3016, %v3753, %v3839
  %v3882 = vsel %vm3017, %v3754, %v3840
  %v3883 = vsel %vm3018, %v3755, %v3841
  %3884 = vrot.lane.b32.xlu0 %v2889, 34
  %v3885 = vpop.permute.xlu0 %3884
  %3886 = vrot.lane.b32.xlu0 %v2890, 34
  %v3887 = vpop.permute.xlu0 %3886
  %3888 = vrot.lane.b32.xlu0 %v2891, 34
  %v3889 = vpop.permute.xlu0 %3888
  %3890 = vrot.lane.b32.xlu0 %v2892, 34
  %v3891 = vpop.permute.xlu0 %3890
  %3892 = vrot.lane.b32.xlu0 %v2893, 34
  %v3893 = vpop.permute.xlu0 %3892
  %3894 = vrot.lane.b32.xlu0 %v2894, 34
  %v3895 = vpop.permute.xlu0 %3894
  %3896 = vrot.lane.b32.xlu0 %v2895, 34
  %v3897 = vpop.permute.xlu0 %3896
  %3898 = vrot.lane.b32.xlu0 %v2896, 34
  %v3899 = vpop.permute.xlu0 %3898
  %3900 = vrot.lane.b32.xlu0 %v2897, 34
  %v3901 = vpop.permute.xlu0 %3900
  %3902 = vrot.lane.b32.xlu0 %v2898, 34
  %v3903 = vpop.permute.xlu0 %3902
  %3904 = vrot.lane.b32.xlu0 %v2899, 34
  %v3905 = vpop.permute.xlu0 %3904
  %3906 = vrot.lane.b32.xlu0 %v2900, 34
  %v3907 = vpop.permute.xlu0 %3906
  %3908 = vrot.lane.b32.xlu0 %v2901, 34
  %v3909 = vpop.permute.xlu0 %3908
  %3910 = vrot.lane.b32.xlu0 %v2902, 34
  %v3911 = vpop.permute.xlu0 %3910
  %3912 = vrot.lane.b32.xlu0 %v2903, 34
  %v3913 = vpop.permute.xlu0 %3912
  %3914 = vrot.lane.b32.xlu0 %v2904, 34
  %v3915 = vpop.permute.xlu0 %3914
  %3916 = vrot.lane.b32.xlu0 %v2905, 34
  %v3917 = vpop.permute.xlu0 %3916
  %3918 = vrot.lane.b32.xlu0 %v2906, 34
  %v3919 = vpop.permute.xlu0 %3918
  %3920 = vrot.lane.b32.xlu0 %v2907, 34
  %v3921 = vpop.permute.xlu0 %3920
  %3922 = vrot.lane.b32.xlu0 %v2908, 34
  %v3923 = vpop.permute.xlu0 %3922
  %3924 = vrot.lane.b32.xlu0 %v2909, 34
  %v3925 = vpop.permute.xlu0 %3924
  %3926 = vrot.lane.b32.xlu0 %v2910, 34
  %v3927 = vpop.permute.xlu0 %3926
  %vm3928 = vcmask 277504
  %v3929 = vsel %vm3928, %v3885, %v3887
  %v3930 = vsel %vm3928, %v3887, %v3889
  %v3931 = vsel %vm3928, %v3889, %v3891
  %v3932 = vsel %vm3928, %v3891, %v3893
  %v3933 = vsel %vm3928, %v3893, %v3895
  %v3934 = vsel %vm3928, %v3895, %v3897
  %v3935 = vsel %vm3928, %v3897, %v3899
  %v3936 = vsel %vm3928, %v3899, %v3901
  %v3937 = vsel %vm3928, %v3901, %v3903
  %v3938 = vsel %vm3928, %v3903, %v3905
  %v3939 = vsel %vm3928, %v3905, %v3907
  %v3940 = vsel %vm3928, %v3907, %v3909
  %v3941 = vsel %vm3928, %v3909, %v3911
  %v3942 = vsel %vm3928, %v3911, %v3913
  %v3943 = vsel %vm3928, %v3913, %v3915
  %v3944 = vsel %vm3928, %v3915, %v3917
  %v3945 = vsel %vm3928, %v3917, %v3919
  %v3946 = vsel %vm3928, %v3919, %v3921
  %v3947 = vsel %vm3928, %v3921, %v3923
  %v3948 = vsel %vm3928, %v3923, %v3925
  %v3949 = vsel %vm3928, %v3925, %v3927
  %v3971 = vsel %vm3236, %v3929, %v3863
  %v3972 = vsel %vm3237, %v3930, %v3864
  %v3973 = vsel %vm3238, %v3931, %v3865
  %v3974 = vsel %vm3239, %v3932, %v3866
  %v3975 = vsel %vm3240, %v3933, %v3867
  %v3976 = vsel %vm3241, %v3934, %v3868
  %v3977 = vsel %vm3242, %v3935, %v3869
  %v3978 = vsel %vm3243, %v3936, %v3870
  %v3979 = vsel %vm3244, %v3937, %v3871
  %v3980 = vsel %vm3245, %v3938, %v3872
  %v3981 = vsel %vm3246, %v3939, %v3873
  %v3982 = vsel %vm3247, %v3940, %v3874
  %v3983 = vsel %vm3248, %v3941, %v3875
  %v3984 = vsel %vm3249, %v3942, %v3876
  %v3985 = vsel %vm3250, %v3943, %v3877
  %v3986 = vsel %vm3251, %v3944, %v3878
  %v3987 = vsel %vm3252, %v3945, %v3879
  %v3988 = vsel %vm3253, %v3946, %v3880
  %v3989 = vsel %vm3254, %v3947, %v3881
  %v3990 = vsel %vm3255, %v3948, %v3882
  %v3991 = vsel %vm3256, %v3949, %v3883
  %v3992 = vsel %vm54, 1, 0
  %v3993 = vsel %vm55, 1, 0
  %v3994 = vsel %vm56, 1, 0
  %v3995 = vlaneseq
  %v3996 = vshrl.u32 %v3995, 7
  %v3997 = vsub.s32 0, %v3996
  %v3998 = vrot.slane %v3992, %v3997
  %v3999 = vlaneseq
  %v4000 = vshrl.u32 %v3999, 7
  %v4001 = vsub.s32 1, %v4000
  %v4002 = vrot.slane %v3992, %v4001
  %v4003 = vlaneseq
  %v4004 = vshrl.u32 %v4003, 7
  %v4005 = vsub.s32 2, %v4004
  %v4006 = vrot.slane %v3992, %v4005
  %v4007 = vlaneseq
  %v4008 = vshrl.u32 %v4007, 7
  %v4009 = vsub.s32 3, %v4008
  %v4010 = vrot.slane %v3992, %v4009
  %v4011 = vlaneseq
  %v4012 = vshrl.u32 %v4011, 7
  %v4013 = vsub.s32 4, %v4012
  %v4014 = vrot.slane %v3992, %v4013
  %v4015 = vlaneseq
  %v4016 = vshrl.u32 %v4015, 7
  %v4017 = vsub.s32 5, %v4016
  %v4018 = vrot.slane %v3992, %v4017
  %v4019 = vlaneseq
  %v4020 = vshrl.u32 %v4019, 7
  %v4021 = vsub.s32 6, %v4020
  %v4022 = vrot.slane %v3992, %v4021
  %v4023 = vlaneseq
  %v4024 = vshrl.u32 %v4023, 7
  %v4025 = vsub.s32 7, %v4024
  %v4026 = vrot.slane %v3992, %v4025
  %v4027 = vlaneseq
  %v4028 = vshrl.u32 %v4027, 7
  %v4029 = vsub.s32 0, %v4028
  %v4030 = vrot.slane %v3993, %v4029
  %v4031 = vlaneseq
  %v4032 = vshrl.u32 %v4031, 7
  %v4033 = vsub.s32 1, %v4032
  %v4034 = vrot.slane %v3993, %v4033
  %v4035 = vlaneseq
  %v4036 = vshrl.u32 %v4035, 7
  %v4037 = vsub.s32 2, %v4036
  %v4038 = vrot.slane %v3993, %v4037
  %v4039 = vlaneseq
  %v4040 = vshrl.u32 %v4039, 7
  %v4041 = vsub.s32 3, %v4040
  %v4042 = vrot.slane %v3993, %v4041
  %v4043 = vlaneseq
  %v4044 = vshrl.u32 %v4043, 7
  %v4045 = vsub.s32 4, %v4044
  %v4046 = vrot.slane %v3993, %v4045
  %v4047 = vlaneseq
  %v4048 = vshrl.u32 %v4047, 7
  %v4049 = vsub.s32 5, %v4048
  %v4050 = vrot.slane %v3993, %v4049
  %v4051 = vlaneseq
  %v4052 = vshrl.u32 %v4051, 7
  %v4053 = vsub.s32 6, %v4052
  %v4054 = vrot.slane %v3993, %v4053
  %v4055 = vlaneseq
  %v4056 = vshrl.u32 %v4055, 7
  %v4057 = vsub.s32 7, %v4056
  %v4058 = vrot.slane %v3993, %v4057
  %v4059 = vlaneseq
  %v4060 = vshrl.u32 %v4059, 7
  %v4061 = vsub.s32 0, %v4060
  %v4062 = vrot.slane %v3994, %v4061
  %v4063 = vlaneseq
  %v4064 = vshrl.u32 %v4063, 7
  %v4065 = vsub.s32 1, %v4064
  %v4066 = vrot.slane %v3994, %v4065
  %v4067 = vlaneseq
  %v4068 = vshrl.u32 %v4067, 7
  %v4069 = vsub.s32 2, %v4068
  %v4070 = vrot.slane %v3994, %v4069
  %v4071 = vlaneseq
  %v4072 = vshrl.u32 %v4071, 7
  %v4073 = vsub.s32 3, %v4072
  %v4074 = vrot.slane %v3994, %v4073
  %v4075 = vlaneseq
  %v4076 = vshrl.u32 %v4075, 7
  %v4077 = vsub.s32 4, %v4076
  %v4078 = vrot.slane %v3994, %v4077
  %vm4079 = vcmp.eq.s32.totalorder %v3998, 1
  %vm4080 = vcmp.eq.s32.totalorder %v4002, 1
  %vm4081 = vcmp.eq.s32.totalorder %v4006, 1
  %vm4082 = vcmp.eq.s32.totalorder %v4010, 1
  %vm4083 = vcmp.eq.s32.totalorder %v4014, 1
  %vm4084 = vcmp.eq.s32.totalorder %v4018, 1
  %vm4085 = vcmp.eq.s32.totalorder %v4022, 1
  %vm4086 = vcmp.eq.s32.totalorder %v4026, 1
  %vm4087 = vcmp.eq.s32.totalorder %v4030, 1
  %vm4088 = vcmp.eq.s32.totalorder %v4034, 1
  %vm4089 = vcmp.eq.s32.totalorder %v4038, 1
  %vm4090 = vcmp.eq.s32.totalorder %v4042, 1
  %vm4091 = vcmp.eq.s32.totalorder %v4046, 1
  %vm4092 = vcmp.eq.s32.totalorder %v4050, 1
  %vm4093 = vcmp.eq.s32.totalorder %v4054, 1
  %vm4094 = vcmp.eq.s32.totalorder %v4058, 1
  %vm4095 = vcmp.eq.s32.totalorder %v4062, 1
  %vm4096 = vcmp.eq.s32.totalorder %v4066, 1
  %vm4097 = vcmp.eq.s32.totalorder %v4070, 1
  %vm4098 = vcmp.eq.s32.totalorder %v4074, 1
  %vm4099 = vcmp.eq.s32.totalorder %v4078, 1
  %v4100 = vsel %vm4079, %v3971, %v3366
  %v4101 = vsel %vm4080, %v3972, %v3367
  %v4102 = vsel %vm4081, %v3973, %v3368
  %v4103 = vsel %vm4082, %v3974, %v3369
  %v4104 = vsel %vm4083, %v3975, %v3370
  %v4105 = vsel %vm4084, %v3976, %v3371
  %v4106 = vsel %vm4085, %v3977, %v3372
  %v4107 = vsel %vm4086, %v3978, %v3373
  %v4108 = vsel %vm4087, %v3979, %v3374
  %v4109 = vsel %vm4088, %v3980, %v3375
  %v4110 = vsel %vm4089, %v3981, %v3376
  %v4111 = vsel %vm4090, %v3982, %v3377
  %v4112 = vsel %vm4091, %v3983, %v3378
  %v4113 = vsel %vm4092, %v3984, %v3379
  %v4114 = vsel %vm4093, %v3985, %v3380
  %v4115 = vsel %vm4094, %v3986, %v3381
  %v4116 = vsel %vm4095, %v3987, %v3382
  %v4117 = vsel %vm4096, %v3988, %v3383
  %v4118 = vsel %vm4097, %v3989, %v3384
  %v4119 = vsel %vm4098, %v3990, %v3385
  %v4120 = vsel %vm4099, %v3991, %v3386
  %v4121 = vsel %vm51, 1, 0
  %v4122 = vsel %vm52, 1, 0
  %v4123 = vsel %vm53, 1, 0
  %v4124 = vlaneseq
  %v4125 = vshrl.u32 %v4124, 7
  %v4126 = vsub.s32 0, %v4125
  %v4127 = vrot.slane %v4121, %v4126
  %v4128 = vlaneseq
  %v4129 = vshrl.u32 %v4128, 7
  %v4130 = vsub.s32 1, %v4129
  %v4131 = vrot.slane %v4121, %v4130
  %v4132 = vlaneseq
  %v4133 = vshrl.u32 %v4132, 7
  %v4134 = vsub.s32 2, %v4133
  %v4135 = vrot.slane %v4121, %v4134
  %v4136 = vlaneseq
  %v4137 = vshrl.u32 %v4136, 7
  %v4138 = vsub.s32 3, %v4137
  %v4139 = vrot.slane %v4121, %v4138
  %v4140 = vlaneseq
  %v4141 = vshrl.u32 %v4140, 7
  %v4142 = vsub.s32 4, %v4141
  %v4143 = vrot.slane %v4121, %v4142
  %v4144 = vlaneseq
  %v4145 = vshrl.u32 %v4144, 7
  %v4146 = vsub.s32 5, %v4145
  %v4147 = vrot.slane %v4121, %v4146
  %v4148 = vlaneseq
  %v4149 = vshrl.u32 %v4148, 7
  %v4150 = vsub.s32 6, %v4149
  %v4151 = vrot.slane %v4121, %v4150
  %v4152 = vlaneseq
  %v4153 = vshrl.u32 %v4152, 7
  %v4154 = vsub.s32 7, %v4153
  %v4155 = vrot.slane %v4121, %v4154
  %v4156 = vlaneseq
  %v4157 = vshrl.u32 %v4156, 7
  %v4158 = vsub.s32 0, %v4157
  %v4159 = vrot.slane %v4122, %v4158
  %v4160 = vlaneseq
  %v4161 = vshrl.u32 %v4160, 7
  %v4162 = vsub.s32 1, %v4161
  %v4163 = vrot.slane %v4122, %v4162
  %v4164 = vlaneseq
  %v4165 = vshrl.u32 %v4164, 7
  %v4166 = vsub.s32 2, %v4165
  %v4167 = vrot.slane %v4122, %v4166
  %v4168 = vlaneseq
  %v4169 = vshrl.u32 %v4168, 7
  %v4170 = vsub.s32 3, %v4169
  %v4171 = vrot.slane %v4122, %v4170
  %v4172 = vlaneseq
  %v4173 = vshrl.u32 %v4172, 7
  %v4174 = vsub.s32 4, %v4173
  %v4175 = vrot.slane %v4122, %v4174
  %v4176 = vlaneseq
  %v4177 = vshrl.u32 %v4176, 7
  %v4178 = vsub.s32 5, %v4177
  %v4179 = vrot.slane %v4122, %v4178
  %v4180 = vlaneseq
  %v4181 = vshrl.u32 %v4180, 7
  %v4182 = vsub.s32 6, %v4181
  %v4183 = vrot.slane %v4122, %v4182
  %v4184 = vlaneseq
  %v4185 = vshrl.u32 %v4184, 7
  %v4186 = vsub.s32 7, %v4185
  %v4187 = vrot.slane %v4122, %v4186
  %v4188 = vlaneseq
  %v4189 = vshrl.u32 %v4188, 7
  %v4190 = vsub.s32 0, %v4189
  %v4191 = vrot.slane %v4123, %v4190
  %v4192 = vlaneseq
  %v4193 = vshrl.u32 %v4192, 7
  %v4194 = vsub.s32 1, %v4193
  %v4195 = vrot.slane %v4123, %v4194
  %v4196 = vlaneseq
  %v4197 = vshrl.u32 %v4196, 7
  %v4198 = vsub.s32 2, %v4197
  %v4199 = vrot.slane %v4123, %v4198
  %v4200 = vlaneseq
  %v4201 = vshrl.u32 %v4200, 7
  %v4202 = vsub.s32 3, %v4201
  %v4203 = vrot.slane %v4123, %v4202
  %v4204 = vlaneseq
  %v4205 = vshrl.u32 %v4204, 7
  %v4206 = vsub.s32 4, %v4205
  %v4207 = vrot.slane %v4123, %v4206
  %vm4208 = vcmp.eq.s32.totalorder %v4127, 1
  %vm4209 = vcmp.eq.s32.totalorder %v4131, 1
  %vm4210 = vcmp.eq.s32.totalorder %v4135, 1
  %vm4211 = vcmp.eq.s32.totalorder %v4139, 1
  %vm4212 = vcmp.eq.s32.totalorder %v4143, 1
  %vm4213 = vcmp.eq.s32.totalorder %v4147, 1
  %vm4214 = vcmp.eq.s32.totalorder %v4151, 1
  %vm4215 = vcmp.eq.s32.totalorder %v4155, 1
  %vm4216 = vcmp.eq.s32.totalorder %v4159, 1
  %vm4217 = vcmp.eq.s32.totalorder %v4163, 1
  %vm4218 = vcmp.eq.s32.totalorder %v4167, 1
  %vm4219 = vcmp.eq.s32.totalorder %v4171, 1
  %vm4220 = vcmp.eq.s32.totalorder %v4175, 1
  %vm4221 = vcmp.eq.s32.totalorder %v4179, 1
  %vm4222 = vcmp.eq.s32.totalorder %v4183, 1
  %vm4223 = vcmp.eq.s32.totalorder %v4187, 1
  %vm4224 = vcmp.eq.s32.totalorder %v4191, 1
  %vm4225 = vcmp.eq.s32.totalorder %v4195, 1
  %vm4226 = vcmp.eq.s32.totalorder %v4199, 1
  %vm4227 = vcmp.eq.s32.totalorder %v4203, 1
  %vm4228 = vcmp.eq.s32.totalorder %v4207, 1
  %v4229 = vsel %vm4208, %v3669, %v4100
  %v4230 = vsel %vm4209, %v3670, %v4101
  %v4231 = vsel %vm4210, %v3671, %v4102
  %v4232 = vsel %vm4211, %v3672, %v4103
  %v4233 = vsel %vm4212, %v3673, %v4104
  %v4234 = vsel %vm4213, %v3674, %v4105
  %v4235 = vsel %vm4214, %v3675, %v4106
  %v4236 = vsel %vm4215, %v3676, %v4107
  %v4237 = vsel %vm4216, %v3677, %v4108
  %v4238 = vsel %vm4217, %v3678, %v4109
  %v4239 = vsel %vm4218, %v3679, %v4110
  %v4240 = vsel %vm4219, %v3680, %v4111
  %v4241 = vsel %vm4220, %v3681, %v4112
  %v4242 = vsel %vm4221, %v3682, %v4113
  %v4243 = vsel %vm4222, %v3683, %v4114
  %v4244 = vsel %vm4223, %v3684, %v4115
  %v4245 = vsel %vm4224, %v3685, %v4116
  %v4246 = vsel %vm4225, %v3686, %v4117
  %v4247 = vsel %vm4226, %v3687, %v4118
  %v4248 = vsel %vm4227, %v3688, %v4119
  %v4249 = vsel %vm4228, %v3689, %v4120
  %4250 = vst [vmem:[#allocation2 + $0x8] sm:$0xff] %v4229
  %4251 = vst [vmem:[#allocation2 + $0x10] sm:$0xff] %v4230
  %4252 = vst [vmem:[#allocation2 + $0x18] sm:$0xff] %v4231
  %4253 = vst [vmem:[#allocation2 + $0x20] sm:$0xff] %v4232
  %4254 = vst [vmem:[#allocation2 + $0x28] sm:$0xff] %v4233
  %4255 = vst [vmem:[#allocation2 + $0x30] sm:$0xff] %v4234
  %4256 = vst [vmem:[#allocation2 + $0x38] sm:$0xff] %v4235
  %4257 = vst [vmem:[#allocation2 + $0x40] sm:$0xff] %v4236
  %4258 = vst [vmem:[#allocation2 + $0x48] sm:$0xff] %v4237
  %4259 = vst [vmem:[#allocation2 + $0x50] sm:$0xff] %v4238
  %4260 = vst [vmem:[#allocation2 + $0x58] sm:$0xff] %v4239
  %4261 = vst [vmem:[#allocation2 + $0x60] sm:$0xff] %v4240
  %4262 = vst [vmem:[#allocation2 + $0x68] sm:$0xff] %v4241
  %4263 = vst [vmem:[#allocation2 + $0x70] sm:$0xff] %v4242
  %4264 = vst [vmem:[#allocation2 + $0x78] sm:$0xff] %v4243
  %4265 = vst [vmem:[#allocation2 + $0x80] sm:$0xff] %v4244
  %4266 = vst [vmem:[#allocation2 + $0x88] sm:$0xff] %v4245
  %4267 = vst [vmem:[#allocation2 + $0x90] sm:$0xff] %v4246
  %4268 = vst [vmem:[#allocation2 + $0x98] sm:$0xff] %v4247
  %4269 = vst [vmem:[#allocation2 + $0xa0] sm:$0xff] %v4248
  %4270 = vst [vmem:[#allocation2 + $0xa8] sm:$0xff] %v4249
  %v4271 = vld [vmem:[#allocation2] sm:$0xff]
  %v4272 = vld [vmem:[#allocation2 + $0x8] sm:$0xff]
  %v4273 = vld [vmem:[#allocation2 + $0x10] sm:$0xff]
  %v4274 = vld [vmem:[#allocation2 + $0x18] sm:$0xff]
  %v4275 = vld [vmem:[#allocation2 + $0x20] sm:$0xff]
  %v4276 = vld [vmem:[#allocation2 + $0x28] sm:$0xff]
  %v4277 = vld [vmem:[#allocation2 + $0x30] sm:$0xff]
  %v4278 = vld [vmem:[#allocation2 + $0x38] sm:$0xff]
  %v4279 = vld [vmem:[#allocation2 + $0x40] sm:$0xff]
  %v4280 = vld [vmem:[#allocation2 + $0x48] sm:$0xff]
  %v4281 = vld [vmem:[#allocation2 + $0x50] sm:$0xff]
  %v4282 = vld [vmem:[#allocation2 + $0x58] sm:$0xff]
  %v4283 = vld [vmem:[#allocation2 + $0x60] sm:$0xff]
  %v4284 = vld [vmem:[#allocation2 + $0x68] sm:$0xff]
  %v4285 = vld [vmem:[#allocation2 + $0x70] sm:$0xff]
  %v4286 = vld [vmem:[#allocation2 + $0x78] sm:$0xff]
  %v4287 = vld [vmem:[#allocation2 + $0x80] sm:$0xff]
  %v4288 = vld [vmem:[#allocation2 + $0x88] sm:$0xff]
  %v4289 = vld [vmem:[#allocation2 + $0x90] sm:$0xff]
  %v4290 = vld [vmem:[#allocation2 + $0x98] sm:$0xff]
  %v4291 = vld [vmem:[#allocation2 + $0xa0] sm:$0xff]
  %v4292 = vld [vmem:[#allocation2 + $0xa8] sm:$0xff]
  %v4293 = vpack.c.bf16 %v4271, %v4271
  %v4294 = vpack.c.bf16 %v4272, %v4272
  %v4295 = vpack.c.bf16 %v4273, %v4273
  %v4296 = vpack.c.bf16 %v4274, %v4274
  %v4297 = vpack.c.bf16 %v4275, %v4275
  %v4298 = vpack.c.bf16 %v4276, %v4276
  %v4299 = vpack.c.bf16 %v4277, %v4277
  %v4300 = vpack.c.bf16 %v4278, %v4278
  %v4301 = vpack.c.bf16 %v4279, %v4279
  %v4302 = vpack.c.bf16 %v4280, %v4280
  %v4303 = vpack.c.bf16 %v4281, %v4281
  %v4304 = vpack.c.bf16 %v4282, %v4282
  %v4305 = vpack.c.bf16 %v4283, %v4283
  %v4306 = vpack.c.bf16 %v4284, %v4284
  %v4307 = vpack.c.bf16 %v4285, %v4285
  %v4308 = vpack.c.bf16 %v4286, %v4286
  %v4309 = vpack.c.bf16 %v4287, %v4287
  %v4310 = vpack.c.bf16 %v4288, %v4288
  %v4311 = vpack.c.bf16 %v4289, %v4289
  %v4312 = vpack.c.bf16 %v4290, %v4290
  %v4313 = vpack.c.bf16 %v4291, %v4291
  %v4314 = vpack.c.bf16 %v4292, %v4292
  %v4337 = vunpack.c.l.b16 %v4293
  %v4338 = vunpack.c.l.b16 %v4294
  %v4339 = vunpack.c.l.b16 %v4295
  %v4340 = vunpack.c.l.b16 %v4296
  %v4341 = vunpack.c.l.b16 %v4297
  %v4342 = vunpack.c.l.b16 %v4298
  %v4343 = vunpack.c.l.b16 %v4299
  %v4344 = vunpack.c.l.b16 %v4300
  %v4345 = vunpack.c.l.b16 %v4301
  %v4346 = vunpack.c.l.b16 %v4302
  %v4347 = vunpack.c.l.b16 %v4303
  %v4348 = vunpack.c.l.b16 %v4304
  %v4349 = vunpack.c.l.b16 %v4305
  %v4350 = vunpack.c.l.b16 %v4306
  %v4351 = vunpack.c.l.b16 %v4307
  %v4352 = vunpack.c.l.b16 %v4308
  %v4353 = vunpack.c.l.b16 %v4309
  %v4354 = vunpack.c.l.b16 %v4310
  %v4355 = vunpack.c.l.b16 %v4311
  %v4356 = vunpack.c.l.b16 %v4312
  %v4357 = vunpack.c.l.b16 %v4313
  %v4358 = vunpack.c.l.b16 %v4314
  %v4359 = vpack.c.b16 %v4338, %v4337
  %v4360 = vpack.c.b16 %v4340, %v4339
  %v4361 = vpack.c.b16 %v4342, %v4341
  %v4362 = vpack.c.b16 %v4344, %v4343
  %v4363 = vpack.c.b16 %v4346, %v4345
  %v4364 = vpack.c.b16 %v4348, %v4347
  %v4365 = vpack.c.b16 %v4350, %v4349
  %v4366 = vpack.c.b16 %v4352, %v4351
  %v4367 = vpack.c.b16 %v4354, %v4353
  %v4368 = vpack.c.b16 %v4356, %v4355
  %v4369 = vpack.c.b16 %v4358, %v4357
  %4370 = vrot.lane.b32.xlu0 %v4359, 19
  %v4371 = vpop.permute.xlu0 %4370
  %4372 = vrot.lane.b32.xlu0 %v4360, 19
  %v4373 = vpop.permute.xlu0 %4372
  %4374 = vrot.lane.b32.xlu0 %v4361, 19
  %v4375 = vpop.permute.xlu0 %4374
  %4376 = vrot.lane.b32.xlu0 %v4362, 19
  %v4377 = vpop.permute.xlu0 %4376
  %4378 = vrot.lane.b32.xlu0 %v4363, 19
  %v4379 = vpop.permute.xlu0 %4378
  %4380 = vrot.lane.b32.xlu0 %v4364, 19
  %v4381 = vpop.permute.xlu0 %4380
  %4382 = vrot.lane.b32.xlu0 %v4365, 19
  %v4383 = vpop.permute.xlu0 %4382
  %4384 = vrot.lane.b32.xlu0 %v4366, 19
  %v4385 = vpop.permute.xlu0 %4384
  %4386 = vrot.lane.b32.xlu0 %v4367, 19
  %v4387 = vpop.permute.xlu0 %4386
  %4388 = vrot.lane.b32.xlu0 %v4368, 19
  %v4389 = vpop.permute.xlu0 %4388
  %4390 = vrot.lane.b32.xlu0 %v4369, 19
  %v4391 = vpop.permute.xlu0 %4390
  %v4392 = vrot.slane %v4371, 4
  %v4393 = vrot.slane %v4373, 4
  %v4394 = vrot.slane %v4375, 4
  %v4395 = vrot.slane %v4377, 4
  %v4396 = vrot.slane %v4379, 4
  %v4397 = vrot.slane %v4381, 4
  %v4398 = vrot.slane %v4383, 4
  %v4399 = vrot.slane %v4385, 4
  %v4400 = vrot.slane %v4387, 4
  %v4401 = vrot.slane %v4389, 4
  %v4402 = vrot.slane %v4391, 4
  %v4403 = vsel %vm253, %v4392, %v4393
  %v4404 = vsel %vm255, %v4371, %v4403
  %v4405 = vsel %vm253, %v4393, %v4394
  %v4406 = vsel %vm255, %v4373, %v4405
  %v4407 = vsel %vm253, %v4394, %v4395
  %v4408 = vsel %vm255, %v4375, %v4407
  %v4409 = vsel %vm253, %v4395, %v4396
  %v4410 = vsel %vm255, %v4377, %v4409
  %v4411 = vsel %vm253, %v4396, %v4397
  %v4412 = vsel %vm255, %v4379, %v4411
  %v4413 = vsel %vm253, %v4397, %v4398
  %v4414 = vsel %vm255, %v4381, %v4413
  %v4415 = vsel %vm253, %v4398, %v4399
  %v4416 = vsel %vm255, %v4383, %v4415
  %v4417 = vsel %vm253, %v4399, %v4400
  %v4418 = vsel %vm255, %v4385, %v4417
  %v4419 = vsel %vm253, %v4400, %v4401
  %v4420 = vsel %vm255, %v4387, %v4419
  %v4421 = vsel %vm253, %v4401, %v4402
  %v4422 = vsel %vm255, %v4389, %v4421
  %v4423 = vsel %vm255, %v4391, %v4402
  %4435 = vst [vmem:[#allocation3] sm:$0xff] %v4404
  %4436 = vst [vmem:[#allocation3 + $0x8] sm:$0xff] %v4406
  %4437 = vst [vmem:[#allocation3 + $0x10] sm:$0xff] %v4408
  %4438 = vst [vmem:[#allocation3 + $0x18] sm:$0xff] %v4410
  %4439 = vst [vmem:[#allocation3 + $0x20] sm:$0xff] %v4412
  %4440 = vst [vmem:[#allocation3 + $0x28] sm:$0xff] %v4414
  %4441 = vst [vmem:[#allocation3 + $0x30] sm:$0xff] %v4416
  %4442 = vst [vmem:[#allocation3 + $0x38] sm:$0xff] %v4418
  %4443 = vst [vmem:[#allocation3 + $0x40] sm:$0xff] %v4420
  %4444 = vst [vmem:[#allocation3 + $0x48] sm:$0xff] %v4422
  %4445 = vst [vmem:[#allocation3 + $0x50] sm:$0xf] %v4423
  %v4446 = vld [vmem:[#allocation2] sm:$0xff]
  %v4447 = vld [vmem:[#allocation2 + $0x8] sm:$0xff]
  %v4448 = vld [vmem:[#allocation2 + $0x10] sm:$0xff]
  %v4449 = vld [vmem:[#allocation2 + $0x18] sm:$0xff]
  %v4450 = vld [vmem:[#allocation2 + $0x20] sm:$0xff]
  %v4451 = vld [vmem:[#allocation2 + $0x28] sm:$0xff]
  %v4452 = vld [vmem:[#allocation2 + $0x30] sm:$0xff]
  %v4453 = vld [vmem:[#allocation2 + $0x38] sm:$0xff]
  %v4454 = vld [vmem:[#allocation2 + $0x40] sm:$0xff]
  %v4455 = vld [vmem:[#allocation2 + $0x48] sm:$0xff]
  %v4456 = vld [vmem:[#allocation2 + $0x50] sm:$0xff]
  %v4457 = vld [vmem:[#allocation2 + $0x58] sm:$0xff]
  %v4458 = vld [vmem:[#allocation2 + $0x60] sm:$0xff]
  %v4459 = vld [vmem:[#allocation2 + $0x68] sm:$0xff]
  %v4460 = vld [vmem:[#allocation2 + $0x70] sm:$0xff]
  %v4461 = vld [vmem:[#allocation2 + $0x78] sm:$0xff]
  %v4462 = vld [vmem:[#allocation2 + $0x80] sm:$0xff]
  %v4463 = vld [vmem:[#allocation2 + $0x88] sm:$0xff]
  %v4464 = vld [vmem:[#allocation2 + $0x90] sm:$0xff]
  %v4465 = vld [vmem:[#allocation2 + $0x98] sm:$0xff]
  %v4466 = vld [vmem:[#allocation2 + $0xa0] sm:$0xff]
  %v4467 = vld [vmem:[#allocation2 + $0xa8] sm:$0xff]
  %v4468 = vpack.c.bf16 %v4446, %v4446
  %v4469 = vpack.c.bf16 %v4447, %v4447
  %v4470 = vpack.c.bf16 %v4448, %v4448
  %v4471 = vpack.c.bf16 %v4449, %v4449
  %v4472 = vpack.c.bf16 %v4450, %v4450
  %v4473 = vpack.c.bf16 %v4451, %v4451
  %v4474 = vpack.c.bf16 %v4452, %v4452
  %v4475 = vpack.c.bf16 %v4453, %v4453
  %v4476 = vpack.c.bf16 %v4454, %v4454
  %v4477 = vpack.c.bf16 %v4455, %v4455
  %v4478 = vpack.c.bf16 %v4456, %v4456
  %v4479 = vpack.c.bf16 %v4457, %v4457
  %v4480 = vpack.c.bf16 %v4458, %v4458
  %v4481 = vpack.c.bf16 %v4459, %v4459
  %v4482 = vpack.c.bf16 %v4460, %v4460
  %v4483 = vpack.c.bf16 %v4461, %v4461
  %v4484 = vpack.c.bf16 %v4462, %v4462
  %v4485 = vpack.c.bf16 %v4463, %v4463
  %v4486 = vpack.c.bf16 %v4464, %v4464
  %v4487 = vpack.c.bf16 %v4465, %v4465
  %v4488 = vpack.c.bf16 %v4466, %v4466
  %v4489 = vpack.c.bf16 %v4467, %v4467
  %v4512 = vunpack.c.l.b16 %v4468
  %v4513 = vunpack.c.l.b16 %v4469
  %v4514 = vunpack.c.l.b16 %v4470
  %v4515 = vunpack.c.l.b16 %v4471
  %v4516 = vunpack.c.l.b16 %v4472
  %v4517 = vunpack.c.l.b16 %v4473
  %v4518 = vunpack.c.l.b16 %v4474
  %v4519 = vunpack.c.l.b16 %v4475
  %v4520 = vunpack.c.l.b16 %v4476
  %v4521 = vunpack.c.l.b16 %v4477
  %v4522 = vunpack.c.l.b16 %v4478
  %v4523 = vunpack.c.l.b16 %v4479
  %v4524 = vunpack.c.l.b16 %v4480
  %v4525 = vunpack.c.l.b16 %v4481
  %v4526 = vunpack.c.l.b16 %v4482
  %v4527 = vunpack.c.l.b16 %v4483
  %v4528 = vunpack.c.l.b16 %v4484
  %v4529 = vunpack.c.l.b16 %v4485
  %v4530 = vunpack.c.l.b16 %v4486
  %v4531 = vunpack.c.l.b16 %v4487
  %v4532 = vunpack.c.l.b16 %v4488
  %v4533 = vunpack.c.l.b16 %v4489
  %v4534 = vpack.c.b16 %v4513, %v4512
  %v4535 = vpack.c.b16 %v4515, %v4514
  %v4536 = vpack.c.b16 %v4517, %v4516
  %v4537 = vpack.c.b16 %v4519, %v4518
  %v4538 = vpack.c.b16 %v4521, %v4520
  %v4539 = vpack.c.b16 %v4523, %v4522
  %v4540 = vpack.c.b16 %v4525, %v4524
  %v4541 = vpack.c.b16 %v4527, %v4526
  %v4542 = vpack.c.b16 %v4529, %v4528
  %v4543 = vpack.c.b16 %v4531, %v4530
  %v4544 = vpack.c.b16 %v4533, %v4532
  %4545 = vrot.lane.b32.xlu0 %v4534, 18
  %v4546 = vpop.permute.xlu0 %4545
  %4547 = vrot.lane.b32.xlu0 %v4535, 18
  %v4548 = vpop.permute.xlu0 %4547
  %4549 = vrot.lane.b32.xlu0 %v4536, 18
  %v4550 = vpop.permute.xlu0 %4549
  %4551 = vrot.lane.b32.xlu0 %v4537, 18
  %v4552 = vpop.permute.xlu0 %4551
  %4553 = vrot.lane.b32.xlu0 %v4538, 18
  %v4554 = vpop.permute.xlu0 %4553
  %4555 = vrot.lane.b32.xlu0 %v4539, 18
  %v4556 = vpop.permute.xlu0 %4555
  %4557 = vrot.lane.b32.xlu0 %v4540, 18
  %v4558 = vpop.permute.xlu0 %4557
  %4559 = vrot.lane.b32.xlu0 %v4541, 18
  %v4560 = vpop.permute.xlu0 %4559
  %4561 = vrot.lane.b32.xlu0 %v4542, 18
  %v4562 = vpop.permute.xlu0 %4561
  %4563 = vrot.lane.b32.xlu0 %v4543, 18
  %v4564 = vpop.permute.xlu0 %4563
  %4565 = vrot.lane.b32.xlu0 %v4544, 18
  %v4566 = vpop.permute.xlu0 %4565
  %v4567 = vrot.slane %v4546, 4
  %v4568 = vrot.slane %v4548, 4
  %v4569 = vrot.slane %v4550, 4
  %v4570 = vrot.slane %v4552, 4
  %v4571 = vrot.slane %v4554, 4
  %v4572 = vrot.slane %v4556, 4
  %v4573 = vrot.slane %v4558, 4
  %v4574 = vrot.slane %v4560, 4
  %v4575 = vrot.slane %v4562, 4
  %v4576 = vrot.slane %v4564, 4
  %v4577 = vrot.slane %v4566, 4
  %v4578 = vsel %vm253, %v4567, %v4568
  %v4579 = vsel %vm442, %v4546, %v4578
  %v4580 = vsel %vm253, %v4568, %v4569
  %v4581 = vsel %vm442, %v4548, %v4580
  %v4582 = vsel %vm253, %v4569, %v4570
  %v4583 = vsel %vm442, %v4550, %v4582
  %v4584 = vsel %vm253, %v4570, %v4571
  %v4585 = vsel %vm442, %v4552, %v4584
  %v4586 = vsel %vm253, %v4571, %v4572
  %v4587 = vsel %vm442, %v4554, %v4586
  %v4588 = vsel %vm253, %v4572, %v4573
  %v4589 = vsel %vm442, %v4556, %v4588
  %v4590 = vsel %vm253, %v4573, %v4574
  %v4591 = vsel %vm442, %v4558, %v4590
  %v4592 = vsel %vm253, %v4574, %v4575
  %v4593 = vsel %vm442, %v4560, %v4592
  %v4594 = vsel %vm253, %v4575, %v4576
  %v4595 = vsel %vm442, %v4562, %v4594
  %v4596 = vsel %vm253, %v4576, %v4577
  %v4597 = vsel %vm442, %v4564, %v4596
  %v4598 = vsel %vm442, %v4566, %v4577
  %4610 = vst [vmem:[#allocation3 + $0x54] sm:$0xff] %v4579
  %4611 = vst [vmem:[#allocation3 + $0x5c] sm:$0xff] %v4581
  %4612 = vst [vmem:[#allocation3 + $0x64] sm:$0xff] %v4583
  %4613 = vst [vmem:[#allocation3 + $0x6c] sm:$0xff] %v4585
  %4614 = vst [vmem:[#allocation3 + $0x74] sm:$0xff] %v4587
  %4615 = vst [vmem:[#allocation3 + $0x7c] sm:$0xff] %v4589
  %4616 = vst [vmem:[#allocation3 + $0x84] sm:$0xff] %v4591
  %4617 = vst [vmem:[#allocation3 + $0x8c] sm:$0xff] %v4593
  %4618 = vst [vmem:[#allocation3 + $0x94] sm:$0xff] %v4595
  %4619 = vst [vmem:[#allocation3 + $0x9c] sm:$0xff] %v4597
  %4620 = vst [vmem:[#allocation3 + $0xa4] sm:$0xf] %v4598
  %v4621 = vld [vmem:[#allocation2] sm:$0xff]
  %v4622 = vld [vmem:[#allocation2 + $0x8] sm:$0xff]
  %v4623 = vld [vmem:[#allocation2 + $0x10] sm:$0xff]
  %v4624 = vld [vmem:[#allocation2 + $0x18] sm:$0xff]
  %v4625 = vld [vmem:[#allocation2 + $0x20] sm:$0xff]
  %v4626 = vld [vmem:[#allocation2 + $0x28] sm:$0xff]
  %v4627 = vld [vmem:[#allocation2 + $0x30] sm:$0xff]
  %v4628 = vld [vmem:[#allocation2 + $0x38] sm:$0xff]
  %v4629 = vld [vmem:[#allocation2 + $0x40] sm:$0xff]
  %v4630 = vld [vmem:[#allocation2 + $0x48] sm:$0xff]
  %v4631 = vld [vmem:[#allocation2 + $0x50] sm:$0xff]
  %v4632 = vld [vmem:[#allocation2 + $0x58] sm:$0xff]
  %v4633 = vld [vmem:[#allocation2 + $0x60] sm:$0xff]
  %v4634 = vld [vmem:[#allocation2 + $0x68] sm:$0xff]
  %v4635 = vld [vmem:[#allocation2 + $0x70] sm:$0xff]
  %v4636 = vld [vmem:[#allocation2 + $0x78] sm:$0xff]
  %v4637 = vld [vmem:[#allocation2 + $0x80] sm:$0xff]
  %v4638 = vld [vmem:[#allocation2 + $0x88] sm:$0xff]
  %v4639 = vld [vmem:[#allocation2 + $0x90] sm:$0xff]
  %v4640 = vld [vmem:[#allocation2 + $0x98] sm:$0xff]
  %v4641 = vld [vmem:[#allocation2 + $0xa0] sm:$0xff]
  %v4642 = vld [vmem:[#allocation2 + $0xa8] sm:$0xff]
  %v4643 = vpack.c.bf16 %v4621, %v4621
  %v4644 = vpack.c.bf16 %v4622, %v4622
  %v4645 = vpack.c.bf16 %v4623, %v4623
  %v4646 = vpack.c.bf16 %v4624, %v4624
  %v4647 = vpack.c.bf16 %v4625, %v4625
  %v4648 = vpack.c.bf16 %v4626, %v4626
  %v4649 = vpack.c.bf16 %v4627, %v4627
  %v4650 = vpack.c.bf16 %v4628, %v4628
  %v4651 = vpack.c.bf16 %v4629, %v4629
  %v4652 = vpack.c.bf16 %v4630, %v4630
  %v4653 = vpack.c.bf16 %v4631, %v4631
  %v4654 = vpack.c.bf16 %v4632, %v4632
  %v4655 = vpack.c.bf16 %v4633, %v4633
  %v4656 = vpack.c.bf16 %v4634, %v4634
  %v4657 = vpack.c.bf16 %v4635, %v4635
  %v4658 = vpack.c.bf16 %v4636, %v4636
  %v4659 = vpack.c.bf16 %v4637, %v4637
  %v4660 = vpack.c.bf16 %v4638, %v4638
  %v4661 = vpack.c.bf16 %v4639, %v4639
  %v4662 = vpack.c.bf16 %v4640, %v4640
  %v4663 = vpack.c.bf16 %v4641, %v4641
  %v4664 = vpack.c.bf16 %v4642, %v4642
  %v4687 = vunpack.c.l.b16 %v4643
  %v4688 = vunpack.c.l.b16 %v4644
  %v4689 = vunpack.c.l.b16 %v4645
  %v4690 = vunpack.c.l.b16 %v4646
  %v4691 = vunpack.c.l.b16 %v4647
  %v4692 = vunpack.c.l.b16 %v4648
  %v4693 = vunpack.c.l.b16 %v4649
  %v4694 = vunpack.c.l.b16 %v4650
  %v4695 = vunpack.c.l.b16 %v4651
  %v4696 = vunpack.c.l.b16 %v4652
  %v4697 = vunpack.c.l.b16 %v4653
  %v4698 = vunpack.c.l.b16 %v4654
  %v4699 = vunpack.c.l.b16 %v4655
  %v4700 = vunpack.c.l.b16 %v4656
  %v4701 = vunpack.c.l.b16 %v4657
  %v4702 = vunpack.c.l.b16 %v4658
  %v4703 = vunpack.c.l.b16 %v4659
  %v4704 = vunpack.c.l.b16 %v4660
  %v4705 = vunpack.c.l.b16 %v4661
  %v4706 = vunpack.c.l.b16 %v4662
  %v4707 = vunpack.c.l.b16 %v4663
  %v4708 = vunpack.c.l.b16 %v4664
  %v4709 = vpack.c.b16 %v4688, %v4687
  %v4710 = vpack.c.b16 %v4690, %v4689
  %v4711 = vpack.c.b16 %v4692, %v4691
  %v4712 = vpack.c.b16 %v4694, %v4693
  %v4713 = vpack.c.b16 %v4696, %v4695
  %v4714 = vpack.c.b16 %v4698, %v4697
  %v4715 = vpack.c.b16 %v4700, %v4699
  %v4716 = vpack.c.b16 %v4702, %v4701
  %v4717 = vpack.c.b16 %v4704, %v4703
  %v4718 = vpack.c.b16 %v4706, %v4705
  %v4719 = vpack.c.b16 %v4708, %v4707
  %4720 = vrot.lane.b32.xlu0 %v4709, 17
  %v4721 = vpop.permute.xlu0 %4720
  %4722 = vrot.lane.b32.xlu0 %v4710, 17
  %v4723 = vpop.permute.xlu0 %4722
  %4724 = vrot.lane.b32.xlu0 %v4711, 17
  %v4725 = vpop.permute.xlu0 %4724
  %4726 = vrot.lane.b32.xlu0 %v4712, 17
  %v4727 = vpop.permute.xlu0 %4726
  %4728 = vrot.lane.b32.xlu0 %v4713, 17
  %v4729 = vpop.permute.xlu0 %4728
  %4730 = vrot.lane.b32.xlu0 %v4714, 17
  %v4731 = vpop.permute.xlu0 %4730
  %4732 = vrot.lane.b32.xlu0 %v4715, 17
  %v4733 = vpop.permute.xlu0 %4732
  %4734 = vrot.lane.b32.xlu0 %v4716, 17
  %v4735 = vpop.permute.xlu0 %4734
  %4736 = vrot.lane.b32.xlu0 %v4717, 17
  %v4737 = vpop.permute.xlu0 %4736
  %4738 = vrot.lane.b32.xlu0 %v4718, 17
  %v4739 = vpop.permute.xlu0 %4738
  %4740 = vrot.lane.b32.xlu0 %v4719, 17
  %v4741 = vpop.permute.xlu0 %4740
  %v4742 = vrot.slane %v4721, 4
  %v4743 = vrot.slane %v4723, 4
  %v4744 = vrot.slane %v4725, 4
  %v4745 = vrot.slane %v4727, 4
  %v4746 = vrot.slane %v4729, 4
  %v4747 = vrot.slane %v4731, 4
  %v4748 = vrot.slane %v4733, 4
  %v4749 = vrot.slane %v4735, 4
  %v4750 = vrot.slane %v4737, 4
  %v4751 = vrot.slane %v4739, 4
  %v4752 = vrot.slane %v4741, 4
  %v4753 = vsel %vm253, %v4742, %v4743
  %v4754 = vsel %vm618, %v4721, %v4753
  %v4755 = vsel %vm253, %v4743, %v4744
  %v4756 = vsel %vm618, %v4723, %v4755
  %v4757 = vsel %vm253, %v4744, %v4745
  %v4758 = vsel %vm618, %v4725, %v4757
  %v4759 = vsel %vm253, %v4745, %v4746
  %v4760 = vsel %vm618, %v4727, %v4759
  %v4761 = vsel %vm253, %v4746, %v4747
  %v4762 = vsel %vm618, %v4729, %v4761
  %v4763 = vsel %vm253, %v4747, %v4748
  %v4764 = vsel %vm618, %v4731, %v4763
  %v4765 = vsel %vm253, %v4748, %v4749
  %v4766 = vsel %vm618, %v4733, %v4765
  %v4767 = vsel %vm253, %v4749, %v4750
  %v4768 = vsel %vm618, %v4735, %v4767
  %v4769 = vsel %vm253, %v4750, %v4751
  %v4770 = vsel %vm618, %v4737, %v4769
  %v4771 = vsel %vm253, %v4751, %v4752
  %v4772 = vsel %vm618, %v4739, %v4771
  %v4773 = vsel %vm618, %v4741, %v4752
  %4785 = vst [vmem:[#allocation3 + $0xa8] sm:$0xff] %v4754
  %4786 = vst [vmem:[#allocation3 + $0xb0] sm:$0xff] %v4756
  %4787 = vst [vmem:[#allocation3 + $0xb8] sm:$0xff] %v4758
  %4788 = vst [vmem:[#allocation3 + $0xc0] sm:$0xff] %v4760
  %4789 = vst [vmem:[#allocation3 + $0xc8] sm:$0xff] %v4762
  %4790 = vst [vmem:[#allocation3 + $0xd0] sm:$0xff] %v4764
  %4791 = vst [vmem:[#allocation3 + $0xd8] sm:$0xff] %v4766
  %4792 = vst [vmem:[#allocation3 + $0xe0] sm:$0xff] %v4768
  %4793 = vst [vmem:[#allocation3 + $0xe8] sm:$0xff] %v4770
  %4794 = vst [vmem:[#allocation3 + $0xf0] sm:$0xff] %v4772
  %4795 = vst [vmem:[#allocation3 + $0xf8] sm:$0xf] %v4773
  %v4796 = vld [vmem:[#allocation2] sm:$0xff]
  %v4797 = vld [vmem:[#allocation2 + $0x8] sm:$0xff]
  %v4798 = vld [vmem:[#allocation2 + $0x10] sm:$0xff]
  %v4799 = vld [vmem:[#allocation2 + $0x18] sm:$0xff]
  %v4800 = vld [vmem:[#allocation2 + $0x20] sm:$0xff]
  %v4801 = vld [vmem:[#allocation2 + $0x28] sm:$0xff]
  %v4802 = vld [vmem:[#allocation2 + $0x30] sm:$0xff]
  %v4803 = vld [vmem:[#allocation2 + $0x38] sm:$0xff]
  %v4804 = vld [vmem:[#allocation2 + $0x40] sm:$0xff]
  %v4805 = vld [vmem:[#allocation2 + $0x48] sm:$0xff]
  %v4806 = vld [vmem:[#allocation2 + $0x50] sm:$0xff]
  %v4807 = vld [vmem:[#allocation2 + $0x58] sm:$0xff]
  %v4808 = vld [vmem:[#allocation2 + $0x60] sm:$0xff]
  %v4809 = vld [vmem:[#allocation2 + $0x68] sm:$0xff]
  %v4810 = vld [vmem:[#allocation2 + $0x70] sm:$0xff]
  %v4811 = vld [vmem:[#allocation2 + $0x78] sm:$0xff]
  %v4812 = vld [vmem:[#allocation2 + $0x80] sm:$0xff]
  %v4813 = vld [vmem:[#allocation2 + $0x88] sm:$0xff]
  %v4814 = vld [vmem:[#allocation2 + $0x90] sm:$0xff]
  %v4815 = vld [vmem:[#allocation2 + $0x98] sm:$0xff]
  %v4816 = vld [vmem:[#allocation2 + $0xa0] sm:$0xff]
  %v4817 = vld [vmem:[#allocation2 + $0xa8] sm:$0xff]
  %v4818 = vpack.c.bf16 %v4796, %v4796
  %v4819 = vpack.c.bf16 %v4797, %v4797
  %v4820 = vpack.c.bf16 %v4798, %v4798
  %v4821 = vpack.c.bf16 %v4799, %v4799
  %v4822 = vpack.c.bf16 %v4800, %v4800
  %v4823 = vpack.c.bf16 %v4801, %v4801
  %v4824 = vpack.c.bf16 %v4802, %v4802
  %v4825 = vpack.c.bf16 %v4803, %v4803
  %v4826 = vpack.c.bf16 %v4804, %v4804
  %v4827 = vpack.c.bf16 %v4805, %v4805
  %v4828 = vpack.c.bf16 %v4806, %v4806
  %v4829 = vpack.c.bf16 %v4807, %v4807
  %v4830 = vpack.c.bf16 %v4808, %v4808
  %v4831 = vpack.c.bf16 %v4809, %v4809
  %v4832 = vpack.c.bf16 %v4810, %v4810
  %v4833 = vpack.c.bf16 %v4811, %v4811
  %v4834 = vpack.c.bf16 %v4812, %v4812
  %v4835 = vpack.c.bf16 %v4813, %v4813
  %v4836 = vpack.c.bf16 %v4814, %v4814
  %v4837 = vpack.c.bf16 %v4815, %v4815
  %v4838 = vpack.c.bf16 %v4816, %v4816
  %v4839 = vpack.c.bf16 %v4817, %v4817
  %v4862 = vunpack.c.l.b16 %v4818
  %v4863 = vunpack.c.l.b16 %v4819
  %v4864 = vunpack.c.l.b16 %v4820
  %v4865 = vunpack.c.l.b16 %v4821
  %v4866 = vunpack.c.l.b16 %v4822
  %v4867 = vunpack.c.l.b16 %v4823
  %v4868 = vunpack.c.l.b16 %v4824
  %v4869 = vunpack.c.l.b16 %v4825
  %v4870 = vunpack.c.l.b16 %v4826
  %v4871 = vunpack.c.l.b16 %v4827
  %v4872 = vunpack.c.l.b16 %v4828
  %v4873 = vunpack.c.l.b16 %v4829
  %v4874 = vunpack.c.l.b16 %v4830
  %v4875 = vunpack.c.l.b16 %v4831
  %v4876 = vunpack.c.l.b16 %v4832
  %v4877 = vunpack.c.l.b16 %v4833
  %v4878 = vunpack.c.l.b16 %v4834
  %v4879 = vunpack.c.l.b16 %v4835
  %v4880 = vunpack.c.l.b16 %v4836
  %v4881 = vunpack.c.l.b16 %v4837
  %v4882 = vunpack.c.l.b16 %v4838
  %v4883 = vunpack.c.l.b16 %v4839
  %v4884 = vpack.c.b16 %v4863, %v4862
  %v4885 = vpack.c.b16 %v4865, %v4864
  %v4886 = vpack.c.b16 %v4867, %v4866
  %v4887 = vpack.c.b16 %v4869, %v4868
  %v4888 = vpack.c.b16 %v4871, %v4870
  %v4889 = vpack.c.b16 %v4873, %v4872
  %v4890 = vpack.c.b16 %v4875, %v4874
  %v4891 = vpack.c.b16 %v4877, %v4876
  %v4892 = vpack.c.b16 %v4879, %v4878
  %v4893 = vpack.c.b16 %v4881, %v4880
  %v4894 = vpack.c.b16 %v4883, %v4882
  %4895 = vrot.lane.b32.xlu0 %v4884, 1
  %v4896 = vpop.permute.xlu0 %4895
  %4897 = vrot.lane.b32.xlu0 %v4885, 1
  %v4898 = vpop.permute.xlu0 %4897
  %4899 = vrot.lane.b32.xlu0 %v4886, 1
  %v4900 = vpop.permute.xlu0 %4899
  %4901 = vrot.lane.b32.xlu0 %v4887, 1
  %v4902 = vpop.permute.xlu0 %4901
  %4903 = vrot.lane.b32.xlu0 %v4888, 1
  %v4904 = vpop.permute.xlu0 %4903
  %4905 = vrot.lane.b32.xlu0 %v4889, 1
  %v4906 = vpop.permute.xlu0 %4905
  %4907 = vrot.lane.b32.xlu0 %v4890, 1
  %v4908 = vpop.permute.xlu0 %4907
  %4909 = vrot.lane.b32.xlu0 %v4891, 1
  %v4910 = vpop.permute.xlu0 %4909
  %4911 = vrot.lane.b32.xlu0 %v4892, 1
  %v4912 = vpop.permute.xlu0 %4911
  %4913 = vrot.lane.b32.xlu0 %v4893, 1
  %v4914 = vpop.permute.xlu0 %4913
  %4915 = vrot.lane.b32.xlu0 %v4894, 1
  %v4916 = vpop.permute.xlu0 %4915
  %v4917 = vrot.slane %v4896, 4
  %v4918 = vrot.slane %v4898, 4
  %v4919 = vrot.slane %v4900, 4
  %v4920 = vrot.slane %v4902, 4
  %v4921 = vrot.slane %v4904, 4
  %v4922 = vrot.slane %v4906, 4
  %v4923 = vrot.slane %v4908, 4
  %v4924 = vrot.slane %v4910, 4
  %v4925 = vrot.slane %v4912, 4
  %v4926 = vrot.slane %v4914, 4
  %v4927 = vrot.slane %v4916, 4
  %v4928 = vsel %vm253, %v4917, %v4918
  %v4929 = vsel %vm805, %v4896, %v4928
  %v4930 = vsel %vm253, %v4918, %v4919
  %v4931 = vsel %vm805, %v4898, %v4930
  %v4932 = vsel %vm253, %v4919, %v4920
  %v4933 = vsel %vm805, %v4900, %v4932
  %v4934 = vsel %vm253, %v4920, %v4921
  %v4935 = vsel %vm805, %v4902, %v4934
  %v4936 = vsel %vm253, %v4921, %v4922
  %v4937 = vsel %vm805, %v4904, %v4936
  %v4938 = vsel %vm253, %v4922, %v4923
  %v4939 = vsel %vm805, %v4906, %v4938
  %v4940 = vsel %vm253, %v4923, %v4924
  %v4941 = vsel %vm805, %v4908, %v4940
  %v4942 = vsel %vm253, %v4924, %v4925
  %v4943 = vsel %vm805, %v4910, %v4942
  %v4944 = vsel %vm253, %v4925, %v4926
  %v4945 = vsel %vm805, %v4912, %v4944
  %v4946 = vsel %vm253, %v4926, %v4927
  %v4947 = vsel %vm805, %v4914, %v4946
  %v4948 = vsel %vm805, %v4916, %v4927
  %4960 = vst [vmem:[#allocation3 + $0xfc] sm:$0xff] %v4929
  %4961 = vst [vmem:[#allocation3 + $0x104] sm:$0xff] %v4931
  %4962 = vst [vmem:[#allocation3 + $0x10c] sm:$0xff] %v4933
  %4963 = vst [vmem:[#allocation3 + $0x114] sm:$0xff] %v4935
  %4964 = vst [vmem:[#allocation3 + $0x11c] sm:$0xff] %v4937
  %4965 = vst [vmem:[#allocation3 + $0x124] sm:$0xff] %v4939
  %4966 = vst [vmem:[#allocation3 + $0x12c] sm:$0xff] %v4941
  %4967 = vst [vmem:[#allocation3 + $0x134] sm:$0xff] %v4943
  %4968 = vst [vmem:[#allocation3 + $0x13c] sm:$0xff] %v4945
  %4969 = vst [vmem:[#allocation3 + $0x144] sm:$0xff] %v4947
  %4970 = vst [vmem:[#allocation3 + $0x14c] sm:$0xf] %v4948
  %v4971 = vld [vmem:[#allocation2 + $0x8] sm:$0xff]
  %v4972 = vld [vmem:[#allocation2 + $0x10] sm:$0xff]
  %v4973 = vld [vmem:[#allocation2 + $0x18] sm:$0xff]
  %v4974 = vld [vmem:[#allocation2 + $0x20] sm:$0xff]
  %v4975 = vld [vmem:[#allocation2 + $0x28] sm:$0xff]
  %v4976 = vld [vmem:[#allocation2 + $0x30] sm:$0xff]
  %v4977 = vld [vmem:[#allocation2 + $0x38] sm:$0xff]
  %v4978 = vld [vmem:[#allocation2 + $0x40] sm:$0xff]
  %v4979 = vld [vmem:[#allocation2 + $0x48] sm:$0xff]
  %v4980 = vld [vmem:[#allocation2 + $0x50] sm:$0xff]
  %v4981 = vld [vmem:[#allocation2 + $0x58] sm:$0xff]
  %v4982 = vld [vmem:[#allocation2 + $0x60] sm:$0xff]
  %v4983 = vld [vmem:[#allocation2 + $0x68] sm:$0xff]
  %v4984 = vld [vmem:[#allocation2 + $0x70] sm:$0xff]
  %v4985 = vld [vmem:[#allocation2 + $0x78] sm:$0xff]
  %v4986 = vld [vmem:[#allocation2 + $0x80] sm:$0xff]
  %v4987 = vld [vmem:[#allocation2 + $0x88] sm:$0xff]
  %v4988 = vld [vmem:[#allocation2 + $0x90] sm:$0xff]
  %v4989 = vld [vmem:[#allocation2 + $0x98] sm:$0xff]
  %v4990 = vld [vmem:[#allocation2 + $0xa0] sm:$0xff]
  %v4991 = vld [vmem:[#allocation2 + $0xa8] sm:$0xff]
  %v4992 = vpack.c.bf16 %v4971, %v4971
  %v4993 = vpack.c.bf16 %v4972, %v4972
  %v4994 = vpack.c.bf16 %v4973, %v4973
  %v4995 = vpack.c.bf16 %v4974, %v4974
  %v4996 = vpack.c.bf16 %v4975, %v4975
  %v4997 = vpack.c.bf16 %v4976, %v4976
  %v4998 = vpack.c.bf16 %v4977, %v4977
  %v4999 = vpack.c.bf16 %v4978, %v4978
  %v5000 = vpack.c.bf16 %v4979, %v4979
  %v5001 = vpack.c.bf16 %v4980, %v4980
  %v5002 = vpack.c.bf16 %v4981, %v4981
  %v5003 = vpack.c.bf16 %v4982, %v4982
  %v5004 = vpack.c.bf16 %v4983, %v4983
  %v5005 = vpack.c.bf16 %v4984, %v4984
  %v5006 = vpack.c.bf16 %v4985, %v4985
  %v5007 = vpack.c.bf16 %v4986, %v4986
  %v5008 = vpack.c.bf16 %v4987, %v4987
  %v5009 = vpack.c.bf16 %v4988, %v4988
  %v5010 = vpack.c.bf16 %v4989, %v4989
  %v5011 = vpack.c.bf16 %v4990, %v4990
  %v5012 = vpack.c.bf16 %v4991, %v4991
  %v5034 = vunpack.c.l.b16 %v4992
  %v5035 = vunpack.c.l.b16 %v4993
  %v5036 = vunpack.c.l.b16 %v4994
  %v5037 = vunpack.c.l.b16 %v4995
  %v5038 = vunpack.c.l.b16 %v4996
  %v5039 = vunpack.c.l.b16 %v4997
  %v5040 = vunpack.c.l.b16 %v4998
  %v5041 = vunpack.c.l.b16 %v4999
  %v5042 = vunpack.c.l.b16 %v5000
  %v5043 = vunpack.c.l.b16 %v5001
  %v5044 = vunpack.c.l.b16 %v5002
  %v5045 = vunpack.c.l.b16 %v5003
  %v5046 = vunpack.c.l.b16 %v5004
  %v5047 = vunpack.c.l.b16 %v5005
  %v5048 = vunpack.c.l.b16 %v5006
  %v5049 = vunpack.c.l.b16 %v5007
  %v5050 = vunpack.c.l.b16 %v5008
  %v5051 = vunpack.c.l.b16 %v5009
  %v5052 = vunpack.c.l.b16 %v5010
  %v5053 = vunpack.c.l.b16 %v5011
  %v5054 = vunpack.c.l.b16 %v5012
  %v5055 = vpack.c.b16 %v5035, %v5034
  %v5056 = vpack.c.b16 %v5037, %v5036
  %v5057 = vpack.c.b16 %v5039, %v5038
  %v5058 = vpack.c.b16 %v5041, %v5040
  %v5059 = vpack.c.b16 %v5043, %v5042
  %v5060 = vpack.c.b16 %v5045, %v5044
  %v5061 = vpack.c.b16 %v5047, %v5046
  %v5062 = vpack.c.b16 %v5049, %v5048
  %v5063 = vpack.c.b16 %v5051, %v5050
  %v5064 = vpack.c.b16 %v5053, %v5052
  %v5065 = vpack.c.b16 %v5054, %v5054
  %5077 = vst [vmem:[#allocation3 + $0x150] sm:$0xff] %v5055
  %5078 = vst [vmem:[#allocation3 + $0x158] sm:$0xff] %v5056
  %5079 = vst [vmem:[#allocation3 + $0x160] sm:$0xff] %v5057
  %5080 = vst [vmem:[#allocation3 + $0x168] sm:$0xff] %v5058
  %5081 = vst [vmem:[#allocation3 + $0x170] sm:$0xff] %v5059
  %5082 = vst [vmem:[#allocation3 + $0x178] sm:$0xff] %v5060
  %5083 = vst [vmem:[#allocation3 + $0x180] sm:$0xff] %v5061
  %5084 = vst [vmem:[#allocation3 + $0x188] sm:$0xff] %v5062
  %5085 = vst [vmem:[#allocation3 + $0x190] sm:$0xff] %v5063
  %5086 = vst [vmem:[#allocation3 + $0x198] sm:$0xff] %v5064
  %5087 = vst [vmem:[#allocation3 + $0x1a0] sm:$0xf] %v5065
  %v5088 = vld [vmem:[#allocation2 + $0x8] sm:$0xff]
  %v5089 = vld [vmem:[#allocation2 + $0x10] sm:$0xff]
  %v5090 = vld [vmem:[#allocation2 + $0x18] sm:$0xff]
  %v5091 = vld [vmem:[#allocation2 + $0x20] sm:$0xff]
  %v5092 = vld [vmem:[#allocation2 + $0x28] sm:$0xff]
  %v5093 = vld [vmem:[#allocation2 + $0x30] sm:$0xff]
  %v5094 = vld [vmem:[#allocation2 + $0x38] sm:$0xff]
  %v5095 = vld [vmem:[#allocation2 + $0x40] sm:$0xff]
  %v5096 = vld [vmem:[#allocation2 + $0x48] sm:$0xff]
  %v5097 = vld [vmem:[#allocation2 + $0x50] sm:$0xff]
  %v5098 = vld [vmem:[#allocation2 + $0x58] sm:$0xff]
  %v5099 = vld [vmem:[#allocation2 + $0x60] sm:$0xff]
  %v5100 = vld [vmem:[#allocation2 + $0x68] sm:$0xff]
  %v5101 = vld [vmem:[#allocation2 + $0x70] sm:$0xff]
  %v5102 = vld [vmem:[#allocation2 + $0x78] sm:$0xff]
  %v5103 = vld [vmem:[#allocation2 + $0x80] sm:$0xff]
  %v5104 = vld [vmem:[#allocation2 + $0x88] sm:$0xff]
  %v5105 = vld [vmem:[#allocation2 + $0x90] sm:$0xff]
  %v5106 = vld [vmem:[#allocation2 + $0x98] sm:$0xff]
  %v5107 = vld [vmem:[#allocation2 + $0xa0] sm:$0xff]
  %v5108 = vld [vmem:[#allocation2 + $0xa8] sm:$0xff]
  %v5109 = vld [vmem:[#allocation2 + $0xb0] sm:$0xff]
  %v5110 = vpack.c.bf16 %v5088, %v5088
  %v5111 = vpack.c.bf16 %v5089, %v5089
  %v5112 = vpack.c.bf16 %v5090, %v5090
  %v5113 = vpack.c.bf16 %v5091, %v5091
  %v5114 = vpack.c.bf16 %v5092, %v5092
  %v5115 = vpack.c.bf16 %v5093, %v5093
  %v5116 = vpack.c.bf16 %v5094, %v5094
  %v5117 = vpack.c.bf16 %v5095, %v5095
  %v5118 = vpack.c.bf16 %v5096, %v5096
  %v5119 = vpack.c.bf16 %v5097, %v5097
  %v5120 = vpack.c.bf16 %v5098, %v5098
  %v5121 = vpack.c.bf16 %v5099, %v5099
  %v5122 = vpack.c.bf16 %v5100, %v5100
  %v5123 = vpack.c.bf16 %v5101, %v5101
  %v5124 = vpack.c.bf16 %v5102, %v5102
  %v5125 = vpack.c.bf16 %v5103, %v5103
  %v5126 = vpack.c.bf16 %v5104, %v5104
  %v5127 = vpack.c.bf16 %v5105, %v5105
  %v5128 = vpack.c.bf16 %v5106, %v5106
  %v5129 = vpack.c.bf16 %v5107, %v5107
  %v5130 = vpack.c.bf16 %v5108, %v5108
  %v5131 = vpack.c.bf16 %v5109, %v5109
  %v5154 = vunpack.c.l.b16 %v5110
  %v5155 = vunpack.c.l.b16 %v5111
  %v5156 = vunpack.c.l.b16 %v5112
  %v5157 = vunpack.c.l.b16 %v5113
  %v5158 = vunpack.c.l.b16 %v5114
  %v5159 = vunpack.c.l.b16 %v5115
  %v5160 = vunpack.c.l.b16 %v5116
  %v5161 = vunpack.c.l.b16 %v5117
  %v5162 = vunpack.c.l.b16 %v5118
  %v5163 = vunpack.c.l.b16 %v5119
  %v5164 = vunpack.c.l.b16 %v5120
  %v5165 = vunpack.c.l.b16 %v5121
  %v5166 = vunpack.c.l.b16 %v5122
  %v5167 = vunpack.c.l.b16 %v5123
  %v5168 = vunpack.c.l.b16 %v5124
  %v5169 = vunpack.c.l.b16 %v5125
  %v5170 = vunpack.c.l.b16 %v5126
  %v5171 = vunpack.c.l.b16 %v5127
  %v5172 = vunpack.c.l.b16 %v5128
  %v5173 = vunpack.c.l.b16 %v5129
  %v5174 = vunpack.c.l.b16 %v5130
  %v5175 = vunpack.c.l.b16 %v5131
  %v5176 = vpack.c.b16 %v5155, %v5154
  %v5177 = vpack.c.b16 %v5157, %v5156
  %v5178 = vpack.c.b16 %v5159, %v5158
  %v5179 = vpack.c.b16 %v5161, %v5160
  %v5180 = vpack.c.b16 %v5163, %v5162
  %v5181 = vpack.c.b16 %v5165, %v5164
  %v5182 = vpack.c.b16 %v5167, %v5166
  %v5183 = vpack.c.b16 %v5169, %v5168
  %v5184 = vpack.c.b16 %v5171, %v5170
  %v5185 = vpack.c.b16 %v5173, %v5172
  %v5186 = vpack.c.b16 %v5175, %v5174
  %5187 = vrot.lane.b32.xlu0 %v5176, 127
  %v5188 = vpop.permute.xlu0 %5187
  %5189 = vrot.lane.b32.xlu0 %v5177, 127
  %v5190 = vpop.permute.xlu0 %5189
  %5191 = vrot.lane.b32.xlu0 %v5178, 127
  %v5192 = vpop.permute.xlu0 %5191
  %5193 = vrot.lane.b32.xlu0 %v5179, 127
  %v5194 = vpop.permute.xlu0 %5193
  %5195 = vrot.lane.b32.xlu0 %v5180, 127
  %v5196 = vpop.permute.xlu0 %5195
  %5197 = vrot.lane.b32.xlu0 %v5181, 127
  %v5198 = vpop.permute.xlu0 %5197
  %5199 = vrot.lane.b32.xlu0 %v5182, 127
  %v5200 = vpop.permute.xlu0 %5199
  %5201 = vrot.lane.b32.xlu0 %v5183, 127
  %v5202 = vpop.permute.xlu0 %5201
  %5203 = vrot.lane.b32.xlu0 %v5184, 127
  %v5204 = vpop.permute.xlu0 %5203
  %5205 = vrot.lane.b32.xlu0 %v5185, 127
  %v5206 = vpop.permute.xlu0 %5205
  %5207 = vrot.lane.b32.xlu0 %v5186, 127
  %v5208 = vpop.permute.xlu0 %5207
  %v5209 = vrot.slane %v5188, 4
  %v5210 = vrot.slane %v5190, 4
  %v5211 = vrot.slane %v5192, 4
  %v5212 = vrot.slane %v5194, 4
  %v5213 = vrot.slane %v5196, 4
  %v5214 = vrot.slane %v5198, 4
  %v5215 = vrot.slane %v5200, 4
  %v5216 = vrot.slane %v5202, 4
  %v5217 = vrot.slane %v5204, 4
  %v5218 = vrot.slane %v5206, 4
  %v5219 = vrot.slane %v5208, 4
  %v5220 = vsel %vm253, %v5209, %v5210
  %v5221 = vsel %vm1109, %v5188, %v5220
  %v5222 = vsel %vm253, %v5210, %v5211
  %v5223 = vsel %vm1109, %v5190, %v5222
  %v5224 = vsel %vm253, %v5211, %v5212
  %v5225 = vsel %vm1109, %v5192, %v5224
  %v5226 = vsel %vm253, %v5212, %v5213
  %v5227 = vsel %vm1109, %v5194, %v5226
  %v5228 = vsel %vm253, %v5213, %v5214
  %v5229 = vsel %vm1109, %v5196, %v5228
  %v5230 = vsel %vm253, %v5214, %v5215
  %v5231 = vsel %vm1109, %v5198, %v5230
  %v5232 = vsel %vm253, %v5215, %v5216
  %v5233 = vsel %vm1109, %v5200, %v5232
  %v5234 = vsel %vm253, %v5216, %v5217
  %v5235 = vsel %vm1109, %v5202, %v5234
  %v5236 = vsel %vm253, %v5217, %v5218
  %v5237 = vsel %vm1109, %v5204, %v5236
  %v5238 = vsel %vm253, %v5218, %v5219
  %v5239 = vsel %vm1109, %v5206, %v5238
  %v5240 = vsel %vm1109, %v5208, %v5219
  %5252 = vst [vmem:[#allocation3 + $0x1a4] sm:$0xff] %v5221
  %5253 = vst [vmem:[#allocation3 + $0x1ac] sm:$0xff] %v5223
  %5254 = vst [vmem:[#allocation3 + $0x1b4] sm:$0xff] %v5225
  %5255 = vst [vmem:[#allocation3 + $0x1bc] sm:$0xff] %v5227
  %5256 = vst [vmem:[#allocation3 + $0x1c4] sm:$0xff] %v5229
  %5257 = vst [vmem:[#allocation3 + $0x1cc] sm:$0xff] %v5231
  %5258 = vst [vmem:[#allocation3 + $0x1d4] sm:$0xff] %v5233
  %5259 = vst [vmem:[#allocation3 + $0x1dc] sm:$0xff] %v5235
  %5260 = vst [vmem:[#allocation3 + $0x1e4] sm:$0xff] %v5237
  %5261 = vst [vmem:[#allocation3 + $0x1ec] sm:$0xff] %v5239
  %5262 = vst [vmem:[#allocation3 + $0x1f4] sm:$0xf] %v5240
  %v5263 = vld [vmem:[#allocation2 + $0x8] sm:$0xff]
  %v5264 = vld [vmem:[#allocation2 + $0x10] sm:$0xff]
  %v5265 = vld [vmem:[#allocation2 + $0x18] sm:$0xff]
  %v5266 = vld [vmem:[#allocation2 + $0x20] sm:$0xff]
  %v5267 = vld [vmem:[#allocation2 + $0x28] sm:$0xff]
  %v5268 = vld [vmem:[#allocation2 + $0x30] sm:$0xff]
  %v5269 = vld [vmem:[#allocation2 + $0x38] sm:$0xff]
  %v5270 = vld [vmem:[#allocation2 + $0x40] sm:$0xff]
  %v5271 = vld [vmem:[#allocation2 + $0x48] sm:$0xff]
  %v5272 = vld [vmem:[#allocation2 + $0x50] sm:$0xff]
  %v5273 = vld [vmem:[#allocation2 + $0x58] sm:$0xff]
  %v5274 = vld [vmem:[#allocation2 + $0x60] sm:$0xff]
  %v5275 = vld [vmem:[#allocation2 + $0x68] sm:$0xff]
  %v5276 = vld [vmem:[#allocation2 + $0x70] sm:$0xff]
  %v5277 = vld [vmem:[#allocation2 + $0x78] sm:$0xff]
  %v5278 = vld [vmem:[#allocation2 + $0x80] sm:$0xff]
  %v5279 = vld [vmem:[#allocation2 + $0x88] sm:$0xff]
  %v5280 = vld [vmem:[#allocation2 + $0x90] sm:$0xff]
  %v5281 = vld [vmem:[#allocation2 + $0x98] sm:$0xff]
  %v5282 = vld [vmem:[#allocation2 + $0xa0] sm:$0xff]
  %v5283 = vld [vmem:[#allocation2 + $0xa8] sm:$0xff]
  %v5284 = vld [vmem:[#allocation2 + $0xb0] sm:$0xff]
  %v5285 = vpack.c.bf16 %v5263, %v5263
  %v5286 = vpack.c.bf16 %v5264, %v5264
  %v5287 = vpack.c.bf16 %v5265, %v5265
  %v5288 = vpack.c.bf16 %v5266, %v5266
  %v5289 = vpack.c.bf16 %v5267, %v5267
  %v5290 = vpack.c.bf16 %v5268, %v5268
  %v5291 = vpack.c.bf16 %v5269, %v5269
  %v5292 = vpack.c.bf16 %v5270, %v5270
  %v5293 = vpack.c.bf16 %v5271, %v5271
  %v5294 = vpack.c.bf16 %v5272, %v5272
  %v5295 = vpack.c.bf16 %v5273, %v5273
  %v5296 = vpack.c.bf16 %v5274, %v5274
  %v5297 = vpack.c.bf16 %v5275, %v5275
  %v5298 = vpack.c.bf16 %v5276, %v5276
  %v5299 = vpack.c.bf16 %v5277, %v5277
  %v5300 = vpack.c.bf16 %v5278, %v5278
  %v5301 = vpack.c.bf16 %v5279, %v5279
  %v5302 = vpack.c.bf16 %v5280, %v5280
  %v5303 = vpack.c.bf16 %v5281, %v5281
  %v5304 = vpack.c.bf16 %v5282, %v5282
  %v5305 = vpack.c.bf16 %v5283, %v5283
  %v5306 = vpack.c.bf16 %v5284, %v5284
  %v5329 = vunpack.c.l.b16 %v5285
  %v5330 = vunpack.c.l.b16 %v5286
  %v5331 = vunpack.c.l.b16 %v5287
  %v5332 = vunpack.c.l.b16 %v5288
  %v5333 = vunpack.c.l.b16 %v5289
  %v5334 = vunpack.c.l.b16 %v5290
  %v5335 = vunpack.c.l.b16 %v5291
  %v5336 = vunpack.c.l.b16 %v5292
  %v5337 = vunpack.c.l.b16 %v5293
  %v5338 = vunpack.c.l.b16 %v5294
  %v5339 = vunpack.c.l.b16 %v5295
  %v5340 = vunpack.c.l.b16 %v5296
  %v5341 = vunpack.c.l.b16 %v5297
  %v5342 = vunpack.c.l.b16 %v5298
  %v5343 = vunpack.c.l.b16 %v5299
  %v5344 = vunpack.c.l.b16 %v5300
  %v5345 = vunpack.c.l.b16 %v5301
  %v5346 = vunpack.c.l.b16 %v5302
  %v5347 = vunpack.c.l.b16 %v5303
  %v5348 = vunpack.c.l.b16 %v5304
  %v5349 = vunpack.c.l.b16 %v5305
  %v5350 = vunpack.c.l.b16 %v5306
  %v5351 = vpack.c.b16 %v5330, %v5329
  %v5352 = vpack.c.b16 %v5332, %v5331
  %v5353 = vpack.c.b16 %v5334, %v5333
  %v5354 = vpack.c.b16 %v5336, %v5335
  %v5355 = vpack.c.b16 %v5338, %v5337
  %v5356 = vpack.c.b16 %v5340, %v5339
  %v5357 = vpack.c.b16 %v5342, %v5341
  %v5358 = vpack.c.b16 %v5344, %v5343
  %v5359 = vpack.c.b16 %v5346, %v5345
  %v5360 = vpack.c.b16 %v5348, %v5347
  %v5361 = vpack.c.b16 %v5350, %v5349
  %5362 = vrot.lane.b32.xlu0 %v5351, 111
  %v5363 = vpop.permute.xlu0 %5362
  %5364 = vrot.lane.b32.xlu0 %v5352, 111
  %v5365 = vpop.permute.xlu0 %5364
  %5366 = vrot.lane.b32.xlu0 %v5353, 111
  %v5367 = vpop.permute.xlu0 %5366
  %5368 = vrot.lane.b32.xlu0 %v5354, 111
  %v5369 = vpop.permute.xlu0 %5368
  %5370 = vrot.lane.b32.xlu0 %v5355, 111
  %v5371 = vpop.permute.xlu0 %5370
  %5372 = vrot.lane.b32.xlu0 %v5356, 111
  %v5373 = vpop.permute.xlu0 %5372
  %5374 = vrot.lane.b32.xlu0 %v5357, 111
  %v5375 = vpop.permute.xlu0 %5374
  %5376 = vrot.lane.b32.xlu0 %v5358, 111
  %v5377 = vpop.permute.xlu0 %5376
  %5378 = vrot.lane.b32.xlu0 %v5359, 111
  %v5379 = vpop.permute.xlu0 %5378
  %5380 = vrot.lane.b32.xlu0 %v5360, 111
  %v5381 = vpop.permute.xlu0 %5380
  %5382 = vrot.lane.b32.xlu0 %v5361, 111
  %v5383 = vpop.permute.xlu0 %5382
  %v5384 = vrot.slane %v5363, 4
  %v5385 = vrot.slane %v5365, 4
  %v5386 = vrot.slane %v5367, 4
  %v5387 = vrot.slane %v5369, 4
  %v5388 = vrot.slane %v5371, 4
  %v5389 = vrot.slane %v5373, 4
  %v5390 = vrot.slane %v5375, 4
  %v5391 = vrot.slane %v5377, 4
  %v5392 = vrot.slane %v5379, 4
  %v5393 = vrot.slane %v5381, 4
  %v5394 = vrot.slane %v5383, 4
  %v5395 = vsel %vm253, %v5384, %v5385
  %v5396 = vsel %vm1285, %v5363, %v5395
  %v5397 = vsel %vm253, %v5385, %v5386
  %v5398 = vsel %vm1285, %v5365, %v5397
  %v5399 = vsel %vm253, %v5386, %v5387
  %v5400 = vsel %vm1285, %v5367, %v5399
  %v5401 = vsel %vm253, %v5387, %v5388
  %v5402 = vsel %vm1285, %v5369, %v5401
  %v5403 = vsel %vm253, %v5388, %v5389
  %v5404 = vsel %vm1285, %v5371, %v5403
  %v5405 = vsel %vm253, %v5389, %v5390
  %v5406 = vsel %vm1285, %v5373, %v5405
  %v5407 = vsel %vm253, %v5390, %v5391
  %v5408 = vsel %vm1285, %v5375, %v5407
  %v5409 = vsel %vm253, %v5391, %v5392
  %v5410 = vsel %vm1285, %v5377, %v5409
  %v5411 = vsel %vm253, %v5392, %v5393
  %v5412 = vsel %vm1285, %v5379, %v5411
  %v5413 = vsel %vm253, %v5393, %v5394
  %v5414 = vsel %vm1285, %v5381, %v5413
  %v5415 = vsel %vm1285, %v5383, %v5394
  %5427 = vst [vmem:[#allocation3 + $0x1f8] sm:$0xff] %v5396
  %5428 = vst [vmem:[#allocation3 + $0x200] sm:$0xff] %v5398
  %5429 = vst [vmem:[#allocation3 + $0x208] sm:$0xff] %v5400
  %5430 = vst [vmem:[#allocation3 + $0x210] sm:$0xff] %v5402
  %5431 = vst [vmem:[#allocation3 + $0x218] sm:$0xff] %v5404
  %5432 = vst [vmem:[#allocation3 + $0x220] sm:$0xff] %v5406
  %5433 = vst [vmem:[#allocation3 + $0x228] sm:$0xff] %v5408
  %5434 = vst [vmem:[#allocation3 + $0x230] sm:$0xff] %v5410
  %5435 = vst [vmem:[#allocation3 + $0x238] sm:$0xff] %v5412
  %5436 = vst [vmem:[#allocation3 + $0x240] sm:$0xff] %v5414
  %5437 = vst [vmem:[#allocation3 + $0x248] sm:$0xf] %v5415
  %v5438 = vld [vmem:[#allocation2 + $0x8] sm:$0xff]
  %v5439 = vld [vmem:[#allocation2 + $0x10] sm:$0xff]
  %v5440 = vld [vmem:[#allocation2 + $0x18] sm:$0xff]
  %v5441 = vld [vmem:[#allocation2 + $0x20] sm:$0xff]
  %v5442 = vld [vmem:[#allocation2 + $0x28] sm:$0xff]
  %v5443 = vld [vmem:[#allocation2 + $0x30] sm:$0xff]
  %v5444 = vld [vmem:[#allocation2 + $0x38] sm:$0xff]
  %v5445 = vld [vmem:[#allocation2 + $0x40] sm:$0xff]
  %v5446 = vld [vmem:[#allocation2 + $0x48] sm:$0xff]
  %v5447 = vld [vmem:[#allocation2 + $0x50] sm:$0xff]
  %v5448 = vld [vmem:[#allocation2 + $0x58] sm:$0xff]
  %v5449 = vld [vmem:[#allocation2 + $0x60] sm:$0xff]
  %v5450 = vld [vmem:[#allocation2 + $0x68] sm:$0xff]
  %v5451 = vld [vmem:[#allocation2 + $0x70] sm:$0xff]
  %v5452 = vld [vmem:[#allocation2 + $0x78] sm:$0xff]
  %v5453 = vld [vmem:[#allocation2 + $0x80] sm:$0xff]
  %v5454 = vld [vmem:[#allocation2 + $0x88] sm:$0xff]
  %v5455 = vld [vmem:[#allocation2 + $0x90] sm:$0xff]
  %v5456 = vld [vmem:[#allocation2 + $0x98] sm:$0xff]
  %v5457 = vld [vmem:[#allocation2 + $0xa0] sm:$0xff]
  %v5458 = vld [vmem:[#allocation2 + $0xa8] sm:$0xff]
  %v5459 = vld [vmem:[#allocation2 + $0xb0] sm:$0xff]
  %v5460 = vpack.c.bf16 %v5438, %v5438
  %v5461 = vpack.c.bf16 %v5439, %v5439
  %v5462 = vpack.c.bf16 %v5440, %v5440
  %v5463 = vpack.c.bf16 %v5441, %v5441
  %v5464 = vpack.c.bf16 %v5442, %v5442
  %v5465 = vpack.c.bf16 %v5443, %v5443
  %v5466 = vpack.c.bf16 %v5444, %v5444
  %v5467 = vpack.c.bf16 %v5445, %v5445
  %v5468 = vpack.c.bf16 %v5446, %v5446
  %v5469 = vpack.c.bf16 %v5447, %v5447
  %v5470 = vpack.c.bf16 %v5448, %v5448
  %v5471 = vpack.c.bf16 %v5449, %v5449
  %v5472 = vpack.c.bf16 %v5450, %v5450
  %v5473 = vpack.c.bf16 %v5451, %v5451
  %v5474 = vpack.c.bf16 %v5452, %v5452
  %v5475 = vpack.c.bf16 %v5453, %v5453
  %v5476 = vpack.c.bf16 %v5454, %v5454
  %v5477 = vpack.c.bf16 %v5455, %v5455
  %v5478 = vpack.c.bf16 %v5456, %v5456
  %v5479 = vpack.c.bf16 %v5457, %v5457
  %v5480 = vpack.c.bf16 %v5458, %v5458
  %v5481 = vpack.c.bf16 %v5459, %v5459
  %v5504 = vunpack.c.l.b16 %v5460
  %v5505 = vunpack.c.l.b16 %v5461
  %v5506 = vunpack.c.l.b16 %v5462
  %v5507 = vunpack.c.l.b16 %v5463
  %v5508 = vunpack.c.l.b16 %v5464
  %v5509 = vunpack.c.l.b16 %v5465
  %v5510 = vunpack.c.l.b16 %v5466
  %v5511 = vunpack.c.l.b16 %v5467
  %v5512 = vunpack.c.l.b16 %v5468
  %v5513 = vunpack.c.l.b16 %v5469
  %v5514 = vunpack.c.l.b16 %v5470
  %v5515 = vunpack.c.l.b16 %v5471
  %v5516 = vunpack.c.l.b16 %v5472
  %v5517 = vunpack.c.l.b16 %v5473
  %v5518 = vunpack.c.l.b16 %v5474
  %v5519 = vunpack.c.l.b16 %v5475
  %v5520 = vunpack.c.l.b16 %v5476
  %v5521 = vunpack.c.l.b16 %v5477
  %v5522 = vunpack.c.l.b16 %v5478
  %v5523 = vunpack.c.l.b16 %v5479
  %v5524 = vunpack.c.l.b16 %v5480
  %v5525 = vunpack.c.l.b16 %v5481
  %v5526 = vpack.c.b16 %v5505, %v5504
  %v5527 = vpack.c.b16 %v5507, %v5506
  %v5528 = vpack.c.b16 %v5509, %v5508
  %v5529 = vpack.c.b16 %v5511, %v5510
  %v5530 = vpack.c.b16 %v5513, %v5512
  %v5531 = vpack.c.b16 %v5515, %v5514
  %v5532 = vpack.c.b16 %v5517, %v5516
  %v5533 = vpack.c.b16 %v5519, %v5518
  %v5534 = vpack.c.b16 %v5521, %v5520
  %v5535 = vpack.c.b16 %v5523, %v5522
  %v5536 = vpack.c.b16 %v5525, %v5524
  %5537 = vrot.lane.b32.xlu0 %v5526, 110
  %v5538 = vpop.permute.xlu0 %5537
  %5539 = vrot.lane.b32.xlu0 %v5527, 110
  %v5540 = vpop.permute.xlu0 %5539
  %5541 = vrot.lane.b32.xlu0 %v5528, 110
  %v5542 = vpop.permute.xlu0 %5541
  %5543 = vrot.lane.b32.xlu0 %v5529, 110
  %v5544 = vpop.permute.xlu0 %5543
  %5545 = vrot.lane.b32.xlu0 %v5530, 110
  %v5546 = vpop.permute.xlu0 %5545
  %5547 = vrot.lane.b32.xlu0 %v5531, 110
  %v5548 = vpop.permute.xlu0 %5547
  %5549 = vrot.lane.b32.xlu0 %v5532, 110
  %v5550 = vpop.permute.xlu0 %5549
  %5551 = vrot.lane.b32.xlu0 %v5533, 110
  %v5552 = vpop.permute.xlu0 %5551
  %5553 = vrot.lane.b32.xlu0 %v5534, 110
  %v5554 = vpop.permute.xlu0 %5553
  %5555 = vrot.lane.b32.xlu0 %v5535, 110
  %v5556 = vpop.permute.xlu0 %5555
  %5557 = vrot.lane.b32.xlu0 %v5536, 110
  %v5558 = vpop.permute.xlu0 %5557
  %v5559 = vrot.slane %v5538, 4
  %v5560 = vrot.slane %v5540, 4
  %v5561 = vrot.slane %v5542, 4
  %v5562 = vrot.slane %v5544, 4
  %v5563 = vrot.slane %v5546, 4
  %v5564 = vrot.slane %v5548, 4
  %v5565 = vrot.slane %v5550, 4
  %v5566 = vrot.slane %v5552, 4
  %v5567 = vrot.slane %v5554, 4
  %v5568 = vrot.slane %v5556, 4
  %v5569 = vrot.slane %v5558, 4
  %v5570 = vsel %vm253, %v5559, %v5560
  %v5571 = vsel %vm1472, %v5538, %v5570
  %v5572 = vsel %vm253, %v5560, %v5561
  %v5573 = vsel %vm1472, %v5540, %v5572
  %v5574 = vsel %vm253, %v5561, %v5562
  %v5575 = vsel %vm1472, %v5542, %v5574
  %v5576 = vsel %vm253, %v5562, %v5563
  %v5577 = vsel %vm1472, %v5544, %v5576
  %v5578 = vsel %vm253, %v5563, %v5564
  %v5579 = vsel %vm1472, %v5546, %v5578
  %v5580 = vsel %vm253, %v5564, %v5565
  %v5581 = vsel %vm1472, %v5548, %v5580
  %v5582 = vsel %vm253, %v5565, %v5566
  %v5583 = vsel %vm1472, %v5550, %v5582
  %v5584 = vsel %vm253, %v5566, %v5567
  %v5585 = vsel %vm1472, %v5552, %v5584
  %v5586 = vsel %vm253, %v5567, %v5568
  %v5587 = vsel %vm1472, %v5554, %v5586
  %v5588 = vsel %vm253, %v5568, %v5569
  %v5589 = vsel %vm1472, %v5556, %v5588
  %v5590 = vsel %vm1472, %v5558, %v5569
  %5602 = vst [vmem:[#allocation3 + $0x24c] sm:$0xff] %v5571
  %5603 = vst [vmem:[#allocation3 + $0x254] sm:$0xff] %v5573
  %5604 = vst [vmem:[#allocation3 + $0x25c] sm:$0xff] %v5575
  %5605 = vst [vmem:[#allocation3 + $0x264] sm:$0xff] %v5577
  %5606 = vst [vmem:[#allocation3 + $0x26c] sm:$0xff] %v5579
  %5607 = vst [vmem:[#allocation3 + $0x274] sm:$0xff] %v5581
  %5608 = vst [vmem:[#allocation3 + $0x27c] sm:$0xff] %v5583
  %5609 = vst [vmem:[#allocation3 + $0x284] sm:$0xff] %v5585
  %5610 = vst [vmem:[#allocation3 + $0x28c] sm:$0xff] %v5587
  %5611 = vst [vmem:[#allocation3 + $0x294] sm:$0xff] %v5589
  %5612 = vst [vmem:[#allocation3 + $0x29c] sm:$0xf] %v5590
  %v5613 = vld [vmem:[#allocation2 + $0x8] sm:$0xff]
  %v5614 = vld [vmem:[#allocation2 + $0x10] sm:$0xff]
  %v5615 = vld [vmem:[#allocation2 + $0x18] sm:$0xff]
  %v5616 = vld [vmem:[#allocation2 + $0x20] sm:$0xff]
  %v5617 = vld [vmem:[#allocation2 + $0x28] sm:$0xff]
  %v5618 = vld [vmem:[#allocation2 + $0x30] sm:$0xff]
  %v5619 = vld [vmem:[#allocation2 + $0x38] sm:$0xff]
  %v5620 = vld [vmem:[#allocation2 + $0x40] sm:$0xff]
  %v5621 = vld [vmem:[#allocation2 + $0x48] sm:$0xff]
  %v5622 = vld [vmem:[#allocation2 + $0x50] sm:$0xff]
  %v5623 = vld [vmem:[#allocation2 + $0x58] sm:$0xff]
  %v5624 = vld [vmem:[#allocation2 + $0x60] sm:$0xff]
  %v5625 = vld [vmem:[#allocation2 + $0x68] sm:$0xff]
  %v5626 = vld [vmem:[#allocation2 + $0x70] sm:$0xff]
  %v5627 = vld [vmem:[#allocation2 + $0x78] sm:$0xff]
  %v5628 = vld [vmem:[#allocation2 + $0x80] sm:$0xff]
  %v5629 = vld [vmem:[#allocation2 + $0x88] sm:$0xff]
  %v5630 = vld [vmem:[#allocation2 + $0x90] sm:$0xff]
  %v5631 = vld [vmem:[#allocation2 + $0x98] sm:$0xff]
  %v5632 = vld [vmem:[#allocation2 + $0xa0] sm:$0xff]
  %v5633 = vld [vmem:[#allocation2 + $0xa8] sm:$0xff]
  %v5634 = vld [vmem:[#allocation2 + $0xb0] sm:$0xff]
  %v5635 = vpack.c.bf16 %v5613, %v5613
  %v5636 = vpack.c.bf16 %v5614, %v5614
  %v5637 = vpack.c.bf16 %v5615, %v5615
  %v5638 = vpack.c.bf16 %v5616, %v5616
  %v5639 = vpack.c.bf16 %v5617, %v5617
  %v5640 = vpack.c.bf16 %v5618, %v5618
  %v5641 = vpack.c.bf16 %v5619, %v5619
  %v5642 = vpack.c.bf16 %v5620, %v5620
  %v5643 = vpack.c.bf16 %v5621, %v5621
  %v5644 = vpack.c.bf16 %v5622, %v5622
  %v5645 = vpack.c.bf16 %v5623, %v5623
  %v5646 = vpack.c.bf16 %v5624, %v5624
  %v5647 = vpack.c.bf16 %v5625, %v5625
  %v5648 = vpack.c.bf16 %v5626, %v5626
  %v5649 = vpack.c.bf16 %v5627, %v5627
  %v5650 = vpack.c.bf16 %v5628, %v5628
  %v5651 = vpack.c.bf16 %v5629, %v5629
  %v5652 = vpack.c.bf16 %v5630, %v5630
  %v5653 = vpack.c.bf16 %v5631, %v5631
  %v5654 = vpack.c.bf16 %v5632, %v5632
  %v5655 = vpack.c.bf16 %v5633, %v5633
  %v5656 = vpack.c.bf16 %v5634, %v5634
  %v5679 = vunpack.c.l.b16 %v5635
  %v5680 = vunpack.c.l.b16 %v5636
  %v5681 = vunpack.c.l.b16 %v5637
  %v5682 = vunpack.c.l.b16 %v5638
  %v5683 = vunpack.c.l.b16 %v5639
  %v5684 = vunpack.c.l.b16 %v5640
  %v5685 = vunpack.c.l.b16 %v5641
  %v5686 = vunpack.c.l.b16 %v5642
  %v5687 = vunpack.c.l.b16 %v5643
  %v5688 = vunpack.c.l.b16 %v5644
  %v5689 = vunpack.c.l.b16 %v5645
  %v5690 = vunpack.c.l.b16 %v5646
  %v5691 = vunpack.c.l.b16 %v5647
  %v5692 = vunpack.c.l.b16 %v5648
  %v5693 = vunpack.c.l.b16 %v5649
  %v5694 = vunpack.c.l.b16 %v5650
  %v5695 = vunpack.c.l.b16 %v5651
  %v5696 = vunpack.c.l.b16 %v5652
  %v5697 = vunpack.c.l.b16 %v5653
  %v5698 = vunpack.c.l.b16 %v5654
  %v5699 = vunpack.c.l.b16 %v5655
  %v5700 = vunpack.c.l.b16 %v5656
  %v5701 = vpack.c.b16 %v5680, %v5679
  %v5702 = vpack.c.b16 %v5682, %v5681
  %v5703 = vpack.c.b16 %v5684, %v5683
  %v5704 = vpack.c.b16 %v5686, %v5685
  %v5705 = vpack.c.b16 %v5688, %v5687
  %v5706 = vpack.c.b16 %v5690, %v5689
  %v5707 = vpack.c.b16 %v5692, %v5691
  %v5708 = vpack.c.b16 %v5694, %v5693
  %v5709 = vpack.c.b16 %v5696, %v5695
  %v5710 = vpack.c.b16 %v5698, %v5697
  %v5711 = vpack.c.b16 %v5700, %v5699
  %5712 = vrot.lane.b32.xlu0 %v5701, 109
  %v5713 = vpop.permute.xlu0 %5712
  %5714 = vrot.lane.b32.xlu0 %v5702, 109
  %v5715 = vpop.permute.xlu0 %5714
  %5716 = vrot.lane.b32.xlu0 %v5703, 109
  %v5717 = vpop.permute.xlu0 %5716
  %5718 = vrot.lane.b32.xlu0 %v5704, 109
  %v5719 = vpop.permute.xlu0 %5718
  %5720 = vrot.lane.b32.xlu0 %v5705, 109
  %v5721 = vpop.permute.xlu0 %5720
  %5722 = vrot.lane.b32.xlu0 %v5706, 109
  %v5723 = vpop.permute.xlu0 %5722
  %5724 = vrot.lane.b32.xlu0 %v5707, 109
  %v5725 = vpop.permute.xlu0 %5724
  %5726 = vrot.lane.b32.xlu0 %v5708, 109
  %v5727 = vpop.permute.xlu0 %5726
  %5728 = vrot.lane.b32.xlu0 %v5709, 109
  %v5729 = vpop.permute.xlu0 %5728
  %5730 = vrot.lane.b32.xlu0 %v5710, 109
  %v5731 = vpop.permute.xlu0 %5730
  %5732 = vrot.lane.b32.xlu0 %v5711, 109
  %v5733 = vpop.permute.xlu0 %5732
  %v5734 = vrot.slane %v5713, 4
  %v5735 = vrot.slane %v5715, 4
  %v5736 = vrot.slane %v5717, 4
  %v5737 = vrot.slane %v5719, 4
  %v5738 = vrot.slane %v5721, 4
  %v5739 = vrot.slane %v5723, 4
  %v5740 = vrot.slane %v5725, 4
  %v5741 = vrot.slane %v5727, 4
  %v5742 = vrot.slane %v5729, 4
  %v5743 = vrot.slane %v5731, 4
  %v5744 = vrot.slane %v5733, 4
  %v5745 = vsel %vm253, %v5734, %v5735
  %v5746 = vsel %vm1648, %v5713, %v5745
  %v5747 = vsel %vm253, %v5735, %v5736
  %v5748 = vsel %vm1648, %v5715, %v5747
  %v5749 = vsel %vm253, %v5736, %v5737
  %v5750 = vsel %vm1648, %v5717, %v5749
  %v5751 = vsel %vm253, %v5737, %v5738
  %v5752 = vsel %vm1648, %v5719, %v5751
  %v5753 = vsel %vm253, %v5738, %v5739
  %v5754 = vsel %vm1648, %v5721, %v5753
  %v5755 = vsel %vm253, %v5739, %v5740
  %v5756 = vsel %vm1648, %v5723, %v5755
  %v5757 = vsel %vm253, %v5740, %v5741
  %v5758 = vsel %vm1648, %v5725, %v5757
  %v5759 = vsel %vm253, %v5741, %v5742
  %v5760 = vsel %vm1648, %v5727, %v5759
  %v5761 = vsel %vm253, %v5742, %v5743
  %v5762 = vsel %vm1648, %v5729, %v5761
  %v5763 = vsel %vm253, %v5743, %v5744
  %v5764 = vsel %vm1648, %v5731, %v5763
  %v5765 = vsel %vm1648, %v5733, %v5744
  %5777 = vst [vmem:[#allocation3 + $0x2a0] sm:$0xff] %v5746
  %5778 = vst [vmem:[#allocation3 + $0x2a8] sm:$0xff] %v5748
  %5779 = vst [vmem:[#allocation3 + $0x2b0] sm:$0xff] %v5750
  %5780 = vst [vmem:[#allocation3 + $0x2b8] sm:$0xff] %v5752
  %5781 = vst [vmem:[#allocation3 + $0x2c0] sm:$0xff] %v5754
  %5782 = vst [vmem:[#allocation3 + $0x2c8] sm:$0xff] %v5756
  %5783 = vst [vmem:[#allocation3 + $0x2d0] sm:$0xff] %v5758
  %5784 = vst [vmem:[#allocation3 + $0x2d8] sm:$0xff] %v5760
  %5785 = vst [vmem:[#allocation3 + $0x2e0] sm:$0xff] %v5762
  %5786 = vst [vmem:[#allocation3 + $0x2e8] sm:$0xff] %v5764
  %5787 = vst [vmem:[#allocation3 + $0x2f0] sm:$0xf] %v5765
  %v5788 = vld [vmem:[%s7] sm:$0xf]
  %v5789 = vld [vmem:[#allocation3] sm:$0xff]
  %v5790 = vld [vmem:[#allocation3 + $0x8] sm:$0xff]
  %v5791 = vld [vmem:[#allocation3 + $0x10] sm:$0xff]
  %v5792 = vld [vmem:[#allocation3 + $0x18] sm:$0xff]
  %v5793 = vld [vmem:[#allocation3 + $0x20] sm:$0xff]
  %v5794 = vld [vmem:[#allocation3 + $0x28] sm:$0xff]
  %v5795 = vld [vmem:[#allocation3 + $0x30] sm:$0xff]
  %v5796 = vld [vmem:[#allocation3 + $0x38] sm:$0xff]
  %v5797 = vld [vmem:[#allocation3 + $0x40] sm:$0xff]
  %v5798 = vld [vmem:[#allocation3 + $0x48] sm:$0xff]
  %v5799 = vld [vmem:[#allocation3 + $0x50] sm:$0xf]
  %v5800 = vld [vmem:[#allocation3 + $0x54] sm:$0xff]
  %v5801 = vld [vmem:[#allocation3 + $0x5c] sm:$0xff]
  %v5802 = vld [vmem:[#allocation3 + $0x64] sm:$0xff]
  %v5803 = vld [vmem:[#allocation3 + $0x6c] sm:$0xff]
  %v5804 = vld [vmem:[#allocation3 + $0x74] sm:$0xff]
  %v5805 = vld [vmem:[#allocation3 + $0x7c] sm:$0xff]
  %v5806 = vld [vmem:[#allocation3 + $0x84] sm:$0xff]
  %v5807 = vld [vmem:[#allocation3 + $0x8c] sm:$0xff]
  %v5808 = vld [vmem:[#allocation3 + $0x94] sm:$0xff]
  %v5809 = vld [vmem:[#allocation3 + $0x9c] sm:$0xff]
  %v5810 = vld [vmem:[#allocation3 + $0xa4] sm:$0xf]
  %v5811 = vld [vmem:[#allocation3 + $0xa8] sm:$0xff]
  %v5812 = vld [vmem:[#allocation3 + $0xb0] sm:$0xff]
  %v5813 = vld [vmem:[#allocation3 + $0xb8] sm:$0xff]
  %v5814 = vld [vmem:[#allocation3 + $0xc0] sm:$0xff]
  %v5815 = vld [vmem:[#allocation3 + $0xc8] sm:$0xff]
  %v5816 = vld [vmem:[#allocation3 + $0xd0] sm:$0xff]
  %v5817 = vld [vmem:[#allocation3 + $0xd8] sm:$0xff]
  %v5818 = vld [vmem:[#allocation3 + $0xe0] sm:$0xff]
  %v5819 = vld [vmem:[#allocation3 + $0xe8] sm:$0xff]
  %v5820 = vld [vmem:[#allocation3 + $0xf0] sm:$0xff]
  %v5821 = vld [vmem:[#allocation3 + $0xf8] sm:$0xf]
  %v5822 = vld [vmem:[#allocation3 + $0xfc] sm:$0xff]
  %v5823 = vld [vmem:[#allocation3 + $0x104] sm:$0xff]
  %v5824 = vld [vmem:[#allocation3 + $0x10c] sm:$0xff]
  %v5825 = vld [vmem:[#allocation3 + $0x114] sm:$0xff]
  %v5826 = vld [vmem:[#allocation3 + $0x11c] sm:$0xff]
  %v5827 = vld [vmem:[#allocation3 + $0x124] sm:$0xff]
  %v5828 = vld [vmem:[#allocation3 + $0x12c] sm:$0xff]
  %v5829 = vld [vmem:[#allocation3 + $0x134] sm:$0xff]
  %v5830 = vld [vmem:[#allocation3 + $0x13c] sm:$0xff]
  %v5831 = vld [vmem:[#allocation3 + $0x144] sm:$0xff]
  %v5832 = vld [vmem:[#allocation3 + $0x14c] sm:$0xf]
  %v5833 = vld [vmem:[#allocation3 + $0x150] sm:$0xff]
  %v5834 = vld [vmem:[#allocation3 + $0x158] sm:$0xff]
  %v5835 = vld [vmem:[#allocation3 + $0x160] sm:$0xff]
  %v5836 = vld [vmem:[#allocation3 + $0x168] sm:$0xff]
  %v5837 = vld [vmem:[#allocation3 + $0x170] sm:$0xff]
  %v5838 = vld [vmem:[#allocation3 + $0x178] sm:$0xff]
  %v5839 = vld [vmem:[#allocation3 + $0x180] sm:$0xff]
  %v5840 = vld [vmem:[#allocation3 + $0x188] sm:$0xff]
  %v5841 = vld [vmem:[#allocation3 + $0x190] sm:$0xff]
  %v5842 = vld [vmem:[#allocation3 + $0x198] sm:$0xff]
  %v5843 = vld [vmem:[#allocation3 + $0x1a0] sm:$0xf]
  %v5844 = vld [vmem:[#allocation3 + $0x1a4] sm:$0xff]
  %v5845 = vld [vmem:[#allocation3 + $0x1ac] sm:$0xff]
  %v5846 = vld [vmem:[#allocation3 + $0x1b4] sm:$0xff]
  %v5847 = vld [vmem:[#allocation3 + $0x1bc] sm:$0xff]
  %v5848 = vld [vmem:[#allocation3 + $0x1c4] sm:$0xff]
  %v5849 = vld [vmem:[#allocation3 + $0x1cc] sm:$0xff]
  %v5850 = vld [vmem:[#allocation3 + $0x1d4] sm:$0xff]
  %v5851 = vld [vmem:[#allocation3 + $0x1dc] sm:$0xff]
  %v5852 = vld [vmem:[#allocation3 + $0x1e4] sm:$0xff]
  %v5853 = vld [vmem:[#allocation3 + $0x1ec] sm:$0xff]
  %v5854 = vld [vmem:[#allocation3 + $0x1f4] sm:$0xf]
  %v5855 = vld [vmem:[#allocation3 + $0x1f8] sm:$0xff]
  %v5856 = vld [vmem:[#allocation3 + $0x200] sm:$0xff]
  %v5857 = vld [vmem:[#allocation3 + $0x208] sm:$0xff]
  %v5858 = vld [vmem:[#allocation3 + $0x210] sm:$0xff]
  %v5859 = vld [vmem:[#allocation3 + $0x218] sm:$0xff]
  %v5860 = vld [vmem:[#allocation3 + $0x220] sm:$0xff]
  %v5861 = vld [vmem:[#allocation3 + $0x228] sm:$0xff]
  %v5862 = vld [vmem:[#allocation3 + $0x230] sm:$0xff]
  %v5863 = vld [vmem:[#allocation3 + $0x238] sm:$0xff]
  %v5864 = vld [vmem:[#allocation3 + $0x240] sm:$0xff]
  %v5865 = vld [vmem:[#allocation3 + $0x248] sm:$0xf]
  %v5866 = vld [vmem:[#allocation3 + $0x24c] sm:$0xff]
  %v5867 = vld [vmem:[#allocation3 + $0x254] sm:$0xff]
  %v5868 = vld [vmem:[#allocation3 + $0x25c] sm:$0xff]
  %v5869 = vld [vmem:[#allocation3 + $0x264] sm:$0xff]
  %v5870 = vld [vmem:[#allocation3 + $0x26c] sm:$0xff]
  %v5871 = vld [vmem:[#allocation3 + $0x274] sm:$0xff]
  %v5872 = vld [vmem:[#allocation3 + $0x27c] sm:$0xff]
  %v5873 = vld [vmem:[#allocation3 + $0x284] sm:$0xff]
  %v5874 = vld [vmem:[#allocation3 + $0x28c] sm:$0xff]
  %v5875 = vld [vmem:[#allocation3 + $0x294] sm:$0xff]
  %v5876 = vld [vmem:[#allocation3 + $0x29c] sm:$0xf]
  %v5877 = vld [vmem:[#allocation3 + $0x2a0] sm:$0xff]
  %v5878 = vld [vmem:[#allocation3 + $0x2a8] sm:$0xff]
  %v5879 = vld [vmem:[#allocation3 + $0x2b0] sm:$0xff]
  %v5880 = vld [vmem:[#allocation3 + $0x2b8] sm:$0xff]
  %v5881 = vld [vmem:[#allocation3 + $0x2c0] sm:$0xff]
  %v5882 = vld [vmem:[#allocation3 + $0x2c8] sm:$0xff]
  %v5883 = vld [vmem:[#allocation3 + $0x2d0] sm:$0xff]
  %v5884 = vld [vmem:[#allocation3 + $0x2d8] sm:$0xff]
  %v5885 = vld [vmem:[#allocation3 + $0x2e0] sm:$0xff]
  %v5886 = vld [vmem:[#allocation3 + $0x2e8] sm:$0xff]
  %v5887 = vld [vmem:[#allocation3 + $0x2f0] sm:$0xf]
  %v5987 = vunpack.c.l.b16 %v5789
  %v5988 = vunpack.c.h.b16 %v5789
  %v5989 = vunpack.c.l.b16 %v5790
  %v5990 = vunpack.c.h.b16 %v5790
  %v5991 = vunpack.c.l.b16 %v5791
  %v5992 = vunpack.c.h.b16 %v5791
  %v5993 = vunpack.c.l.b16 %v5792
  %v5994 = vunpack.c.h.b16 %v5792
  %v5995 = vunpack.c.l.b16 %v5793
  %v5996 = vunpack.c.h.b16 %v5793
  %v5997 = vunpack.c.l.b16 %v5794
  %v5998 = vunpack.c.h.b16 %v5794
  %v5999 = vunpack.c.l.b16 %v5795
  %v6000 = vunpack.c.h.b16 %v5795
  %v6001 = vunpack.c.l.b16 %v5796
  %v6002 = vunpack.c.h.b16 %v5796
  %v6003 = vunpack.c.l.b16 %v5797
  %v6004 = vunpack.c.h.b16 %v5797
  %v6005 = vunpack.c.l.b16 %v5798
  %v6006 = vunpack.c.h.b16 %v5798
  %v6007 = vunpack.c.l.b16 %v5799
  %v6008 = vunpack.c.l.b16 %v5800
  %v6009 = vunpack.c.h.b16 %v5800
  %v6010 = vunpack.c.l.b16 %v5801
  %v6011 = vunpack.c.h.b16 %v5801
  %v6012 = vunpack.c.l.b16 %v5802
  %v6013 = vunpack.c.h.b16 %v5802
  %v6014 = vunpack.c.l.b16 %v5803
  %v6015 = vunpack.c.h.b16 %v5803
  %v6016 = vunpack.c.l.b16 %v5804
  %v6017 = vunpack.c.h.b16 %v5804
  %v6018 = vunpack.c.l.b16 %v5805
  %v6019 = vunpack.c.h.b16 %v5805
  %v6020 = vunpack.c.l.b16 %v5806
  %v6021 = vunpack.c.h.b16 %v5806
  %v6022 = vunpack.c.l.b16 %v5807
  %v6023 = vunpack.c.h.b16 %v5807
  %v6024 = vunpack.c.l.b16 %v5808
  %v6025 = vunpack.c.h.b16 %v5808
  %v6026 = vunpack.c.l.b16 %v5809
  %v6027 = vunpack.c.h.b16 %v5809
  %v6028 = vunpack.c.l.b16 %v5810
  %v6029 = vunpack.c.l.b16 %v5811
  %v6030 = vunpack.c.h.b16 %v5811
  %v6031 = vunpack.c.l.b16 %v5812
  %v6032 = vunpack.c.h.b16 %v5812
  %v6033 = vunpack.c.l.b16 %v5813
  %v6034 = vunpack.c.h.b16 %v5813
  %v6035 = vunpack.c.l.b16 %v5814
  %v6036 = vunpack.c.h.b16 %v5814
  %v6037 = vunpack.c.l.b16 %v5815
  %v6038 = vunpack.c.h.b16 %v5815
  %v6039 = vunpack.c.l.b16 %v5816
  %v6040 = vunpack.c.h.b16 %v5816
  %v6041 = vunpack.c.l.b16 %v5817
  %v6042 = vunpack.c.h.b16 %v5817
  %v6043 = vunpack.c.l.b16 %v5818
  %v6044 = vunpack.c.h.b16 %v5818
  %v6045 = vunpack.c.l.b16 %v5819
  %v6046 = vunpack.c.h.b16 %v5819
  %v6047 = vunpack.c.l.b16 %v5820
  %v6048 = vunpack.c.h.b16 %v5820
  %v6049 = vunpack.c.l.b16 %v5821
  %v6050 = vunpack.c.l.b16 %v5822
  %v6051 = vunpack.c.h.b16 %v5822
  %v6052 = vunpack.c.l.b16 %v5823
  %v6053 = vunpack.c.h.b16 %v5823
  %v6054 = vunpack.c.l.b16 %v5824
  %v6055 = vunpack.c.h.b16 %v5824
  %v6056 = vunpack.c.l.b16 %v5825
  %v6057 = vunpack.c.h.b16 %v5825
  %v6058 = vunpack.c.l.b16 %v5826
  %v6059 = vunpack.c.h.b16 %v5826
  %v6060 = vunpack.c.l.b16 %v5827
  %v6061 = vunpack.c.h.b16 %v5827
  %v6062 = vunpack.c.l.b16 %v5828
  %v6063 = vunpack.c.h.b16 %v5828
  %v6064 = vunpack.c.l.b16 %v5829
  %v6065 = vunpack.c.h.b16 %v5829
  %v6066 = vunpack.c.l.b16 %v5830
  %v6067 = vunpack.c.h.b16 %v5830
  %v6068 = vunpack.c.l.b16 %v5831
  %v6069 = vunpack.c.h.b16 %v5831
  %v6070 = vunpack.c.l.b16 %v5832
  %v6071 = vunpack.c.l.b16 %v5833
  %v6072 = vunpack.c.h.b16 %v5833
  %v6073 = vunpack.c.l.b16 %v5834
  %v6074 = vunpack.c.h.b16 %v5834
  %v6075 = vunpack.c.l.b16 %v5835
  %v6076 = vunpack.c.h.b16 %v5835
  %v6077 = vunpack.c.l.b16 %v5836
  %v6078 = vunpack.c.h.b16 %v5836
  %v6079 = vunpack.c.l.b16 %v5837
  %v6080 = vunpack.c.h.b16 %v5837
  %v6081 = vunpack.c.l.b16 %v5838
  %v6082 = vunpack.c.h.b16 %v5838
  %v6083 = vunpack.c.l.b16 %v5839
  %v6084 = vunpack.c.h.b16 %v5839
  %v6085 = vunpack.c.l.b16 %v5840
  %v6086 = vunpack.c.h.b16 %v5840
  %v6087 = vunpack.c.l.b16 %v5841
  %v6088 = vunpack.c.h.b16 %v5841
  %v6089 = vunpack.c.l.b16 %v5842
  %v6090 = vunpack.c.h.b16 %v5842
  %v6091 = vunpack.c.l.b16 %v5843
  %v6092 = vunpack.c.l.b16 %v5844
  %v6093 = vunpack.c.h.b16 %v5844
  %v6094 = vunpack.c.l.b16 %v5845
  %v6095 = vunpack.c.h.b16 %v5845
  %v6096 = vunpack.c.l.b16 %v5846
  %v6097 = vunpack.c.h.b16 %v5846
  %v6098 = vunpack.c.l.b16 %v5847
  %v6099 = vunpack.c.h.b16 %v5847
  %v6100 = vunpack.c.l.b16 %v5848
  %v6101 = vunpack.c.h.b16 %v5848
  %v6102 = vunpack.c.l.b16 %v5849
  %v6103 = vunpack.c.h.b16 %v5849
  %v6104 = vunpack.c.l.b16 %v5850
  %v6105 = vunpack.c.h.b16 %v5850
  %v6106 = vunpack.c.l.b16 %v5851
  %v6107 = vunpack.c.h.b16 %v5851
  %v6108 = vunpack.c.l.b16 %v5852
  %v6109 = vunpack.c.h.b16 %v5852
  %v6110 = vunpack.c.l.b16 %v5853
  %v6111 = vunpack.c.h.b16 %v5853
  %v6112 = vunpack.c.l.b16 %v5854
  %v6113 = vunpack.c.l.b16 %v5855
  %v6114 = vunpack.c.h.b16 %v5855
  %v6115 = vunpack.c.l.b16 %v5856
  %v6116 = vunpack.c.h.b16 %v5856
  %v6117 = vunpack.c.l.b16 %v5857
  %v6118 = vunpack.c.h.b16 %v5857
  %v6119 = vunpack.c.l.b16 %v5858
  %v6120 = vunpack.c.h.b16 %v5858
  %v6121 = vunpack.c.l.b16 %v5859
  %v6122 = vunpack.c.h.b16 %v5859
  %v6123 = vunpack.c.l.b16 %v5860
  %v6124 = vunpack.c.h.b16 %v5860
  %v6125 = vunpack.c.l.b16 %v5861
  %v6126 = vunpack.c.h.b16 %v5861
  %v6127 = vunpack.c.l.b16 %v5862
  %v6128 = vunpack.c.h.b16 %v5862
  %v6129 = vunpack.c.l.b16 %v5863
  %v6130 = vunpack.c.h.b16 %v5863
  %v6131 = vunpack.c.l.b16 %v5864
  %v6132 = vunpack.c.h.b16 %v5864
  %v6133 = vunpack.c.l.b16 %v5865
  %v6134 = vunpack.c.l.b16 %v5866
  %v6135 = vunpack.c.h.b16 %v5866
  %v6136 = vunpack.c.l.b16 %v5867
  %v6137 = vunpack.c.h.b16 %v5867
  %v6138 = vunpack.c.l.b16 %v5868
  %v6139 = vunpack.c.h.b16 %v5868
  %v6140 = vunpack.c.l.b16 %v5869
  %v6141 = vunpack.c.h.b16 %v5869
  %v6142 = vunpack.c.l.b16 %v5870
  %v6143 = vunpack.c.h.b16 %v5870
  %v6144 = vunpack.c.l.b16 %v5871
  %v6145 = vunpack.c.h.b16 %v5871
  %v6146 = vunpack.c.l.b16 %v5872
  %v6147 = vunpack.c.h.b16 %v5872
  %v6148 = vunpack.c.l.b16 %v5873
  %v6149 = vunpack.c.h.b16 %v5873
  %v6150 = vunpack.c.l.b16 %v5874
  %v6151 = vunpack.c.h.b16 %v5874
  %v6152 = vunpack.c.l.b16 %v5875
  %v6153 = vunpack.c.h.b16 %v5875
  %v6154 = vunpack.c.l.b16 %v5876
  %v6155 = vunpack.c.l.b16 %v5877
  %v6156 = vunpack.c.h.b16 %v5877
  %v6157 = vunpack.c.l.b16 %v5878
  %v6158 = vunpack.c.h.b16 %v5878
  %v6159 = vunpack.c.l.b16 %v5879
  %v6160 = vunpack.c.h.b16 %v5879
  %v6161 = vunpack.c.l.b16 %v5880
  %v6162 = vunpack.c.h.b16 %v5880
  %v6163 = vunpack.c.l.b16 %v5881
  %v6164 = vunpack.c.h.b16 %v5881
  %v6165 = vunpack.c.l.b16 %v5882
  %v6166 = vunpack.c.h.b16 %v5882
  %v6167 = vunpack.c.l.b16 %v5883
  %v6168 = vunpack.c.h.b16 %v5883
  %v6169 = vunpack.c.l.b16 %v5884
  %v6170 = vunpack.c.h.b16 %v5884
  %v6171 = vunpack.c.l.b16 %v5885
  %v6172 = vunpack.c.h.b16 %v5885
  %v6173 = vunpack.c.l.b16 %v5886
  %v6174 = vunpack.c.h.b16 %v5886
  %v6175 = vunpack.c.l.b16 %v5887
  %v6176 = vpack.c.b16 %v6008, %v5987
  %v6177 = vpack.c.b16 %v6009, %v5988
  %v6178 = vpack.c.b16 %v6010, %v5989
  %v6179 = vpack.c.b16 %v6011, %v5990
  %v6180 = vpack.c.b16 %v6012, %v5991
  %v6181 = vpack.c.b16 %v6013, %v5992
  %v6182 = vpack.c.b16 %v6014, %v5993
  %v6183 = vpack.c.b16 %v6015, %v5994
  %v6184 = vpack.c.b16 %v6016, %v5995
  %v6185 = vpack.c.b16 %v6017, %v5996
  %v6186 = vpack.c.b16 %v6018, %v5997
  %v6187 = vpack.c.b16 %v6019, %v5998
  %v6188 = vpack.c.b16 %v6020, %v5999
  %v6189 = vpack.c.b16 %v6021, %v6000
  %v6190 = vpack.c.b16 %v6022, %v6001
  %v6191 = vpack.c.b16 %v6023, %v6002
  %v6192 = vpack.c.b16 %v6024, %v6003
  %v6193 = vpack.c.b16 %v6025, %v6004
  %v6194 = vpack.c.b16 %v6026, %v6005
  %v6195 = vpack.c.b16 %v6027, %v6006
  %v6196 = vpack.c.b16 %v6028, %v6007
  %v6197 = vpack.c.b16 %v6050, %v6029
  %v6198 = vpack.c.b16 %v6051, %v6030
  %v6199 = vpack.c.b16 %v6052, %v6031
  %v6200 = vpack.c.b16 %v6053, %v6032
  %v6201 = vpack.c.b16 %v6054, %v6033
  %v6202 = vpack.c.b16 %v6055, %v6034
  %v6203 = vpack.c.b16 %v6056, %v6035
  %v6204 = vpack.c.b16 %v6057, %v6036
  %v6205 = vpack.c.b16 %v6058, %v6037
  %v6206 = vpack.c.b16 %v6059, %v6038
  %v6207 = vpack.c.b16 %v6060, %v6039
  %v6208 = vpack.c.b16 %v6061, %v6040
  %v6209 = vpack.c.b16 %v6062, %v6041
  %v6210 = vpack.c.b16 %v6063, %v6042
  %v6211 = vpack.c.b16 %v6064, %v6043
  %v6212 = vpack.c.b16 %v6065, %v6044
  %v6213 = vpack.c.b16 %v6066, %v6045
  %v6214 = vpack.c.b16 %v6067, %v6046
  %v6215 = vpack.c.b16 %v6068, %v6047
  %v6216 = vpack.c.b16 %v6069, %v6048
  %v6217 = vpack.c.b16 %v6070, %v6049
  %v6218 = vpack.c.b16 %v6092, %v6071
  %v6219 = vpack.c.b16 %v6093, %v6072
  %v6220 = vpack.c.b16 %v6094, %v6073
  %v6221 = vpack.c.b16 %v6095, %v6074
  %v6222 = vpack.c.b16 %v6096, %v6075
  %v6223 = vpack.c.b16 %v6097, %v6076
  %v6224 = vpack.c.b16 %v6098, %v6077
  %v6225 = vpack.c.b16 %v6099, %v6078
  %v6226 = vpack.c.b16 %v6100, %v6079
  %v6227 = vpack.c.b16 %v6101, %v6080
  %v6228 = vpack.c.b16 %v6102, %v6081
  %v6229 = vpack.c.b16 %v6103, %v6082
  %v6230 = vpack.c.b16 %v6104, %v6083
  %v6231 = vpack.c.b16 %v6105, %v6084
  %v6232 = vpack.c.b16 %v6106, %v6085
  %v6233 = vpack.c.b16 %v6107, %v6086
  %v6234 = vpack.c.b16 %v6108, %v6087
  %v6235 = vpack.c.b16 %v6109, %v6088
  %v6236 = vpack.c.b16 %v6110, %v6089
  %v6237 = vpack.c.b16 %v6111, %v6090
  %v6238 = vpack.c.b16 %v6112, %v6091
  %v6239 = vpack.c.b16 %v6134, %v6113
  %v6240 = vpack.c.b16 %v6135, %v6114
  %v6241 = vpack.c.b16 %v6136, %v6115
  %v6242 = vpack.c.b16 %v6137, %v6116
  %v6243 = vpack.c.b16 %v6138, %v6117
  %v6244 = vpack.c.b16 %v6139, %v6118
  %v6245 = vpack.c.b16 %v6140, %v6119
  %v6246 = vpack.c.b16 %v6141, %v6120
  %v6247 = vpack.c.b16 %v6142, %v6121
  %v6248 = vpack.c.b16 %v6143, %v6122
  %v6249 = vpack.c.b16 %v6144, %v6123
  %v6250 = vpack.c.b16 %v6145, %v6124
  %v6251 = vpack.c.b16 %v6146, %v6125
  %v6252 = vpack.c.b16 %v6147, %v6126
  %v6253 = vpack.c.b16 %v6148, %v6127
  %v6254 = vpack.c.b16 %v6149, %v6128
  %v6255 = vpack.c.b16 %v6150, %v6129
  %v6256 = vpack.c.b16 %v6151, %v6130
  %v6257 = vpack.c.b16 %v6152, %v6131
  %v6258 = vpack.c.b16 %v6153, %v6132
  %v6259 = vpack.c.b16 %v6154, %v6133
  %v6260 = vpack.c.b16 %v6155, %v6155
  %v6261 = vpack.c.b16 %v6156, %v6156
  %v6262 = vpack.c.b16 %v6157, %v6157
  %v6263 = vpack.c.b16 %v6158, %v6158
  %v6264 = vpack.c.b16 %v6159, %v6159
  %v6265 = vpack.c.b16 %v6160, %v6160
  %v6266 = vpack.c.b16 %v6161, %v6161
  %v6267 = vpack.c.b16 %v6162, %v6162
  %v6268 = vpack.c.b16 %v6163, %v6163
  %v6269 = vpack.c.b16 %v6164, %v6164
  %v6270 = vpack.c.b16 %v6165, %v6165
  %v6271 = vpack.c.b16 %v6166, %v6166
  %v6272 = vpack.c.b16 %v6167, %v6167
  %v6273 = vpack.c.b16 %v6168, %v6168
  %v6274 = vpack.c.b16 %v6169, %v6169
  %v6275 = vpack.c.b16 %v6170, %v6170
  %v6276 = vpack.c.b16 %v6171, %v6171
  %v6277 = vpack.c.b16 %v6172, %v6172
  %v6278 = vpack.c.b16 %v6173, %v6173
  %v6279 = vpack.c.b16 %v6174, %v6174
  %v6280 = vpack.c.b16 %v6175, %v6175
  %vm6365 = vcmask 588800
  %v6367 = vsel %vm6365, %v5788, 0
  %vm6369 = vcmask 1043456
  %v6371 = vsel %vm6369, %v6260, 0
  %v6374 = vsel %vm6369, %v6261, 0
  %v6377 = vsel %vm6369, %v6262, 0
  %v6380 = vsel %vm6369, %v6263, 0
  %v6383 = vsel %vm6369, %v6264, 0
  %v6386 = vsel %vm6369, %v6265, 0
  %v6389 = vsel %vm6369, %v6266, 0
  %v6392 = vsel %vm6369, %v6267, 0
  %v6395 = vsel %vm6369, %v6268, 0
  %v6398 = vsel %vm6369, %v6269, 0
  %v6401 = vsel %vm6369, %v6270, 0
  %v6404 = vsel %vm6369, %v6271, 0
  %v6407 = vsel %vm6369, %v6272, 0
  %v6410 = vsel %vm6369, %v6273, 0
  %v6413 = vsel %vm6369, %v6274, 0
  %v6416 = vsel %vm6369, %v6275, 0
  %v6419 = vsel %vm6369, %v6276, 0
  %v6422 = vsel %vm6369, %v6277, 0
  %v6425 = vsel %vm6369, %v6278, 0
  %v6428 = vsel %vm6369, %v6279, 0
  %v6431 = vsel %vm6369, %v6280, 0
  %6433 = vmatprep.subr.bf16.mxu0 %v6177
  %6434 = vmatpush1.bf16.msra.mxu0 %v6176
  %6435 = vmatprep.subr.bf16.mxu0 %v6198
  %6436 = vmatpush1.bf16.msra.mxu0 %v6197
  %6437 = vmatprep.subr.bf16.mxu0 %v6219
  %6438 = vmatpush1.bf16.msra.mxu0 %v6218
  %6439 = vmatprep.subr.bf16.mxu0 %v6240
  %6440 = vmatpush1.bf16.msra.mxu0 %v6239
  %6441 = vmatprep.subr.bf16.mxu0 %v6374
  %6442 = vmatpush1.bf16.msra.mxu0 %v6371
  %6443 = vmatprep.subr.bf16.mxu0 0
  %6444 = vmatpush1.bf16.msra.mxu0 0
  %6445 = vmatprep.subr.bf16.mxu0 0
  %6446 = vmatpush1.bf16.msra.mxu0 0
  %6447 = vmatprep.subr.bf16.mxu0 0
  %6448 = vmatpush1.bf16.msra.mxu0 0
  %6449 = vmatprep.subr.bf16.mxu0 0
  %6450 = vmatpush1.bf16.msra.mxu0 0
  %6451 = vmatprep.subr.bf16.mxu0 0
  %6452 = vmatpush1.bf16.msra.mxu0 0
  %6453 = vmatprep.subr.bf16.mxu0 0
  %6454 = vmatpush1.bf16.msra.mxu0 0
  %6455 = vmatprep.subr.bf16.mxu0 0
  %6456 = vmatpush1.bf16.msra.mxu0 0
  %6457 = vmatprep.subr.bf16.mxu0 0
  %6458 = vmatpush1.bf16.msra.mxu0 0
  %6459 = vmatprep.subr.bf16.mxu0 0
  %6460 = vmatpush1.bf16.msra.mxu0 0
  %6461 = vmatprep.subr.bf16.mxu0 0
  %6462 = vmatpush1.bf16.msra.mxu0 0
  %6463 = vmatprep.subr.bf16.mxu0 0
  %6464 = vmatpush1.bf16.msra.mxu0 0
  %6465 = vmatprep.mubr.bf16.mxu0 0
  %6466 = vmatmul.mubr.bf16.gmra.mrb[0].mxu0 %v6367
  %v6467 = vpop.f32.mrb[0].mxu0
  %v6468 = vadd.f32 0.0, %v6467
  %v6469 = vpop.f32.mrb[0].mxu0
  %v6470 = vadd.f32 0.0, %v6469
  %v6471 = vpop.f32.mrb[0].mxu0
  %v6472 = vpop.f32.mrb[0].mxu0
  %6473 = vdwg.mxu0
  %6474 = vmatprep.subr.bf16.mxu0 %v6179
  %6475 = vmatpush1.bf16.msra.mxu0 %v6178
  %6476 = vmatprep.subr.bf16.mxu0 %v6200
  %6477 = vmatpush1.bf16.msra.mxu0 %v6199
  %6478 = vmatprep.subr.bf16.mxu0 %v6221
  %6479 = vmatpush1.bf16.msra.mxu0 %v6220
  %6480 = vmatprep.subr.bf16.mxu0 %v6242
  %6481 = vmatpush1.bf16.msra.mxu0 %v6241
  %6482 = vmatprep.subr.bf16.mxu0 %v6380
  %6483 = vmatpush1.bf16.msra.mxu0 %v6377
  %6484 = vmatprep.subr.bf16.mxu0 0
  %6485 = vmatpush1.bf16.msra.mxu0 0
  %6486 = vmatprep.subr.bf16.mxu0 0
  %6487 = vmatpush1.bf16.msra.mxu0 0
  %6488 = vmatprep.subr.bf16.mxu0 0
  %6489 = vmatpush1.bf16.msra.mxu0 0
  %6490 = vmatprep.subr.bf16.mxu0 0
  %6491 = vmatpush1.bf16.msra.mxu0 0
  %6492 = vmatprep.subr.bf16.mxu0 0
  %6493 = vmatpush1.bf16.msra.mxu0 0
  %6494 = vmatprep.subr.bf16.mxu0 0
  %6495 = vmatpush1.bf16.msra.mxu0 0
  %6496 = vmatprep.subr.bf16.mxu0 0
  %6497 = vmatpush1.bf16.msra.mxu0 0
  %6498 = vmatprep.subr.bf16.mxu0 0
  %6499 = vmatpush1.bf16.msra.mxu0 0
  %6500 = vmatprep.subr.bf16.mxu0 0
  %6501 = vmatpush1.bf16.msra.mxu0 0
  %6502 = vmatprep.subr.bf16.mxu0 0
  %6503 = vmatpush1.bf16.msra.mxu0 0
  %6504 = vmatprep.subr.bf16.mxu0 0
  %6505 = vmatpush1.bf16.msra.mxu0 0
  %6506 = vmatprep.mubr.bf16.mxu0 0
  %6507 = vmatmul.mubr.bf16.gmra.mrb[0].mxu0 %v6367
  %v6508 = vpop.f32.mrb[0].mxu0
  %v6509 = vadd.f32 0.0, %v6508
  %v6510 = vpop.f32.mrb[0].mxu0
  %v6511 = vadd.f32 0.0, %v6510
  %v6512 = vpop.f32.mrb[0].mxu0
  %v6513 = vpop.f32.mrb[0].mxu0
  %6514 = vdwg.mxu0
  %6515 = vmatprep.subr.bf16.mxu0 %v6181
  %6516 = vmatpush1.bf16.msra.mxu0 %v6180
  %6517 = vmatprep.subr.bf16.mxu0 %v6202
  %6518 = vmatpush1.bf16.msra.mxu0 %v6201
  %6519 = vmatprep.subr.bf16.mxu0 %v6223
  %6520 = vmatpush1.bf16.msra.mxu0 %v6222
  %6521 = vmatprep.subr.bf16.mxu0 %v6244
  %6522 = vmatpush1.bf16.msra.mxu0 %v6243
  %6523 = vmatprep.subr.bf16.mxu0 %v6386
  %6524 = vmatpush1.bf16.msra.mxu0 %v6383
  %6525 = vmatprep.subr.bf16.mxu0 0
  %6526 = vmatpush1.bf16.msra.mxu0 0
  %6527 = vmatprep.subr.bf16.mxu0 0
  %6528 = vmatpush1.bf16.msra.mxu0 0
  %6529 = vmatprep.subr.bf16.mxu0 0
  %6530 = vmatpush1.bf16.msra.mxu0 0
  %6531 = vmatprep.subr.bf16.mxu0 0
  %6532 = vmatpush1.bf16.msra.mxu0 0
  %6533 = vmatprep.subr.bf16.mxu0 0
  %6534 = vmatpush1.bf16.msra.mxu0 0
  %6535 = vmatprep.subr.bf16.mxu0 0
  %6536 = vmatpush1.bf16.msra.mxu0 0
  %6537 = vmatprep.subr.bf16.mxu0 0
  %6538 = vmatpush1.bf16.msra.mxu0 0
  %6539 = vmatprep.subr.bf16.mxu0 0
  %6540 = vmatpush1.bf16.msra.mxu0 0
  %6541 = vmatprep.subr.bf16.mxu0 0
  %6542 = vmatpush1.bf16.msra.mxu0 0
  %6543 = vmatprep.subr.bf16.mxu0 0
  %6544 = vmatpush1.bf16.msra.mxu0 0
  %6545 = vmatprep.subr.bf16.mxu0 0
  %6546 = vmatpush1.bf16.msra.mxu0 0
  %6547 = vmatprep.mubr.bf16.mxu0 0
  %6548 = vmatmul.mubr.bf16.gmra.mrb[0].mxu0 %v6367
  %v6549 = vpop.f32.mrb[0].mxu0
  %v6550 = vadd.f32 0.0, %v6549
  %v6551 = vpop.f32.mrb[0].mxu0
  %v6552 = vadd.f32 0.0, %v6551
  %v6553 = vpop.f32.mrb[0].mxu0
  %v6554 = vpop.f32.mrb[0].mxu0
  %6555 = vdwg.mxu0
  %6556 = vmatprep.subr.bf16.mxu0 %v6183
  %6557 = vmatpush1.bf16.msra.mxu0 %v6182
  %6558 = vmatprep.subr.bf16.mxu0 %v6204
  %6559 = vmatpush1.bf16.msra.mxu0 %v6203
  %6560 = vmatprep.subr.bf16.mxu0 %v6225
  %6561 = vmatpush1.bf16.msra.mxu0 %v6224
  %6562 = vmatprep.subr.bf16.mxu0 %v6246
  %6563 = vmatpush1.bf16.msra.mxu0 %v6245
  %6564 = vmatprep.subr.bf16.mxu0 %v6392
  %6565 = vmatpush1.bf16.msra.mxu0 %v6389
  %6566 = vmatprep.subr.bf16.mxu0 0
  %6567 = vmatpush1.bf16.msra.mxu0 0
  %6568 = vmatprep.subr.bf16.mxu0 0
  %6569 = vmatpush1.bf16.msra.mxu0 0
  %6570 = vmatprep.subr.bf16.mxu0 0
  %6571 = vmatpush1.bf16.msra.mxu0 0
  %6572 = vmatprep.subr.bf16.mxu0 0
  %6573 = vmatpush1.bf16.msra.mxu0 0
  %6574 = vmatprep.subr.bf16.mxu0 0
  %6575 = vmatpush1.bf16.msra.mxu0 0
  %6576 = vmatprep.subr.bf16.mxu0 0
  %6577 = vmatpush1.bf16.msra.mxu0 0
  %6578 = vmatprep.subr.bf16.mxu0 0
  %6579 = vmatpush1.bf16.msra.mxu0 0
  %6580 = vmatprep.subr.bf16.mxu0 0
  %6581 = vmatpush1.bf16.msra.mxu0 0
  %6582 = vmatprep.subr.bf16.mxu0 0
  %6583 = vmatpush1.bf16.msra.mxu0 0
  %6584 = vmatprep.subr.bf16.mxu0 0
  %6585 = vmatpush1.bf16.msra.mxu0 0
  %6586 = vmatprep.subr.bf16.mxu0 0
  %6587 = vmatpush1.bf16.msra.mxu0 0
  %6588 = vmatprep.mubr.bf16.mxu0 0
  %6589 = vmatmul.mubr.bf16.gmra.mrb[0].mxu0 %v6367
  %v6590 = vpop.f32.mrb[0].mxu0
  %v6591 = vadd.f32 0.0, %v6590
  %v6592 = vpop.f32.mrb[0].mxu0
  %v6593 = vadd.f32 0.0, %v6592
  %v6594 = vpop.f32.mrb[0].mxu0
  %v6595 = vpop.f32.mrb[0].mxu0
  %6596 = vdwg.mxu0
  %6597 = vmatprep.subr.bf16.mxu0 %v6185
  %6598 = vmatpush1.bf16.msra.mxu0 %v6184
  %6599 = vmatprep.subr.bf16.mxu0 %v6206
  %6600 = vmatpush1.bf16.msra.mxu0 %v6205
  %6601 = vmatprep.subr.bf16.mxu0 %v6227
  %6602 = vmatpush1.bf16.msra.mxu0 %v6226
  %6603 = vmatprep.subr.bf16.mxu0 %v6248
  %6604 = vmatpush1.bf16.msra.mxu0 %v6247
  %6605 = vmatprep.subr.bf16.mxu0 %v6398
  %6606 = vmatpush1.bf16.msra.mxu0 %v6395
  %6607 = vmatprep.subr.bf16.mxu0 0
  %6608 = vmatpush1.bf16.msra.mxu0 0
  %6609 = vmatprep.subr.bf16.mxu0 0
  %6610 = vmatpush1.bf16.msra.mxu0 0
  %6611 = vmatprep.subr.bf16.mxu0 0
  %6612 = vmatpush1.bf16.msra.mxu0 0
  %6613 = vmatprep.subr.bf16.mxu0 0
  %6614 = vmatpush1.bf16.msra.mxu0 0
  %6615 = vmatprep.subr.bf16.mxu0 0
  %6616 = vmatpush1.bf16.msra.mxu0 0
  %6617 = vmatprep.subr.bf16.mxu0 0
  %6618 = vmatpush1.bf16.msra.mxu0 0
  %6619 = vmatprep.subr.bf16.mxu0 0
  %6620 = vmatpush1.bf16.msra.mxu0 0
  %6621 = vmatprep.subr.bf16.mxu0 0
  %6622 = vmatpush1.bf16.msra.mxu0 0
  %6623 = vmatprep.subr.bf16.mxu0 0
  %6624 = vmatpush1.bf16.msra.mxu0 0
  %6625 = vmatprep.subr.bf16.mxu0 0
  %6626 = vmatpush1.bf16.msra.mxu0 0
  %6627 = vmatprep.subr.bf16.mxu0 0
  %6628 = vmatpush1.bf16.msra.mxu0 0
  %6629 = vmatprep.mubr.bf16.mxu0 0
  %6630 = vmatmul.mubr.bf16.gmra.mrb[0].mxu0 %v6367
  %v6631 = vpop.f32.mrb[0].mxu0
  %v6632 = vadd.f32 0.0, %v6631
  %v6633 = vpop.f32.mrb[0].mxu0
  %v6634 = vadd.f32 0.0, %v6633
  %v6635 = vpop.f32.mrb[0].mxu0
  %v6636 = vpop.f32.mrb[0].mxu0
  %6637 = vdwg.mxu0
  %6638 = vmatprep.subr.bf16.mxu0 %v6187
  %6639 = vmatpush1.bf16.msra.mxu0 %v6186
  %6640 = vmatprep.subr.bf16.mxu0 %v6208
  %6641 = vmatpush1.bf16.msra.mxu0 %v6207
  %6642 = vmatprep.subr.bf16.mxu0 %v6229
  %6643 = vmatpush1.bf16.msra.mxu0 %v6228
  %6644 = vmatprep.subr.bf16.mxu0 %v6250
  %6645 = vmatpush1.bf16.msra.mxu0 %v6249
  %6646 = vmatprep.subr.bf16.mxu0 %v6404
  %6647 = vmatpush1.bf16.msra.mxu0 %v6401
  %6648 = vmatprep.subr.bf16.mxu0 0
  %6649 = vmatpush1.bf16.msra.mxu0 0
  %6650 = vmatprep.subr.bf16.mxu0 0
  %6651 = vmatpush1.bf16.msra.mxu0 0
  %6652 = vmatprep.subr.bf16.mxu0 0
  %6653 = vmatpush1.bf16.msra.mxu0 0
  %6654 = vmatprep.subr.bf16.mxu0 0
  %6655 = vmatpush1.bf16.msra.mxu0 0
  %6656 = vmatprep.subr.bf16.mxu0 0
  %6657 = vmatpush1.bf16.msra.mxu0 0
  %6658 = vmatprep.subr.bf16.mxu0 0
  %6659 = vmatpush1.bf16.msra.mxu0 0
  %6660 = vmatprep.subr.bf16.mxu0 0
  %6661 = vmatpush1.bf16.msra.mxu0 0
  %6662 = vmatprep.subr.bf16.mxu0 0
  %6663 = vmatpush1.bf16.msra.mxu0 0
  %6664 = vmatprep.subr.bf16.mxu0 0
  %6665 = vmatpush1.bf16.msra.mxu0 0
  %6666 = vmatprep.subr.bf16.mxu0 0
  %6667 = vmatpush1.bf16.msra.mxu0 0
  %6668 = vmatprep.subr.bf16.mxu0 0
  %6669 = vmatpush1.bf16.msra.mxu0 0
  %6670 = vmatprep.mubr.bf16.mxu0 0
  %6671 = vmatmul.mubr.bf16.gmra.mrb[0].mxu0 %v6367
  %v6672 = vpop.f32.mrb[0].mxu0
  %v6673 = vadd.f32 0.0, %v6672
  %v6674 = vpop.f32.mrb[0].mxu0
  %v6675 = vadd.f32 0.0, %v6674
  %v6676 = vpop.f32.mrb[0].mxu0
  %v6677 = vpop.f32.mrb[0].mxu0
  %6678 = vdwg.mxu0
  %6679 = vmatprep.subr.bf16.mxu0 %v6189
  %6680 = vmatpush1.bf16.msra.mxu0 %v6188
  %6681 = vmatprep.subr.bf16.mxu0 %v6210
  %6682 = vmatpush1.bf16.msra.mxu0 %v6209
  %6683 = vmatprep.subr.bf16.mxu0 %v6231
  %6684 = vmatpush1.bf16.msra.mxu0 %v6230
  %6685 = vmatprep.subr.bf16.mxu0 %v6252
  %6686 = vmatpush1.bf16.msra.mxu0 %v6251
  %6687 = vmatprep.subr.bf16.mxu0 %v6410
  %6688 = vmatpush1.bf16.msra.mxu0 %v6407
  %6689 = vmatprep.subr.bf16.mxu0 0
  %6690 = vmatpush1.bf16.msra.mxu0 0
  %6691 = vmatprep.subr.bf16.mxu0 0
  %6692 = vmatpush1.bf16.msra.mxu0 0
  %6693 = vmatprep.subr.bf16.mxu0 0
  %6694 = vmatpush1.bf16.msra.mxu0 0
  %6695 = vmatprep.subr.bf16.mxu0 0
  %6696 = vmatpush1.bf16.msra.mxu0 0
  %6697 = vmatprep.subr.bf16.mxu0 0
  %6698 = vmatpush1.bf16.msra.mxu0 0
  %6699 = vmatprep.subr.bf16.mxu0 0
  %6700 = vmatpush1.bf16.msra.mxu0 0
  %6701 = vmatprep.subr.bf16.mxu0 0
  %6702 = vmatpush1.bf16.msra.mxu0 0
  %6703 = vmatprep.subr.bf16.mxu0 0
  %6704 = vmatpush1.bf16.msra.mxu0 0
  %6705 = vmatprep.subr.bf16.mxu0 0
  %6706 = vmatpush1.bf16.msra.mxu0 0
  %6707 = vmatprep.subr.bf16.mxu0 0
  %6708 = vmatpush1.bf16.msra.mxu0 0
  %6709 = vmatprep.subr.bf16.mxu0 0
  %6710 = vmatpush1.bf16.msra.mxu0 0
  %6711 = vmatprep.mubr.bf16.mxu0 0
  %6712 = vmatmul.mubr.bf16.gmra.mrb[0].mxu0 %v6367
  %v6713 = vpop.f32.mrb[0].mxu0
  %v6714 = vadd.f32 0.0, %v6713
  %v6715 = vpop.f32.mrb[0].mxu0
  %v6716 = vadd.f32 0.0, %v6715
  %v6717 = vpop.f32.mrb[0].mxu0
  %v6718 = vpop.f32.mrb[0].mxu0
  %6719 = vdwg.mxu0
  %6720 = vmatprep.subr.bf16.mxu0 %v6191
  %6721 = vmatpush1.bf16.msra.mxu0 %v6190
  %6722 = vmatprep.subr.bf16.mxu0 %v6212
  %6723 = vmatpush1.bf16.msra.mxu0 %v6211
  %6724 = vmatprep.subr.bf16.mxu0 %v6233
  %6725 = vmatpush1.bf16.msra.mxu0 %v6232
  %6726 = vmatprep.subr.bf16.mxu0 %v6254
  %6727 = vmatpush1.bf16.msra.mxu0 %v6253
  %6728 = vmatprep.subr.bf16.mxu0 %v6416
  %6729 = vmatpush1.bf16.msra.mxu0 %v6413
  %6730 = vmatprep.subr.bf16.mxu0 0
  %6731 = vmatpush1.bf16.msra.mxu0 0
  %6732 = vmatprep.subr.bf16.mxu0 0
  %6733 = vmatpush1.bf16.msra.mxu0 0
  %6734 = vmatprep.subr.bf16.mxu0 0
  %6735 = vmatpush1.bf16.msra.mxu0 0
  %6736 = vmatprep.subr.bf16.mxu0 0
  %6737 = vmatpush1.bf16.msra.mxu0 0
  %6738 = vmatprep.subr.bf16.mxu0 0
  %6739 = vmatpush1.bf16.msra.mxu0 0
  %6740 = vmatprep.subr.bf16.mxu0 0
  %6741 = vmatpush1.bf16.msra.mxu0 0
  %6742 = vmatprep.subr.bf16.mxu0 0
  %6743 = vmatpush1.bf16.msra.mxu0 0
  %6744 = vmatprep.subr.bf16.mxu0 0
  %6745 = vmatpush1.bf16.msra.mxu0 0
  %6746 = vmatprep.subr.bf16.mxu0 0
  %6747 = vmatpush1.bf16.msra.mxu0 0
  %6748 = vmatprep.subr.bf16.mxu0 0
  %6749 = vmatpush1.bf16.msra.mxu0 0
  %6750 = vmatprep.subr.bf16.mxu0 0
  %6751 = vmatpush1.bf16.msra.mxu0 0
  %6752 = vmatprep.mubr.bf16.mxu0 0
  %6753 = vmatmul.mubr.bf16.gmra.mrb[0].mxu0 %v6367
  %v6754 = vpop.f32.mrb[0].mxu0
  %v6755 = vadd.f32 0.0, %v6754
  %v6756 = vpop.f32.mrb[0].mxu0
  %v6757 = vadd.f32 0.0, %v6756
  %v6758 = vpop.f32.mrb[0].mxu0
  %v6759 = vpop.f32.mrb[0].mxu0
  %6760 = vdwg.mxu0
  %6761 = vmatprep.subr.bf16.mxu0 %v6193
  %6762 = vmatpush1.bf16.msra.mxu0 %v6192
  %6763 = vmatprep.subr.bf16.mxu0 %v6214
  %6764 = vmatpush1.bf16.msra.mxu0 %v6213
  %6765 = vmatprep.subr.bf16.mxu0 %v6235
  %6766 = vmatpush1.bf16.msra.mxu0 %v6234
  %6767 = vmatprep.subr.bf16.mxu0 %v6256
  %6768 = vmatpush1.bf16.msra.mxu0 %v6255
  %6769 = vmatprep.subr.bf16.mxu0 %v6422
  %6770 = vmatpush1.bf16.msra.mxu0 %v6419
  %6771 = vmatprep.subr.bf16.mxu0 0
  %6772 = vmatpush1.bf16.msra.mxu0 0
  %6773 = vmatprep.subr.bf16.mxu0 0
  %6774 = vmatpush1.bf16.msra.mxu0 0
  %6775 = vmatprep.subr.bf16.mxu0 0
  %6776 = vmatpush1.bf16.msra.mxu0 0
  %6777 = vmatprep.subr.bf16.mxu0 0
  %6778 = vmatpush1.bf16.msra.mxu0 0
  %6779 = vmatprep.subr.bf16.mxu0 0
  %6780 = vmatpush1.bf16.msra.mxu0 0
  %6781 = vmatprep.subr.bf16.mxu0 0
  %6782 = vmatpush1.bf16.msra.mxu0 0
  %6783 = vmatprep.subr.bf16.mxu0 0
  %6784 = vmatpush1.bf16.msra.mxu0 0
  %6785 = vmatprep.subr.bf16.mxu0 0
  %6786 = vmatpush1.bf16.msra.mxu0 0
  %6787 = vmatprep.subr.bf16.mxu0 0
  %6788 = vmatpush1.bf16.msra.mxu0 0
  %6789 = vmatprep.subr.bf16.mxu0 0
  %6790 = vmatpush1.bf16.msra.mxu0 0
  %6791 = vmatprep.subr.bf16.mxu0 0
  %6792 = vmatpush1.bf16.msra.mxu0 0
  %6793 = vmatprep.mubr.bf16.mxu0 0
  %6794 = vmatmul.mubr.bf16.gmra.mrb[0].mxu0 %v6367
  %v6795 = vpop.f32.mrb[0].mxu0
  %v6796 = vadd.f32 0.0, %v6795
  %v6797 = vpop.f32.mrb[0].mxu0
  %v6798 = vadd.f32 0.0, %v6797
  %v6799 = vpop.f32.mrb[0].mxu0
  %v6800 = vpop.f32.mrb[0].mxu0
  %6801 = vdwg.mxu0
  %6802 = vmatprep.subr.bf16.mxu0 %v6195
  %6803 = vmatpush1.bf16.msra.mxu0 %v6194
  %6804 = vmatprep.subr.bf16.mxu0 %v6216
  %6805 = vmatpush1.bf16.msra.mxu0 %v6215
  %6806 = vmatprep.subr.bf16.mxu0 %v6237
  %6807 = vmatpush1.bf16.msra.mxu0 %v6236
  %6808 = vmatprep.subr.bf16.mxu0 %v6258
  %6809 = vmatpush1.bf16.msra.mxu0 %v6257
  %6810 = vmatprep.subr.bf16.mxu0 %v6428
  %6811 = vmatpush1.bf16.msra.mxu0 %v6425
  %6812 = vmatprep.subr.bf16.mxu0 0
  %6813 = vmatpush1.bf16.msra.mxu0 0
  %6814 = vmatprep.subr.bf16.mxu0 0
  %6815 = vmatpush1.bf16.msra.mxu0 0
  %6816 = vmatprep.subr.bf16.mxu0 0
  %6817 = vmatpush1.bf16.msra.mxu0 0
  %6818 = vmatprep.subr.bf16.mxu0 0
  %6819 = vmatpush1.bf16.msra.mxu0 0
  %6820 = vmatprep.subr.bf16.mxu0 0
  %6821 = vmatpush1.bf16.msra.mxu0 0
  %6822 = vmatprep.subr.bf16.mxu0 0
  %6823 = vmatpush1.bf16.msra.mxu0 0
  %6824 = vmatprep.subr.bf16.mxu0 0
  %6825 = vmatpush1.bf16.msra.mxu0 0
  %6826 = vmatprep.subr.bf16.mxu0 0
  %6827 = vmatpush1.bf16.msra.mxu0 0
  %6828 = vmatprep.subr.bf16.mxu0 0
  %6829 = vmatpush1.bf16.msra.mxu0 0
  %6830 = vmatprep.subr.bf16.mxu0 0
  %6831 = vmatpush1.bf16.msra.mxu0 0
  %6832 = vmatprep.subr.bf16.mxu0 0
  %6833 = vmatpush1.bf16.msra.mxu0 0
  %6834 = vmatprep.mubr.bf16.mxu0 0
  %6835 = vmatmul.mubr.bf16.gmra.mrb[0].mxu0 %v6367
  %v6836 = vpop.f32.mrb[0].mxu0
  %v6837 = vadd.f32 0.0, %v6836
  %v6838 = vpop.f32.mrb[0].mxu0
  %v6839 = vadd.f32 0.0, %v6838
  %v6840 = vpop.f32.mrb[0].mxu0
  %v6841 = vpop.f32.mrb[0].mxu0
  %6842 = vdwg.mxu0
  %6843 = vmatprep.subr.bf16.mxu0 0
  %6844 = vmatpush1.bf16.msra.mxu0 %v6196
  %6845 = vmatprep.subr.bf16.mxu0 0
  %6846 = vmatpush1.bf16.msra.mxu0 %v6217
  %6847 = vmatprep.subr.bf16.mxu0 0
  %6848 = vmatpush1.bf16.msra.mxu0 %v6238
  %6849 = vmatprep.subr.bf16.mxu0 0
  %6850 = vmatpush1.bf16.msra.mxu0 %v6259
  %6851 = vmatprep.subr.bf16.mxu0 0
  %6852 = vmatpush1.bf16.msra.mxu0 %v6431
  %6853 = vmatprep.subr.bf16.mxu0 0
  %6854 = vmatpush1.bf16.msra.mxu0 0
  %6855 = vmatprep.subr.bf16.mxu0 0
  %6856 = vmatpush1.bf16.msra.mxu0 0
  %6857 = vmatprep.subr.bf16.mxu0 0
  %6858 = vmatpush1.bf16.msra.mxu0 0
  %6859 = vmatprep.subr.bf16.mxu0 0
  %6860 = vmatpush1.bf16.msra.mxu0 0
  %6861 = vmatprep.subr.bf16.mxu0 0
  %6862 = vmatpush1.bf16.msra.mxu0 0
  %6863 = vmatprep.subr.bf16.mxu0 0
  %6864 = vmatpush1.bf16.msra.mxu0 0
  %6865 = vmatprep.subr.bf16.mxu0 0
  %6866 = vmatpush1.bf16.msra.mxu0 0
  %6867 = vmatprep.subr.bf16.mxu0 0
  %6868 = vmatpush1.bf16.msra.mxu0 0
  %6869 = vmatprep.subr.bf16.mxu0 0
  %6870 = vmatpush1.bf16.msra.mxu0 0
  %6871 = vmatprep.subr.bf16.mxu0 0
  %6872 = vmatpush1.bf16.msra.mxu0 0
  %6873 = vmatprep.subr.bf16.mxu0 0
  %6874 = vmatpush1.bf16.msra.mxu0 0
  %6875 = vmatprep.mubr.bf16.mxu0 0
  %6876 = vmatmul.mubr.bf16.gmra.mrb[0].mxu0 %v6367
  %v6877 = vpop.f32.mrb[0].mxu0
  %v6878 = vadd.f32 0.0, %v6877
  %v6879 = vpop.f32.mrb[0].mxu0
  %v6880 = vpop.f32.mrb[0].mxu0
  %v6881 = vpop.f32.mrb[0].mxu0
  %6882 = vdwg.mxu0
  %v6883 = vmul.f32 %v6468, %v2536
  %v6884 = vmul.f32 %v6470, %v2540
  %v6885 = vmul.f32 %v6509, %v2544
  %v6886 = vmul.f32 %v6511, %v2548
  %v6887 = vmul.f32 %v6550, %v2552
  %v6888 = vmul.f32 %v6552, %v2556
  %v6889 = vmul.f32 %v6591, %v2560
  %v6890 = vmul.f32 %v6593, %v2564
  %v6891 = vmul.f32 %v6632, %v2568
  %v6892 = vmul.f32 %v6634, %v2572
  %v6893 = vmul.f32 %v6673, %v2576
  %v6894 = vmul.f32 %v6675, %v2580
  %v6895 = vmul.f32 %v6714, %v2584
  %v6896 = vmul.f32 %v6716, %v2588
  %v6897 = vmul.f32 %v6755, %v2592
  %v6898 = vmul.f32 %v6757, %v2596
  %v6899 = vmul.f32 %v6796, %v2600
  %v6900 = vmul.f32 %v6798, %v2604
  %v6901 = vmul.f32 %v6837, %v2608
  %v6902 = vmul.f32 %v6839, %v2612
  %v6903 = vmul.f32 %v6878, %v2616
  %v6904 = vadd.f32 %v6883, %v6884
  %v6905 = vadd.f32 %v6904, %v6885
  %v6906 = vadd.f32 %v6905, %v6886
  %v6907 = vadd.f32 %v6906, %v6887
  %v6908 = vadd.f32 %v6907, %v6888
  %v6909 = vadd.f32 %v6908, %v6889
  %v6910 = vadd.f32 %v6909, %v6890
  %v6911 = vadd.f32 %v6910, %v6891
  %v6912 = vadd.f32 %v6911, %v6892
  %v6913 = vadd.f32 %v6912, %v6893
  %v6914 = vadd.f32 %v6913, %v6894
  %v6915 = vadd.f32 %v6914, %v6895
  %v6916 = vadd.f32 %v6915, %v6896
  %v6917 = vadd.f32 %v6916, %v6897
  %v6918 = vadd.f32 %v6917, %v6898
  %v6919 = vadd.f32 %v6918, %v6899
  %v6920 = vadd.f32 %v6919, %v6900
  %v6921 = vadd.f32 %v6920, %v6901
  %v6922 = vadd.f32 %v6921, %v6902
  %v6923 = vadd.f32 %v6922, %v6903
  %6924 = vadd.xlane.f32.xlu0 %v6923
  %v6925 = vpop.xlane.xlu0 %6924
  %v6926 = vmul.f32 %v6925, 0.00048828125
  %v6927 = vsub.f32 %v6468, %v6926
  %v6928 = vsub.f32 %v6470, %v6926
  %v6929 = vsub.f32 %v6509, %v6926
  %v6930 = vsub.f32 %v6511, %v6926
  %v6931 = vsub.f32 %v6550, %v6926
  %v6932 = vsub.f32 %v6552, %v6926
  %v6933 = vsub.f32 %v6591, %v6926
  %v6934 = vsub.f32 %v6593, %v6926
  %v6935 = vsub.f32 %v6632, %v6926
  %v6936 = vsub.f32 %v6634, %v6926
  %v6937 = vsub.f32 %v6673, %v6926
  %v6938 = vsub.f32 %v6675, %v6926
  %v6939 = vsub.f32 %v6714, %v6926
  %v6940 = vsub.f32 %v6716, %v6926
  %v6941 = vsub.f32 %v6755, %v6926
  %v6942 = vsub.f32 %v6757, %v6926
  %v6943 = vsub.f32 %v6796, %v6926
  %v6944 = vsub.f32 %v6798, %v6926
  %v6945 = vsub.f32 %v6837, %v6926
  %v6946 = vsub.f32 %v6839, %v6926
  %v6947 = vsub.f32 %v6878, %v6926
  %v6948 = vmul.f32 %v6927, %v2536
  %v6949 = vmul.f32 %v6928, %v2540
  %v6950 = vmul.f32 %v6929, %v2544
  %v6951 = vmul.f32 %v6930, %v2548
  %v6952 = vmul.f32 %v6931, %v2552
  %v6953 = vmul.f32 %v6932, %v2556
  %v6954 = vmul.f32 %v6933, %v2560
  %v6955 = vmul.f32 %v6934, %v2564
  %v6956 = vmul.f32 %v6935, %v2568
  %v6957 = vmul.f32 %v6936, %v2572
  %v6958 = vmul.f32 %v6937, %v2576
  %v6959 = vmul.f32 %v6938, %v2580
  %v6960 = vmul.f32 %v6939, %v2584
  %v6961 = vmul.f32 %v6940, %v2588
  %v6962 = vmul.f32 %v6941, %v2592
  %v6963 = vmul.f32 %v6942, %v2596
  %v6964 = vmul.f32 %v6943, %v2600
  %v6965 = vmul.f32 %v6944, %v2604
  %v6966 = vmul.f32 %v6945, %v2608
  %v6967 = vmul.f32 %v6946, %v2612
  %v6968 = vmul.f32 %v6947, %v2616
  %v6969 = vmul.f32 %v6948, %v6948
  %v6970 = vmul.f32 %v6949, %v6949
  %v6971 = vmul.f32 %v6950, %v6950
  %v6972 = vmul.f32 %v6951, %v6951
  %v6973 = vmul.f32 %v6952, %v6952
  %v6974 = vmul.f32 %v6953, %v6953
  %v6975 = vmul.f32 %v6954, %v6954
  %v6976 = vmul.f32 %v6955, %v6955
  %v6977 = vmul.f32 %v6956, %v6956
  %v6978 = vmul.f32 %v6957, %v6957
  %v6979 = vmul.f32 %v6958, %v6958
  %v6980 = vmul.f32 %v6959, %v6959
  %v6981 = vmul.f32 %v6960, %v6960
  %v6982 = vmul.f32 %v6961, %v6961
  %v6983 = vmul.f32 %v6962, %v6962
  %v6984 = vmul.f32 %v6963, %v6963
  %v6985 = vmul.f32 %v6964, %v6964
  %v6986 = vmul.f32 %v6965, %v6965
  %v6987 = vmul.f32 %v6966, %v6966
  %v6988 = vmul.f32 %v6967, %v6967
  %v6989 = vmul.f32 %v6968, %v6968
  %v6990 = vadd.f32 %v6969, %v6970
  %v6991 = vadd.f32 %v6990, %v6971
  %v6992 = vadd.f32 %v6991, %v6972
  %v6993 = vadd.f32 %v6992, %v6973
  %v6994 = vadd.f32 %v6993, %v6974
  %v6995 = vadd.f32 %v6994, %v6975
  %v6996 = vadd.f32 %v6995, %v6976
  %v6997 = vadd.f32 %v6996, %v6977
  %v6998 = vadd.f32 %v6997, %v6978
  %v6999 = vadd.f32 %v6998, %v6979
  %v7000 = vadd.f32 %v6999, %v6980
  %v7001 = vadd.f32 %v7000, %v6981
  %v7002 = vadd.f32 %v7001, %v6982
  %v7003 = vadd.f32 %v7002, %v6983
  %v7004 = vadd.f32 %v7003, %v6984
  %v7005 = vadd.f32 %v7004, %v6985
  %v7006 = vadd.f32 %v7005, %v6986
  %v7007 = vadd.f32 %v7006, %v6987
  %v7008 = vadd.f32 %v7007, %v6988
  %v7009 = vadd.f32 %v7008, %v6989
  %7010 = vadd.xlane.f32.xlu0 %v7009
  %v7011 = vpop.xlane.xlu0 %7010
  %v7012 = vmul.f32 %v7011, 0.00048828125
  %v7013 = vld [vmem:[%s8] sm:$0xff]
  %v7014 = vadd.f32 %v7012, 1e-05
  %v7015 = vrsqrt.pop %v7014
  %v7016 = vmul.f32 %v7013, %v7015
  %7018 = vset.pattern.permute.xlu0 0
  %7019 = vperm.xlu0 %7018, %v7016
  %v7020 = vpop.permute.xlu0 %7019
  %v7022 = vmul.f32 %v6948, %v7020
  %v7023 = vmul.f32 %v6949, %v7020
  %v7024 = vmul.f32 %v6950, %v7020
  %v7025 = vmul.f32 %v6951, %v7020
  %v7026 = vmul.f32 %v6952, %v7020
  %v7027 = vmul.f32 %v6953, %v7020
  %v7028 = vmul.f32 %v6954, %v7020
  %v7029 = vmul.f32 %v6955, %v7020
  %v7030 = vmul.f32 %v6956, %v7020
  %v7031 = vmul.f32 %v6957, %v7020
  %v7032 = vmul.f32 %v6958, %v7020
  %v7033 = vmul.f32 %v6959, %v7020
  %v7034 = vmul.f32 %v6960, %v7020
  %v7035 = vmul.f32 %v6961, %v7020
  %v7036 = vmul.f32 %v6962, %v7020
  %v7037 = vmul.f32 %v6963, %v7020
  %v7038 = vmul.f32 %v6964, %v7020
  %v7039 = vmul.f32 %v6965, %v7020
  %v7040 = vmul.f32 %v6966, %v7020
  %v7041 = vmul.f32 %v6967, %v7020
  %v7042 = vmul.f32 %v6968, %v7020
  %v7043 = vld [vmem:[%s9] sm:$0xff]
  %7045 = vset.pattern.permute.xlu0 0
  %7046 = vperm.xlu0 %7045, %v7043
  %v7047 = vpop.permute.xlu0 %7046
  %v7049 = vadd.f32 %v7022, %v7047
  %v7050 = vadd.f32 %v7023, %v7047
  %v7051 = vadd.f32 %v7024, %v7047
  %v7052 = vadd.f32 %v7025, %v7047
  %v7053 = vadd.f32 %v7026, %v7047
  %v7054 = vadd.f32 %v7027, %v7047
  %v7055 = vadd.f32 %v7028, %v7047
  %v7056 = vadd.f32 %v7029, %v7047
  %v7057 = vadd.f32 %v7030, %v7047
  %v7058 = vadd.f32 %v7031, %v7047
  %v7059 = vadd.f32 %v7032, %v7047
  %v7060 = vadd.f32 %v7033, %v7047
  %v7061 = vadd.f32 %v7034, %v7047
  %v7062 = vadd.f32 %v7035, %v7047
  %v7063 = vadd.f32 %v7036, %v7047
  %v7064 = vadd.f32 %v7037, %v7047
  %v7065 = vadd.f32 %v7038, %v7047
  %v7066 = vadd.f32 %v7039, %v7047
  %v7067 = vadd.f32 %v7040, %v7047
  %v7068 = vadd.f32 %v7041, %v7047
  %v7069 = vadd.f32 %v7042, %v7047
  %v7070 = vmax.f32 %v7049, 0.0
  %v7071 = vmax.f32 %v7050, 0.0
  %v7072 = vmax.f32 %v7051, 0.0
  %v7073 = vmax.f32 %v7052, 0.0
  %v7074 = vmax.f32 %v7053, 0.0
  %v7075 = vmax.f32 %v7054, 0.0
  %v7076 = vmax.f32 %v7055, 0.0
  %v7077 = vmax.f32 %v7056, 0.0
  %v7078 = vmax.f32 %v7057, 0.0
  %v7079 = vmax.f32 %v7058, 0.0
  %v7080 = vmax.f32 %v7059, 0.0
  %v7081 = vmax.f32 %v7060, 0.0
  %v7082 = vmax.f32 %v7061, 0.0
  %v7083 = vmax.f32 %v7062, 0.0
  %v7084 = vmax.f32 %v7063, 0.0
  %v7085 = vmax.f32 %v7064, 0.0
  %v7086 = vmax.f32 %v7065, 0.0
  %v7087 = vmax.f32 %v7066, 0.0
  %v7088 = vmax.f32 %v7067, 0.0
  %v7089 = vmax.f32 %v7068, 0.0
  %v7090 = vmax.f32 %v7069, 0.0
  %7091 = vst [vmem:[%s10] sm:$0xff] %v7070
  %7092 = vst [vmem:[%s10 + $0x8] sm:$0xff] %v7071
  %7093 = vst [vmem:[%s10 + $0x10] sm:$0xff] %v7072
  %7094 = vst [vmem:[%s10 + $0x18] sm:$0xff] %v7073
  %7095 = vst [vmem:[%s10 + $0x20] sm:$0xff] %v7074
  %7096 = vst [vmem:[%s10 + $0x28] sm:$0xff] %v7075
  %7097 = vst [vmem:[%s10 + $0x30] sm:$0xff] %v7076
  %7098 = vst [vmem:[%s10 + $0x38] sm:$0xff] %v7077
  %7099 = vst [vmem:[%s10 + $0x40] sm:$0xff] %v7078
  %7100 = vst [vmem:[%s10 + $0x48] sm:$0xff] %v7079
  %7101 = vst [vmem:[%s10 + $0x50] sm:$0xff] %v7080
  %7102 = vst [vmem:[%s10 + $0x58] sm:$0xff] %v7081
  %7103 = vst [vmem:[%s10 + $0x60] sm:$0xff] %v7082
  %7104 = vst [vmem:[%s10 + $0x68] sm:$0xff] %v7083
  %7105 = vst [vmem:[%s10 + $0x70] sm:$0xff] %v7084
  %7106 = vst [vmem:[%s10 + $0x78] sm:$0xff] %v7085
  %7107 = vst [vmem:[%s10 + $0x80] sm:$0xff] %v7086
  %7108 = vst [vmem:[%s10 + $0x88] sm:$0xff] %v7087
  %7109 = vst [vmem:[%s10 + $0x90] sm:$0xff] %v7088
  %7110 = vst [vmem:[%s10 + $0x98] sm:$0xff] %v7089
  %7111 = vst [vmem:[%s10 + $0xa0] sm:$0xff] %v7090
  // Predicated region
  $region42: #{conv_layer_forward.1} parent=0 // pred_check
    _
  $region43: #{conv_layer_forward.1} parent=0 // pred_check_branch
    %7113 = sbr.rel (0) target = $region45
  $region44: #{conv_layer_forward.1} parent=0 // pred_region
    _
  $region45: #{conv_layer_forward.1} parent=0 // pred_fallthru
    _
  // Predicated region
  $region46: #{conv_layer_forward.1} parent=0 // pred_check
    _
  $region47: #{conv_layer_forward.1} parent=0 // pred_check_branch
    %7115 = sbr.rel (0) target = $region49
  $region48: #{conv_layer_forward.1} parent=0 // pred_region
    _
  $region49: #{conv_layer_forward.1} parent=0 // pred_fallthru
    _

</llo_original>
